<compile_context>
chip_gen: v5e
topology: v5e:2x2
jax: 0.10.0
libtpu: 0.0.40
codegen_flags: <defaults>
</compile_context>

<pallas_src>
import functools

import jax
import jax.numpy as jnp
from jax.experimental import pallas as pl
from jax.experimental.pallas import tpu as pltpu

# bf16 on the MXU path for the byte-heavy layers (conv2 matmul, fc1).
# Set to jnp.float32 to recover bit-closer-to-PyTorch numerics.
MATMUL_DTYPE = jnp.bfloat16

_VMEM_LIMIT = 32 * 1024 * 1024  # safe on v5e/v6e (128 MiB phys) and v7x (64 MiB phys)


def _round_up(x, m):
    return (x + m - 1) // m * m


# ----------------------------------------------------------------------------
# Pallas kernels
# ----------------------------------------------------------------------------
def _conv_bn_relu_pool_kernel(p_ref, w_ref, scale_ref, shift_ref, o_ref):
    """Fused conv(matmul) + BN affine + ReLU + 2x2 maxpool.

    p_ref:    (4, TM, K)  im2col patches, one slab per 2x2 pool-window position
    w_ref:    (K, N)      conv weights as a matrix
    scale/shift: (1, N)   folded BN (+ conv bias)
    o_ref:    (TM, N)     pooled output rows (one row per pooled pixel)
    """
    w = w_ref[...]
    scale = scale_ref[...]
    shift = shift_ref[...]
    r = None
    for j in range(4):  # 2x2 pool window, unrolled
        y = jnp.dot(p_ref[j], w, preferred_element_type=jnp.float32)
        y = y * scale + shift                      # BN (affine) before pooling
        r = y if r is None else jnp.maximum(r, y)  # maxpool; ReLU commutes with max
    o_ref[...] = jnp.maximum(r, 0.0).astype(o_ref.dtype)


def conv_bn_relu_pool(patches, w, scale, shift, *, tile_m, out_dtype=jnp.float32):
    """patches: (4, M, K); w: (K, N) -> (M, N) pooled activation."""
    _, M, K = patches.shape
    N = w.shape[1]
    TM = min(tile_m, _round_up(M, 8))     # tile caps are multiples of 8
    Mp = _round_up(M, TM)
    if Mp != M:                           # ragged tail -> zero-pad rows
        patches = jnp.pad(patches, ((0, 0), (0, Mp - M), (0, 0)))
    out = pl.pallas_call(
        _conv_bn_relu_pool_kernel,
        out_shape=jax.ShapeDtypeStruct((Mp, N), out_dtype),
        grid=(Mp // TM,),
        in_specs=[
            pl.BlockSpec((4, TM, K), lambda i: (0, i, 0)),
            pl.BlockSpec((K, N), lambda i: (0, 0)),
            pl.BlockSpec((1, N), lambda i: (0, 0)),
            pl.BlockSpec((1, N), lambda i: (0, 0)),
        ],
        out_specs=pl.BlockSpec((TM, N), lambda i: (i, 0)),
        compiler_params=pltpu.CompilerParams(
            dimension_semantics=("parallel",), vmem_limit_bytes=_VMEM_LIMIT),
    )(patches, w,
      scale.reshape(1, N).astype(jnp.float32),
      shift.reshape(1, N).astype(jnp.float32))
    return out[:M] if Mp != M else out


def _fc_head_kernel(x_ref, w1_ref, b1_ref, w2_ref, b2_ref, w3_ref, b3_ref, o_ref):
    """Fused Linear(6272,256)+ReLU -> Linear(256,128)+ReLU -> Linear(128,10).

    Dropout(0.5) layers are identity in inference mode.
    """
    h = jnp.dot(x_ref[...], w1_ref[...], preferred_element_type=jnp.float32)
    h = jnp.maximum(h + b1_ref[...], 0.0)
    h = jnp.dot(h, w2_ref[...], preferred_element_type=jnp.float32)
    h = jnp.maximum(h + b2_ref[...], 0.0)
    y = jnp.dot(h, w3_ref[...], preferred_element_type=jnp.float32) + b3_ref[...]
    o_ref[...] = y.astype(o_ref.dtype)


def fc_head(x, w1, b1, w2, b2, w3, b3, *, tile_b=128):
    B, D = x.shape
    H1, H2, NO = w1.shape[1], w2.shape[1], w3.shape[1]
    TB = min(tile_b, _round_up(B, 8))
    Bp = _round_up(B, TB)
    if Bp != B:
        x = jnp.pad(x, ((0, Bp - B), (0, 0)))
    out = pl.pallas_call(
        _fc_head_kernel,
        out_shape=jax.ShapeDtypeStruct((Bp, NO), jnp.float32),
        grid=(Bp // TB,),
        in_specs=[
            pl.BlockSpec((TB, D), lambda i: (i, 0)),
            pl.BlockSpec((D, H1), lambda i: (0, 0)),
            pl.BlockSpec((1, H1), lambda i: (0, 0)),
            pl.BlockSpec((H1, H2), lambda i: (0, 0)),
            pl.BlockSpec((1, H2), lambda i: (0, 0)),
            pl.BlockSpec((H2, NO), lambda i: (0, 0)),
            pl.BlockSpec((1, NO), lambda i: (0, 0)),
        ],
        out_specs=pl.BlockSpec((TB, NO), lambda i: (i, 0)),
        compiler_params=pltpu.CompilerParams(
            dimension_semantics=("parallel",), vmem_limit_bytes=_VMEM_LIMIT),
    )(x, w1, b1.reshape(1, H1), w2, b2.reshape(1, H2), w3, b3.reshape(1, NO))
    return out[:B] if Bp != B else out


# ----------------------------------------------------------------------------
# Glue: pool-ordered im2col patch extraction (3x3, padding=1, stride=1)
# ----------------------------------------------------------------------------
def build_conv1_patches(x):
    """x: (B, 28, 28) -> (4, B*14*14, 9); slab j = pool-window position (py,px)."""
    B, H, W = x.shape
    xp = jnp.pad(x, ((0, 0), (1, 1), (1, 1)))
    taps = [xp[:, ky:ky + H, kx:kx + W] for ky in range(3) for kx in range(3)]
    p = jnp.stack(taps, axis=-1)                                   # (B,H,W,9)
    p = p.reshape(B, H // 2, 2, W // 2, 2, 9).transpose(2, 4, 0, 1, 3, 5)
    return p.reshape(4, B * (H // 2) * (W // 2), 9)


def build_conv2_patches(a):
    """a: (B, 14, 14, 32) -> (4, B*7*7, 288); patch ordering (ky, kx, cin)."""
    B, H, W, C = a.shape
    ap = jnp.pad(a, ((0, 0), (1, 1), (1, 1), (0, 0)))
    taps = [ap[:, ky:ky + H, kx:kx + W, :] for ky in range(3) for kx in range(3)]
    p = jnp.stack(taps, axis=3).reshape(B, H, W, 9 * C)            # (ky,kx,cin)
    p = p.reshape(B, H // 2, 2, W // 2, 2, 9 * C).transpose(2, 4, 0, 1, 3, 5)
    return p.reshape(4, B * (H // 2) * (W // 2), 9 * C)


def conv_weight_to_matrix(w_torch_layout):
    """(cout, cin, 3, 3) -> (9*cin, cout) matching im2col (ky, kx, cin) order."""
    cout, cin, kh, kw = w_torch_layout.shape
    return jnp.transpose(w_torch_layout, (2, 3, 1, 0)).reshape(kh * kw * cin, cout)


def fc1_weight_to_nhwc(fc1_w, C=128, H=7, W=7):
    """Permute fc1 rows from PyTorch (C,H,W)-flatten order to NHWC-flatten order."""
    return fc1_w.reshape(C, H, W, -1).transpose(1, 2, 0, 3).reshape(C * H * W, -1)


def fold_bn(conv_bias, gamma, beta, running_mean, running_var, eps=1e-5):
    """BN(conv_out + bias) = conv_out * scale + shift."""
    s = gamma / jnp.sqrt(running_var + eps)
    return s, (conv_bias - running_mean) * s + beta


# ----------------------------------------------------------------------------
# Parameter construction (deterministic, synthetic) + inference-time prep
# ----------------------------------------------------------------------------
def init_params(key):
    ks = jax.random.split(key, 10)
    p = {}
    p["conv1_w"] = jax.random.normal(ks[0], (32, 1, 3, 3), jnp.float32) * 0.1
    p["conv1_b"] = jax.random.normal(ks[1], (32,), jnp.float32) * 0.01
    p["conv2_w"] = jax.random.normal(ks[2], (128, 32, 3, 3), jnp.float32) * 0.05
    p["conv2_b"] = jax.random.normal(ks[3], (128,), jnp.float32) * 0.01
    p["fc1_w"] = jax.random.normal(ks[4], (128 * 7 * 7, 256), jnp.float32) * 0.02
    p["fc1_b"] = jax.random.normal(ks[5], (256,), jnp.float32) * 0.01
    p["fc2_w"] = jax.random.normal(ks[6], (256, 128), jnp.float32) * 0.05
    p["fc2_b"] = jax.random.normal(ks[7], (128,), jnp.float32) * 0.01
    p["fc3_w"] = jax.random.normal(ks[8], (128, 10), jnp.float32) * 0.05
    p["fc3_b"] = jax.random.normal(ks[9], (10,), jnp.float32) * 0.01
    # BatchNorm parameters at PyTorch defaults (weight=1, bias=0, mean=0, var=1)
    for name, c in (("bn1", 32), ("bn2", 128)):
        p[f"{name}_gamma"] = jnp.ones((c,), jnp.float32)
        p[f"{name}_beta"] = jnp.zeros((c,), jnp.float32)
        p[f"{name}_mean"] = jnp.zeros((c,), jnp.float32)
        p[f"{name}_var"] = jnp.ones((c,), jnp.float32)
    return p


def prepare_inference_params(p):
    """One-time constant weight preprocessing (BN fold, layout permutes, bf16)."""
    q = {}
    q["w1"] = conv_weight_to_matrix(p["conv1_w"])                       # (9, 32) f32
    q["s1"], q["t1"] = fold_bn(p["conv1_b"], p["bn1_gamma"], p["bn1_beta"],
                               p["bn1_mean"], p["bn1_var"])
    q["w2"] = conv_weight_to_matrix(p["conv2_w"]).astype(MATMUL_DTYPE)  # (288, 128)
    q["s2"], q["t2"] = fold_bn(p["conv2_b"], p["bn2_gamma"], p["bn2_beta"],
                               p["bn2_mean"], p["bn2_var"])
    q["fc1_w"] = fc1_weight_to_nhwc(p["fc1_w"]).astype(MATMUL_DTYPE)    # NHWC rows
    q["fc1_b"] = p["fc1_b"]
    q["fc2_w"] = p["fc2_w"]
    q["fc2_b"] = p["fc2_b"]
    q["fc3_w"] = p["fc3_w"]
    q["fc3_b"] = p["fc3_b"]
    return q


# ----------------------------------------------------------------------------
# Forward pass
# ----------------------------------------------------------------------------
def cnn_forward(prep, x_nchw):
    B = x_nchw.shape[0]
    x = x_nchw.reshape(B, 28, 28)                       # cin == 1

    # block 1: Conv(1->32, k3, p1) + BN + ReLU + MaxPool, fused in one kernel
    p1 = build_conv1_patches(x)                         # (4, B*196, 9) f32
    a1 = conv_bn_relu_pool(p1, q_w(prep, "w1"), prep["s1"], prep["t1"],
                           tile_m=2048, out_dtype=MATMUL_DTYPE)   # (B*196, 32)
    a1 = a1.reshape(B, 14, 14, 32)

    # block 2: Conv(32->128, k3, p1) + BN + ReLU + MaxPool, fused (bf16 MXU path)
    p2 = build_conv2_patches(a1)                        # (4, B*49, 288) bf16
    a2 = conv_bn_relu_pool(p2, prep["w2"], prep["s2"], prep["t2"],
                           tile_m=512, out_dtype=MATMUL_DTYPE)    # (B*49, 128)

    # Flatten: rows are already (b, h, w) with 128 channels last (NHWC); fc1_w
    # rows were pre-permuted to NHWC order, so no transpose is needed here.
    xf = a2.reshape(B, 7 * 7 * 128)

    # classifier head: fc1+ReLU(+Dropout=id)+fc2+ReLU(+Dropout=id)+fc3, one kernel
    return fc_head(xf, prep["fc1_w"], prep["fc1_b"],
                   prep["fc2_w"], prep["fc2_b"],
                   prep["fc3_w"], prep["fc3_b"], tile_b=128)


def q_w(prep, name):
    return prep[name]


if __name__ == "__main__":
    key = jax.random.PRNGKey(0)
    k_param, k_input = jax.random.split(key)
    params = init_params(k_param)
    prep = prepare_inference_params(params)
    # 28x28 single-channel input is implied by the Linear(128*7*7, 256) layer.
    x = jax.random.normal(k_input, (2, 1, 28, 28), jnp.float32)

    fwd = jax.jit(cnn_forward)
    out = fwd(prep, x)
    out = jax.block_until_ready(out)
    assert out.shape == (2, 10), out.shape
    assert out.dtype == jnp.float32
    print("KERNEL_OK")
</pallas_src>

<mosaic_0001>
module attributes {stable_mosaic.version = 11 : i64} {
  func.func @_conv_bn_relu_pool_kernel(%arg0: i32, %arg1: memref<4x392x9xf32, #tpu.memory_space<vmem>>, %arg2: memref<9x32xf32, #tpu.memory_space<vmem>>, %arg3: memref<1x32xf32, #tpu.memory_space<vmem>>, %arg4: memref<1x32xf32, #tpu.memory_space<vmem>>, %arg5: memref<392x32xbf16, #tpu.memory_space<vmem>>) attributes {dimension_semantics = [#tpu.dimension_semantics<parallel>], iteration_bounds = array<i64: 1>, scalar_prefetch = 0 : i64, scratch_operands = 0 : i64, tpu.core_type = #tpu.core_type<tc>, window_params = [{transform_indices = @transform_0, window_bounds = array<i64: 4, 392, 9>}, {pipeline_mode = #tpu.pipeline_mode<synchronous>, transform_indices = @transform_1, window_bounds = array<i64: 9, 32>}, {pipeline_mode = #tpu.pipeline_mode<synchronous>, transform_indices = @transform_2, window_bounds = array<i64: 1, 32>}, {pipeline_mode = #tpu.pipeline_mode<synchronous>, transform_indices = @transform_3, window_bounds = array<i64: 1, 32>}, {transform_indices = @transform_4, window_bounds = array<i64: 392, 32>}]} {
    %c0 = arith.constant 0 : index
    %c0_0 = arith.constant 0 : index
    %0 = vector.load %arg2[%c0, %c0_0] : memref<9x32xf32, #tpu.memory_space<vmem>>, vector<9x32xf32>
    %c0_1 = arith.constant 0 : index
    %c0_2 = arith.constant 0 : index
    %1 = vector.load %arg3[%c0_1, %c0_2] : memref<1x32xf32, #tpu.memory_space<vmem>>, vector<1x32xf32>
    %c0_3 = arith.constant 0 : index
    %c0_4 = arith.constant 0 : index
    %2 = vector.load %arg4[%c0_3, %c0_4] : memref<1x32xf32, #tpu.memory_space<vmem>>, vector<1x32xf32>
    %c0_5 = arith.constant 0 : index
    %c0_6 = arith.constant 0 : index
    %c0_7 = arith.constant 0 : index
    %3 = vector.load %arg1[%c0_5, %c0_6, %c0_7] : memref<4x392x9xf32, #tpu.memory_space<vmem>>, vector<1x392x9xf32>
    %4 = vector.shape_cast %3 : vector<1x392x9xf32> to vector<392x9xf32>
    %cst = arith.constant dense<0.000000e+00> : vector<392x32xf32>
    %5 = tpu.matmul %4, %0, %cst {dimension_numbers = #tpu.dot_dimension_numbers<[1], [0], [0], [1], [0, 0, 1, 1], [], []>} : vector<392x9xf32>, vector<9x32xf32>, vector<392x32xf32> -> vector<392x32xf32>
    %6 = vector.broadcast %1 : vector<1x32xf32> to vector<392x32xf32>
    %7 = arith.mulf %5, %6 : vector<392x32xf32>
    %8 = vector.broadcast %2 : vector<1x32xf32> to vector<392x32xf32>
    %9 = arith.addf %7, %8 : vector<392x32xf32>
    %c1 = arith.constant 1 : index
    %c0_8 = arith.constant 0 : index
    %c0_9 = arith.constant 0 : index
    %10 = vector.load %arg1[%c1, %c0_8, %c0_9] : memref<4x392x9xf32, #tpu.memory_space<vmem>>, vector<1x392x9xf32>
    %11 = vector.shape_cast %10 : vector<1x392x9xf32> to vector<392x9xf32>
    %cst_10 = arith.constant dense<0.000000e+00> : vector<392x32xf32>
    %12 = tpu.matmul %11, %0, %cst_10 {dimension_numbers = #tpu.dot_dimension_numbers<[1], [0], [0], [1], [0, 0, 1, 1], [], []>} : vector<392x9xf32>, vector<9x32xf32>, vector<392x32xf32> -> vector<392x32xf32>
    %13 = vector.broadcast %1 : vector<1x32xf32> to vector<392x32xf32>
    %14 = arith.mulf %12, %13 : vector<392x32xf32>
    %15 = vector.broadcast %2 : vector<1x32xf32> to vector<392x32xf32>
    %16 = arith.addf %14, %15 : vector<392x32xf32>
    %17 = arith.maximumf %9, %16 : vector<392x32xf32>
    %c2 = arith.constant 2 : index
    %c0_11 = arith.constant 0 : index
    %c0_12 = arith.constant 0 : index
    %18 = vector.load %arg1[%c2, %c0_11, %c0_12] : memref<4x392x9xf32, #tpu.memory_space<vmem>>, vector<1x392x9xf32>
    %19 = vector.shape_cast %18 : vector<1x392x9xf32> to vector<392x9xf32>
    %cst_13 = arith.constant dense<0.000000e+00> : vector<392x32xf32>
    %20 = tpu.matmul %19, %0, %cst_13 {dimension_numbers = #tpu.dot_dimension_numbers<[1], [0], [0], [1], [0, 0, 1, 1], [], []>} : vector<392x9xf32>, vector<9x32xf32>, vector<392x32xf32> -> vector<392x32xf32>
    %21 = vector.broadcast %1 : vector<1x32xf32> to vector<392x32xf32>
    %22 = arith.mulf %20, %21 : vector<392x32xf32>
    %23 = vector.broadcast %2 : vector<1x32xf32> to vector<392x32xf32>
    %24 = arith.addf %22, %23 : vector<392x32xf32>
    %25 = arith.maximumf %17, %24 : vector<392x32xf32>
    %c3 = arith.constant 3 : index
    %c0_14 = arith.constant 0 : index
    %c0_15 = arith.constant 0 : index
    %26 = vector.load %arg1[%c3, %c0_14, %c0_15] : memref<4x392x9xf32, #tpu.memory_space<vmem>>, vector<1x392x9xf32>
    %27 = vector.shape_cast %26 : vector<1x392x9xf32> to vector<392x9xf32>
    %cst_16 = arith.constant dense<0.000000e+00> : vector<392x32xf32>
    %28 = tpu.matmul %27, %0, %cst_16 {dimension_numbers = #tpu.dot_dimension_numbers<[1], [0], [0], [1], [0, 0, 1, 1], [], []>} : vector<392x9xf32>, vector<9x32xf32>, vector<392x32xf32> -> vector<392x32xf32>
    %29 = vector.broadcast %1 : vector<1x32xf32> to vector<392x32xf32>
    %30 = arith.mulf %28, %29 : vector<392x32xf32>
    %31 = vector.broadcast %2 : vector<1x32xf32> to vector<392x32xf32>
    %32 = arith.addf %30, %31 : vector<392x32xf32>
    %33 = arith.maximumf %25, %32 : vector<392x32xf32>
    %cst_17 = arith.constant 0.000000e+00 : f32
    %34 = vector.broadcast %cst_17 : f32 to vector<392x32xf32>
    %35 = arith.maximumf %33, %34 : vector<392x32xf32>
    %36 = arith.truncf %35 : vector<392x32xf32> to vector<392x32xbf16>
    %c0_18 = arith.constant 0 : index
    %c0_19 = arith.constant 0 : index
    %37 = vector.load %arg5[%c0_18, %c0_19] : memref<392x32xbf16, #tpu.memory_space<vmem>>, vector<392x32xbf16>
    tpu.vector_store %arg5[%c0_18, %c0_19], %36 {strides = array<i32>} : memref<392x32xbf16, #tpu.memory_space<vmem>>, vector<392x32xbf16>,
    return
  }
  func.func @transform_0(%arg0: i32) -> (i32, i32, i32) {
    %c0_i32 = arith.constant 0 : i32
    %c0_i32_0 = arith.constant 0 : i32
    %c0_i32_1 = arith.constant 0 : i32
    return %c0_i32, %arg0, %c0_i32_0 : i32, i32, i32
  }
  func.func @transform_1(%arg0: i32) -> (i32, i32) {
    %c0_i32 = arith.constant 0 : i32
    %c0_i32_0 = arith.constant 0 : i32
    %c0_i32_1 = arith.constant 0 : i32
    return %c0_i32, %c0_i32_0 : i32, i32
  }
  func.func @transform_2(%arg0: i32) -> (i32, i32) {
    %c0_i32 = arith.constant 0 : i32
    %c0_i32_0 = arith.constant 0 : i32
    %c0_i32_1 = arith.constant 0 : i32
    return %c0_i32, %c0_i32_0 : i32, i32
  }
  func.func @transform_3(%arg0: i32) -> (i32, i32) {
    %c0_i32 = arith.constant 0 : i32
    %c0_i32_0 = arith.constant 0 : i32
    %c0_i32_1 = arith.constant 0 : i32
    return %c0_i32, %c0_i32_0 : i32, i32
  }
  func.func @transform_4(%arg0: i32) -> (i32, i32) {
    %c0_i32 = arith.constant 0 : i32
    %c0_i32_0 = arith.constant 0 : i32
    return %arg0, %c0_i32 : i32, i32
  }
}

module attributes {stable_mosaic.version = 11 : i64} {
  func.func @_conv_bn_relu_pool_kernel(%arg0: i32, %arg1: memref<4x104x288xbf16, #tpu.memory_space<vmem>>, %arg2: memref<288x128xbf16, #tpu.memory_space<vmem>>, %arg3: memref<1x128xf32, #tpu.memory_space<vmem>>, %arg4: memref<1x128xf32, #tpu.memory_space<vmem>>, %arg5: memref<104x128xbf16, #tpu.memory_space<vmem>>) attributes {dimension_semantics = [#tpu.dimension_semantics<parallel>], iteration_bounds = array<i64: 1>, scalar_prefetch = 0 : i64, scratch_operands = 0 : i64, tpu.core_type = #tpu.core_type<tc>, window_params = [{transform_indices = @transform_0, window_bounds = array<i64: 4, 104, 288>}, {pipeline_mode = #tpu.pipeline_mode<synchronous>, transform_indices = @transform_1, window_bounds = array<i64: 288, 128>}, {pipeline_mode = #tpu.pipeline_mode<synchronous>, transform_indices = @transform_2, window_bounds = array<i64: 1, 128>}, {pipeline_mode = #tpu.pipeline_mode<synchronous>, transform_indices = @transform_3, window_bounds = array<i64: 1, 128>}, {transform_indices = @transform_4, window_bounds = array<i64: 104, 128>}]} {
    %c0 = arith.constant 0 : index
    %c0_0 = arith.constant 0 : index
    %0 = vector.load %arg2[%c0, %c0_0] : memref<288x128xbf16, #tpu.memory_space<vmem>>, vector<288x128xbf16>
    %c0_1 = arith.constant 0 : index
    %c0_2 = arith.constant 0 : index
    %1 = vector.load %arg3[%c0_1, %c0_2] : memref<1x128xf32, #tpu.memory_space<vmem>>, vector<1x128xf32>
    %c0_3 = arith.constant 0 : index
    %c0_4 = arith.constant 0 : index
    %2 = vector.load %arg4[%c0_3, %c0_4] : memref<1x128xf32, #tpu.memory_space<vmem>>, vector<1x128xf32>
    %c0_5 = arith.constant 0 : index
    %c0_6 = arith.constant 0 : index
    %c0_7 = arith.constant 0 : index
    %3 = vector.load %arg1[%c0_5, %c0_6, %c0_7] : memref<4x104x288xbf16, #tpu.memory_space<vmem>>, vector<1x104x288xbf16>
    %4 = vector.shape_cast %3 : vector<1x104x288xbf16> to vector<104x288xbf16>
    %cst = arith.constant dense<0.000000e+00> : vector<104x128xf32>
    %5 = tpu.matmul %4, %0, %cst {dimension_numbers = #tpu.dot_dimension_numbers<[1], [0], [0], [1], [0, 0, 1, 1], [], []>} : vector<104x288xbf16>, vector<288x128xbf16>, vector<104x128xf32> -> vector<104x128xf32>
    %6 = vector.broadcast %1 : vector<1x128xf32> to vector<104x128xf32>
    %7 = arith.mulf %5, %6 : vector<104x128xf32>
    %8 = vector.broadcast %2 : vector<1x128xf32> to vector<104x128xf32>
    %9 = arith.addf %7, %8 : vector<104x128xf32>
    %c1 = arith.constant 1 : index
    %c0_8 = arith.constant 0 : index
    %c0_9 = arith.constant 0 : index
    %10 = vector.load %arg1[%c1, %c0_8, %c0_9] : memref<4x104x288xbf16, #tpu.memory_space<vmem>>, vector<1x104x288xbf16>
    %11 = vector.shape_cast %10 : vector<1x104x288xbf16> to vector<104x288xbf16>
    %cst_10 = arith.constant dense<0.000000e+00> : vector<104x128xf32>
    %12 = tpu.matmul %11, %0, %cst_10 {dimension_numbers = #tpu.dot_dimension_numbers<[1], [0], [0], [1], [0, 0, 1, 1], [], []>} : vector<104x288xbf16>, vector<288x128xbf16>, vector<104x128xf32> -> vector<104x128xf32>
    %13 = vector.broadcast %1 : vector<1x128xf32> to vector<104x128xf32>
    %14 = arith.mulf %12, %13 : vector<104x128xf32>
    %15 = vector.broadcast %2 : vector<1x128xf32> to vector<104x128xf32>
    %16 = arith.addf %14, %15 : vector<104x128xf32>
    %17 = arith.maximumf %9, %16 : vector<104x128xf32>
    %c2 = arith.constant 2 : index
    %c0_11 = arith.constant 0 : index
    %c0_12 = arith.constant 0 : index
    %18 = vector.load %arg1[%c2, %c0_11, %c0_12] : memref<4x104x288xbf16, #tpu.memory_space<vmem>>, vector<1x104x288xbf16>
    %19 = vector.shape_cast %18 : vector<1x104x288xbf16> to vector<104x288xbf16>
    %cst_13 = arith.constant dense<0.000000e+00> : vector<104x128xf32>
    %20 = tpu.matmul %19, %0, %cst_13 {dimension_numbers = #tpu.dot_dimension_numbers<[1], [0], [0], [1], [0, 0, 1, 1], [], []>} : vector<104x288xbf16>, vector<288x128xbf16>, vector<104x128xf32> -> vector<104x128xf32>
    %21 = vector.broadcast %1 : vector<1x128xf32> to vector<104x128xf32>
    %22 = arith.mulf %20, %21 : vector<104x128xf32>
    %23 = vector.broadcast %2 : vector<1x128xf32> to vector<104x128xf32>
    %24 = arith.addf %22, %23 : vector<104x128xf32>
    %25 = arith.maximumf %17, %24 : vector<104x128xf32>
    %c3 = arith.constant 3 : index
    %c0_14 = arith.constant 0 : index
    %c0_15 = arith.constant 0 : index
    %26 = vector.load %arg1[%c3, %c0_14, %c0_15] : memref<4x104x288xbf16, #tpu.memory_space<vmem>>, vector<1x104x288xbf16>
    %27 = vector.shape_cast %26 : vector<1x104x288xbf16> to vector<104x288xbf16>
    %cst_16 = arith.constant dense<0.000000e+00> : vector<104x128xf32>
    %28 = tpu.matmul %27, %0, %cst_16 {dimension_numbers = #tpu.dot_dimension_numbers<[1], [0], [0], [1], [0, 0, 1, 1], [], []>} : vector<104x288xbf16>, vector<288x128xbf16>, vector<104x128xf32> -> vector<104x128xf32>
    %29 = vector.broadcast %1 : vector<1x128xf32> to vector<104x128xf32>
    %30 = arith.mulf %28, %29 : vector<104x128xf32>
    %31 = vector.broadcast %2 : vector<1x128xf32> to vector<104x128xf32>
    %32 = arith.addf %30, %31 : vector<104x128xf32>
    %33 = arith.maximumf %25, %32 : vector<104x128xf32>
    %cst_17 = arith.constant 0.000000e+00 : f32
    %34 = vector.broadcast %cst_17 : f32 to vector<104x128xf32>
    %35 = arith.maximumf %33, %34 : vector<104x128xf32>
    %36 = arith.truncf %35 : vector<104x128xf32> to vector<104x128xbf16>
    %c0_18 = arith.constant 0 : index
    %c0_19 = arith.constant 0 : index
    %37 = vector.load %arg5[%c0_18, %c0_19] : memref<104x128xbf16, #tpu.memory_space<vmem>>, vector<104x128xbf16>
    tpu.vector_store %arg5[%c0_18, %c0_19], %36 {strides = array<i32>} : memref<104x128xbf16, #tpu.memory_space<vmem>>, vector<104x128xbf16>,
    return
  }
  func.func @transform_0(%arg0: i32) -> (i32, i32, i32) {
    %c0_i32 = arith.constant 0 : i32
    %c0_i32_0 = arith.constant 0 : i32
    %c0_i32_1 = arith.constant 0 : i32
    return %c0_i32, %arg0, %c0_i32_0 : i32, i32, i32
  }
  func.func @transform_1(%arg0: i32) -> (i32, i32) {
    %c0_i32 = arith.constant 0 : i32
    %c0_i32_0 = arith.constant 0 : i32
    %c0_i32_1 = arith.constant 0 : i32
    return %c0_i32, %c0_i32_0 : i32, i32
  }
  func.func @transform_2(%arg0: i32) -> (i32, i32) {
    %c0_i32 = arith.constant 0 : i32
    %c0_i32_0 = arith.constant 0 : i32
    %c0_i32_1 = arith.constant 0 : i32
    return %c0_i32, %c0_i32_0 : i32, i32
  }
  func.func @transform_3(%arg0: i32) -> (i32, i32) {
    %c0_i32 = arith.constant 0 : i32
    %c0_i32_0 = arith.constant 0 : i32
    %c0_i32_1 = arith.constant 0 : i32
    return %c0_i32, %c0_i32_0 : i32, i32
  }
  func.func @transform_4(%arg0: i32) -> (i32, i32) {
    %c0_i32 = arith.constant 0 : i32
    %c0_i32_0 = arith.constant 0 : i32
    return %arg0, %c0_i32 : i32, i32
  }
}

module attributes {stable_mosaic.version = 11 : i64} {
  func.func @_fc_head_kernel(%arg0: i32, %arg1: memref<8x6272xbf16, #tpu.memory_space<vmem>>, %arg2: memref<6272x256xbf16, #tpu.memory_space<vmem>>, %arg3: memref<1x256xf32, #tpu.memory_space<vmem>>, %arg4: memref<256x128xf32, #tpu.memory_space<vmem>>, %arg5: memref<1x128xf32, #tpu.memory_space<vmem>>, %arg6: memref<128x10xf32, #tpu.memory_space<vmem>>, %arg7: memref<1x10xf32, #tpu.memory_space<vmem>>, %arg8: memref<8x10xf32, #tpu.memory_space<vmem>>) attributes {dimension_semantics = [#tpu.dimension_semantics<parallel>], iteration_bounds = array<i64: 1>, scalar_prefetch = 0 : i64, scratch_operands = 0 : i64, tpu.core_type = #tpu.core_type<tc>, window_params = [{transform_indices = @transform_0, window_bounds = array<i64: 8, 6272>}, {pipeline_mode = #tpu.pipeline_mode<synchronous>, transform_indices = @transform_1, window_bounds = array<i64: 6272, 256>}, {pipeline_mode = #tpu.pipeline_mode<synchronous>, transform_indices = @transform_2, window_bounds = array<i64: 1, 256>}, {pipeline_mode = #tpu.pipeline_mode<synchronous>, transform_indices = @transform_3, window_bounds = array<i64: 256, 128>}, {pipeline_mode = #tpu.pipeline_mode<synchronous>, transform_indices = @transform_4, window_bounds = array<i64: 1, 128>}, {pipeline_mode = #tpu.pipeline_mode<synchronous>, transform_indices = @transform_5, window_bounds = array<i64: 128, 10>}, {pipeline_mode = #tpu.pipeline_mode<synchronous>, transform_indices = @transform_6, window_bounds = array<i64: 1, 10>}, {transform_indices = @transform_7, window_bounds = array<i64: 8, 10>}]} {
    %c0 = arith.constant 0 : index
    %c0_0 = arith.constant 0 : index
    %0 = vector.load %arg1[%c0, %c0_0] : memref<8x6272xbf16, #tpu.memory_space<vmem>>, vector<8x6272xbf16>
    %c0_1 = arith.constant 0 : index
    %c0_2 = arith.constant 0 : index
    %1 = vector.load %arg2[%c0_1, %c0_2] : memref<6272x256xbf16, #tpu.memory_space<vmem>>, vector<6272x256xbf16>
    %cst = arith.constant dense<0.000000e+00> : vector<8x256xf32>
    %2 = tpu.matmul %0, %1, %cst {dimension_numbers = #tpu.dot_dimension_numbers<[1], [0], [0], [1], [0, 0, 1, 1], [], []>} : vector<8x6272xbf16>, vector<6272x256xbf16>, vector<8x256xf32> -> vector<8x256xf32>
    %c0_3 = arith.constant 0 : index
    %c0_4 = arith.constant 0 : index
    %3 = vector.load %arg3[%c0_3, %c0_4] : memref<1x256xf32, #tpu.memory_space<vmem>>, vector<1x256xf32>
    %4 = vector.broadcast %3 : vector<1x256xf32> to vector<8x256xf32>
    %5 = arith.addf %2, %4 : vector<8x256xf32>
    %cst_5 = arith.constant 0.000000e+00 : f32
    %6 = vector.broadcast %cst_5 : f32 to vector<8x256xf32>
    %7 = arith.maximumf %5, %6 : vector<8x256xf32>
    %c0_6 = arith.constant 0 : index
    %c0_7 = arith.constant 0 : index
    %8 = vector.load %arg4[%c0_6, %c0_7] : memref<256x128xf32, #tpu.memory_space<vmem>>, vector<256x128xf32>
    %cst_8 = arith.constant dense<0.000000e+00> : vector<8x128xf32>
    %9 = tpu.matmul %7, %8, %cst_8 {dimension_numbers = #tpu.dot_dimension_numbers<[1], [0], [0], [1], [0, 0, 1, 1], [], []>} : vector<8x256xf32>, vector<256x128xf32>, vector<8x128xf32> -> vector<8x128xf32>
    %c0_9 = arith.constant 0 : index
    %c0_10 = arith.constant 0 : index
    %10 = vector.load %arg5[%c0_9, %c0_10] : memref<1x128xf32, #tpu.memory_space<vmem>>, vector<1x128xf32>
    %11 = vector.broadcast %10 : vector<1x128xf32> to vector<8x128xf32>
    %12 = arith.addf %9, %11 : vector<8x128xf32>
    %cst_11 = arith.constant 0.000000e+00 : f32
    %13 = vector.broadcast %cst_11 : f32 to vector<8x128xf32>
    %14 = arith.maximumf %12, %13 : vector<8x128xf32>
    %c0_12 = arith.constant 0 : index
    %c0_13 = arith.constant 0 : index
    %15 = vector.load %arg6[%c0_12, %c0_13] : memref<128x10xf32, #tpu.memory_space<vmem>>, vector<128x10xf32>
    %cst_14 = arith.constant dense<0.000000e+00> : vector<8x10xf32>
    %16 = tpu.matmul %14, %15, %cst_14 {dimension_numbers = #tpu.dot_dimension_numbers<[1], [0], [0], [1], [0, 0, 1, 1], [], []>} : vector<8x128xf32>, vector<128x10xf32>, vector<8x10xf32> -> vector<8x10xf32>
    %c0_15 = arith.constant 0 : index
    %c0_16 = arith.constant 0 : index
    %17 = vector.load %arg7[%c0_15, %c0_16] : memref<1x10xf32, #tpu.memory_space<vmem>>, vector<1x10xf32>
    %18 = vector.broadcast %17 : vector<1x10xf32> to vector<8x10xf32>
    %19 = arith.addf %16, %18 : vector<8x10xf32>
    %c0_17 = arith.constant 0 : index
    %c0_18 = arith.constant 0 : index
    %20 = vector.load %arg8[%c0_17, %c0_18] : memref<8x10xf32, #tpu.memory_space<vmem>>, vector<8x10xf32>
    tpu.vector_store %arg8[%c0_17, %c0_18], %19 {strides = array<i32>} : memref<8x10xf32, #tpu.memory_space<vmem>>, vector<8x10xf32>,
    return
  }
  func.func @transform_0(%arg0: i32) -> (i32, i32) {
    %c0_i32 = arith.constant 0 : i32
    %c0_i32_0 = arith.constant 0 : i32
    return %arg0, %c0_i32 : i32, i32
  }
  func.func @transform_1(%arg0: i32) -> (i32, i32) {
    %c0_i32 = arith.constant 0 : i32
    %c0_i32_0 = arith.constant 0 : i32
    %c0_i32_1 = arith.constant 0 : i32
    return %c0_i32, %c0_i32_0 : i32, i32
  }
  func.func @transform_2(%arg0: i32) -> (i32, i32) {
    %c0_i32 = arith.constant 0 : i32
    %c0_i32_0 = arith.constant 0 : i32
    %c0_i32_1 = arith.constant 0 : i32
    return %c0_i32, %c0_i32_0 : i32, i32
  }
  func.func @transform_3(%arg0: i32) -> (i32, i32) {
    %c0_i32 = arith.constant 0 : i32
    %c0_i32_0 = arith.constant 0 : i32
    %c0_i32_1 = arith.constant 0 : i32
    return %c0_i32, %c0_i32_0 : i32, i32
  }
  func.func @transform_4(%arg0: i32) -> (i32, i32) {
    %c0_i32 = arith.constant 0 : i32
    %c0_i32_0 = arith.constant 0 : i32
    %c0_i32_1 = arith.constant 0 : i32
    return %c0_i32, %c0_i32_0 : i32, i32
  }
  func.func @transform_5(%arg0: i32) -> (i32, i32) {
    %c0_i32 = arith.constant 0 : i32
    %c0_i32_0 = arith.constant 0 : i32
    %c0_i32_1 = arith.constant 0 : i32
    return %c0_i32, %c0_i32_0 : i32, i32
  }
  func.func @transform_6(%arg0: i32) -> (i32, i32) {
    %c0_i32 = arith.constant 0 : i32
    %c0_i32_0 = arith.constant 0 : i32
    %c0_i32_1 = arith.constant 0 : i32
    return %c0_i32, %c0_i32_0 : i32, i32
  }
  func.func @transform_7(%arg0: i32) -> (i32, i32) {
    %c0_i32 = arith.constant 0 : i32
    %c0_i32_0 = arith.constant 0 : i32
    return %arg0, %c0_i32 : i32, i32
  }
}

</mosaic_0001>

<llo_original>
// kernel: cnn_forward.3
$region0: #{cnn_forward.3}
  #allocation0 [shape = 'u32[]', space=smem, size = 0x4, offset = 0x4, fixed_abs, tag = 'smem constant byte address 0x4 - core index']
  #allocation1 [shape = 'u32[72,128]{1,0:T(1,128)}', space=vmem, size = 0x9000, scoped, tag = 'internal scratch']
  %s0 = inlined_call_operand.vmem [shape: f32[4,392,9], index: 0, kind: input, shape index: {}]
  %s1 = inlined_call_operand.vmem [shape: f32[9,32], index: 1, kind: input, shape index: {}]
  %s2 = inlined_call_operand.vmem [shape: f32[1,32], index: 2, kind: input, shape index: {}]
  %s3 = inlined_call_operand.vmem [shape: f32[1,32], index: 3, kind: input, shape index: {}]
  %s4 = inlined_call_operand.vmem [shape: bf16[392,32], index: 4, kind: output, shape index: {}]
  %s5 = sld [smem:[#allocation0]]
  $region26: #{cnn_forward.3} parent=0
    _
  %s7 = ssub.s32 1, %s5
  %s8 = scalar_select 0, %s7, %s5
  // Predicated region
  $region2: #{cnn_forward.3} parent=0 // pred_check
    _
  $region3: #{cnn_forward.3} parent=0 // pred_check_branch
    %10 = sbr.rel (0) target = $region5
  $region4: #{cnn_forward.3} parent=0 // pred_region
    _
  $region5: #{cnn_forward.3} parent=0 // pred_fallthru
    _
  // Predicated region
  $region6: #{cnn_forward.3} parent=0 // pred_check
    _
  $region7: #{cnn_forward.3} parent=0 // pred_check_branch
    %12 = sbr.rel (0) target = $region9
  $region8: #{cnn_forward.3} parent=0 // pred_region
    _
  $region9: #{cnn_forward.3} parent=0 // pred_fallthru
    _
  // Predicated region
  $region10: #{cnn_forward.3} parent=0 // pred_check
    _
  $region11: #{cnn_forward.3} parent=0 // pred_check_branch
    %14 = sbr.rel (0) target = $region13
  $region12: #{cnn_forward.3} parent=0 // pred_region
    _
  $region13: #{cnn_forward.3} parent=0 // pred_fallthru
    _
  // Predicated region
  $region14: #{cnn_forward.3} parent=0 // pred_check
    _
  $region15: #{cnn_forward.3} parent=0 // pred_check_branch
    %16 = sbr.rel (0) target = $region17
  $region16: #{cnn_forward.3} parent=0 // pred_region
    _
  $region17: #{cnn_forward.3} parent=0 // pred_fallthru
    _
  %v17 = vld [vmem:[%s1] sm:$0xff]
  %v18 = vld [vmem:[%s1 + $0x8] sm:$0x1]
  %v19 = vld [vmem:[%s2] sm:$0x1]
  %v20 = vld [vmem:[%s3] sm:$0x1]
  %v21 = vld [vmem:[%s0] sm:$0xff]
  %v22 = vld [vmem:[%s0 + $0x8] sm:$0xff]
  %v23 = vld [vmem:[%s0 + $0x10] sm:$0xff]
  %v24 = vld [vmem:[%s0 + $0x18] sm:$0xff]
  %v25 = vld [vmem:[%s0 + $0x20] sm:$0xff]
  %v26 = vld [vmem:[%s0 + $0x28] sm:$0xff]
  %v27 = vld [vmem:[%s0 + $0x30] sm:$0xff]
  %v28 = vld [vmem:[%s0 + $0x38] sm:$0xff]
  %v29 = vld [vmem:[%s0 + $0x40] sm:$0xff]
  %v30 = vld [vmem:[%s0 + $0x48] sm:$0xff]
  %v31 = vld [vmem:[%s0 + $0x50] sm:$0xff]
  %v32 = vld [vmem:[%s0 + $0x58] sm:$0xff]
  %v33 = vld [vmem:[%s0 + $0x60] sm:$0xff]
  %v34 = vld [vmem:[%s0 + $0x68] sm:$0xff]
  %v35 = vld [vmem:[%s0 + $0x70] sm:$0xff]
  %v36 = vld [vmem:[%s0 + $0x78] sm:$0xff]
  %v37 = vld [vmem:[%s0 + $0x80] sm:$0xff]
  %v38 = vld [vmem:[%s0 + $0x88] sm:$0xff]
  %v39 = vld [vmem:[%s0 + $0x90] sm:$0xff]
  %v40 = vld [vmem:[%s0 + $0x98] sm:$0xff]
  %v41 = vld [vmem:[%s0 + $0xa0] sm:$0xff]
  %v42 = vld [vmem:[%s0 + $0xa8] sm:$0xff]
  %v43 = vld [vmem:[%s0 + $0xb0] sm:$0xff]
  %v44 = vld [vmem:[%s0 + $0xb8] sm:$0xff]
  %v45 = vld [vmem:[%s0 + $0xc0] sm:$0xff]
  %v46 = vld [vmem:[%s0 + $0xc8] sm:$0xff]
  %v47 = vld [vmem:[%s0 + $0xd0] sm:$0xff]
  %v48 = vld [vmem:[%s0 + $0xd8] sm:$0xff]
  %v49 = vld [vmem:[%s0 + $0xe0] sm:$0xff]
  %v50 = vld [vmem:[%s0 + $0xe8] sm:$0xff]
  %v51 = vld [vmem:[%s0 + $0xf0] sm:$0xff]
  %v52 = vld [vmem:[%s0 + $0xf8] sm:$0xff]
  %v53 = vld [vmem:[%s0 + $0x100] sm:$0xff]
  %v54 = vld [vmem:[%s0 + $0x108] sm:$0xff]
  %v55 = vld [vmem:[%s0 + $0x110] sm:$0xff]
  %v56 = vld [vmem:[%s0 + $0x118] sm:$0xff]
  %v57 = vld [vmem:[%s0 + $0x120] sm:$0xff]
  %v58 = vld [vmem:[%s0 + $0x128] sm:$0xff]
  %v59 = vld [vmem:[%s0 + $0x130] sm:$0xff]
  %v60 = vld [vmem:[%s0 + $0x138] sm:$0xff]
  %v61 = vld [vmem:[%s0 + $0x140] sm:$0xff]
  %v62 = vld [vmem:[%s0 + $0x148] sm:$0xff]
  %v63 = vld [vmem:[%s0 + $0x150] sm:$0xff]
  %v64 = vld [vmem:[%s0 + $0x158] sm:$0xff]
  %v65 = vld [vmem:[%s0 + $0x160] sm:$0xff]
  %v66 = vld [vmem:[%s0 + $0x168] sm:$0xff]
  %v67 = vld [vmem:[%s0 + $0x170] sm:$0xff]
  %v68 = vld [vmem:[%s0 + $0x178] sm:$0xff]
  %v69 = vld [vmem:[%s0 + $0x180] sm:$0xff]
  %vm70 = vcmask 72704
  %v72 = vsel %vm70, %v21, 0
  %v75 = vsel %vm70, %v22, 0
  %v78 = vsel %vm70, %v23, 0
  %v81 = vsel %vm70, %v24, 0
  %v84 = vsel %vm70, %v25, 0
  %v87 = vsel %vm70, %v26, 0
  %v90 = vsel %vm70, %v27, 0
  %v93 = vsel %vm70, %v28, 0
  %v96 = vsel %vm70, %v29, 0
  %v99 = vsel %vm70, %v30, 0
  %v102 = vsel %vm70, %v31, 0
  %v105 = vsel %vm70, %v32, 0
  %v108 = vsel %vm70, %v33, 0
  %v111 = vsel %vm70, %v34, 0
  %v114 = vsel %vm70, %v35, 0
  %v117 = vsel %vm70, %v36, 0
  %v120 = vsel %vm70, %v37, 0
  %v123 = vsel %vm70, %v38, 0
  %v126 = vsel %vm70, %v39, 0
  %v129 = vsel %vm70, %v40, 0
  %v132 = vsel %vm70, %v41, 0
  %v135 = vsel %vm70, %v42, 0
  %v138 = vsel %vm70, %v43, 0
  %v141 = vsel %vm70, %v44, 0
  %v144 = vsel %vm70, %v45, 0
  %v147 = vsel %vm70, %v46, 0
  %v150 = vsel %vm70, %v47, 0
  %v153 = vsel %vm70, %v48, 0
  %v156 = vsel %vm70, %v49, 0
  %v159 = vsel %vm70, %v50, 0
  %v162 = vsel %vm70, %v51, 0
  %v165 = vsel %vm70, %v52, 0
  %v168 = vsel %vm70, %v53, 0
  %v171 = vsel %vm70, %v54, 0
  %v174 = vsel %vm70, %v55, 0
  %v177 = vsel %vm70, %v56, 0
  %v180 = vsel %vm70, %v57, 0
  %v183 = vsel %vm70, %v58, 0
  %v186 = vsel %vm70, %v59, 0
  %v189 = vsel %vm70, %v60, 0
  %v192 = vsel %vm70, %v61, 0
  %v195 = vsel %vm70, %v62, 0
  %v198 = vsel %vm70, %v63, 0
  %v201 = vsel %vm70, %v64, 0
  %v204 = vsel %vm70, %v65, 0
  %v207 = vsel %vm70, %v66, 0
  %v210 = vsel %vm70, %v67, 0
  %v213 = vsel %vm70, %v68, 0
  %v216 = vsel %vm70, %v69, 0
  %vm218 = vcmask 1040384
  %v220 = vsel %vm218, %v18, 0
  %222 = vmatpush.msra.mxu0 0.0
  %223 = vmatpush.msra.mxu0 0.0
  %224 = vmatpush.msra.mxu0 0.0
  %225 = vmatpush.msra.mxu0 0.0
  %226 = vmatpush.msra.mxu0 0.0
  %227 = vmatpush.msra.mxu0 0.0
  %228 = vmatpush.msra.mxu0 0.0
  %229 = vmatpush.msra.mxu0 0.0
  %230 = vmatpush.msra.mxu0 0.0
  %231 = vmatpush.msra.mxu0 0.0
  %232 = vmatpush.msra.mxu0 0.0
  %233 = vmatpush.msra.mxu0 0.0
  %234 = vmatpush.msra.mxu0 0.0
  %235 = vmatpush.msra.mxu0 0.0
  %236 = vmatpush.msra.mxu0 %v220
  %237 = vmatpush.msra.mxu0 %v17
  %238 = vmatmul.f32.gmra.mxu0 %v72
  %v239 = vpop.f32.mrf.mxu0
  %v240 = vadd.f32 0.0, %v239
  %241 = vmatmul.f32.gmra.mxu0 %v75
  %v242 = vpop.f32.mrf.mxu0
  %v243 = vadd.f32 0.0, %v242
  %244 = vmatmul.f32.gmra.mxu0 %v78
  %v245 = vpop.f32.mrf.mxu0
  %v246 = vadd.f32 0.0, %v245
  %247 = vmatmul.f32.gmra.mxu0 %v81
  %v248 = vpop.f32.mrf.mxu0
  %v249 = vadd.f32 0.0, %v248
  %250 = vmatmul.f32.gmra.mxu0 %v84
  %v251 = vpop.f32.mrf.mxu0
  %v252 = vadd.f32 0.0, %v251
  %253 = vmatmul.f32.gmra.mxu0 %v87
  %v254 = vpop.f32.mrf.mxu0
  %v255 = vadd.f32 0.0, %v254
  %256 = vmatmul.f32.gmra.mxu0 %v90
  %v257 = vpop.f32.mrf.mxu0
  %v258 = vadd.f32 0.0, %v257
  %259 = vmatmul.f32.gmra.mxu0 %v93
  %v260 = vpop.f32.mrf.mxu0
  %v261 = vadd.f32 0.0, %v260
  %262 = vmatmul.f32.gmra.mxu0 %v96
  %v263 = vpop.f32.mrf.mxu0
  %v264 = vadd.f32 0.0, %v263
  %265 = vmatmul.f32.gmra.mxu0 %v99
  %v266 = vpop.f32.mrf.mxu0
  %v267 = vadd.f32 0.0, %v266
  %268 = vmatmul.f32.gmra.mxu0 %v102
  %v269 = vpop.f32.mrf.mxu0
  %v270 = vadd.f32 0.0, %v269
  %271 = vmatmul.f32.gmra.mxu0 %v105
  %v272 = vpop.f32.mrf.mxu0
  %v273 = vadd.f32 0.0, %v272
  %274 = vmatmul.f32.gmra.mxu0 %v108
  %v275 = vpop.f32.mrf.mxu0
  %v276 = vadd.f32 0.0, %v275
  %277 = vmatmul.f32.gmra.mxu0 %v111
  %v278 = vpop.f32.mrf.mxu0
  %v279 = vadd.f32 0.0, %v278
  %280 = vmatmul.f32.gmra.mxu0 %v114
  %v281 = vpop.f32.mrf.mxu0
  %v282 = vadd.f32 0.0, %v281
  %283 = vmatmul.f32.gmra.mxu0 %v117
  %v284 = vpop.f32.mrf.mxu0
  %v285 = vadd.f32 0.0, %v284
  %286 = vmatmul.f32.gmra.mxu0 %v120
  %v287 = vpop.f32.mrf.mxu0
  %v288 = vadd.f32 0.0, %v287
  %289 = vmatmul.f32.gmra.mxu0 %v123
  %v290 = vpop.f32.mrf.mxu0
  %v291 = vadd.f32 0.0, %v290
  %292 = vmatmul.f32.gmra.mxu0 %v126
  %v293 = vpop.f32.mrf.mxu0
  %v294 = vadd.f32 0.0, %v293
  %295 = vmatmul.f32.gmra.mxu0 %v129
  %v296 = vpop.f32.mrf.mxu0
  %v297 = vadd.f32 0.0, %v296
  %298 = vmatmul.f32.gmra.mxu0 %v132
  %v299 = vpop.f32.mrf.mxu0
  %v300 = vadd.f32 0.0, %v299
  %301 = vmatmul.f32.gmra.mxu0 %v135
  %v302 = vpop.f32.mrf.mxu0
  %v303 = vadd.f32 0.0, %v302
  %304 = vmatmul.f32.gmra.mxu0 %v138
  %v305 = vpop.f32.mrf.mxu0
  %v306 = vadd.f32 0.0, %v305
  %307 = vmatmul.f32.gmra.mxu0 %v141
  %v308 = vpop.f32.mrf.mxu0
  %v309 = vadd.f32 0.0, %v308
  %310 = vmatmul.f32.gmra.mxu0 %v144
  %v311 = vpop.f32.mrf.mxu0
  %v312 = vadd.f32 0.0, %v311
  %313 = vmatmul.f32.gmra.mxu0 %v147
  %v314 = vpop.f32.mrf.mxu0
  %v315 = vadd.f32 0.0, %v314
  %316 = vmatmul.f32.gmra.mxu0 %v150
  %v317 = vpop.f32.mrf.mxu0
  %v318 = vadd.f32 0.0, %v317
  %319 = vmatmul.f32.gmra.mxu0 %v153
  %v320 = vpop.f32.mrf.mxu0
  %v321 = vadd.f32 0.0, %v320
  %322 = vmatmul.f32.gmra.mxu0 %v156
  %v323 = vpop.f32.mrf.mxu0
  %v324 = vadd.f32 0.0, %v323
  %325 = vmatmul.f32.gmra.mxu0 %v159
  %v326 = vpop.f32.mrf.mxu0
  %v327 = vadd.f32 0.0, %v326
  %328 = vmatmul.f32.gmra.mxu0 %v162
  %v329 = vpop.f32.mrf.mxu0
  %v330 = vadd.f32 0.0, %v329
  %331 = vmatmul.f32.gmra.mxu0 %v165
  %v332 = vpop.f32.mrf.mxu0
  %v333 = vadd.f32 0.0, %v332
  %334 = vmatmul.f32.gmra.mxu0 %v168
  %v335 = vpop.f32.mrf.mxu0
  %v336 = vadd.f32 0.0, %v335
  %337 = vmatmul.f32.gmra.mxu0 %v171
  %v338 = vpop.f32.mrf.mxu0
  %v339 = vadd.f32 0.0, %v338
  %340 = vmatmul.f32.gmra.mxu0 %v174
  %v341 = vpop.f32.mrf.mxu0
  %v342 = vadd.f32 0.0, %v341
  %343 = vmatmul.f32.gmra.mxu0 %v177
  %v344 = vpop.f32.mrf.mxu0
  %v345 = vadd.f32 0.0, %v344
  %346 = vmatmul.f32.gmra.mxu0 %v180
  %v347 = vpop.f32.mrf.mxu0
  %v348 = vadd.f32 0.0, %v347
  %349 = vmatmul.f32.gmra.mxu0 %v183
  %v350 = vpop.f32.mrf.mxu0
  %v351 = vadd.f32 0.0, %v350
  %352 = vmatmul.f32.gmra.mxu0 %v186
  %v353 = vpop.f32.mrf.mxu0
  %v354 = vadd.f32 0.0, %v353
  %355 = vmatmul.f32.gmra.mxu0 %v189
  %v356 = vpop.f32.mrf.mxu0
  %v357 = vadd.f32 0.0, %v356
  %358 = vmatmul.f32.gmra.mxu0 %v192
  %v359 = vpop.f32.mrf.mxu0
  %v360 = vadd.f32 0.0, %v359
  %361 = vmatmul.f32.gmra.mxu0 %v195
  %v362 = vpop.f32.mrf.mxu0
  %v363 = vadd.f32 0.0, %v362
  %364 = vmatmul.f32.gmra.mxu0 %v198
  %v365 = vpop.f32.mrf.mxu0
  %v366 = vadd.f32 0.0, %v365
  %367 = vmatmul.f32.gmra.mxu0 %v201
  %v368 = vpop.f32.mrf.mxu0
  %v369 = vadd.f32 0.0, %v368
  %370 = vmatmul.f32.gmra.mxu0 %v204
  %v371 = vpop.f32.mrf.mxu0
  %v372 = vadd.f32 0.0, %v371
  %373 = vmatmul.f32.gmra.mxu0 %v207
  %v374 = vpop.f32.mrf.mxu0
  %v375 = vadd.f32 0.0, %v374
  %376 = vmatmul.f32.gmra.mxu0 %v210
  %v377 = vpop.f32.mrf.mxu0
  %v378 = vadd.f32 0.0, %v377
  %379 = vmatmul.f32.gmra.mxu0 %v213
  %v380 = vpop.f32.mrf.mxu0
  %v381 = vadd.f32 0.0, %v380
  %382 = vmatmul.f32.gmra.mxu0 %v216
  %v383 = vpop.f32.mrf.mxu0
  %v384 = vadd.f32 0.0, %v383
  %385 = vdwg.mxu0
  %v387 = vperm.slane %v19, 0
  %v389 = vmul.f32 %v240, %v387
  %v390 = vmul.f32 %v243, %v387
  %v391 = vmul.f32 %v246, %v387
  %v392 = vmul.f32 %v249, %v387
  %v393 = vmul.f32 %v252, %v387
  %v394 = vmul.f32 %v255, %v387
  %v395 = vmul.f32 %v258, %v387
  %v396 = vmul.f32 %v261, %v387
  %v397 = vmul.f32 %v264, %v387
  %v398 = vmul.f32 %v267, %v387
  %v399 = vmul.f32 %v270, %v387
  %v400 = vmul.f32 %v273, %v387
  %v401 = vmul.f32 %v276, %v387
  %v402 = vmul.f32 %v279, %v387
  %v403 = vmul.f32 %v282, %v387
  %v404 = vmul.f32 %v285, %v387
  %v405 = vmul.f32 %v288, %v387
  %v406 = vmul.f32 %v291, %v387
  %v407 = vmul.f32 %v294, %v387
  %v408 = vmul.f32 %v297, %v387
  %v409 = vmul.f32 %v300, %v387
  %v410 = vmul.f32 %v303, %v387
  %v411 = vmul.f32 %v306, %v387
  %v412 = vmul.f32 %v309, %v387
  %v413 = vmul.f32 %v312, %v387
  %v414 = vmul.f32 %v315, %v387
  %v415 = vmul.f32 %v318, %v387
  %v416 = vmul.f32 %v321, %v387
  %v417 = vmul.f32 %v324, %v387
  %v418 = vmul.f32 %v327, %v387
  %v419 = vmul.f32 %v330, %v387
  %v420 = vmul.f32 %v333, %v387
  %v421 = vmul.f32 %v336, %v387
  %v422 = vmul.f32 %v339, %v387
  %v423 = vmul.f32 %v342, %v387
  %v424 = vmul.f32 %v345, %v387
  %v425 = vmul.f32 %v348, %v387
  %v426 = vmul.f32 %v351, %v387
  %v427 = vmul.f32 %v354, %v387
  %v428 = vmul.f32 %v357, %v387
  %v429 = vmul.f32 %v360, %v387
  %v430 = vmul.f32 %v363, %v387
  %v431 = vmul.f32 %v366, %v387
  %v432 = vmul.f32 %v369, %v387
  %v433 = vmul.f32 %v372, %v387
  %v434 = vmul.f32 %v375, %v387
  %v435 = vmul.f32 %v378, %v387
  %v436 = vmul.f32 %v381, %v387
  %v437 = vmul.f32 %v384, %v387
  %v439 = vperm.slane %v20, 0
  %v441 = vadd.f32 %v389, %v439
  %v442 = vadd.f32 %v390, %v439
  %v443 = vadd.f32 %v391, %v439
  %v444 = vadd.f32 %v392, %v439
  %v445 = vadd.f32 %v393, %v439
  %v446 = vadd.f32 %v394, %v439
  %v447 = vadd.f32 %v395, %v439
  %v448 = vadd.f32 %v396, %v439
  %v449 = vadd.f32 %v397, %v439
  %v450 = vadd.f32 %v398, %v439
  %v451 = vadd.f32 %v399, %v439
  %v452 = vadd.f32 %v400, %v439
  %v453 = vadd.f32 %v401, %v439
  %v454 = vadd.f32 %v402, %v439
  %v455 = vadd.f32 %v403, %v439
  %v456 = vadd.f32 %v404, %v439
  %v457 = vadd.f32 %v405, %v439
  %v458 = vadd.f32 %v406, %v439
  %v459 = vadd.f32 %v407, %v439
  %v460 = vadd.f32 %v408, %v439
  %v461 = vadd.f32 %v409, %v439
  %v462 = vadd.f32 %v410, %v439
  %v463 = vadd.f32 %v411, %v439
  %v464 = vadd.f32 %v412, %v439
  %v465 = vadd.f32 %v413, %v439
  %v466 = vadd.f32 %v414, %v439
  %v467 = vadd.f32 %v415, %v439
  %v468 = vadd.f32 %v416, %v439
  %v469 = vadd.f32 %v417, %v439
  %v470 = vadd.f32 %v418, %v439
  %v471 = vadd.f32 %v419, %v439
  %v472 = vadd.f32 %v420, %v439
  %v473 = vadd.f32 %v421, %v439
  %v474 = vadd.f32 %v422, %v439
  %v475 = vadd.f32 %v423, %v439
  %v476 = vadd.f32 %v424, %v439
  %v477 = vadd.f32 %v425, %v439
  %v478 = vadd.f32 %v426, %v439
  %v479 = vadd.f32 %v427, %v439
  %v480 = vadd.f32 %v428, %v439
  %v481 = vadd.f32 %v429, %v439
  %v482 = vadd.f32 %v430, %v439
  %v483 = vadd.f32 %v431, %v439
  %v484 = vadd.f32 %v432, %v439
  %v485 = vadd.f32 %v433, %v439
  %v486 = vadd.f32 %v434, %v439
  %v487 = vadd.f32 %v435, %v439
  %v488 = vadd.f32 %v436, %v439
  %v489 = vadd.f32 %v437, %v439
  %s490 = scalar_lea.vmem %s0, 392
  %v491 = vld [vmem:[%s490] sm:$0xff]
  %v492 = vld [vmem:[%s490 + $0x8] sm:$0xff]
  %v493 = vld [vmem:[%s490 + $0x10] sm:$0xff]
  %v494 = vld [vmem:[%s490 + $0x18] sm:$0xff]
  %v495 = vld [vmem:[%s490 + $0x20] sm:$0xff]
  %v496 = vld [vmem:[%s490 + $0x28] sm:$0xff]
  %v497 = vld [vmem:[%s490 + $0x30] sm:$0xff]
  %v498 = vld [vmem:[%s490 + $0x38] sm:$0xff]
  %v499 = vld [vmem:[%s490 + $0x40] sm:$0xff]
  %v500 = vld [vmem:[%s490 + $0x48] sm:$0xff]
  %v501 = vld [vmem:[%s490 + $0x50] sm:$0xff]
  %v502 = vld [vmem:[%s490 + $0x58] sm:$0xff]
  %v503 = vld [vmem:[%s490 + $0x60] sm:$0xff]
  %v504 = vld [vmem:[%s490 + $0x68] sm:$0xff]
  %v505 = vld [vmem:[%s490 + $0x70] sm:$0xff]
  %v506 = vld [vmem:[%s490 + $0x78] sm:$0xff]
  %v507 = vld [vmem:[%s490 + $0x80] sm:$0xff]
  %v508 = vld [vmem:[%s490 + $0x88] sm:$0xff]
  %v509 = vld [vmem:[%s490 + $0x90] sm:$0xff]
  %v510 = vld [vmem:[%s490 + $0x98] sm:$0xff]
  %v511 = vld [vmem:[%s490 + $0xa0] sm:$0xff]
  %v512 = vld [vmem:[%s490 + $0xa8] sm:$0xff]
  %v513 = vld [vmem:[%s490 + $0xb0] sm:$0xff]
  %v514 = vld [vmem:[%s490 + $0xb8] sm:$0xff]
  %v515 = vld [vmem:[%s490 + $0xc0] sm:$0xff]
  %v516 = vld [vmem:[%s490 + $0xc8] sm:$0xff]
  %v517 = vld [vmem:[%s490 + $0xd0] sm:$0xff]
  %v518 = vld [vmem:[%s490 + $0xd8] sm:$0xff]
  %v519 = vld [vmem:[%s490 + $0xe0] sm:$0xff]
  %v520 = vld [vmem:[%s490 + $0xe8] sm:$0xff]
  %v521 = vld [vmem:[%s490 + $0xf0] sm:$0xff]
  %v522 = vld [vmem:[%s490 + $0xf8] sm:$0xff]
  %v523 = vld [vmem:[%s490 + $0x100] sm:$0xff]
  %v524 = vld [vmem:[%s490 + $0x108] sm:$0xff]
  %v525 = vld [vmem:[%s490 + $0x110] sm:$0xff]
  %v526 = vld [vmem:[%s490 + $0x118] sm:$0xff]
  %v527 = vld [vmem:[%s490 + $0x120] sm:$0xff]
  %v528 = vld [vmem:[%s490 + $0x128] sm:$0xff]
  %v529 = vld [vmem:[%s490 + $0x130] sm:$0xff]
  %v530 = vld [vmem:[%s490 + $0x138] sm:$0xff]
  %v531 = vld [vmem:[%s490 + $0x140] sm:$0xff]
  %v532 = vld [vmem:[%s490 + $0x148] sm:$0xff]
  %v533 = vld [vmem:[%s490 + $0x150] sm:$0xff]
  %v534 = vld [vmem:[%s490 + $0x158] sm:$0xff]
  %v535 = vld [vmem:[%s490 + $0x160] sm:$0xff]
  %v536 = vld [vmem:[%s490 + $0x168] sm:$0xff]
  %v537 = vld [vmem:[%s490 + $0x170] sm:$0xff]
  %v538 = vld [vmem:[%s490 + $0x178] sm:$0xff]
  %v539 = vld [vmem:[%s490 + $0x180] sm:$0xff]
  %v541 = vsel %vm70, %v491, 0
  %v544 = vsel %vm70, %v492, 0
  %v547 = vsel %vm70, %v493, 0
  %v550 = vsel %vm70, %v494, 0
  %v553 = vsel %vm70, %v495, 0
  %v556 = vsel %vm70, %v496, 0
  %v559 = vsel %vm70, %v497, 0
  %v562 = vsel %vm70, %v498, 0
  %v565 = vsel %vm70, %v499, 0
  %v568 = vsel %vm70, %v500, 0
  %v571 = vsel %vm70, %v501, 0
  %v574 = vsel %vm70, %v502, 0
  %v577 = vsel %vm70, %v503, 0
  %v580 = vsel %vm70, %v504, 0
  %v583 = vsel %vm70, %v505, 0
  %v586 = vsel %vm70, %v506, 0
  %v589 = vsel %vm70, %v507, 0
  %v592 = vsel %vm70, %v508, 0
  %v595 = vsel %vm70, %v509, 0
  %v598 = vsel %vm70, %v510, 0
  %v601 = vsel %vm70, %v511, 0
  %v604 = vsel %vm70, %v512, 0
  %v607 = vsel %vm70, %v513, 0
  %v610 = vsel %vm70, %v514, 0
  %v613 = vsel %vm70, %v515, 0
  %v616 = vsel %vm70, %v516, 0
  %v619 = vsel %vm70, %v517, 0
  %v622 = vsel %vm70, %v518, 0
  %v625 = vsel %vm70, %v519, 0
  %v628 = vsel %vm70, %v520, 0
  %v631 = vsel %vm70, %v521, 0
  %v634 = vsel %vm70, %v522, 0
  %v637 = vsel %vm70, %v523, 0
  %v640 = vsel %vm70, %v524, 0
  %v643 = vsel %vm70, %v525, 0
  %v646 = vsel %vm70, %v526, 0
  %v649 = vsel %vm70, %v527, 0
  %v652 = vsel %vm70, %v528, 0
  %v655 = vsel %vm70, %v529, 0
  %v658 = vsel %vm70, %v530, 0
  %v661 = vsel %vm70, %v531, 0
  %v664 = vsel %vm70, %v532, 0
  %v667 = vsel %vm70, %v533, 0
  %v670 = vsel %vm70, %v534, 0
  %v673 = vsel %vm70, %v535, 0
  %v676 = vsel %vm70, %v536, 0
  %v679 = vsel %vm70, %v537, 0
  %v682 = vsel %vm70, %v538, 0
  %v685 = vsel %vm70, %v539, 0
  %687 = vmatpush.msra.mxu0 0.0
  %688 = vmatpush.msra.mxu0 0.0
  %689 = vmatpush.msra.mxu0 0.0
  %690 = vmatpush.msra.mxu0 0.0
  %691 = vmatpush.msra.mxu0 0.0
  %692 = vmatpush.msra.mxu0 0.0
  %693 = vmatpush.msra.mxu0 0.0
  %694 = vmatpush.msra.mxu0 0.0
  %695 = vmatpush.msra.mxu0 0.0
  %696 = vmatpush.msra.mxu0 0.0
  %697 = vmatpush.msra.mxu0 0.0
  %698 = vmatpush.msra.mxu0 0.0
  %699 = vmatpush.msra.mxu0 0.0
  %700 = vmatpush.msra.mxu0 0.0
  %701 = vmatpush.msra.mxu0 %v220
  %702 = vmatpush.msra.mxu0 %v17
  %703 = vmatmul.f32.gmra.mxu0 %v541
  %v704 = vpop.f32.mrf.mxu0
  %v705 = vadd.f32 0.0, %v704
  %706 = vmatmul.f32.gmra.mxu0 %v544
  %v707 = vpop.f32.mrf.mxu0
  %v708 = vadd.f32 0.0, %v707
  %709 = vmatmul.f32.gmra.mxu0 %v547
  %v710 = vpop.f32.mrf.mxu0
  %v711 = vadd.f32 0.0, %v710
  %712 = vmatmul.f32.gmra.mxu0 %v550
  %v713 = vpop.f32.mrf.mxu0
  %v714 = vadd.f32 0.0, %v713
  %715 = vmatmul.f32.gmra.mxu0 %v553
  %v716 = vpop.f32.mrf.mxu0
  %v717 = vadd.f32 0.0, %v716
  %718 = vmatmul.f32.gmra.mxu0 %v556
  %v719 = vpop.f32.mrf.mxu0
  %v720 = vadd.f32 0.0, %v719
  %721 = vmatmul.f32.gmra.mxu0 %v559
  %v722 = vpop.f32.mrf.mxu0
  %v723 = vadd.f32 0.0, %v722
  %724 = vmatmul.f32.gmra.mxu0 %v562
  %v725 = vpop.f32.mrf.mxu0
  %v726 = vadd.f32 0.0, %v725
  %727 = vmatmul.f32.gmra.mxu0 %v565
  %v728 = vpop.f32.mrf.mxu0
  %v729 = vadd.f32 0.0, %v728
  %730 = vmatmul.f32.gmra.mxu0 %v568
  %v731 = vpop.f32.mrf.mxu0
  %v732 = vadd.f32 0.0, %v731
  %733 = vmatmul.f32.gmra.mxu0 %v571
  %v734 = vpop.f32.mrf.mxu0
  %v735 = vadd.f32 0.0, %v734
  %736 = vmatmul.f32.gmra.mxu0 %v574
  %v737 = vpop.f32.mrf.mxu0
  %v738 = vadd.f32 0.0, %v737
  %739 = vmatmul.f32.gmra.mxu0 %v577
  %v740 = vpop.f32.mrf.mxu0
  %v741 = vadd.f32 0.0, %v740
  %742 = vmatmul.f32.gmra.mxu0 %v580
  %v743 = vpop.f32.mrf.mxu0
  %v744 = vadd.f32 0.0, %v743
  %745 = vmatmul.f32.gmra.mxu0 %v583
  %v746 = vpop.f32.mrf.mxu0
  %v747 = vadd.f32 0.0, %v746
  %748 = vmatmul.f32.gmra.mxu0 %v586
  %v749 = vpop.f32.mrf.mxu0
  %v750 = vadd.f32 0.0, %v749
  %751 = vmatmul.f32.gmra.mxu0 %v589
  %v752 = vpop.f32.mrf.mxu0
  %v753 = vadd.f32 0.0, %v752
  %754 = vmatmul.f32.gmra.mxu0 %v592
  %v755 = vpop.f32.mrf.mxu0
  %v756 = vadd.f32 0.0, %v755
  %757 = vmatmul.f32.gmra.mxu0 %v595
  %v758 = vpop.f32.mrf.mxu0
  %v759 = vadd.f32 0.0, %v758
  %760 = vmatmul.f32.gmra.mxu0 %v598
  %v761 = vpop.f32.mrf.mxu0
  %v762 = vadd.f32 0.0, %v761
  %763 = vmatmul.f32.gmra.mxu0 %v601
  %v764 = vpop.f32.mrf.mxu0
  %v765 = vadd.f32 0.0, %v764
  %766 = vmatmul.f32.gmra.mxu0 %v604
  %v767 = vpop.f32.mrf.mxu0
  %v768 = vadd.f32 0.0, %v767
  %769 = vmatmul.f32.gmra.mxu0 %v607
  %v770 = vpop.f32.mrf.mxu0
  %v771 = vadd.f32 0.0, %v770
  %772 = vmatmul.f32.gmra.mxu0 %v610
  %v773 = vpop.f32.mrf.mxu0
  %v774 = vadd.f32 0.0, %v773
  %775 = vmatmul.f32.gmra.mxu0 %v613
  %v776 = vpop.f32.mrf.mxu0
  %v777 = vadd.f32 0.0, %v776
  %778 = vmatmul.f32.gmra.mxu0 %v616
  %v779 = vpop.f32.mrf.mxu0
  %v780 = vadd.f32 0.0, %v779
  %781 = vmatmul.f32.gmra.mxu0 %v619
  %v782 = vpop.f32.mrf.mxu0
  %v783 = vadd.f32 0.0, %v782
  %784 = vmatmul.f32.gmra.mxu0 %v622
  %v785 = vpop.f32.mrf.mxu0
  %v786 = vadd.f32 0.0, %v785
  %787 = vmatmul.f32.gmra.mxu0 %v625
  %v788 = vpop.f32.mrf.mxu0
  %v789 = vadd.f32 0.0, %v788
  %790 = vmatmul.f32.gmra.mxu0 %v628
  %v791 = vpop.f32.mrf.mxu0
  %v792 = vadd.f32 0.0, %v791
  %793 = vmatmul.f32.gmra.mxu0 %v631
  %v794 = vpop.f32.mrf.mxu0
  %v795 = vadd.f32 0.0, %v794
  %796 = vmatmul.f32.gmra.mxu0 %v634
  %v797 = vpop.f32.mrf.mxu0
  %v798 = vadd.f32 0.0, %v797
  %799 = vmatmul.f32.gmra.mxu0 %v637
  %v800 = vpop.f32.mrf.mxu0
  %v801 = vadd.f32 0.0, %v800
  %802 = vmatmul.f32.gmra.mxu0 %v640
  %v803 = vpop.f32.mrf.mxu0
  %v804 = vadd.f32 0.0, %v803
  %805 = vmatmul.f32.gmra.mxu0 %v643
  %v806 = vpop.f32.mrf.mxu0
  %v807 = vadd.f32 0.0, %v806
  %808 = vmatmul.f32.gmra.mxu0 %v646
  %v809 = vpop.f32.mrf.mxu0
  %v810 = vadd.f32 0.0, %v809
  %811 = vmatmul.f32.gmra.mxu0 %v649
  %v812 = vpop.f32.mrf.mxu0
  %v813 = vadd.f32 0.0, %v812
  %814 = vmatmul.f32.gmra.mxu0 %v652
  %v815 = vpop.f32.mrf.mxu0
  %v816 = vadd.f32 0.0, %v815
  %817 = vmatmul.f32.gmra.mxu0 %v655
  %v818 = vpop.f32.mrf.mxu0
  %v819 = vadd.f32 0.0, %v818
  %820 = vmatmul.f32.gmra.mxu0 %v658
  %v821 = vpop.f32.mrf.mxu0
  %v822 = vadd.f32 0.0, %v821
  %823 = vmatmul.f32.gmra.mxu0 %v661
  %v824 = vpop.f32.mrf.mxu0
  %v825 = vadd.f32 0.0, %v824
  %826 = vmatmul.f32.gmra.mxu0 %v664
  %v827 = vpop.f32.mrf.mxu0
  %v828 = vadd.f32 0.0, %v827
  %829 = vmatmul.f32.gmra.mxu0 %v667
  %v830 = vpop.f32.mrf.mxu0
  %v831 = vadd.f32 0.0, %v830
  %832 = vmatmul.f32.gmra.mxu0 %v670
  %v833 = vpop.f32.mrf.mxu0
  %v834 = vadd.f32 0.0, %v833
  %835 = vmatmul.f32.gmra.mxu0 %v673
  %v836 = vpop.f32.mrf.mxu0
  %v837 = vadd.f32 0.0, %v836
  %838 = vmatmul.f32.gmra.mxu0 %v676
  %v839 = vpop.f32.mrf.mxu0
  %v840 = vadd.f32 0.0, %v839
  %841 = vmatmul.f32.gmra.mxu0 %v679
  %v842 = vpop.f32.mrf.mxu0
  %v843 = vadd.f32 0.0, %v842
  %844 = vmatmul.f32.gmra.mxu0 %v682
  %v845 = vpop.f32.mrf.mxu0
  %v846 = vadd.f32 0.0, %v845
  %847 = vmatmul.f32.gmra.mxu0 %v685
  %v848 = vpop.f32.mrf.mxu0
  %v849 = vadd.f32 0.0, %v848
  %850 = vdwg.mxu0
  %v851 = vmul.f32 %v705, %v387
  %v852 = vmul.f32 %v708, %v387
  %v853 = vmul.f32 %v711, %v387
  %v854 = vmul.f32 %v714, %v387
  %v855 = vmul.f32 %v717, %v387
  %v856 = vmul.f32 %v720, %v387
  %v857 = vmul.f32 %v723, %v387
  %v858 = vmul.f32 %v726, %v387
  %v859 = vmul.f32 %v729, %v387
  %v860 = vmul.f32 %v732, %v387
  %v861 = vmul.f32 %v735, %v387
  %v862 = vmul.f32 %v738, %v387
  %v863 = vmul.f32 %v741, %v387
  %v864 = vmul.f32 %v744, %v387
  %v865 = vmul.f32 %v747, %v387
  %v866 = vmul.f32 %v750, %v387
  %v867 = vmul.f32 %v753, %v387
  %v868 = vmul.f32 %v756, %v387
  %v869 = vmul.f32 %v759, %v387
  %v870 = vmul.f32 %v762, %v387
  %v871 = vmul.f32 %v765, %v387
  %v872 = vmul.f32 %v768, %v387
  %v873 = vmul.f32 %v771, %v387
  %v874 = vmul.f32 %v774, %v387
  %v875 = vmul.f32 %v777, %v387
  %v876 = vmul.f32 %v780, %v387
  %v877 = vmul.f32 %v783, %v387
  %v878 = vmul.f32 %v786, %v387
  %v879 = vmul.f32 %v789, %v387
  %v880 = vmul.f32 %v792, %v387
  %v881 = vmul.f32 %v795, %v387
  %v882 = vmul.f32 %v798, %v387
  %v883 = vmul.f32 %v801, %v387
  %v884 = vmul.f32 %v804, %v387
  %v885 = vmul.f32 %v807, %v387
  %v886 = vmul.f32 %v810, %v387
  %v887 = vmul.f32 %v813, %v387
  %v888 = vmul.f32 %v816, %v387
  %v889 = vmul.f32 %v819, %v387
  %v890 = vmul.f32 %v822, %v387
  %v891 = vmul.f32 %v825, %v387
  %v892 = vmul.f32 %v828, %v387
  %v893 = vmul.f32 %v831, %v387
  %v894 = vmul.f32 %v834, %v387
  %v895 = vmul.f32 %v837, %v387
  %v896 = vmul.f32 %v840, %v387
  %v897 = vmul.f32 %v843, %v387
  %v898 = vmul.f32 %v846, %v387
  %v899 = vmul.f32 %v849, %v387
  %v900 = vadd.f32 %v851, %v439
  %v901 = vadd.f32 %v852, %v439
  %v902 = vadd.f32 %v853, %v439
  %v903 = vadd.f32 %v854, %v439
  %v904 = vadd.f32 %v855, %v439
  %v905 = vadd.f32 %v856, %v439
  %v906 = vadd.f32 %v857, %v439
  %v907 = vadd.f32 %v858, %v439
  %v908 = vadd.f32 %v859, %v439
  %v909 = vadd.f32 %v860, %v439
  %v910 = vadd.f32 %v861, %v439
  %v911 = vadd.f32 %v862, %v439
  %v912 = vadd.f32 %v863, %v439
  %v913 = vadd.f32 %v864, %v439
  %v914 = vadd.f32 %v865, %v439
  %v915 = vadd.f32 %v866, %v439
  %v916 = vadd.f32 %v867, %v439
  %v917 = vadd.f32 %v868, %v439
  %v918 = vadd.f32 %v869, %v439
  %v919 = vadd.f32 %v870, %v439
  %v920 = vadd.f32 %v871, %v439
  %v921 = vadd.f32 %v872, %v439
  %v922 = vadd.f32 %v873, %v439
  %v923 = vadd.f32 %v874, %v439
  %v924 = vadd.f32 %v875, %v439
  %v925 = vadd.f32 %v876, %v439
  %v926 = vadd.f32 %v877, %v439
  %v927 = vadd.f32 %v878, %v439
  %v928 = vadd.f32 %v879, %v439
  %v929 = vadd.f32 %v880, %v439
  %v930 = vadd.f32 %v881, %v439
  %v931 = vadd.f32 %v882, %v439
  %v932 = vadd.f32 %v883, %v439
  %v933 = vadd.f32 %v884, %v439
  %v934 = vadd.f32 %v885, %v439
  %v935 = vadd.f32 %v886, %v439
  %v936 = vadd.f32 %v887, %v439
  %v937 = vadd.f32 %v888, %v439
  %v938 = vadd.f32 %v889, %v439
  %v939 = vadd.f32 %v890, %v439
  %v940 = vadd.f32 %v891, %v439
  %v941 = vadd.f32 %v892, %v439
  %v942 = vadd.f32 %v893, %v439
  %v943 = vadd.f32 %v894, %v439
  %v944 = vadd.f32 %v895, %v439
  %v945 = vadd.f32 %v896, %v439
  %v946 = vadd.f32 %v897, %v439
  %v947 = vadd.f32 %v898, %v439
  %v948 = vadd.f32 %v899, %v439
  %v949 = vmax.f32 %v441, %v900
  %v950 = vmax.f32 %v442, %v901
  %v951 = vmax.f32 %v443, %v902
  %v952 = vmax.f32 %v444, %v903
  %v953 = vmax.f32 %v445, %v904
  %v954 = vmax.f32 %v446, %v905
  %v955 = vmax.f32 %v447, %v906
  %v956 = vmax.f32 %v448, %v907
  %v957 = vmax.f32 %v449, %v908
  %v958 = vmax.f32 %v450, %v909
  %v959 = vmax.f32 %v451, %v910
  %v960 = vmax.f32 %v452, %v911
  %v961 = vmax.f32 %v453, %v912
  %v962 = vmax.f32 %v454, %v913
  %v963 = vmax.f32 %v455, %v914
  %v964 = vmax.f32 %v456, %v915
  %v965 = vmax.f32 %v457, %v916
  %v966 = vmax.f32 %v458, %v917
  %v967 = vmax.f32 %v459, %v918
  %v968 = vmax.f32 %v460, %v919
  %v969 = vmax.f32 %v461, %v920
  %v970 = vmax.f32 %v462, %v921
  %v971 = vmax.f32 %v463, %v922
  %v972 = vmax.f32 %v464, %v923
  %v973 = vmax.f32 %v465, %v924
  %v974 = vmax.f32 %v466, %v925
  %v975 = vmax.f32 %v467, %v926
  %v976 = vmax.f32 %v468, %v927
  %v977 = vmax.f32 %v469, %v928
  %v978 = vmax.f32 %v470, %v929
  %v979 = vmax.f32 %v471, %v930
  %v980 = vmax.f32 %v472, %v931
  %v981 = vmax.f32 %v473, %v932
  %v982 = vmax.f32 %v474, %v933
  %v983 = vmax.f32 %v475, %v934
  %v984 = vmax.f32 %v476, %v935
  %v985 = vmax.f32 %v477, %v936
  %v986 = vmax.f32 %v478, %v937
  %v987 = vmax.f32 %v479, %v938
  %v988 = vmax.f32 %v480, %v939
  %v989 = vmax.f32 %v481, %v940
  %v990 = vmax.f32 %v482, %v941
  %v991 = vmax.f32 %v483, %v942
  %v992 = vmax.f32 %v484, %v943
  %v993 = vmax.f32 %v485, %v944
  %v994 = vmax.f32 %v486, %v945
  %v995 = vmax.f32 %v487, %v946
  %v996 = vmax.f32 %v488, %v947
  %v997 = vmax.f32 %v489, %v948
  %s998 = scalar_lea.vmem %s0, 784
  %v999 = vld [vmem:[%s998] sm:$0xff]
  %v1000 = vld [vmem:[%s998 + $0x8] sm:$0xff]
  %v1001 = vld [vmem:[%s998 + $0x10] sm:$0xff]
  %v1002 = vld [vmem:[%s998 + $0x18] sm:$0xff]
  %v1003 = vld [vmem:[%s998 + $0x20] sm:$0xff]
  %v1004 = vld [vmem:[%s998 + $0x28] sm:$0xff]
  %v1005 = vld [vmem:[%s998 + $0x30] sm:$0xff]
  %v1006 = vld [vmem:[%s998 + $0x38] sm:$0xff]
  %v1007 = vld [vmem:[%s998 + $0x40] sm:$0xff]
  %v1008 = vld [vmem:[%s998 + $0x48] sm:$0xff]
  %v1009 = vld [vmem:[%s998 + $0x50] sm:$0xff]
  %v1010 = vld [vmem:[%s998 + $0x58] sm:$0xff]
  %v1011 = vld [vmem:[%s998 + $0x60] sm:$0xff]
  %v1012 = vld [vmem:[%s998 + $0x68] sm:$0xff]
  %v1013 = vld [vmem:[%s998 + $0x70] sm:$0xff]
  %v1014 = vld [vmem:[%s998 + $0x78] sm:$0xff]
  %v1015 = vld [vmem:[%s998 + $0x80] sm:$0xff]
  %v1016 = vld [vmem:[%s998 + $0x88] sm:$0xff]
  %v1017 = vld [vmem:[%s998 + $0x90] sm:$0xff]
  %v1018 = vld [vmem:[%s998 + $0x98] sm:$0xff]
  %v1019 = vld [vmem:[%s998 + $0xa0] sm:$0xff]
  %v1020 = vld [vmem:[%s998 + $0xa8] sm:$0xff]
  %v1021 = vld [vmem:[%s998 + $0xb0] sm:$0xff]
  %v1022 = vld [vmem:[%s998 + $0xb8] sm:$0xff]
  %v1023 = vld [vmem:[%s998 + $0xc0] sm:$0xff]
  %v1024 = vld [vmem:[%s998 + $0xc8] sm:$0xff]
  %v1025 = vld [vmem:[%s998 + $0xd0] sm:$0xff]
  %v1026 = vld [vmem:[%s998 + $0xd8] sm:$0xff]
  %v1027 = vld [vmem:[%s998 + $0xe0] sm:$0xff]
  %v1028 = vld [vmem:[%s998 + $0xe8] sm:$0xff]
  %v1029 = vld [vmem:[%s998 + $0xf0] sm:$0xff]
  %v1030 = vld [vmem:[%s998 + $0xf8] sm:$0xff]
  %v1031 = vld [vmem:[%s998 + $0x100] sm:$0xff]
  %v1032 = vld [vmem:[%s998 + $0x108] sm:$0xff]
  %v1033 = vld [vmem:[%s998 + $0x110] sm:$0xff]
  %v1034 = vld [vmem:[%s998 + $0x118] sm:$0xff]
  %v1035 = vld [vmem:[%s998 + $0x120] sm:$0xff]
  %v1036 = vld [vmem:[%s998 + $0x128] sm:$0xff]
  %v1037 = vld [vmem:[%s998 + $0x130] sm:$0xff]
  %v1038 = vld [vmem:[%s998 + $0x138] sm:$0xff]
  %v1039 = vld [vmem:[%s998 + $0x140] sm:$0xff]
  %v1040 = vld [vmem:[%s998 + $0x148] sm:$0xff]
  %v1041 = vld [vmem:[%s998 + $0x150] sm:$0xff]
  %v1042 = vld [vmem:[%s998 + $0x158] sm:$0xff]
  %v1043 = vld [vmem:[%s998 + $0x160] sm:$0xff]
  %v1044 = vld [vmem:[%s998 + $0x168] sm:$0xff]
  %v1045 = vld [vmem:[%s998 + $0x170] sm:$0xff]
  %v1046 = vld [vmem:[%s998 + $0x178] sm:$0xff]
  %v1047 = vld [vmem:[%s998 + $0x180] sm:$0xff]
  %v1049 = vsel %vm70, %v999, 0
  %v1052 = vsel %vm70, %v1000, 0
  %v1055 = vsel %vm70, %v1001, 0
  %v1058 = vsel %vm70, %v1002, 0
  %v1061 = vsel %vm70, %v1003, 0
  %v1064 = vsel %vm70, %v1004, 0
  %v1067 = vsel %vm70, %v1005, 0
  %v1070 = vsel %vm70, %v1006, 0
  %v1073 = vsel %vm70, %v1007, 0
  %v1076 = vsel %vm70, %v1008, 0
  %v1079 = vsel %vm70, %v1009, 0
  %v1082 = vsel %vm70, %v1010, 0
  %v1085 = vsel %vm70, %v1011, 0
  %v1088 = vsel %vm70, %v1012, 0
  %v1091 = vsel %vm70, %v1013, 0
  %v1094 = vsel %vm70, %v1014, 0
  %v1097 = vsel %vm70, %v1015, 0
  %v1100 = vsel %vm70, %v1016, 0
  %v1103 = vsel %vm70, %v1017, 0
  %v1106 = vsel %vm70, %v1018, 0
  %v1109 = vsel %vm70, %v1019, 0
  %v1112 = vsel %vm70, %v1020, 0
  %v1115 = vsel %vm70, %v1021, 0
  %v1118 = vsel %vm70, %v1022, 0
  %v1121 = vsel %vm70, %v1023, 0
  %v1124 = vsel %vm70, %v1024, 0
  %v1127 = vsel %vm70, %v1025, 0
  %v1130 = vsel %vm70, %v1026, 0
  %v1133 = vsel %vm70, %v1027, 0
  %v1136 = vsel %vm70, %v1028, 0
  %v1139 = vsel %vm70, %v1029, 0
  %v1142 = vsel %vm70, %v1030, 0
  %v1145 = vsel %vm70, %v1031, 0
  %v1148 = vsel %vm70, %v1032, 0
  %v1151 = vsel %vm70, %v1033, 0
  %v1154 = vsel %vm70, %v1034, 0
  %v1157 = vsel %vm70, %v1035, 0
  %v1160 = vsel %vm70, %v1036, 0
  %v1163 = vsel %vm70, %v1037, 0
  %v1166 = vsel %vm70, %v1038, 0
  %v1169 = vsel %vm70, %v1039, 0
  %v1172 = vsel %vm70, %v1040, 0
  %v1175 = vsel %vm70, %v1041, 0
  %v1178 = vsel %vm70, %v1042, 0
  %v1181 = vsel %vm70, %v1043, 0
  %v1184 = vsel %vm70, %v1044, 0
  %v1187 = vsel %vm70, %v1045, 0
  %v1190 = vsel %vm70, %v1046, 0
  %v1193 = vsel %vm70, %v1047, 0
  %1195 = vmatpush.msra.mxu0 0.0
  %1196 = vmatpush.msra.mxu0 0.0
  %1197 = vmatpush.msra.mxu0 0.0
  %1198 = vmatpush.msra.mxu0 0.0
  %1199 = vmatpush.msra.mxu0 0.0
  %1200 = vmatpush.msra.mxu0 0.0
  %1201 = vmatpush.msra.mxu0 0.0
  %1202 = vmatpush.msra.mxu0 0.0
  %1203 = vmatpush.msra.mxu0 0.0
  %1204 = vmatpush.msra.mxu0 0.0
  %1205 = vmatpush.msra.mxu0 0.0
  %1206 = vmatpush.msra.mxu0 0.0
  %1207 = vmatpush.msra.mxu0 0.0
  %1208 = vmatpush.msra.mxu0 0.0
  %1209 = vmatpush.msra.mxu0 %v220
  %1210 = vmatpush.msra.mxu0 %v17
  %1211 = vmatmul.f32.gmra.mxu0 %v1049
  %v1212 = vpop.f32.mrf.mxu0
  %v1213 = vadd.f32 0.0, %v1212
  %1214 = vmatmul.f32.gmra.mxu0 %v1052
  %v1215 = vpop.f32.mrf.mxu0
  %v1216 = vadd.f32 0.0, %v1215
  %1217 = vmatmul.f32.gmra.mxu0 %v1055
  %v1218 = vpop.f32.mrf.mxu0
  %v1219 = vadd.f32 0.0, %v1218
  %1220 = vmatmul.f32.gmra.mxu0 %v1058
  %v1221 = vpop.f32.mrf.mxu0
  %v1222 = vadd.f32 0.0, %v1221
  %1223 = vmatmul.f32.gmra.mxu0 %v1061
  %v1224 = vpop.f32.mrf.mxu0
  %v1225 = vadd.f32 0.0, %v1224
  %1226 = vmatmul.f32.gmra.mxu0 %v1064
  %v1227 = vpop.f32.mrf.mxu0
  %v1228 = vadd.f32 0.0, %v1227
  %1229 = vmatmul.f32.gmra.mxu0 %v1067
  %v1230 = vpop.f32.mrf.mxu0
  %v1231 = vadd.f32 0.0, %v1230
  %1232 = vmatmul.f32.gmra.mxu0 %v1070
  %v1233 = vpop.f32.mrf.mxu0
  %v1234 = vadd.f32 0.0, %v1233
  %1235 = vmatmul.f32.gmra.mxu0 %v1073
  %v1236 = vpop.f32.mrf.mxu0
  %v1237 = vadd.f32 0.0, %v1236
  %1238 = vmatmul.f32.gmra.mxu0 %v1076
  %v1239 = vpop.f32.mrf.mxu0
  %v1240 = vadd.f32 0.0, %v1239
  %1241 = vmatmul.f32.gmra.mxu0 %v1079
  %v1242 = vpop.f32.mrf.mxu0
  %v1243 = vadd.f32 0.0, %v1242
  %1244 = vmatmul.f32.gmra.mxu0 %v1082
  %v1245 = vpop.f32.mrf.mxu0
  %v1246 = vadd.f32 0.0, %v1245
  %1247 = vmatmul.f32.gmra.mxu0 %v1085
  %v1248 = vpop.f32.mrf.mxu0
  %v1249 = vadd.f32 0.0, %v1248
  %1250 = vmatmul.f32.gmra.mxu0 %v1088
  %v1251 = vpop.f32.mrf.mxu0
  %v1252 = vadd.f32 0.0, %v1251
  %1253 = vmatmul.f32.gmra.mxu0 %v1091
  %v1254 = vpop.f32.mrf.mxu0
  %v1255 = vadd.f32 0.0, %v1254
  %1256 = vmatmul.f32.gmra.mxu0 %v1094
  %v1257 = vpop.f32.mrf.mxu0
  %v1258 = vadd.f32 0.0, %v1257
  %1259 = vmatmul.f32.gmra.mxu0 %v1097
  %v1260 = vpop.f32.mrf.mxu0
  %v1261 = vadd.f32 0.0, %v1260
  %1262 = vmatmul.f32.gmra.mxu0 %v1100
  %v1263 = vpop.f32.mrf.mxu0
  %v1264 = vadd.f32 0.0, %v1263
  %1265 = vmatmul.f32.gmra.mxu0 %v1103
  %v1266 = vpop.f32.mrf.mxu0
  %v1267 = vadd.f32 0.0, %v1266
  %1268 = vmatmul.f32.gmra.mxu0 %v1106
  %v1269 = vpop.f32.mrf.mxu0
  %v1270 = vadd.f32 0.0, %v1269
  %1271 = vmatmul.f32.gmra.mxu0 %v1109
  %v1272 = vpop.f32.mrf.mxu0
  %v1273 = vadd.f32 0.0, %v1272
  %1274 = vmatmul.f32.gmra.mxu0 %v1112
  %v1275 = vpop.f32.mrf.mxu0
  %v1276 = vadd.f32 0.0, %v1275
  %1277 = vmatmul.f32.gmra.mxu0 %v1115
  %v1278 = vpop.f32.mrf.mxu0
  %v1279 = vadd.f32 0.0, %v1278
  %1280 = vmatmul.f32.gmra.mxu0 %v1118
  %v1281 = vpop.f32.mrf.mxu0
  %v1282 = vadd.f32 0.0, %v1281
  %1283 = vmatmul.f32.gmra.mxu0 %v1121
  %v1284 = vpop.f32.mrf.mxu0
  %v1285 = vadd.f32 0.0, %v1284
  %1286 = vmatmul.f32.gmra.mxu0 %v1124
  %v1287 = vpop.f32.mrf.mxu0
  %v1288 = vadd.f32 0.0, %v1287
  %1289 = vmatmul.f32.gmra.mxu0 %v1127
  %v1290 = vpop.f32.mrf.mxu0
  %v1291 = vadd.f32 0.0, %v1290
  %1292 = vmatmul.f32.gmra.mxu0 %v1130
  %v1293 = vpop.f32.mrf.mxu0
  %v1294 = vadd.f32 0.0, %v1293
  %1295 = vmatmul.f32.gmra.mxu0 %v1133
  %v1296 = vpop.f32.mrf.mxu0
  %v1297 = vadd.f32 0.0, %v1296
  %1298 = vmatmul.f32.gmra.mxu0 %v1136
  %v1299 = vpop.f32.mrf.mxu0
  %v1300 = vadd.f32 0.0, %v1299
  %1301 = vmatmul.f32.gmra.mxu0 %v1139
  %v1302 = vpop.f32.mrf.mxu0
  %v1303 = vadd.f32 0.0, %v1302
  %1304 = vmatmul.f32.gmra.mxu0 %v1142
  %v1305 = vpop.f32.mrf.mxu0
  %v1306 = vadd.f32 0.0, %v1305
  %1307 = vmatmul.f32.gmra.mxu0 %v1145
  %v1308 = vpop.f32.mrf.mxu0
  %v1309 = vadd.f32 0.0, %v1308
  %1310 = vmatmul.f32.gmra.mxu0 %v1148
  %v1311 = vpop.f32.mrf.mxu0
  %v1312 = vadd.f32 0.0, %v1311
  %1313 = vmatmul.f32.gmra.mxu0 %v1151
  %v1314 = vpop.f32.mrf.mxu0
  %v1315 = vadd.f32 0.0, %v1314
  %1316 = vmatmul.f32.gmra.mxu0 %v1154
  %v1317 = vpop.f32.mrf.mxu0
  %v1318 = vadd.f32 0.0, %v1317
  %1319 = vmatmul.f32.gmra.mxu0 %v1157
  %v1320 = vpop.f32.mrf.mxu0
  %v1321 = vadd.f32 0.0, %v1320
  %1322 = vmatmul.f32.gmra.mxu0 %v1160
  %v1323 = vpop.f32.mrf.mxu0
  %v1324 = vadd.f32 0.0, %v1323
  %1325 = vmatmul.f32.gmra.mxu0 %v1163
  %v1326 = vpop.f32.mrf.mxu0
  %v1327 = vadd.f32 0.0, %v1326
  %1328 = vmatmul.f32.gmra.mxu0 %v1166
  %v1329 = vpop.f32.mrf.mxu0
  %v1330 = vadd.f32 0.0, %v1329
  %1331 = vmatmul.f32.gmra.mxu0 %v1169
  %v1332 = vpop.f32.mrf.mxu0
  %v1333 = vadd.f32 0.0, %v1332
  %1334 = vmatmul.f32.gmra.mxu0 %v1172
  %v1335 = vpop.f32.mrf.mxu0
  %v1336 = vadd.f32 0.0, %v1335
  %1337 = vmatmul.f32.gmra.mxu0 %v1175
  %v1338 = vpop.f32.mrf.mxu0
  %v1339 = vadd.f32 0.0, %v1338
  %1340 = vmatmul.f32.gmra.mxu0 %v1178
  %v1341 = vpop.f32.mrf.mxu0
  %v1342 = vadd.f32 0.0, %v1341
  %1343 = vmatmul.f32.gmra.mxu0 %v1181
  %v1344 = vpop.f32.mrf.mxu0
  %v1345 = vadd.f32 0.0, %v1344
  %1346 = vmatmul.f32.gmra.mxu0 %v1184
  %v1347 = vpop.f32.mrf.mxu0
  %v1348 = vadd.f32 0.0, %v1347
  %1349 = vmatmul.f32.gmra.mxu0 %v1187
  %v1350 = vpop.f32.mrf.mxu0
  %v1351 = vadd.f32 0.0, %v1350
  %1352 = vmatmul.f32.gmra.mxu0 %v1190
  %v1353 = vpop.f32.mrf.mxu0
  %v1354 = vadd.f32 0.0, %v1353
  %1355 = vmatmul.f32.gmra.mxu0 %v1193
  %v1356 = vpop.f32.mrf.mxu0
  %v1357 = vadd.f32 0.0, %v1356
  %1358 = vdwg.mxu0
  %v1359 = vmul.f32 %v1213, %v387
  %v1360 = vmul.f32 %v1216, %v387
  %v1361 = vmul.f32 %v1219, %v387
  %v1362 = vmul.f32 %v1222, %v387
  %v1363 = vmul.f32 %v1225, %v387
  %v1364 = vmul.f32 %v1228, %v387
  %v1365 = vmul.f32 %v1231, %v387
  %v1366 = vmul.f32 %v1234, %v387
  %v1367 = vmul.f32 %v1237, %v387
  %v1368 = vmul.f32 %v1240, %v387
  %v1369 = vmul.f32 %v1243, %v387
  %v1370 = vmul.f32 %v1246, %v387
  %v1371 = vmul.f32 %v1249, %v387
  %v1372 = vmul.f32 %v1252, %v387
  %v1373 = vmul.f32 %v1255, %v387
  %v1374 = vmul.f32 %v1258, %v387
  %v1375 = vmul.f32 %v1261, %v387
  %v1376 = vmul.f32 %v1264, %v387
  %v1377 = vmul.f32 %v1267, %v387
  %v1378 = vmul.f32 %v1270, %v387
  %v1379 = vmul.f32 %v1273, %v387
  %v1380 = vmul.f32 %v1276, %v387
  %v1381 = vmul.f32 %v1279, %v387
  %v1382 = vmul.f32 %v1282, %v387
  %v1383 = vmul.f32 %v1285, %v387
  %v1384 = vmul.f32 %v1288, %v387
  %v1385 = vmul.f32 %v1291, %v387
  %v1386 = vmul.f32 %v1294, %v387
  %v1387 = vmul.f32 %v1297, %v387
  %v1388 = vmul.f32 %v1300, %v387
  %v1389 = vmul.f32 %v1303, %v387
  %v1390 = vmul.f32 %v1306, %v387
  %v1391 = vmul.f32 %v1309, %v387
  %v1392 = vmul.f32 %v1312, %v387
  %v1393 = vmul.f32 %v1315, %v387
  %v1394 = vmul.f32 %v1318, %v387
  %v1395 = vmul.f32 %v1321, %v387
  %v1396 = vmul.f32 %v1324, %v387
  %v1397 = vmul.f32 %v1327, %v387
  %v1398 = vmul.f32 %v1330, %v387
  %v1399 = vmul.f32 %v1333, %v387
  %v1400 = vmul.f32 %v1336, %v387
  %v1401 = vmul.f32 %v1339, %v387
  %v1402 = vmul.f32 %v1342, %v387
  %v1403 = vmul.f32 %v1345, %v387
  %v1404 = vmul.f32 %v1348, %v387
  %v1405 = vmul.f32 %v1351, %v387
  %v1406 = vmul.f32 %v1354, %v387
  %v1407 = vmul.f32 %v1357, %v387
  %v1408 = vadd.f32 %v1359, %v439
  %v1409 = vadd.f32 %v1360, %v439
  %v1410 = vadd.f32 %v1361, %v439
  %v1411 = vadd.f32 %v1362, %v439
  %v1412 = vadd.f32 %v1363, %v439
  %v1413 = vadd.f32 %v1364, %v439
  %v1414 = vadd.f32 %v1365, %v439
  %v1415 = vadd.f32 %v1366, %v439
  %v1416 = vadd.f32 %v1367, %v439
  %v1417 = vadd.f32 %v1368, %v439
  %v1418 = vadd.f32 %v1369, %v439
  %v1419 = vadd.f32 %v1370, %v439
  %v1420 = vadd.f32 %v1371, %v439
  %v1421 = vadd.f32 %v1372, %v439
  %v1422 = vadd.f32 %v1373, %v439
  %v1423 = vadd.f32 %v1374, %v439
  %v1424 = vadd.f32 %v1375, %v439
  %v1425 = vadd.f32 %v1376, %v439
  %v1426 = vadd.f32 %v1377, %v439
  %v1427 = vadd.f32 %v1378, %v439
  %v1428 = vadd.f32 %v1379, %v439
  %v1429 = vadd.f32 %v1380, %v439
  %v1430 = vadd.f32 %v1381, %v439
  %v1431 = vadd.f32 %v1382, %v439
  %v1432 = vadd.f32 %v1383, %v439
  %v1433 = vadd.f32 %v1384, %v439
  %v1434 = vadd.f32 %v1385, %v439
  %v1435 = vadd.f32 %v1386, %v439
  %v1436 = vadd.f32 %v1387, %v439
  %v1437 = vadd.f32 %v1388, %v439
  %v1438 = vadd.f32 %v1389, %v439
  %v1439 = vadd.f32 %v1390, %v439
  %v1440 = vadd.f32 %v1391, %v439
  %v1441 = vadd.f32 %v1392, %v439
  %v1442 = vadd.f32 %v1393, %v439
  %v1443 = vadd.f32 %v1394, %v439
  %v1444 = vadd.f32 %v1395, %v439
  %v1445 = vadd.f32 %v1396, %v439
  %v1446 = vadd.f32 %v1397, %v439
  %v1447 = vadd.f32 %v1398, %v439
  %v1448 = vadd.f32 %v1399, %v439
  %v1449 = vadd.f32 %v1400, %v439
  %v1450 = vadd.f32 %v1401, %v439
  %v1451 = vadd.f32 %v1402, %v439
  %v1452 = vadd.f32 %v1403, %v439
  %v1453 = vadd.f32 %v1404, %v439
  %v1454 = vadd.f32 %v1405, %v439
  %v1455 = vadd.f32 %v1406, %v439
  %v1456 = vadd.f32 %v1407, %v439
  %v1457 = vmax.f32 %v949, %v1408
  %v1458 = vmax.f32 %v950, %v1409
  %v1459 = vmax.f32 %v951, %v1410
  %v1460 = vmax.f32 %v952, %v1411
  %v1461 = vmax.f32 %v953, %v1412
  %v1462 = vmax.f32 %v954, %v1413
  %v1463 = vmax.f32 %v955, %v1414
  %v1464 = vmax.f32 %v956, %v1415
  %v1465 = vmax.f32 %v957, %v1416
  %v1466 = vmax.f32 %v958, %v1417
  %v1467 = vmax.f32 %v959, %v1418
  %v1468 = vmax.f32 %v960, %v1419
  %v1469 = vmax.f32 %v961, %v1420
  %v1470 = vmax.f32 %v962, %v1421
  %v1471 = vmax.f32 %v963, %v1422
  %v1472 = vmax.f32 %v964, %v1423
  %v1473 = vmax.f32 %v965, %v1424
  %v1474 = vmax.f32 %v966, %v1425
  %v1475 = vmax.f32 %v967, %v1426
  %v1476 = vmax.f32 %v968, %v1427
  %v1477 = vmax.f32 %v969, %v1428
  %v1478 = vmax.f32 %v970, %v1429
  %v1479 = vmax.f32 %v971, %v1430
  %v1480 = vmax.f32 %v972, %v1431
  %v1481 = vmax.f32 %v973, %v1432
  %v1482 = vmax.f32 %v974, %v1433
  %v1483 = vmax.f32 %v975, %v1434
  %v1484 = vmax.f32 %v976, %v1435
  %v1485 = vmax.f32 %v977, %v1436
  %v1486 = vmax.f32 %v978, %v1437
  %v1487 = vmax.f32 %v979, %v1438
  %v1488 = vmax.f32 %v980, %v1439
  %v1489 = vmax.f32 %v981, %v1440
  %v1490 = vmax.f32 %v982, %v1441
  %v1491 = vmax.f32 %v983, %v1442
  %v1492 = vmax.f32 %v984, %v1443
  %v1493 = vmax.f32 %v985, %v1444
  %v1494 = vmax.f32 %v986, %v1445
  %v1495 = vmax.f32 %v987, %v1446
  %v1496 = vmax.f32 %v988, %v1447
  %v1497 = vmax.f32 %v989, %v1448
  %v1498 = vmax.f32 %v990, %v1449
  %v1499 = vmax.f32 %v991, %v1450
  %v1500 = vmax.f32 %v992, %v1451
  %v1501 = vmax.f32 %v993, %v1452
  %v1502 = vmax.f32 %v994, %v1453
  %v1503 = vmax.f32 %v995, %v1454
  %v1504 = vmax.f32 %v996, %v1455
  %v1505 = vmax.f32 %v997, %v1456
  %s1506 = scalar_lea.vmem %s0, 1176
  %v1507 = vld [vmem:[%s1506] sm:$0xff]
  %v1508 = vld [vmem:[%s1506 + $0x8] sm:$0xff]
  %v1509 = vld [vmem:[%s1506 + $0x10] sm:$0xff]
  %v1510 = vld [vmem:[%s1506 + $0x18] sm:$0xff]
  %v1511 = vld [vmem:[%s1506 + $0x20] sm:$0xff]
  %v1512 = vld [vmem:[%s1506 + $0x28] sm:$0xff]
  %v1513 = vld [vmem:[%s1506 + $0x30] sm:$0xff]
  %v1514 = vld [vmem:[%s1506 + $0x38] sm:$0xff]
  %v1515 = vld [vmem:[%s1506 + $0x40] sm:$0xff]
  %v1516 = vld [vmem:[%s1506 + $0x48] sm:$0xff]
  %v1517 = vld [vmem:[%s1506 + $0x50] sm:$0xff]
  %v1518 = vld [vmem:[%s1506 + $0x58] sm:$0xff]
  %v1519 = vld [vmem:[%s1506 + $0x60] sm:$0xff]
  %v1520 = vld [vmem:[%s1506 + $0x68] sm:$0xff]
  %v1521 = vld [vmem:[%s1506 + $0x70] sm:$0xff]
  %v1522 = vld [vmem:[%s1506 + $0x78] sm:$0xff]
  %v1523 = vld [vmem:[%s1506 + $0x80] sm:$0xff]
  %v1524 = vld [vmem:[%s1506 + $0x88] sm:$0xff]
  %v1525 = vld [vmem:[%s1506 + $0x90] sm:$0xff]
  %v1526 = vld [vmem:[%s1506 + $0x98] sm:$0xff]
  %v1527 = vld [vmem:[%s1506 + $0xa0] sm:$0xff]
  %v1528 = vld [vmem:[%s1506 + $0xa8] sm:$0xff]
  %v1529 = vld [vmem:[%s1506 + $0xb0] sm:$0xff]
  %v1530 = vld [vmem:[%s1506 + $0xb8] sm:$0xff]
  %v1531 = vld [vmem:[%s1506 + $0xc0] sm:$0xff]
  %v1532 = vld [vmem:[%s1506 + $0xc8] sm:$0xff]
  %v1533 = vld [vmem:[%s1506 + $0xd0] sm:$0xff]
  %v1534 = vld [vmem:[%s1506 + $0xd8] sm:$0xff]
  %v1535 = vld [vmem:[%s1506 + $0xe0] sm:$0xff]
  %v1536 = vld [vmem:[%s1506 + $0xe8] sm:$0xff]
  %v1537 = vld [vmem:[%s1506 + $0xf0] sm:$0xff]
  %v1538 = vld [vmem:[%s1506 + $0xf8] sm:$0xff]
  %v1539 = vld [vmem:[%s1506 + $0x100] sm:$0xff]
  %v1540 = vld [vmem:[%s1506 + $0x108] sm:$0xff]
  %v1541 = vld [vmem:[%s1506 + $0x110] sm:$0xff]
  %v1542 = vld [vmem:[%s1506 + $0x118] sm:$0xff]
  %v1543 = vld [vmem:[%s1506 + $0x120] sm:$0xff]
  %v1544 = vld [vmem:[%s1506 + $0x128] sm:$0xff]
  %v1545 = vld [vmem:[%s1506 + $0x130] sm:$0xff]
  %v1546 = vld [vmem:[%s1506 + $0x138] sm:$0xff]
  %v1547 = vld [vmem:[%s1506 + $0x140] sm:$0xff]
  %v1548 = vld [vmem:[%s1506 + $0x148] sm:$0xff]
  %v1549 = vld [vmem:[%s1506 + $0x150] sm:$0xff]
  %v1550 = vld [vmem:[%s1506 + $0x158] sm:$0xff]
  %v1551 = vld [vmem:[%s1506 + $0x160] sm:$0xff]
  %v1552 = vld [vmem:[%s1506 + $0x168] sm:$0xff]
  %v1553 = vld [vmem:[%s1506 + $0x170] sm:$0xff]
  %v1554 = vld [vmem:[%s1506 + $0x178] sm:$0xff]
  %v1555 = vld [vmem:[%s1506 + $0x180] sm:$0xff]
  %v1557 = vsel %vm70, %v1507, 0
  %v1560 = vsel %vm70, %v1508, 0
  %v1563 = vsel %vm70, %v1509, 0
  %v1566 = vsel %vm70, %v1510, 0
  %v1569 = vsel %vm70, %v1511, 0
  %v1572 = vsel %vm70, %v1512, 0
  %v1575 = vsel %vm70, %v1513, 0
  %v1578 = vsel %vm70, %v1514, 0
  %v1581 = vsel %vm70, %v1515, 0
  %v1584 = vsel %vm70, %v1516, 0
  %v1587 = vsel %vm70, %v1517, 0
  %v1590 = vsel %vm70, %v1518, 0
  %v1593 = vsel %vm70, %v1519, 0
  %v1596 = vsel %vm70, %v1520, 0
  %v1599 = vsel %vm70, %v1521, 0
  %v1602 = vsel %vm70, %v1522, 0
  %v1605 = vsel %vm70, %v1523, 0
  %v1608 = vsel %vm70, %v1524, 0
  %v1611 = vsel %vm70, %v1525, 0
  %v1614 = vsel %vm70, %v1526, 0
  %v1617 = vsel %vm70, %v1527, 0
  %v1620 = vsel %vm70, %v1528, 0
  %v1623 = vsel %vm70, %v1529, 0
  %v1626 = vsel %vm70, %v1530, 0
  %v1629 = vsel %vm70, %v1531, 0
  %v1632 = vsel %vm70, %v1532, 0
  %v1635 = vsel %vm70, %v1533, 0
  %v1638 = vsel %vm70, %v1534, 0
  %v1641 = vsel %vm70, %v1535, 0
  %v1644 = vsel %vm70, %v1536, 0
  %v1647 = vsel %vm70, %v1537, 0
  %v1650 = vsel %vm70, %v1538, 0
  %v1653 = vsel %vm70, %v1539, 0
  %v1656 = vsel %vm70, %v1540, 0
  %v1659 = vsel %vm70, %v1541, 0
  %v1662 = vsel %vm70, %v1542, 0
  %v1665 = vsel %vm70, %v1543, 0
  %v1668 = vsel %vm70, %v1544, 0
  %v1671 = vsel %vm70, %v1545, 0
  %v1674 = vsel %vm70, %v1546, 0
  %v1677 = vsel %vm70, %v1547, 0
  %v1680 = vsel %vm70, %v1548, 0
  %v1683 = vsel %vm70, %v1549, 0
  %v1686 = vsel %vm70, %v1550, 0
  %v1689 = vsel %vm70, %v1551, 0
  %v1692 = vsel %vm70, %v1552, 0
  %v1695 = vsel %vm70, %v1553, 0
  %v1698 = vsel %vm70, %v1554, 0
  %v1701 = vsel %vm70, %v1555, 0
  %1703 = vmatpush.msra.mxu0 0.0
  %1704 = vmatpush.msra.mxu0 0.0
  %1705 = vmatpush.msra.mxu0 0.0
  %1706 = vmatpush.msra.mxu0 0.0
  %1707 = vmatpush.msra.mxu0 0.0
  %1708 = vmatpush.msra.mxu0 0.0
  %1709 = vmatpush.msra.mxu0 0.0
  %1710 = vmatpush.msra.mxu0 0.0
  %1711 = vmatpush.msra.mxu0 0.0
  %1712 = vmatpush.msra.mxu0 0.0
  %1713 = vmatpush.msra.mxu0 0.0
  %1714 = vmatpush.msra.mxu0 0.0
  %1715 = vmatpush.msra.mxu0 0.0
  %1716 = vmatpush.msra.mxu0 0.0
  %1717 = vmatpush.msra.mxu0 %v220
  %1718 = vmatpush.msra.mxu0 %v17
  %1719 = vmatmul.f32.gmra.mxu0 %v1557
  %v1720 = vpop.f32.mrf.mxu0
  %v1721 = vadd.f32 0.0, %v1720
  %1722 = vmatmul.f32.gmra.mxu0 %v1560
  %v1723 = vpop.f32.mrf.mxu0
  %v1724 = vadd.f32 0.0, %v1723
  %1725 = vmatmul.f32.gmra.mxu0 %v1563
  %v1726 = vpop.f32.mrf.mxu0
  %v1727 = vadd.f32 0.0, %v1726
  %1728 = vmatmul.f32.gmra.mxu0 %v1566
  %v1729 = vpop.f32.mrf.mxu0
  %v1730 = vadd.f32 0.0, %v1729
  %1731 = vmatmul.f32.gmra.mxu0 %v1569
  %v1732 = vpop.f32.mrf.mxu0
  %v1733 = vadd.f32 0.0, %v1732
  %1734 = vmatmul.f32.gmra.mxu0 %v1572
  %v1735 = vpop.f32.mrf.mxu0
  %v1736 = vadd.f32 0.0, %v1735
  %1737 = vmatmul.f32.gmra.mxu0 %v1575
  %v1738 = vpop.f32.mrf.mxu0
  %v1739 = vadd.f32 0.0, %v1738
  %1740 = vmatmul.f32.gmra.mxu0 %v1578
  %v1741 = vpop.f32.mrf.mxu0
  %v1742 = vadd.f32 0.0, %v1741
  %1743 = vmatmul.f32.gmra.mxu0 %v1581
  %v1744 = vpop.f32.mrf.mxu0
  %v1745 = vadd.f32 0.0, %v1744
  %1746 = vmatmul.f32.gmra.mxu0 %v1584
  %v1747 = vpop.f32.mrf.mxu0
  %v1748 = vadd.f32 0.0, %v1747
  %1749 = vmatmul.f32.gmra.mxu0 %v1587
  %v1750 = vpop.f32.mrf.mxu0
  %v1751 = vadd.f32 0.0, %v1750
  %1752 = vmatmul.f32.gmra.mxu0 %v1590
  %v1753 = vpop.f32.mrf.mxu0
  %v1754 = vadd.f32 0.0, %v1753
  %1755 = vmatmul.f32.gmra.mxu0 %v1593
  %v1756 = vpop.f32.mrf.mxu0
  %v1757 = vadd.f32 0.0, %v1756
  %1758 = vmatmul.f32.gmra.mxu0 %v1596
  %v1759 = vpop.f32.mrf.mxu0
  %v1760 = vadd.f32 0.0, %v1759
  %1761 = vmatmul.f32.gmra.mxu0 %v1599
  %v1762 = vpop.f32.mrf.mxu0
  %v1763 = vadd.f32 0.0, %v1762
  %1764 = vmatmul.f32.gmra.mxu0 %v1602
  %v1765 = vpop.f32.mrf.mxu0
  %v1766 = vadd.f32 0.0, %v1765
  %1767 = vmatmul.f32.gmra.mxu0 %v1605
  %v1768 = vpop.f32.mrf.mxu0
  %v1769 = vadd.f32 0.0, %v1768
  %1770 = vmatmul.f32.gmra.mxu0 %v1608
  %v1771 = vpop.f32.mrf.mxu0
  %v1772 = vadd.f32 0.0, %v1771
  %1773 = vmatmul.f32.gmra.mxu0 %v1611
  %v1774 = vpop.f32.mrf.mxu0
  %v1775 = vadd.f32 0.0, %v1774
  %1776 = vmatmul.f32.gmra.mxu0 %v1614
  %v1777 = vpop.f32.mrf.mxu0
  %v1778 = vadd.f32 0.0, %v1777
  %1779 = vmatmul.f32.gmra.mxu0 %v1617
  %v1780 = vpop.f32.mrf.mxu0
  %v1781 = vadd.f32 0.0, %v1780
  %1782 = vmatmul.f32.gmra.mxu0 %v1620
  %v1783 = vpop.f32.mrf.mxu0
  %v1784 = vadd.f32 0.0, %v1783
  %1785 = vmatmul.f32.gmra.mxu0 %v1623
  %v1786 = vpop.f32.mrf.mxu0
  %v1787 = vadd.f32 0.0, %v1786
  %1788 = vmatmul.f32.gmra.mxu0 %v1626
  %v1789 = vpop.f32.mrf.mxu0
  %v1790 = vadd.f32 0.0, %v1789
  %1791 = vmatmul.f32.gmra.mxu0 %v1629
  %v1792 = vpop.f32.mrf.mxu0
  %v1793 = vadd.f32 0.0, %v1792
  %1794 = vmatmul.f32.gmra.mxu0 %v1632
  %v1795 = vpop.f32.mrf.mxu0
  %v1796 = vadd.f32 0.0, %v1795
  %1797 = vmatmul.f32.gmra.mxu0 %v1635
  %v1798 = vpop.f32.mrf.mxu0
  %v1799 = vadd.f32 0.0, %v1798
  %1800 = vmatmul.f32.gmra.mxu0 %v1638
  %v1801 = vpop.f32.mrf.mxu0
  %v1802 = vadd.f32 0.0, %v1801
  %1803 = vmatmul.f32.gmra.mxu0 %v1641
  %v1804 = vpop.f32.mrf.mxu0
  %v1805 = vadd.f32 0.0, %v1804
  %1806 = vmatmul.f32.gmra.mxu0 %v1644
  %v1807 = vpop.f32.mrf.mxu0
  %v1808 = vadd.f32 0.0, %v1807
  %1809 = vmatmul.f32.gmra.mxu0 %v1647
  %v1810 = vpop.f32.mrf.mxu0
  %v1811 = vadd.f32 0.0, %v1810
  %1812 = vmatmul.f32.gmra.mxu0 %v1650
  %v1813 = vpop.f32.mrf.mxu0
  %v1814 = vadd.f32 0.0, %v1813
  %1815 = vmatmul.f32.gmra.mxu0 %v1653
  %v1816 = vpop.f32.mrf.mxu0
  %v1817 = vadd.f32 0.0, %v1816
  %1818 = vmatmul.f32.gmra.mxu0 %v1656
  %v1819 = vpop.f32.mrf.mxu0
  %v1820 = vadd.f32 0.0, %v1819
  %1821 = vmatmul.f32.gmra.mxu0 %v1659
  %v1822 = vpop.f32.mrf.mxu0
  %v1823 = vadd.f32 0.0, %v1822
  %1824 = vmatmul.f32.gmra.mxu0 %v1662
  %v1825 = vpop.f32.mrf.mxu0
  %v1826 = vadd.f32 0.0, %v1825
  %1827 = vmatmul.f32.gmra.mxu0 %v1665
  %v1828 = vpop.f32.mrf.mxu0
  %v1829 = vadd.f32 0.0, %v1828
  %1830 = vmatmul.f32.gmra.mxu0 %v1668
  %v1831 = vpop.f32.mrf.mxu0
  %v1832 = vadd.f32 0.0, %v1831
  %1833 = vmatmul.f32.gmra.mxu0 %v1671
  %v1834 = vpop.f32.mrf.mxu0
  %v1835 = vadd.f32 0.0, %v1834
  %1836 = vmatmul.f32.gmra.mxu0 %v1674
  %v1837 = vpop.f32.mrf.mxu0
  %v1838 = vadd.f32 0.0, %v1837
  %1839 = vmatmul.f32.gmra.mxu0 %v1677
  %v1840 = vpop.f32.mrf.mxu0
  %v1841 = vadd.f32 0.0, %v1840
  %1842 = vmatmul.f32.gmra.mxu0 %v1680
  %v1843 = vpop.f32.mrf.mxu0
  %v1844 = vadd.f32 0.0, %v1843
  %1845 = vmatmul.f32.gmra.mxu0 %v1683
  %v1846 = vpop.f32.mrf.mxu0
  %v1847 = vadd.f32 0.0, %v1846
  %1848 = vmatmul.f32.gmra.mxu0 %v1686
  %v1849 = vpop.f32.mrf.mxu0
  %v1850 = vadd.f32 0.0, %v1849
  %1851 = vmatmul.f32.gmra.mxu0 %v1689
  %v1852 = vpop.f32.mrf.mxu0
  %v1853 = vadd.f32 0.0, %v1852
  %1854 = vmatmul.f32.gmra.mxu0 %v1692
  %v1855 = vpop.f32.mrf.mxu0
  %v1856 = vadd.f32 0.0, %v1855
  %1857 = vmatmul.f32.gmra.mxu0 %v1695
  %v1858 = vpop.f32.mrf.mxu0
  %v1859 = vadd.f32 0.0, %v1858
  %1860 = vmatmul.f32.gmra.mxu0 %v1698
  %v1861 = vpop.f32.mrf.mxu0
  %v1862 = vadd.f32 0.0, %v1861
  %1863 = vmatmul.f32.gmra.mxu0 %v1701
  %v1864 = vpop.f32.mrf.mxu0
  %v1865 = vadd.f32 0.0, %v1864
  %1866 = vdwg.mxu0
  %v1867 = vmul.f32 %v1721, %v387
  %v1868 = vmul.f32 %v1724, %v387
  %v1869 = vmul.f32 %v1727, %v387
  %v1870 = vmul.f32 %v1730, %v387
  %v1871 = vmul.f32 %v1733, %v387
  %v1872 = vmul.f32 %v1736, %v387
  %v1873 = vmul.f32 %v1739, %v387
  %v1874 = vmul.f32 %v1742, %v387
  %v1875 = vmul.f32 %v1745, %v387
  %v1876 = vmul.f32 %v1748, %v387
  %v1877 = vmul.f32 %v1751, %v387
  %v1878 = vmul.f32 %v1754, %v387
  %v1879 = vmul.f32 %v1757, %v387
  %v1880 = vmul.f32 %v1760, %v387
  %v1881 = vmul.f32 %v1763, %v387
  %v1882 = vmul.f32 %v1766, %v387
  %v1883 = vmul.f32 %v1769, %v387
  %v1884 = vmul.f32 %v1772, %v387
  %v1885 = vmul.f32 %v1775, %v387
  %v1886 = vmul.f32 %v1778, %v387
  %v1887 = vmul.f32 %v1781, %v387
  %v1888 = vmul.f32 %v1784, %v387
  %v1889 = vmul.f32 %v1787, %v387
  %v1890 = vmul.f32 %v1790, %v387
  %v1891 = vmul.f32 %v1793, %v387
  %v1892 = vmul.f32 %v1796, %v387
  %v1893 = vmul.f32 %v1799, %v387
  %v1894 = vmul.f32 %v1802, %v387
  %v1895 = vmul.f32 %v1805, %v387
  %v1896 = vmul.f32 %v1808, %v387
  %v1897 = vmul.f32 %v1811, %v387
  %v1898 = vmul.f32 %v1814, %v387
  %v1899 = vmul.f32 %v1817, %v387
  %v1900 = vmul.f32 %v1820, %v387
  %v1901 = vmul.f32 %v1823, %v387
  %v1902 = vmul.f32 %v1826, %v387
  %v1903 = vmul.f32 %v1829, %v387
  %v1904 = vmul.f32 %v1832, %v387
  %v1905 = vmul.f32 %v1835, %v387
  %v1906 = vmul.f32 %v1838, %v387
  %v1907 = vmul.f32 %v1841, %v387
  %v1908 = vmul.f32 %v1844, %v387
  %v1909 = vmul.f32 %v1847, %v387
  %v1910 = vmul.f32 %v1850, %v387
  %v1911 = vmul.f32 %v1853, %v387
  %v1912 = vmul.f32 %v1856, %v387
  %v1913 = vmul.f32 %v1859, %v387
  %v1914 = vmul.f32 %v1862, %v387
  %v1915 = vmul.f32 %v1865, %v387
  %v1916 = vadd.f32 %v1867, %v439
  %v1917 = vadd.f32 %v1868, %v439
  %v1918 = vadd.f32 %v1869, %v439
  %v1919 = vadd.f32 %v1870, %v439
  %v1920 = vadd.f32 %v1871, %v439
  %v1921 = vadd.f32 %v1872, %v439
  %v1922 = vadd.f32 %v1873, %v439
  %v1923 = vadd.f32 %v1874, %v439
  %v1924 = vadd.f32 %v1875, %v439
  %v1925 = vadd.f32 %v1876, %v439
  %v1926 = vadd.f32 %v1877, %v439
  %v1927 = vadd.f32 %v1878, %v439
  %v1928 = vadd.f32 %v1879, %v439
  %v1929 = vadd.f32 %v1880, %v439
  %v1930 = vadd.f32 %v1881, %v439
  %v1931 = vadd.f32 %v1882, %v439
  %v1932 = vadd.f32 %v1883, %v439
  %v1933 = vadd.f32 %v1884, %v439
  %v1934 = vadd.f32 %v1885, %v439
  %v1935 = vadd.f32 %v1886, %v439
  %v1936 = vadd.f32 %v1887, %v439
  %v1937 = vadd.f32 %v1888, %v439
  %v1938 = vadd.f32 %v1889, %v439
  %v1939 = vadd.f32 %v1890, %v439
  %v1940 = vadd.f32 %v1891, %v439
  %v1941 = vadd.f32 %v1892, %v439
  %v1942 = vadd.f32 %v1893, %v439
  %v1943 = vadd.f32 %v1894, %v439
  %v1944 = vadd.f32 %v1895, %v439
  %v1945 = vadd.f32 %v1896, %v439
  %v1946 = vadd.f32 %v1897, %v439
  %v1947 = vadd.f32 %v1898, %v439
  %v1948 = vadd.f32 %v1899, %v439
  %v1949 = vadd.f32 %v1900, %v439
  %v1950 = vadd.f32 %v1901, %v439
  %v1951 = vadd.f32 %v1902, %v439
  %v1952 = vadd.f32 %v1903, %v439
  %v1953 = vadd.f32 %v1904, %v439
  %v1954 = vadd.f32 %v1905, %v439
  %v1955 = vadd.f32 %v1906, %v439
  %v1956 = vadd.f32 %v1907, %v439
  %v1957 = vadd.f32 %v1908, %v439
  %v1958 = vadd.f32 %v1909, %v439
  %v1959 = vadd.f32 %v1910, %v439
  %v1960 = vadd.f32 %v1911, %v439
  %v1961 = vadd.f32 %v1912, %v439
  %v1962 = vadd.f32 %v1913, %v439
  %v1963 = vadd.f32 %v1914, %v439
  %v1964 = vadd.f32 %v1915, %v439
  %v1965 = vmax.f32 %v1457, %v1916
  %v1966 = vmax.f32 %v1458, %v1917
  %v1967 = vmax.f32 %v1459, %v1918
  %v1968 = vmax.f32 %v1460, %v1919
  %v1969 = vmax.f32 %v1461, %v1920
  %v1970 = vmax.f32 %v1462, %v1921
  %v1971 = vmax.f32 %v1463, %v1922
  %v1972 = vmax.f32 %v1464, %v1923
  %v1973 = vmax.f32 %v1465, %v1924
  %v1974 = vmax.f32 %v1466, %v1925
  %v1975 = vmax.f32 %v1467, %v1926
  %v1976 = vmax.f32 %v1468, %v1927
  %v1977 = vmax.f32 %v1469, %v1928
  %v1978 = vmax.f32 %v1470, %v1929
  %v1979 = vmax.f32 %v1471, %v1930
  %v1980 = vmax.f32 %v1472, %v1931
  %v1981 = vmax.f32 %v1473, %v1932
  %v1982 = vmax.f32 %v1474, %v1933
  %v1983 = vmax.f32 %v1475, %v1934
  %v1984 = vmax.f32 %v1476, %v1935
  %v1985 = vmax.f32 %v1477, %v1936
  %v1986 = vmax.f32 %v1478, %v1937
  %v1987 = vmax.f32 %v1479, %v1938
  %v1988 = vmax.f32 %v1480, %v1939
  %v1989 = vmax.f32 %v1481, %v1940
  %v1990 = vmax.f32 %v1482, %v1941
  %v1991 = vmax.f32 %v1483, %v1942
  %v1992 = vmax.f32 %v1484, %v1943
  %v1993 = vmax.f32 %v1485, %v1944
  %v1994 = vmax.f32 %v1486, %v1945
  %v1995 = vmax.f32 %v1487, %v1946
  %v1996 = vmax.f32 %v1488, %v1947
  %v1997 = vmax.f32 %v1489, %v1948
  %v1998 = vmax.f32 %v1490, %v1949
  %v1999 = vmax.f32 %v1491, %v1950
  %v2000 = vmax.f32 %v1492, %v1951
  %v2001 = vmax.f32 %v1493, %v1952
  %v2002 = vmax.f32 %v1494, %v1953
  %v2003 = vmax.f32 %v1495, %v1954
  %v2004 = vmax.f32 %v1496, %v1955
  %v2005 = vmax.f32 %v1497, %v1956
  %v2006 = vmax.f32 %v1498, %v1957
  %v2007 = vmax.f32 %v1499, %v1958
  %v2008 = vmax.f32 %v1500, %v1959
  %v2009 = vmax.f32 %v1501, %v1960
  %v2010 = vmax.f32 %v1502, %v1961
  %v2011 = vmax.f32 %v1503, %v1962
  %v2012 = vmax.f32 %v1504, %v1963
  %v2013 = vmax.f32 %v1505, %v1964
  %v2014 = vmax.f32 %v1965, 0.0
  %v2015 = vmax.f32 %v1966, 0.0
  %v2016 = vmax.f32 %v1967, 0.0
  %v2017 = vmax.f32 %v1968, 0.0
  %v2018 = vmax.f32 %v1969, 0.0
  %v2019 = vmax.f32 %v1970, 0.0
  %v2020 = vmax.f32 %v1971, 0.0
  %v2021 = vmax.f32 %v1972, 0.0
  %v2022 = vmax.f32 %v1973, 0.0
  %v2023 = vmax.f32 %v1974, 0.0
  %v2024 = vmax.f32 %v1975, 0.0
  %v2025 = vmax.f32 %v1976, 0.0
  %v2026 = vmax.f32 %v1977, 0.0
  %v2027 = vmax.f32 %v1978, 0.0
  %v2028 = vmax.f32 %v1979, 0.0
  %v2029 = vmax.f32 %v1980, 0.0
  %v2030 = vmax.f32 %v1981, 0.0
  %v2031 = vmax.f32 %v1982, 0.0
  %v2032 = vmax.f32 %v1983, 0.0
  %v2033 = vmax.f32 %v1984, 0.0
  %v2034 = vmax.f32 %v1985, 0.0
  %v2035 = vmax.f32 %v1986, 0.0
  %v2036 = vmax.f32 %v1987, 0.0
  %v2037 = vmax.f32 %v1988, 0.0
  %v2038 = vmax.f32 %v1989, 0.0
  %v2039 = vmax.f32 %v1990, 0.0
  %v2040 = vmax.f32 %v1991, 0.0
  %v2041 = vmax.f32 %v1992, 0.0
  %v2042 = vmax.f32 %v1993, 0.0
  %v2043 = vmax.f32 %v1994, 0.0
  %v2044 = vmax.f32 %v1995, 0.0
  %v2045 = vmax.f32 %v1996, 0.0
  %v2046 = vmax.f32 %v1997, 0.0
  %v2047 = vmax.f32 %v1998, 0.0
  %v2048 = vmax.f32 %v1999, 0.0
  %v2049 = vmax.f32 %v2000, 0.0
  %v2050 = vmax.f32 %v2001, 0.0
  %v2051 = vmax.f32 %v2002, 0.0
  %v2052 = vmax.f32 %v2003, 0.0
  %v2053 = vmax.f32 %v2004, 0.0
  %v2054 = vmax.f32 %v2005, 0.0
  %v2055 = vmax.f32 %v2006, 0.0
  %v2056 = vmax.f32 %v2007, 0.0
  %v2057 = vmax.f32 %v2008, 0.0
  %v2058 = vmax.f32 %v2009, 0.0
  %v2059 = vmax.f32 %v2010, 0.0
  %v2060 = vmax.f32 %v2011, 0.0
  %v2061 = vmax.f32 %v2012, 0.0
  %v2062 = vmax.f32 %v2013, 0.0
  %v2063 = vpack.c.bf16 %v2014, %v2014
  %v2064 = vpack.c.bf16 %v2015, %v2015
  %v2065 = vpack.c.bf16 %v2016, %v2016
  %v2066 = vpack.c.bf16 %v2017, %v2017
  %v2067 = vpack.c.bf16 %v2018, %v2018
  %v2068 = vpack.c.bf16 %v2019, %v2019
  %v2069 = vpack.c.bf16 %v2020, %v2020
  %v2070 = vpack.c.bf16 %v2021, %v2021
  %v2071 = vpack.c.bf16 %v2022, %v2022
  %v2072 = vpack.c.bf16 %v2023, %v2023
  %v2073 = vpack.c.bf16 %v2024, %v2024
  %v2074 = vpack.c.bf16 %v2025, %v2025
  %v2075 = vpack.c.bf16 %v2026, %v2026
  %v2076 = vpack.c.bf16 %v2027, %v2027
  %v2077 = vpack.c.bf16 %v2028, %v2028
  %v2078 = vpack.c.bf16 %v2029, %v2029
  %v2079 = vpack.c.bf16 %v2030, %v2030
  %v2080 = vpack.c.bf16 %v2031, %v2031
  %v2081 = vpack.c.bf16 %v2032, %v2032
  %v2082 = vpack.c.bf16 %v2033, %v2033
  %v2083 = vpack.c.bf16 %v2034, %v2034
  %v2084 = vpack.c.bf16 %v2035, %v2035
  %v2085 = vpack.c.bf16 %v2036, %v2036
  %v2086 = vpack.c.bf16 %v2037, %v2037
  %v2087 = vpack.c.bf16 %v2038, %v2038
  %v2088 = vpack.c.bf16 %v2039, %v2039
  %v2089 = vpack.c.bf16 %v2040, %v2040
  %v2090 = vpack.c.bf16 %v2041, %v2041
  %v2091 = vpack.c.bf16 %v2042, %v2042
  %v2092 = vpack.c.bf16 %v2043, %v2043
  %v2093 = vpack.c.bf16 %v2044, %v2044
  %v2094 = vpack.c.bf16 %v2045, %v2045
  %v2095 = vpack.c.bf16 %v2046, %v2046
  %v2096 = vpack.c.bf16 %v2047, %v2047
  %v2097 = vpack.c.bf16 %v2048, %v2048
  %v2098 = vpack.c.bf16 %v2049, %v2049
  %v2099 = vpack.c.bf16 %v2050, %v2050
  %v2100 = vpack.c.bf16 %v2051, %v2051
  %v2101 = vpack.c.bf16 %v2052, %v2052
  %v2102 = vpack.c.bf16 %v2053, %v2053
  %v2103 = vpack.c.bf16 %v2054, %v2054
  %v2104 = vpack.c.bf16 %v2055, %v2055
  %v2105 = vpack.c.bf16 %v2056, %v2056
  %v2106 = vpack.c.bf16 %v2057, %v2057
  %v2107 = vpack.c.bf16 %v2058, %v2058
  %v2108 = vpack.c.bf16 %v2059, %v2059
  %v2109 = vpack.c.bf16 %v2060, %v2060
  %v2110 = vpack.c.bf16 %v2061, %v2061
  %v2111 = vpack.c.bf16 %v2062, %v2062
  %vm2112 = vcmask 257024
  %2113 = vst.msk [vmem:[%s4] sm:$0xf] %vm2112, %v2063
  %2114 = vst.msk [vmem:[%s4 + $0x4] sm:$0xf] %vm2112, %v2064
  %2115 = vst.msk [vmem:[%s4 + $0x8] sm:$0xf] %vm2112, %v2065
  %2116 = vst.msk [vmem:[%s4 + $0xc] sm:$0xf] %vm2112, %v2066
  %2117 = vst.msk [vmem:[%s4 + $0x10] sm:$0xf] %vm2112, %v2067
  %2118 = vst.msk [vmem:[%s4 + $0x14] sm:$0xf] %vm2112, %v2068
  %2119 = vst.msk [vmem:[%s4 + $0x18] sm:$0xf] %vm2112, %v2069
  %2120 = vst.msk [vmem:[%s4 + $0x1c] sm:$0xf] %vm2112, %v2070
  %2121 = vst.msk [vmem:[%s4 + $0x20] sm:$0xf] %vm2112, %v2071
  %2122 = vst.msk [vmem:[%s4 + $0x24] sm:$0xf] %vm2112, %v2072
  %2123 = vst.msk [vmem:[%s4 + $0x28] sm:$0xf] %vm2112, %v2073
  %2124 = vst.msk [vmem:[%s4 + $0x2c] sm:$0xf] %vm2112, %v2074
  %2125 = vst.msk [vmem:[%s4 + $0x30] sm:$0xf] %vm2112, %v2075
  %2126 = vst.msk [vmem:[%s4 + $0x34] sm:$0xf] %vm2112, %v2076
  %2127 = vst.msk [vmem:[%s4 + $0x38] sm:$0xf] %vm2112, %v2077
  %2128 = vst.msk [vmem:[%s4 + $0x3c] sm:$0xf] %vm2112, %v2078
  %2129 = vst.msk [vmem:[%s4 + $0x40] sm:$0xf] %vm2112, %v2079
  %2130 = vst.msk [vmem:[%s4 + $0x44] sm:$0xf] %vm2112, %v2080
  %2131 = vst.msk [vmem:[%s4 + $0x48] sm:$0xf] %vm2112, %v2081
  %2132 = vst.msk [vmem:[%s4 + $0x4c] sm:$0xf] %vm2112, %v2082
  %2133 = vst.msk [vmem:[%s4 + $0x50] sm:$0xf] %vm2112, %v2083
  %2134 = vst.msk [vmem:[%s4 + $0x54] sm:$0xf] %vm2112, %v2084
  %2135 = vst.msk [vmem:[%s4 + $0x58] sm:$0xf] %vm2112, %v2085
  %2136 = vst.msk [vmem:[%s4 + $0x5c] sm:$0xf] %vm2112, %v2086
  %2137 = vst.msk [vmem:[%s4 + $0x60] sm:$0xf] %vm2112, %v2087
  %2138 = vst.msk [vmem:[%s4 + $0x64] sm:$0xf] %vm2112, %v2088
  %2139 = vst.msk [vmem:[%s4 + $0x68] sm:$0xf] %vm2112, %v2089
  %2140 = vst.msk [vmem:[%s4 + $0x6c] sm:$0xf] %vm2112, %v2090
  %2141 = vst.msk [vmem:[%s4 + $0x70] sm:$0xf] %vm2112, %v2091
  %2142 = vst.msk [vmem:[%s4 + $0x74] sm:$0xf] %vm2112, %v2092
  %2143 = vst.msk [vmem:[%s4 + $0x78] sm:$0xf] %vm2112, %v2093
  %2144 = vst.msk [vmem:[%s4 + $0x7c] sm:$0xf] %vm2112, %v2094
  %2145 = vst.msk [vmem:[%s4 + $0x80] sm:$0xf] %vm2112, %v2095
  %2146 = vst.msk [vmem:[%s4 + $0x84] sm:$0xf] %vm2112, %v2096
  %2147 = vst.msk [vmem:[%s4 + $0x88] sm:$0xf] %vm2112, %v2097
  %2148 = vst.msk [vmem:[%s4 + $0x8c] sm:$0xf] %vm2112, %v2098
  %2149 = vst.msk [vmem:[%s4 + $0x90] sm:$0xf] %vm2112, %v2099
  %2150 = vst.msk [vmem:[%s4 + $0x94] sm:$0xf] %vm2112, %v2100
  %2151 = vst.msk [vmem:[%s4 + $0x98] sm:$0xf] %vm2112, %v2101
  %2152 = vst.msk [vmem:[%s4 + $0x9c] sm:$0xf] %vm2112, %v2102
  %2153 = vst.msk [vmem:[%s4 + $0xa0] sm:$0xf] %vm2112, %v2103
  %2154 = vst.msk [vmem:[%s4 + $0xa4] sm:$0xf] %vm2112, %v2104
  %2155 = vst.msk [vmem:[%s4 + $0xa8] sm:$0xf] %vm2112, %v2105
  %2156 = vst.msk [vmem:[%s4 + $0xac] sm:$0xf] %vm2112, %v2106
  %2157 = vst.msk [vmem:[%s4 + $0xb0] sm:$0xf] %vm2112, %v2107
  %2158 = vst.msk [vmem:[%s4 + $0xb4] sm:$0xf] %vm2112, %v2108
  %2159 = vst.msk [vmem:[%s4 + $0xb8] sm:$0xf] %vm2112, %v2109
  %2160 = vst.msk [vmem:[%s4 + $0xbc] sm:$0xf] %vm2112, %v2110
  %2161 = vst.msk [vmem:[%s4 + $0xc0] sm:$0xf] %vm2112, %v2111
  // Predicated region
  $region18: #{cnn_forward.3} parent=0 // pred_check
    _
  $region19: #{cnn_forward.3} parent=0 // pred_check_branch
    %2163 = sbr.rel (0) target = $region21
  $region20: #{cnn_forward.3} parent=0 // pred_region
    _
  $region21: #{cnn_forward.3} parent=0 // pred_fallthru
    _
  // Predicated region
  $region22: #{cnn_forward.3} parent=0 // pred_check
    _
  $region23: #{cnn_forward.3} parent=0 // pred_check_branch
    %2165 = sbr.rel (0) target = $region25
  $region24: #{cnn_forward.3} parent=0 // pred_region
    _
  $region25: #{cnn_forward.3} parent=0 // pred_fallthru
    _

// kernel: cnn_forward.4
$region0: #{cnn_forward.4}
  #allocation0 [shape = 'u32[]', space=smem, size = 0x4, offset = 0x4, fixed_abs, tag = 'smem constant byte address 0x4 - core index']
  #allocation1 [shape = 'u32[72,128]{1,0:T(1,128)}', space=vmem, size = 0x9000, scoped, tag = 'internal scratch']
  %s0 = inlined_call_operand.vmem [shape: bf16[4,104,288], index: 0, kind: input, shape index: {}]
  %s1 = inlined_call_operand.vmem [shape: bf16[288,128], index: 1, kind: input, shape index: {}]
  %s2 = inlined_call_operand.vmem [shape: f32[1,128], index: 2, kind: input, shape index: {}]
  %s3 = inlined_call_operand.vmem [shape: f32[1,128], index: 3, kind: input, shape index: {}]
  %s4 = inlined_call_operand.vmem [shape: bf16[104,128], index: 4, kind: output, shape index: {}]
  %s5 = sld [smem:[#allocation0]]
  $region26: #{cnn_forward.4} parent=0
    _
  %s7 = ssub.s32 1, %s5
  %s8 = scalar_select 0, %s7, %s5
  // Predicated region
  $region2: #{cnn_forward.4} parent=0 // pred_check
    _
  $region3: #{cnn_forward.4} parent=0 // pred_check_branch
    %10 = sbr.rel (0) target = $region5
  $region4: #{cnn_forward.4} parent=0 // pred_region
    _
  $region5: #{cnn_forward.4} parent=0 // pred_fallthru
    _
  // Predicated region
  $region6: #{cnn_forward.4} parent=0 // pred_check
    _
  $region7: #{cnn_forward.4} parent=0 // pred_check_branch
    %12 = sbr.rel (0) target = $region9
  $region8: #{cnn_forward.4} parent=0 // pred_region
    _
  $region9: #{cnn_forward.4} parent=0 // pred_fallthru
    _
  // Predicated region
  $region10: #{cnn_forward.4} parent=0 // pred_check
    _
  $region11: #{cnn_forward.4} parent=0 // pred_check_branch
    %14 = sbr.rel (0) target = $region13
  $region12: #{cnn_forward.4} parent=0 // pred_region
    _
  $region13: #{cnn_forward.4} parent=0 // pred_fallthru
    _
  // Predicated region
  $region14: #{cnn_forward.4} parent=0 // pred_check
    _
  $region15: #{cnn_forward.4} parent=0 // pred_check_branch
    %16 = sbr.rel (0) target = $region17
  $region16: #{cnn_forward.4} parent=0 // pred_region
    _
  $region17: #{cnn_forward.4} parent=0 // pred_fallthru
    _
  %v18 = vld [vmem:[%s1] sm:$0xf]
  %v19 = vld [vmem:[%s1 + $0x4] sm:$0xf]
  %v20 = vld [vmem:[%s1 + $0x8] sm:$0xf]
  %v21 = vld [vmem:[%s1 + $0xc] sm:$0xf]
  %v22 = vld [vmem:[%s1 + $0x10] sm:$0xf]
  %v23 = vld [vmem:[%s1 + $0x14] sm:$0xf]
  %v24 = vld [vmem:[%s1 + $0x18] sm:$0xf]
  %v25 = vld [vmem:[%s1 + $0x1c] sm:$0xf]
  %v26 = vld [vmem:[%s1 + $0x20] sm:$0xf]
  %v27 = vld [vmem:[%s1 + $0x24] sm:$0xf]
  %v28 = vld [vmem:[%s1 + $0x28] sm:$0xf]
  %v29 = vld [vmem:[%s1 + $0x2c] sm:$0xf]
  %v30 = vld [vmem:[%s1 + $0x30] sm:$0xf]
  %v31 = vld [vmem:[%s1 + $0x34] sm:$0xf]
  %v32 = vld [vmem:[%s1 + $0x38] sm:$0xf]
  %v33 = vld [vmem:[%s1 + $0x3c] sm:$0xf]
  %v34 = vld [vmem:[%s1 + $0x40] sm:$0xf]
  %v35 = vld [vmem:[%s1 + $0x44] sm:$0xf]
  %v36 = vld [vmem:[%s1 + $0x48] sm:$0xf]
  %v37 = vld [vmem:[%s1 + $0x4c] sm:$0xf]
  %v38 = vld [vmem:[%s1 + $0x50] sm:$0xf]
  %v39 = vld [vmem:[%s1 + $0x54] sm:$0xf]
  %v40 = vld [vmem:[%s1 + $0x58] sm:$0xf]
  %v41 = vld [vmem:[%s1 + $0x5c] sm:$0xf]
  %v42 = vld [vmem:[%s1 + $0x60] sm:$0xf]
  %v43 = vld [vmem:[%s1 + $0x64] sm:$0xf]
  %v44 = vld [vmem:[%s1 + $0x68] sm:$0xf]
  %v45 = vld [vmem:[%s1 + $0x6c] sm:$0xf]
  %v46 = vld [vmem:[%s1 + $0x70] sm:$0xf]
  %v47 = vld [vmem:[%s1 + $0x74] sm:$0xf]
  %v48 = vld [vmem:[%s1 + $0x78] sm:$0xf]
  %v49 = vld [vmem:[%s1 + $0x7c] sm:$0xf]
  %v50 = vld [vmem:[%s1 + $0x80] sm:$0xf]
  %v51 = vld [vmem:[%s1 + $0x84] sm:$0xf]
  %v52 = vld [vmem:[%s1 + $0x88] sm:$0xf]
  %v53 = vld [vmem:[%s1 + $0x8c] sm:$0xf]
  %v54 = vld [vmem:[%s2] sm:$0x1]
  %v55 = vld [vmem:[%s3] sm:$0x1]
  %v56 = vld [vmem:[%s0] sm:$0xff]
  %v57 = vld [vmem:[%s0 + $0x8] sm:$0xf]
  %v58 = vld [vmem:[%s0 + $0xc] sm:$0xff]
  %v59 = vld [vmem:[%s0 + $0x14] sm:$0xf]
  %v60 = vld [vmem:[%s0 + $0x18] sm:$0xff]
  %v61 = vld [vmem:[%s0 + $0x20] sm:$0xf]
  %v62 = vld [vmem:[%s0 + $0x24] sm:$0xff]
  %v63 = vld [vmem:[%s0 + $0x2c] sm:$0xf]
  %v64 = vld [vmem:[%s0 + $0x30] sm:$0xff]
  %v65 = vld [vmem:[%s0 + $0x38] sm:$0xf]
  %v66 = vld [vmem:[%s0 + $0x3c] sm:$0xff]
  %v67 = vld [vmem:[%s0 + $0x44] sm:$0xf]
  %v68 = vld [vmem:[%s0 + $0x48] sm:$0xff]
  %v69 = vld [vmem:[%s0 + $0x50] sm:$0xf]
  %v70 = vld [vmem:[%s0 + $0x54] sm:$0xff]
  %v71 = vld [vmem:[%s0 + $0x5c] sm:$0xf]
  %v72 = vld [vmem:[%s0 + $0x60] sm:$0xff]
  %v73 = vld [vmem:[%s0 + $0x68] sm:$0xf]
  %v74 = vld [vmem:[%s0 + $0x6c] sm:$0xff]
  %v75 = vld [vmem:[%s0 + $0x74] sm:$0xf]
  %v76 = vld [vmem:[%s0 + $0x78] sm:$0xff]
  %v77 = vld [vmem:[%s0 + $0x80] sm:$0xf]
  %v78 = vld [vmem:[%s0 + $0x84] sm:$0xff]
  %v79 = vld [vmem:[%s0 + $0x8c] sm:$0xf]
  %v80 = vld [vmem:[%s0 + $0x90] sm:$0xff]
  %v81 = vld [vmem:[%s0 + $0x98] sm:$0xf]
  %v108 = vunpack.c.l.b16 %v56
  %v109 = vunpack.c.h.b16 %v56
  %v110 = vunpack.c.l.b16 %v57
  %v111 = vunpack.c.l.b16 %v58
  %v112 = vunpack.c.h.b16 %v58
  %v113 = vunpack.c.l.b16 %v59
  %v114 = vunpack.c.l.b16 %v60
  %v115 = vunpack.c.h.b16 %v60
  %v116 = vunpack.c.l.b16 %v61
  %v117 = vunpack.c.l.b16 %v62
  %v118 = vunpack.c.h.b16 %v62
  %v119 = vunpack.c.l.b16 %v63
  %v120 = vunpack.c.l.b16 %v64
  %v121 = vunpack.c.h.b16 %v64
  %v122 = vunpack.c.l.b16 %v65
  %v123 = vunpack.c.l.b16 %v66
  %v124 = vunpack.c.h.b16 %v66
  %v125 = vunpack.c.l.b16 %v67
  %v126 = vunpack.c.l.b16 %v68
  %v127 = vunpack.c.h.b16 %v68
  %v128 = vunpack.c.l.b16 %v69
  %v129 = vunpack.c.l.b16 %v70
  %v130 = vunpack.c.h.b16 %v70
  %v131 = vunpack.c.l.b16 %v71
  %v132 = vunpack.c.l.b16 %v72
  %v133 = vunpack.c.h.b16 %v72
  %v134 = vunpack.c.l.b16 %v73
  %v135 = vunpack.c.l.b16 %v74
  %v136 = vunpack.c.h.b16 %v74
  %v137 = vunpack.c.l.b16 %v75
  %v138 = vunpack.c.l.b16 %v76
  %v139 = vunpack.c.h.b16 %v76
  %v140 = vunpack.c.l.b16 %v77
  %v141 = vunpack.c.l.b16 %v78
  %v142 = vunpack.c.h.b16 %v78
  %v143 = vunpack.c.l.b16 %v79
  %v144 = vunpack.c.l.b16 %v80
  %v145 = vunpack.c.h.b16 %v80
  %v146 = vunpack.c.l.b16 %v81
  %v147 = vpack.c.b16 %v111, %v108
  %v148 = vpack.c.b16 %v112, %v109
  %v149 = vpack.c.b16 %v113, %v110
  %v150 = vpack.c.b16 %v117, %v114
  %v151 = vpack.c.b16 %v118, %v115
  %v152 = vpack.c.b16 %v119, %v116
  %v153 = vpack.c.b16 %v123, %v120
  %v154 = vpack.c.b16 %v124, %v121
  %v155 = vpack.c.b16 %v125, %v122
  %v156 = vpack.c.b16 %v129, %v126
  %v157 = vpack.c.b16 %v130, %v127
  %v158 = vpack.c.b16 %v131, %v128
  %v159 = vpack.c.b16 %v135, %v132
  %v160 = vpack.c.b16 %v136, %v133
  %v161 = vpack.c.b16 %v137, %v134
  %v162 = vpack.c.b16 %v141, %v138
  %v163 = vpack.c.b16 %v142, %v139
  %v164 = vpack.c.b16 %v143, %v140
  %v165 = vpack.c.b16 %v144, %v144
  %v166 = vpack.c.b16 %v145, %v145
  %v167 = vpack.c.b16 %v146, %v146
  %v218 = vunpack.c.l.b16 %v18
  %v219 = vunpack.c.l.b16 %v19
  %v220 = vunpack.c.l.b16 %v20
  %v221 = vunpack.c.l.b16 %v21
  %v222 = vunpack.c.l.b16 %v22
  %v223 = vunpack.c.l.b16 %v23
  %v224 = vunpack.c.l.b16 %v24
  %v225 = vunpack.c.l.b16 %v25
  %v226 = vunpack.c.l.b16 %v26
  %v227 = vunpack.c.l.b16 %v27
  %v228 = vunpack.c.l.b16 %v28
  %v229 = vunpack.c.l.b16 %v29
  %v230 = vunpack.c.l.b16 %v30
  %v231 = vunpack.c.l.b16 %v31
  %v232 = vunpack.c.l.b16 %v32
  %v233 = vunpack.c.l.b16 %v33
  %v234 = vunpack.c.l.b16 %v34
  %v235 = vunpack.c.l.b16 %v35
  %v236 = vunpack.c.l.b16 %v36
  %v237 = vunpack.c.l.b16 %v37
  %v238 = vunpack.c.l.b16 %v38
  %v239 = vunpack.c.l.b16 %v39
  %v240 = vunpack.c.l.b16 %v40
  %v241 = vunpack.c.l.b16 %v41
  %v242 = vunpack.c.l.b16 %v42
  %v243 = vunpack.c.l.b16 %v43
  %v244 = vunpack.c.l.b16 %v44
  %v245 = vunpack.c.l.b16 %v45
  %v246 = vunpack.c.l.b16 %v46
  %v247 = vunpack.c.l.b16 %v47
  %v248 = vunpack.c.l.b16 %v48
  %v249 = vunpack.c.l.b16 %v49
  %v250 = vunpack.c.l.b16 %v50
  %v251 = vunpack.c.l.b16 %v51
  %v252 = vunpack.c.l.b16 %v52
  %v253 = vunpack.c.l.b16 %v53
  %v254 = vpack.c.b16 %v219, %v218
  %v255 = vpack.c.b16 %v221, %v220
  %v256 = vpack.c.b16 %v223, %v222
  %v257 = vpack.c.b16 %v225, %v224
  %v258 = vpack.c.b16 %v227, %v226
  %v259 = vpack.c.b16 %v229, %v228
  %v260 = vpack.c.b16 %v231, %v230
  %v261 = vpack.c.b16 %v233, %v232
  %v262 = vpack.c.b16 %v235, %v234
  %v263 = vpack.c.b16 %v237, %v236
  %v264 = vpack.c.b16 %v239, %v238
  %v265 = vpack.c.b16 %v241, %v240
  %v266 = vpack.c.b16 %v243, %v242
  %v267 = vpack.c.b16 %v245, %v244
  %v268 = vpack.c.b16 %v247, %v246
  %v269 = vpack.c.b16 %v249, %v248
  %v270 = vpack.c.b16 %v251, %v250
  %v271 = vpack.c.b16 %v253, %v252
  %vm290 = vcmask 261120
  %v292 = vsel %vm290, %v149, 0
  %v295 = vsel %vm290, %v152, 0
  %v298 = vsel %vm290, %v155, 0
  %v301 = vsel %vm290, %v158, 0
  %v304 = vsel %vm290, %v161, 0
  %v307 = vsel %vm290, %v164, 0
  %v310 = vsel %vm290, %v167, 0
  %312 = vmatpush.bf16.msra.mxu0 %v261
  %313 = vmatpush.bf16.msra.mxu0 %v260
  %314 = vmatpush.bf16.msra.mxu0 %v259
  %315 = vmatpush.bf16.msra.mxu0 %v258
  %316 = vmatpush.bf16.msra.mxu0 %v257
  %317 = vmatpush.bf16.msra.mxu0 %v256
  %318 = vmatpush.bf16.msra.mxu0 %v255
  %319 = vmatpush.bf16.msra.mxu0 %v254
  %320 = vmatmul.bf16.gmra.mxu0 %v147
  %v321 = vpop.f32.mrf.mxu0
  %v322 = vadd.f32 0.0, %v321
  %v323 = vpop.f32.mrf.mxu0
  %v324 = vadd.f32 0.0, %v323
  %325 = vmatmul.bf16.gmra.mxu0 %v150
  %v326 = vpop.f32.mrf.mxu0
  %v327 = vadd.f32 0.0, %v326
  %v328 = vpop.f32.mrf.mxu0
  %v329 = vadd.f32 0.0, %v328
  %330 = vmatmul.bf16.gmra.mxu0 %v153
  %v331 = vpop.f32.mrf.mxu0
  %v332 = vadd.f32 0.0, %v331
  %v333 = vpop.f32.mrf.mxu0
  %v334 = vadd.f32 0.0, %v333
  %335 = vmatmul.bf16.gmra.mxu0 %v156
  %v336 = vpop.f32.mrf.mxu0
  %v337 = vadd.f32 0.0, %v336
  %v338 = vpop.f32.mrf.mxu0
  %v339 = vadd.f32 0.0, %v338
  %340 = vmatmul.bf16.gmra.mxu0 %v159
  %v341 = vpop.f32.mrf.mxu0
  %v342 = vadd.f32 0.0, %v341
  %v343 = vpop.f32.mrf.mxu0
  %v344 = vadd.f32 0.0, %v343
  %345 = vmatmul.bf16.gmra.mxu0 %v162
  %v346 = vpop.f32.mrf.mxu0
  %v347 = vadd.f32 0.0, %v346
  %v348 = vpop.f32.mrf.mxu0
  %v349 = vadd.f32 0.0, %v348
  %350 = vmatmul.bf16.gmra.mxu0 %v165
  %v351 = vpop.f32.mrf.mxu0
  %v352 = vadd.f32 0.0, %v351
  %v353 = vpop.f32.mrf.mxu0
  %354 = vdwg.mxu0
  %355 = vmatpush.bf16.msra.mxu0 %v269
  %356 = vmatpush.bf16.msra.mxu0 %v268
  %357 = vmatpush.bf16.msra.mxu0 %v267
  %358 = vmatpush.bf16.msra.mxu0 %v266
  %359 = vmatpush.bf16.msra.mxu0 %v265
  %360 = vmatpush.bf16.msra.mxu0 %v264
  %361 = vmatpush.bf16.msra.mxu0 %v263
  %362 = vmatpush.bf16.msra.mxu0 %v262
  %363 = vmatmul.bf16.gmra.mxu0 %v148
  %v364 = vpop.f32.mrf.mxu0
  %v365 = vadd.f32 %v322, %v364
  %v366 = vpop.f32.mrf.mxu0
  %v367 = vadd.f32 %v324, %v366
  %368 = vmatmul.bf16.gmra.mxu0 %v151
  %v369 = vpop.f32.mrf.mxu0
  %v370 = vadd.f32 %v327, %v369
  %v371 = vpop.f32.mrf.mxu0
  %v372 = vadd.f32 %v329, %v371
  %373 = vmatmul.bf16.gmra.mxu0 %v154
  %v374 = vpop.f32.mrf.mxu0
  %v375 = vadd.f32 %v332, %v374
  %v376 = vpop.f32.mrf.mxu0
  %v377 = vadd.f32 %v334, %v376
  %378 = vmatmul.bf16.gmra.mxu0 %v157
  %v379 = vpop.f32.mrf.mxu0
  %v380 = vadd.f32 %v337, %v379
  %v381 = vpop.f32.mrf.mxu0
  %v382 = vadd.f32 %v339, %v381
  %383 = vmatmul.bf16.gmra.mxu0 %v160
  %v384 = vpop.f32.mrf.mxu0
  %v385 = vadd.f32 %v342, %v384
  %v386 = vpop.f32.mrf.mxu0
  %v387 = vadd.f32 %v344, %v386
  %388 = vmatmul.bf16.gmra.mxu0 %v163
  %v389 = vpop.f32.mrf.mxu0
  %v390 = vadd.f32 %v347, %v389
  %v391 = vpop.f32.mrf.mxu0
  %v392 = vadd.f32 %v349, %v391
  %393 = vmatmul.bf16.gmra.mxu0 %v166
  %v394 = vpop.f32.mrf.mxu0
  %v395 = vadd.f32 %v352, %v394
  %v396 = vpop.f32.mrf.mxu0
  %397 = vdwg.mxu0
  %398 = vmatpush.bf16.msra.mxu0 0
  %399 = vmatpush.bf16.msra.mxu0 0
  %400 = vmatpush.bf16.msra.mxu0 0
  %401 = vmatpush.bf16.msra.mxu0 0
  %402 = vmatpush.bf16.msra.mxu0 0
  %403 = vmatpush.bf16.msra.mxu0 0
  %404 = vmatpush.bf16.msra.mxu0 %v271
  %405 = vmatpush.bf16.msra.mxu0 %v270
  %406 = vmatmul.bf16.gmra.mxu0 %v292
  %v407 = vpop.f32.mrf.mxu0
  %v408 = vadd.f32 %v365, %v407
  %v409 = vpop.f32.mrf.mxu0
  %v410 = vadd.f32 %v367, %v409
  %411 = vmatmul.bf16.gmra.mxu0 %v295
  %v412 = vpop.f32.mrf.mxu0
  %v413 = vadd.f32 %v370, %v412
  %v414 = vpop.f32.mrf.mxu0
  %v415 = vadd.f32 %v372, %v414
  %416 = vmatmul.bf16.gmra.mxu0 %v298
  %v417 = vpop.f32.mrf.mxu0
  %v418 = vadd.f32 %v375, %v417
  %v419 = vpop.f32.mrf.mxu0
  %v420 = vadd.f32 %v377, %v419
  %421 = vmatmul.bf16.gmra.mxu0 %v301
  %v422 = vpop.f32.mrf.mxu0
  %v423 = vadd.f32 %v380, %v422
  %v424 = vpop.f32.mrf.mxu0
  %v425 = vadd.f32 %v382, %v424
  %426 = vmatmul.bf16.gmra.mxu0 %v304
  %v427 = vpop.f32.mrf.mxu0
  %v428 = vadd.f32 %v385, %v427
  %v429 = vpop.f32.mrf.mxu0
  %v430 = vadd.f32 %v387, %v429
  %431 = vmatmul.bf16.gmra.mxu0 %v307
  %v432 = vpop.f32.mrf.mxu0
  %v433 = vadd.f32 %v390, %v432
  %v434 = vpop.f32.mrf.mxu0
  %v435 = vadd.f32 %v392, %v434
  %436 = vmatmul.bf16.gmra.mxu0 %v310
  %v437 = vpop.f32.mrf.mxu0
  %v438 = vadd.f32 %v395, %v437
  %v439 = vpop.f32.mrf.mxu0
  %440 = vdwg.mxu0
  %v442 = vperm.slane %v54, 0
  %v444 = vmul.f32 %v408, %v442
  %v445 = vmul.f32 %v410, %v442
  %v446 = vmul.f32 %v413, %v442
  %v447 = vmul.f32 %v415, %v442
  %v448 = vmul.f32 %v418, %v442
  %v449 = vmul.f32 %v420, %v442
  %v450 = vmul.f32 %v423, %v442
  %v451 = vmul.f32 %v425, %v442
  %v452 = vmul.f32 %v428, %v442
  %v453 = vmul.f32 %v430, %v442
  %v454 = vmul.f32 %v433, %v442
  %v455 = vmul.f32 %v435, %v442
  %v456 = vmul.f32 %v438, %v442
  %v458 = vperm.slane %v55, 0
  %v460 = vadd.f32 %v444, %v458
  %v461 = vadd.f32 %v445, %v458
  %v462 = vadd.f32 %v446, %v458
  %v463 = vadd.f32 %v447, %v458
  %v464 = vadd.f32 %v448, %v458
  %v465 = vadd.f32 %v449, %v458
  %v466 = vadd.f32 %v450, %v458
  %v467 = vadd.f32 %v451, %v458
  %v468 = vadd.f32 %v452, %v458
  %v469 = vadd.f32 %v453, %v458
  %v470 = vadd.f32 %v454, %v458
  %v471 = vadd.f32 %v455, %v458
  %v472 = vadd.f32 %v456, %v458
  %s473 = scalar_lea.vmem %s0, 156
  %v474 = vld [vmem:[%s473] sm:$0xff]
  %v475 = vld [vmem:[%s473 + $0x8] sm:$0xf]
  %v476 = vld [vmem:[%s473 + $0xc] sm:$0xff]
  %v477 = vld [vmem:[%s473 + $0x14] sm:$0xf]
  %v478 = vld [vmem:[%s473 + $0x18] sm:$0xff]
  %v479 = vld [vmem:[%s473 + $0x20] sm:$0xf]
  %v480 = vld [vmem:[%s473 + $0x24] sm:$0xff]
  %v481 = vld [vmem:[%s473 + $0x2c] sm:$0xf]
  %v482 = vld [vmem:[%s473 + $0x30] sm:$0xff]
  %v483 = vld [vmem:[%s473 + $0x38] sm:$0xf]
  %v484 = vld [vmem:[%s473 + $0x3c] sm:$0xff]
  %v485 = vld [vmem:[%s473 + $0x44] sm:$0xf]
  %v486 = vld [vmem:[%s473 + $0x48] sm:$0xff]
  %v487 = vld [vmem:[%s473 + $0x50] sm:$0xf]
  %v488 = vld [vmem:[%s473 + $0x54] sm:$0xff]
  %v489 = vld [vmem:[%s473 + $0x5c] sm:$0xf]
  %v490 = vld [vmem:[%s473 + $0x60] sm:$0xff]
  %v491 = vld [vmem:[%s473 + $0x68] sm:$0xf]
  %v492 = vld [vmem:[%s473 + $0x6c] sm:$0xff]
  %v493 = vld [vmem:[%s473 + $0x74] sm:$0xf]
  %v494 = vld [vmem:[%s473 + $0x78] sm:$0xff]
  %v495 = vld [vmem:[%s473 + $0x80] sm:$0xf]
  %v496 = vld [vmem:[%s473 + $0x84] sm:$0xff]
  %v497 = vld [vmem:[%s473 + $0x8c] sm:$0xf]
  %v498 = vld [vmem:[%s473 + $0x90] sm:$0xff]
  %v499 = vld [vmem:[%s473 + $0x98] sm:$0xf]
  %v526 = vunpack.c.l.b16 %v474
  %v527 = vunpack.c.h.b16 %v474
  %v528 = vunpack.c.l.b16 %v475
  %v529 = vunpack.c.l.b16 %v476
  %v530 = vunpack.c.h.b16 %v476
  %v531 = vunpack.c.l.b16 %v477
  %v532 = vunpack.c.l.b16 %v478
  %v533 = vunpack.c.h.b16 %v478
  %v534 = vunpack.c.l.b16 %v479
  %v535 = vunpack.c.l.b16 %v480
  %v536 = vunpack.c.h.b16 %v480
  %v537 = vunpack.c.l.b16 %v481
  %v538 = vunpack.c.l.b16 %v482
  %v539 = vunpack.c.h.b16 %v482
  %v540 = vunpack.c.l.b16 %v483
  %v541 = vunpack.c.l.b16 %v484
  %v542 = vunpack.c.h.b16 %v484
  %v543 = vunpack.c.l.b16 %v485
  %v544 = vunpack.c.l.b16 %v486
  %v545 = vunpack.c.h.b16 %v486
  %v546 = vunpack.c.l.b16 %v487
  %v547 = vunpack.c.l.b16 %v488
  %v548 = vunpack.c.h.b16 %v488
  %v549 = vunpack.c.l.b16 %v489
  %v550 = vunpack.c.l.b16 %v490
  %v551 = vunpack.c.h.b16 %v490
  %v552 = vunpack.c.l.b16 %v491
  %v553 = vunpack.c.l.b16 %v492
  %v554 = vunpack.c.h.b16 %v492
  %v555 = vunpack.c.l.b16 %v493
  %v556 = vunpack.c.l.b16 %v494
  %v557 = vunpack.c.h.b16 %v494
  %v558 = vunpack.c.l.b16 %v495
  %v559 = vunpack.c.l.b16 %v496
  %v560 = vunpack.c.h.b16 %v496
  %v561 = vunpack.c.l.b16 %v497
  %v562 = vunpack.c.l.b16 %v498
  %v563 = vunpack.c.h.b16 %v498
  %v564 = vunpack.c.l.b16 %v499
  %v565 = vpack.c.b16 %v529, %v526
  %v566 = vpack.c.b16 %v530, %v527
  %v567 = vpack.c.b16 %v531, %v528
  %v568 = vpack.c.b16 %v535, %v532
  %v569 = vpack.c.b16 %v536, %v533
  %v570 = vpack.c.b16 %v537, %v534
  %v571 = vpack.c.b16 %v541, %v538
  %v572 = vpack.c.b16 %v542, %v539
  %v573 = vpack.c.b16 %v543, %v540
  %v574 = vpack.c.b16 %v547, %v544
  %v575 = vpack.c.b16 %v548, %v545
  %v576 = vpack.c.b16 %v549, %v546
  %v577 = vpack.c.b16 %v553, %v550
  %v578 = vpack.c.b16 %v554, %v551
  %v579 = vpack.c.b16 %v555, %v552
  %v580 = vpack.c.b16 %v559, %v556
  %v581 = vpack.c.b16 %v560, %v557
  %v582 = vpack.c.b16 %v561, %v558
  %v583 = vpack.c.b16 %v562, %v562
  %v584 = vpack.c.b16 %v563, %v563
  %v585 = vpack.c.b16 %v564, %v564
  %v601 = vsel %vm290, %v567, 0
  %v604 = vsel %vm290, %v570, 0
  %v607 = vsel %vm290, %v573, 0
  %v610 = vsel %vm290, %v576, 0
  %v613 = vsel %vm290, %v579, 0
  %v616 = vsel %vm290, %v582, 0
  %v619 = vsel %vm290, %v585, 0
  %621 = vmatpush.bf16.msra.mxu0 %v261
  %622 = vmatpush.bf16.msra.mxu0 %v260
  %623 = vmatpush.bf16.msra.mxu0 %v259
  %624 = vmatpush.bf16.msra.mxu0 %v258
  %625 = vmatpush.bf16.msra.mxu0 %v257
  %626 = vmatpush.bf16.msra.mxu0 %v256
  %627 = vmatpush.bf16.msra.mxu0 %v255
  %628 = vmatpush.bf16.msra.mxu0 %v254
  %629 = vmatmul.bf16.gmra.mxu0 %v565
  %v630 = vpop.f32.mrf.mxu0
  %v631 = vadd.f32 0.0, %v630
  %v632 = vpop.f32.mrf.mxu0
  %v633 = vadd.f32 0.0, %v632
  %634 = vmatmul.bf16.gmra.mxu0 %v568
  %v635 = vpop.f32.mrf.mxu0
  %v636 = vadd.f32 0.0, %v635
  %v637 = vpop.f32.mrf.mxu0
  %v638 = vadd.f32 0.0, %v637
  %639 = vmatmul.bf16.gmra.mxu0 %v571
  %v640 = vpop.f32.mrf.mxu0
  %v641 = vadd.f32 0.0, %v640
  %v642 = vpop.f32.mrf.mxu0
  %v643 = vadd.f32 0.0, %v642
  %644 = vmatmul.bf16.gmra.mxu0 %v574
  %v645 = vpop.f32.mrf.mxu0
  %v646 = vadd.f32 0.0, %v645
  %v647 = vpop.f32.mrf.mxu0
  %v648 = vadd.f32 0.0, %v647
  %649 = vmatmul.bf16.gmra.mxu0 %v577
  %v650 = vpop.f32.mrf.mxu0
  %v651 = vadd.f32 0.0, %v650
  %v652 = vpop.f32.mrf.mxu0
  %v653 = vadd.f32 0.0, %v652
  %654 = vmatmul.bf16.gmra.mxu0 %v580
  %v655 = vpop.f32.mrf.mxu0
  %v656 = vadd.f32 0.0, %v655
  %v657 = vpop.f32.mrf.mxu0
  %v658 = vadd.f32 0.0, %v657
  %659 = vmatmul.bf16.gmra.mxu0 %v583
  %v660 = vpop.f32.mrf.mxu0
  %v661 = vadd.f32 0.0, %v660
  %v662 = vpop.f32.mrf.mxu0
  %663 = vdwg.mxu0
  %664 = vmatpush.bf16.msra.mxu0 %v269
  %665 = vmatpush.bf16.msra.mxu0 %v268
  %666 = vmatpush.bf16.msra.mxu0 %v267
  %667 = vmatpush.bf16.msra.mxu0 %v266
  %668 = vmatpush.bf16.msra.mxu0 %v265
  %669 = vmatpush.bf16.msra.mxu0 %v264
  %670 = vmatpush.bf16.msra.mxu0 %v263
  %671 = vmatpush.bf16.msra.mxu0 %v262
  %672 = vmatmul.bf16.gmra.mxu0 %v566
  %v673 = vpop.f32.mrf.mxu0
  %v674 = vadd.f32 %v631, %v673
  %v675 = vpop.f32.mrf.mxu0
  %v676 = vadd.f32 %v633, %v675
  %677 = vmatmul.bf16.gmra.mxu0 %v569
  %v678 = vpop.f32.mrf.mxu0
  %v679 = vadd.f32 %v636, %v678
  %v680 = vpop.f32.mrf.mxu0
  %v681 = vadd.f32 %v638, %v680
  %682 = vmatmul.bf16.gmra.mxu0 %v572
  %v683 = vpop.f32.mrf.mxu0
  %v684 = vadd.f32 %v641, %v683
  %v685 = vpop.f32.mrf.mxu0
  %v686 = vadd.f32 %v643, %v685
  %687 = vmatmul.bf16.gmra.mxu0 %v575
  %v688 = vpop.f32.mrf.mxu0
  %v689 = vadd.f32 %v646, %v688
  %v690 = vpop.f32.mrf.mxu0
  %v691 = vadd.f32 %v648, %v690
  %692 = vmatmul.bf16.gmra.mxu0 %v578
  %v693 = vpop.f32.mrf.mxu0
  %v694 = vadd.f32 %v651, %v693
  %v695 = vpop.f32.mrf.mxu0
  %v696 = vadd.f32 %v653, %v695
  %697 = vmatmul.bf16.gmra.mxu0 %v581
  %v698 = vpop.f32.mrf.mxu0
  %v699 = vadd.f32 %v656, %v698
  %v700 = vpop.f32.mrf.mxu0
  %v701 = vadd.f32 %v658, %v700
  %702 = vmatmul.bf16.gmra.mxu0 %v584
  %v703 = vpop.f32.mrf.mxu0
  %v704 = vadd.f32 %v661, %v703
  %v705 = vpop.f32.mrf.mxu0
  %706 = vdwg.mxu0
  %707 = vmatpush.bf16.msra.mxu0 0
  %708 = vmatpush.bf16.msra.mxu0 0
  %709 = vmatpush.bf16.msra.mxu0 0
  %710 = vmatpush.bf16.msra.mxu0 0
  %711 = vmatpush.bf16.msra.mxu0 0
  %712 = vmatpush.bf16.msra.mxu0 0
  %713 = vmatpush.bf16.msra.mxu0 %v271
  %714 = vmatpush.bf16.msra.mxu0 %v270
  %715 = vmatmul.bf16.gmra.mxu0 %v601
  %v716 = vpop.f32.mrf.mxu0
  %v717 = vadd.f32 %v674, %v716
  %v718 = vpop.f32.mrf.mxu0
  %v719 = vadd.f32 %v676, %v718
  %720 = vmatmul.bf16.gmra.mxu0 %v604
  %v721 = vpop.f32.mrf.mxu0
  %v722 = vadd.f32 %v679, %v721
  %v723 = vpop.f32.mrf.mxu0
  %v724 = vadd.f32 %v681, %v723
  %725 = vmatmul.bf16.gmra.mxu0 %v607
  %v726 = vpop.f32.mrf.mxu0
  %v727 = vadd.f32 %v684, %v726
  %v728 = vpop.f32.mrf.mxu0
  %v729 = vadd.f32 %v686, %v728
  %730 = vmatmul.bf16.gmra.mxu0 %v610
  %v731 = vpop.f32.mrf.mxu0
  %v732 = vadd.f32 %v689, %v731
  %v733 = vpop.f32.mrf.mxu0
  %v734 = vadd.f32 %v691, %v733
  %735 = vmatmul.bf16.gmra.mxu0 %v613
  %v736 = vpop.f32.mrf.mxu0
  %v737 = vadd.f32 %v694, %v736
  %v738 = vpop.f32.mrf.mxu0
  %v739 = vadd.f32 %v696, %v738
  %740 = vmatmul.bf16.gmra.mxu0 %v616
  %v741 = vpop.f32.mrf.mxu0
  %v742 = vadd.f32 %v699, %v741
  %v743 = vpop.f32.mrf.mxu0
  %v744 = vadd.f32 %v701, %v743
  %745 = vmatmul.bf16.gmra.mxu0 %v619
  %v746 = vpop.f32.mrf.mxu0
  %v747 = vadd.f32 %v704, %v746
  %v748 = vpop.f32.mrf.mxu0
  %749 = vdwg.mxu0
  %v750 = vmul.f32 %v717, %v442
  %v751 = vmul.f32 %v719, %v442
  %v752 = vmul.f32 %v722, %v442
  %v753 = vmul.f32 %v724, %v442
  %v754 = vmul.f32 %v727, %v442
  %v755 = vmul.f32 %v729, %v442
  %v756 = vmul.f32 %v732, %v442
  %v757 = vmul.f32 %v734, %v442
  %v758 = vmul.f32 %v737, %v442
  %v759 = vmul.f32 %v739, %v442
  %v760 = vmul.f32 %v742, %v442
  %v761 = vmul.f32 %v744, %v442
  %v762 = vmul.f32 %v747, %v442
  %v763 = vadd.f32 %v750, %v458
  %v764 = vadd.f32 %v751, %v458
  %v765 = vadd.f32 %v752, %v458
  %v766 = vadd.f32 %v753, %v458
  %v767 = vadd.f32 %v754, %v458
  %v768 = vadd.f32 %v755, %v458
  %v769 = vadd.f32 %v756, %v458
  %v770 = vadd.f32 %v757, %v458
  %v771 = vadd.f32 %v758, %v458
  %v772 = vadd.f32 %v759, %v458
  %v773 = vadd.f32 %v760, %v458
  %v774 = vadd.f32 %v761, %v458
  %v775 = vadd.f32 %v762, %v458
  %v776 = vmax.f32 %v460, %v763
  %v777 = vmax.f32 %v461, %v764
  %v778 = vmax.f32 %v462, %v765
  %v779 = vmax.f32 %v463, %v766
  %v780 = vmax.f32 %v464, %v767
  %v781 = vmax.f32 %v465, %v768
  %v782 = vmax.f32 %v466, %v769
  %v783 = vmax.f32 %v467, %v770
  %v784 = vmax.f32 %v468, %v771
  %v785 = vmax.f32 %v469, %v772
  %v786 = vmax.f32 %v470, %v773
  %v787 = vmax.f32 %v471, %v774
  %v788 = vmax.f32 %v472, %v775
  %s789 = scalar_lea.vmem %s0, 312
  %v790 = vld [vmem:[%s789] sm:$0xff]
  %v791 = vld [vmem:[%s789 + $0x8] sm:$0xf]
  %v792 = vld [vmem:[%s789 + $0xc] sm:$0xff]
  %v793 = vld [vmem:[%s789 + $0x14] sm:$0xf]
  %v794 = vld [vmem:[%s789 + $0x18] sm:$0xff]
  %v795 = vld [vmem:[%s789 + $0x20] sm:$0xf]
  %v796 = vld [vmem:[%s789 + $0x24] sm:$0xff]
  %v797 = vld [vmem:[%s789 + $0x2c] sm:$0xf]
  %v798 = vld [vmem:[%s789 + $0x30] sm:$0xff]
  %v799 = vld [vmem:[%s789 + $0x38] sm:$0xf]
  %v800 = vld [vmem:[%s789 + $0x3c] sm:$0xff]
  %v801 = vld [vmem:[%s789 + $0x44] sm:$0xf]
  %v802 = vld [vmem:[%s789 + $0x48] sm:$0xff]
  %v803 = vld [vmem:[%s789 + $0x50] sm:$0xf]
  %v804 = vld [vmem:[%s789 + $0x54] sm:$0xff]
  %v805 = vld [vmem:[%s789 + $0x5c] sm:$0xf]
  %v806 = vld [vmem:[%s789 + $0x60] sm:$0xff]
  %v807 = vld [vmem:[%s789 + $0x68] sm:$0xf]
  %v808 = vld [vmem:[%s789 + $0x6c] sm:$0xff]
  %v809 = vld [vmem:[%s789 + $0x74] sm:$0xf]
  %v810 = vld [vmem:[%s789 + $0x78] sm:$0xff]
  %v811 = vld [vmem:[%s789 + $0x80] sm:$0xf]
  %v812 = vld [vmem:[%s789 + $0x84] sm:$0xff]
  %v813 = vld [vmem:[%s789 + $0x8c] sm:$0xf]
  %v814 = vld [vmem:[%s789 + $0x90] sm:$0xff]
  %v815 = vld [vmem:[%s789 + $0x98] sm:$0xf]
  %v842 = vunpack.c.l.b16 %v790
  %v843 = vunpack.c.h.b16 %v790
  %v844 = vunpack.c.l.b16 %v791
  %v845 = vunpack.c.l.b16 %v792
  %v846 = vunpack.c.h.b16 %v792
  %v847 = vunpack.c.l.b16 %v793
  %v848 = vunpack.c.l.b16 %v794
  %v849 = vunpack.c.h.b16 %v794
  %v850 = vunpack.c.l.b16 %v795
  %v851 = vunpack.c.l.b16 %v796
  %v852 = vunpack.c.h.b16 %v796
  %v853 = vunpack.c.l.b16 %v797
  %v854 = vunpack.c.l.b16 %v798
  %v855 = vunpack.c.h.b16 %v798
  %v856 = vunpack.c.l.b16 %v799
  %v857 = vunpack.c.l.b16 %v800
  %v858 = vunpack.c.h.b16 %v800
  %v859 = vunpack.c.l.b16 %v801
  %v860 = vunpack.c.l.b16 %v802
  %v861 = vunpack.c.h.b16 %v802
  %v862 = vunpack.c.l.b16 %v803
  %v863 = vunpack.c.l.b16 %v804
  %v864 = vunpack.c.h.b16 %v804
  %v865 = vunpack.c.l.b16 %v805
  %v866 = vunpack.c.l.b16 %v806
  %v867 = vunpack.c.h.b16 %v806
  %v868 = vunpack.c.l.b16 %v807
  %v869 = vunpack.c.l.b16 %v808
  %v870 = vunpack.c.h.b16 %v808
  %v871 = vunpack.c.l.b16 %v809
  %v872 = vunpack.c.l.b16 %v810
  %v873 = vunpack.c.h.b16 %v810
  %v874 = vunpack.c.l.b16 %v811
  %v875 = vunpack.c.l.b16 %v812
  %v876 = vunpack.c.h.b16 %v812
  %v877 = vunpack.c.l.b16 %v813
  %v878 = vunpack.c.l.b16 %v814
  %v879 = vunpack.c.h.b16 %v814
  %v880 = vunpack.c.l.b16 %v815
  %v881 = vpack.c.b16 %v845, %v842
  %v882 = vpack.c.b16 %v846, %v843
  %v883 = vpack.c.b16 %v847, %v844
  %v884 = vpack.c.b16 %v851, %v848
  %v885 = vpack.c.b16 %v852, %v849
  %v886 = vpack.c.b16 %v853, %v850
  %v887 = vpack.c.b16 %v857, %v854
  %v888 = vpack.c.b16 %v858, %v855
  %v889 = vpack.c.b16 %v859, %v856
  %v890 = vpack.c.b16 %v863, %v860
  %v891 = vpack.c.b16 %v864, %v861
  %v892 = vpack.c.b16 %v865, %v862
  %v893 = vpack.c.b16 %v869, %v866
  %v894 = vpack.c.b16 %v870, %v867
  %v895 = vpack.c.b16 %v871, %v868
  %v896 = vpack.c.b16 %v875, %v872
  %v897 = vpack.c.b16 %v876, %v873
  %v898 = vpack.c.b16 %v877, %v874
  %v899 = vpack.c.b16 %v878, %v878
  %v900 = vpack.c.b16 %v879, %v879
  %v901 = vpack.c.b16 %v880, %v880
  %v917 = vsel %vm290, %v883, 0
  %v920 = vsel %vm290, %v886, 0
  %v923 = vsel %vm290, %v889, 0
  %v926 = vsel %vm290, %v892, 0
  %v929 = vsel %vm290, %v895, 0
  %v932 = vsel %vm290, %v898, 0
  %v935 = vsel %vm290, %v901, 0
  %937 = vmatpush.bf16.msra.mxu0 %v261
  %938 = vmatpush.bf16.msra.mxu0 %v260
  %939 = vmatpush.bf16.msra.mxu0 %v259
  %940 = vmatpush.bf16.msra.mxu0 %v258
  %941 = vmatpush.bf16.msra.mxu0 %v257
  %942 = vmatpush.bf16.msra.mxu0 %v256
  %943 = vmatpush.bf16.msra.mxu0 %v255
  %944 = vmatpush.bf16.msra.mxu0 %v254
  %945 = vmatmul.bf16.gmra.mxu0 %v881
  %v946 = vpop.f32.mrf.mxu0
  %v947 = vadd.f32 0.0, %v946
  %v948 = vpop.f32.mrf.mxu0
  %v949 = vadd.f32 0.0, %v948
  %950 = vmatmul.bf16.gmra.mxu0 %v884
  %v951 = vpop.f32.mrf.mxu0
  %v952 = vadd.f32 0.0, %v951
  %v953 = vpop.f32.mrf.mxu0
  %v954 = vadd.f32 0.0, %v953
  %955 = vmatmul.bf16.gmra.mxu0 %v887
  %v956 = vpop.f32.mrf.mxu0
  %v957 = vadd.f32 0.0, %v956
  %v958 = vpop.f32.mrf.mxu0
  %v959 = vadd.f32 0.0, %v958
  %960 = vmatmul.bf16.gmra.mxu0 %v890
  %v961 = vpop.f32.mrf.mxu0
  %v962 = vadd.f32 0.0, %v961
  %v963 = vpop.f32.mrf.mxu0
  %v964 = vadd.f32 0.0, %v963
  %965 = vmatmul.bf16.gmra.mxu0 %v893
  %v966 = vpop.f32.mrf.mxu0
  %v967 = vadd.f32 0.0, %v966
  %v968 = vpop.f32.mrf.mxu0
  %v969 = vadd.f32 0.0, %v968
  %970 = vmatmul.bf16.gmra.mxu0 %v896
  %v971 = vpop.f32.mrf.mxu0
  %v972 = vadd.f32 0.0, %v971
  %v973 = vpop.f32.mrf.mxu0
  %v974 = vadd.f32 0.0, %v973
  %975 = vmatmul.bf16.gmra.mxu0 %v899
  %v976 = vpop.f32.mrf.mxu0
  %v977 = vadd.f32 0.0, %v976
  %v978 = vpop.f32.mrf.mxu0
  %979 = vdwg.mxu0
  %980 = vmatpush.bf16.msra.mxu0 %v269
  %981 = vmatpush.bf16.msra.mxu0 %v268
  %982 = vmatpush.bf16.msra.mxu0 %v267
  %983 = vmatpush.bf16.msra.mxu0 %v266
  %984 = vmatpush.bf16.msra.mxu0 %v265
  %985 = vmatpush.bf16.msra.mxu0 %v264
  %986 = vmatpush.bf16.msra.mxu0 %v263
  %987 = vmatpush.bf16.msra.mxu0 %v262
  %988 = vmatmul.bf16.gmra.mxu0 %v882
  %v989 = vpop.f32.mrf.mxu0
  %v990 = vadd.f32 %v947, %v989
  %v991 = vpop.f32.mrf.mxu0
  %v992 = vadd.f32 %v949, %v991
  %993 = vmatmul.bf16.gmra.mxu0 %v885
  %v994 = vpop.f32.mrf.mxu0
  %v995 = vadd.f32 %v952, %v994
  %v996 = vpop.f32.mrf.mxu0
  %v997 = vadd.f32 %v954, %v996
  %998 = vmatmul.bf16.gmra.mxu0 %v888
  %v999 = vpop.f32.mrf.mxu0
  %v1000 = vadd.f32 %v957, %v999
  %v1001 = vpop.f32.mrf.mxu0
  %v1002 = vadd.f32 %v959, %v1001
  %1003 = vmatmul.bf16.gmra.mxu0 %v891
  %v1004 = vpop.f32.mrf.mxu0
  %v1005 = vadd.f32 %v962, %v1004
  %v1006 = vpop.f32.mrf.mxu0
  %v1007 = vadd.f32 %v964, %v1006
  %1008 = vmatmul.bf16.gmra.mxu0 %v894
  %v1009 = vpop.f32.mrf.mxu0
  %v1010 = vadd.f32 %v967, %v1009
  %v1011 = vpop.f32.mrf.mxu0
  %v1012 = vadd.f32 %v969, %v1011
  %1013 = vmatmul.bf16.gmra.mxu0 %v897
  %v1014 = vpop.f32.mrf.mxu0
  %v1015 = vadd.f32 %v972, %v1014
  %v1016 = vpop.f32.mrf.mxu0
  %v1017 = vadd.f32 %v974, %v1016
  %1018 = vmatmul.bf16.gmra.mxu0 %v900
  %v1019 = vpop.f32.mrf.mxu0
  %v1020 = vadd.f32 %v977, %v1019
  %v1021 = vpop.f32.mrf.mxu0
  %1022 = vdwg.mxu0
  %1023 = vmatpush.bf16.msra.mxu0 0
  %1024 = vmatpush.bf16.msra.mxu0 0
  %1025 = vmatpush.bf16.msra.mxu0 0
  %1026 = vmatpush.bf16.msra.mxu0 0
  %1027 = vmatpush.bf16.msra.mxu0 0
  %1028 = vmatpush.bf16.msra.mxu0 0
  %1029 = vmatpush.bf16.msra.mxu0 %v271
  %1030 = vmatpush.bf16.msra.mxu0 %v270
  %1031 = vmatmul.bf16.gmra.mxu0 %v917
  %v1032 = vpop.f32.mrf.mxu0
  %v1033 = vadd.f32 %v990, %v1032
  %v1034 = vpop.f32.mrf.mxu0
  %v1035 = vadd.f32 %v992, %v1034
  %1036 = vmatmul.bf16.gmra.mxu0 %v920
  %v1037 = vpop.f32.mrf.mxu0
  %v1038 = vadd.f32 %v995, %v1037
  %v1039 = vpop.f32.mrf.mxu0
  %v1040 = vadd.f32 %v997, %v1039
  %1041 = vmatmul.bf16.gmra.mxu0 %v923
  %v1042 = vpop.f32.mrf.mxu0
  %v1043 = vadd.f32 %v1000, %v1042
  %v1044 = vpop.f32.mrf.mxu0
  %v1045 = vadd.f32 %v1002, %v1044
  %1046 = vmatmul.bf16.gmra.mxu0 %v926
  %v1047 = vpop.f32.mrf.mxu0
  %v1048 = vadd.f32 %v1005, %v1047
  %v1049 = vpop.f32.mrf.mxu0
  %v1050 = vadd.f32 %v1007, %v1049
  %1051 = vmatmul.bf16.gmra.mxu0 %v929
  %v1052 = vpop.f32.mrf.mxu0
  %v1053 = vadd.f32 %v1010, %v1052
  %v1054 = vpop.f32.mrf.mxu0
  %v1055 = vadd.f32 %v1012, %v1054
  %1056 = vmatmul.bf16.gmra.mxu0 %v932
  %v1057 = vpop.f32.mrf.mxu0
  %v1058 = vadd.f32 %v1015, %v1057
  %v1059 = vpop.f32.mrf.mxu0
  %v1060 = vadd.f32 %v1017, %v1059
  %1061 = vmatmul.bf16.gmra.mxu0 %v935
  %v1062 = vpop.f32.mrf.mxu0
  %v1063 = vadd.f32 %v1020, %v1062
  %v1064 = vpop.f32.mrf.mxu0
  %1065 = vdwg.mxu0
  %v1066 = vmul.f32 %v1033, %v442
  %v1067 = vmul.f32 %v1035, %v442
  %v1068 = vmul.f32 %v1038, %v442
  %v1069 = vmul.f32 %v1040, %v442
  %v1070 = vmul.f32 %v1043, %v442
  %v1071 = vmul.f32 %v1045, %v442
  %v1072 = vmul.f32 %v1048, %v442
  %v1073 = vmul.f32 %v1050, %v442
  %v1074 = vmul.f32 %v1053, %v442
  %v1075 = vmul.f32 %v1055, %v442
  %v1076 = vmul.f32 %v1058, %v442
  %v1077 = vmul.f32 %v1060, %v442
  %v1078 = vmul.f32 %v1063, %v442
  %v1079 = vadd.f32 %v1066, %v458
  %v1080 = vadd.f32 %v1067, %v458
  %v1081 = vadd.f32 %v1068, %v458
  %v1082 = vadd.f32 %v1069, %v458
  %v1083 = vadd.f32 %v1070, %v458
  %v1084 = vadd.f32 %v1071, %v458
  %v1085 = vadd.f32 %v1072, %v458
  %v1086 = vadd.f32 %v1073, %v458
  %v1087 = vadd.f32 %v1074, %v458
  %v1088 = vadd.f32 %v1075, %v458
  %v1089 = vadd.f32 %v1076, %v458
  %v1090 = vadd.f32 %v1077, %v458
  %v1091 = vadd.f32 %v1078, %v458
  %v1092 = vmax.f32 %v776, %v1079
  %v1093 = vmax.f32 %v777, %v1080
  %v1094 = vmax.f32 %v778, %v1081
  %v1095 = vmax.f32 %v779, %v1082
  %v1096 = vmax.f32 %v780, %v1083
  %v1097 = vmax.f32 %v781, %v1084
  %v1098 = vmax.f32 %v782, %v1085
  %v1099 = vmax.f32 %v783, %v1086
  %v1100 = vmax.f32 %v784, %v1087
  %v1101 = vmax.f32 %v785, %v1088
  %v1102 = vmax.f32 %v786, %v1089
  %v1103 = vmax.f32 %v787, %v1090
  %v1104 = vmax.f32 %v788, %v1091
  %s1105 = scalar_lea.vmem %s0, 468
  %v1106 = vld [vmem:[%s1105] sm:$0xff]
  %v1107 = vld [vmem:[%s1105 + $0x8] sm:$0xf]
  %v1108 = vld [vmem:[%s1105 + $0xc] sm:$0xff]
  %v1109 = vld [vmem:[%s1105 + $0x14] sm:$0xf]
  %v1110 = vld [vmem:[%s1105 + $0x18] sm:$0xff]
  %v1111 = vld [vmem:[%s1105 + $0x20] sm:$0xf]
  %v1112 = vld [vmem:[%s1105 + $0x24] sm:$0xff]
  %v1113 = vld [vmem:[%s1105 + $0x2c] sm:$0xf]
  %v1114 = vld [vmem:[%s1105 + $0x30] sm:$0xff]
  %v1115 = vld [vmem:[%s1105 + $0x38] sm:$0xf]
  %v1116 = vld [vmem:[%s1105 + $0x3c] sm:$0xff]
  %v1117 = vld [vmem:[%s1105 + $0x44] sm:$0xf]
  %v1118 = vld [vmem:[%s1105 + $0x48] sm:$0xff]
  %v1119 = vld [vmem:[%s1105 + $0x50] sm:$0xf]
  %v1120 = vld [vmem:[%s1105 + $0x54] sm:$0xff]
  %v1121 = vld [vmem:[%s1105 + $0x5c] sm:$0xf]
  %v1122 = vld [vmem:[%s1105 + $0x60] sm:$0xff]
  %v1123 = vld [vmem:[%s1105 + $0x68] sm:$0xf]
  %v1124 = vld [vmem:[%s1105 + $0x6c] sm:$0xff]
  %v1125 = vld [vmem:[%s1105 + $0x74] sm:$0xf]
  %v1126 = vld [vmem:[%s1105 + $0x78] sm:$0xff]
  %v1127 = vld [vmem:[%s1105 + $0x80] sm:$0xf]
  %v1128 = vld [vmem:[%s1105 + $0x84] sm:$0xff]
  %v1129 = vld [vmem:[%s1105 + $0x8c] sm:$0xf]
  %v1130 = vld [vmem:[%s1105 + $0x90] sm:$0xff]
  %v1131 = vld [vmem:[%s1105 + $0x98] sm:$0xf]
  %v1158 = vunpack.c.l.b16 %v1106
  %v1159 = vunpack.c.h.b16 %v1106
  %v1160 = vunpack.c.l.b16 %v1107
  %v1161 = vunpack.c.l.b16 %v1108
  %v1162 = vunpack.c.h.b16 %v1108
  %v1163 = vunpack.c.l.b16 %v1109
  %v1164 = vunpack.c.l.b16 %v1110
  %v1165 = vunpack.c.h.b16 %v1110
  %v1166 = vunpack.c.l.b16 %v1111
  %v1167 = vunpack.c.l.b16 %v1112
  %v1168 = vunpack.c.h.b16 %v1112
  %v1169 = vunpack.c.l.b16 %v1113
  %v1170 = vunpack.c.l.b16 %v1114
  %v1171 = vunpack.c.h.b16 %v1114
  %v1172 = vunpack.c.l.b16 %v1115
  %v1173 = vunpack.c.l.b16 %v1116
  %v1174 = vunpack.c.h.b16 %v1116
  %v1175 = vunpack.c.l.b16 %v1117
  %v1176 = vunpack.c.l.b16 %v1118
  %v1177 = vunpack.c.h.b16 %v1118
  %v1178 = vunpack.c.l.b16 %v1119
  %v1179 = vunpack.c.l.b16 %v1120
  %v1180 = vunpack.c.h.b16 %v1120
  %v1181 = vunpack.c.l.b16 %v1121
  %v1182 = vunpack.c.l.b16 %v1122
  %v1183 = vunpack.c.h.b16 %v1122
  %v1184 = vunpack.c.l.b16 %v1123
  %v1185 = vunpack.c.l.b16 %v1124
  %v1186 = vunpack.c.h.b16 %v1124
  %v1187 = vunpack.c.l.b16 %v1125
  %v1188 = vunpack.c.l.b16 %v1126
  %v1189 = vunpack.c.h.b16 %v1126
  %v1190 = vunpack.c.l.b16 %v1127
  %v1191 = vunpack.c.l.b16 %v1128
  %v1192 = vunpack.c.h.b16 %v1128
  %v1193 = vunpack.c.l.b16 %v1129
  %v1194 = vunpack.c.l.b16 %v1130
  %v1195 = vunpack.c.h.b16 %v1130
  %v1196 = vunpack.c.l.b16 %v1131
  %v1197 = vpack.c.b16 %v1161, %v1158
  %v1198 = vpack.c.b16 %v1162, %v1159
  %v1199 = vpack.c.b16 %v1163, %v1160
  %v1200 = vpack.c.b16 %v1167, %v1164
  %v1201 = vpack.c.b16 %v1168, %v1165
  %v1202 = vpack.c.b16 %v1169, %v1166
  %v1203 = vpack.c.b16 %v1173, %v1170
  %v1204 = vpack.c.b16 %v1174, %v1171
  %v1205 = vpack.c.b16 %v1175, %v1172
  %v1206 = vpack.c.b16 %v1179, %v1176
  %v1207 = vpack.c.b16 %v1180, %v1177
  %v1208 = vpack.c.b16 %v1181, %v1178
  %v1209 = vpack.c.b16 %v1185, %v1182
  %v1210 = vpack.c.b16 %v1186, %v1183
  %v1211 = vpack.c.b16 %v1187, %v1184
  %v1212 = vpack.c.b16 %v1191, %v1188
  %v1213 = vpack.c.b16 %v1192, %v1189
  %v1214 = vpack.c.b16 %v1193, %v1190
  %v1215 = vpack.c.b16 %v1194, %v1194
  %v1216 = vpack.c.b16 %v1195, %v1195
  %v1217 = vpack.c.b16 %v1196, %v1196
  %v1233 = vsel %vm290, %v1199, 0
  %v1236 = vsel %vm290, %v1202, 0
  %v1239 = vsel %vm290, %v1205, 0
  %v1242 = vsel %vm290, %v1208, 0
  %v1245 = vsel %vm290, %v1211, 0
  %v1248 = vsel %vm290, %v1214, 0
  %v1251 = vsel %vm290, %v1217, 0
  %1253 = vmatpush.bf16.msra.mxu0 %v261
  %1254 = vmatpush.bf16.msra.mxu0 %v260
  %1255 = vmatpush.bf16.msra.mxu0 %v259
  %1256 = vmatpush.bf16.msra.mxu0 %v258
  %1257 = vmatpush.bf16.msra.mxu0 %v257
  %1258 = vmatpush.bf16.msra.mxu0 %v256
  %1259 = vmatpush.bf16.msra.mxu0 %v255
  %1260 = vmatpush.bf16.msra.mxu0 %v254
  %1261 = vmatmul.bf16.gmra.mxu0 %v1197
  %v1262 = vpop.f32.mrf.mxu0
  %v1263 = vadd.f32 0.0, %v1262
  %v1264 = vpop.f32.mrf.mxu0
  %v1265 = vadd.f32 0.0, %v1264
  %1266 = vmatmul.bf16.gmra.mxu0 %v1200
  %v1267 = vpop.f32.mrf.mxu0
  %v1268 = vadd.f32 0.0, %v1267
  %v1269 = vpop.f32.mrf.mxu0
  %v1270 = vadd.f32 0.0, %v1269
  %1271 = vmatmul.bf16.gmra.mxu0 %v1203
  %v1272 = vpop.f32.mrf.mxu0
  %v1273 = vadd.f32 0.0, %v1272
  %v1274 = vpop.f32.mrf.mxu0
  %v1275 = vadd.f32 0.0, %v1274
  %1276 = vmatmul.bf16.gmra.mxu0 %v1206
  %v1277 = vpop.f32.mrf.mxu0
  %v1278 = vadd.f32 0.0, %v1277
  %v1279 = vpop.f32.mrf.mxu0
  %v1280 = vadd.f32 0.0, %v1279
  %1281 = vmatmul.bf16.gmra.mxu0 %v1209
  %v1282 = vpop.f32.mrf.mxu0
  %v1283 = vadd.f32 0.0, %v1282
  %v1284 = vpop.f32.mrf.mxu0
  %v1285 = vadd.f32 0.0, %v1284
  %1286 = vmatmul.bf16.gmra.mxu0 %v1212
  %v1287 = vpop.f32.mrf.mxu0
  %v1288 = vadd.f32 0.0, %v1287
  %v1289 = vpop.f32.mrf.mxu0
  %v1290 = vadd.f32 0.0, %v1289
  %1291 = vmatmul.bf16.gmra.mxu0 %v1215
  %v1292 = vpop.f32.mrf.mxu0
  %v1293 = vadd.f32 0.0, %v1292
  %v1294 = vpop.f32.mrf.mxu0
  %1295 = vdwg.mxu0
  %1296 = vmatpush.bf16.msra.mxu0 %v269
  %1297 = vmatpush.bf16.msra.mxu0 %v268
  %1298 = vmatpush.bf16.msra.mxu0 %v267
  %1299 = vmatpush.bf16.msra.mxu0 %v266
  %1300 = vmatpush.bf16.msra.mxu0 %v265
  %1301 = vmatpush.bf16.msra.mxu0 %v264
  %1302 = vmatpush.bf16.msra.mxu0 %v263
  %1303 = vmatpush.bf16.msra.mxu0 %v262
  %1304 = vmatmul.bf16.gmra.mxu0 %v1198
  %v1305 = vpop.f32.mrf.mxu0
  %v1306 = vadd.f32 %v1263, %v1305
  %v1307 = vpop.f32.mrf.mxu0
  %v1308 = vadd.f32 %v1265, %v1307
  %1309 = vmatmul.bf16.gmra.mxu0 %v1201
  %v1310 = vpop.f32.mrf.mxu0
  %v1311 = vadd.f32 %v1268, %v1310
  %v1312 = vpop.f32.mrf.mxu0
  %v1313 = vadd.f32 %v1270, %v1312
  %1314 = vmatmul.bf16.gmra.mxu0 %v1204
  %v1315 = vpop.f32.mrf.mxu0
  %v1316 = vadd.f32 %v1273, %v1315
  %v1317 = vpop.f32.mrf.mxu0
  %v1318 = vadd.f32 %v1275, %v1317
  %1319 = vmatmul.bf16.gmra.mxu0 %v1207
  %v1320 = vpop.f32.mrf.mxu0
  %v1321 = vadd.f32 %v1278, %v1320
  %v1322 = vpop.f32.mrf.mxu0
  %v1323 = vadd.f32 %v1280, %v1322
  %1324 = vmatmul.bf16.gmra.mxu0 %v1210
  %v1325 = vpop.f32.mrf.mxu0
  %v1326 = vadd.f32 %v1283, %v1325
  %v1327 = vpop.f32.mrf.mxu0
  %v1328 = vadd.f32 %v1285, %v1327
  %1329 = vmatmul.bf16.gmra.mxu0 %v1213
  %v1330 = vpop.f32.mrf.mxu0
  %v1331 = vadd.f32 %v1288, %v1330
  %v1332 = vpop.f32.mrf.mxu0
  %v1333 = vadd.f32 %v1290, %v1332
  %1334 = vmatmul.bf16.gmra.mxu0 %v1216
  %v1335 = vpop.f32.mrf.mxu0
  %v1336 = vadd.f32 %v1293, %v1335
  %v1337 = vpop.f32.mrf.mxu0
  %1338 = vdwg.mxu0
  %1339 = vmatpush.bf16.msra.mxu0 0
  %1340 = vmatpush.bf16.msra.mxu0 0
  %1341 = vmatpush.bf16.msra.mxu0 0
  %1342 = vmatpush.bf16.msra.mxu0 0
  %1343 = vmatpush.bf16.msra.mxu0 0
  %1344 = vmatpush.bf16.msra.mxu0 0
  %1345 = vmatpush.bf16.msra.mxu0 %v271
  %1346 = vmatpush.bf16.msra.mxu0 %v270
  %1347 = vmatmul.bf16.gmra.mxu0 %v1233
  %v1348 = vpop.f32.mrf.mxu0
  %v1349 = vadd.f32 %v1306, %v1348
  %v1350 = vpop.f32.mrf.mxu0
  %v1351 = vadd.f32 %v1308, %v1350
  %1352 = vmatmul.bf16.gmra.mxu0 %v1236
  %v1353 = vpop.f32.mrf.mxu0
  %v1354 = vadd.f32 %v1311, %v1353
  %v1355 = vpop.f32.mrf.mxu0
  %v1356 = vadd.f32 %v1313, %v1355
  %1357 = vmatmul.bf16.gmra.mxu0 %v1239
  %v1358 = vpop.f32.mrf.mxu0
  %v1359 = vadd.f32 %v1316, %v1358
  %v1360 = vpop.f32.mrf.mxu0
  %v1361 = vadd.f32 %v1318, %v1360
  %1362 = vmatmul.bf16.gmra.mxu0 %v1242
  %v1363 = vpop.f32.mrf.mxu0
  %v1364 = vadd.f32 %v1321, %v1363
  %v1365 = vpop.f32.mrf.mxu0
  %v1366 = vadd.f32 %v1323, %v1365
  %1367 = vmatmul.bf16.gmra.mxu0 %v1245
  %v1368 = vpop.f32.mrf.mxu0
  %v1369 = vadd.f32 %v1326, %v1368
  %v1370 = vpop.f32.mrf.mxu0
  %v1371 = vadd.f32 %v1328, %v1370
  %1372 = vmatmul.bf16.gmra.mxu0 %v1248
  %v1373 = vpop.f32.mrf.mxu0
  %v1374 = vadd.f32 %v1331, %v1373
  %v1375 = vpop.f32.mrf.mxu0
  %v1376 = vadd.f32 %v1333, %v1375
  %1377 = vmatmul.bf16.gmra.mxu0 %v1251
  %v1378 = vpop.f32.mrf.mxu0
  %v1379 = vadd.f32 %v1336, %v1378
  %v1380 = vpop.f32.mrf.mxu0
  %1381 = vdwg.mxu0
  %v1382 = vmul.f32 %v1349, %v442
  %v1383 = vmul.f32 %v1351, %v442
  %v1384 = vmul.f32 %v1354, %v442
  %v1385 = vmul.f32 %v1356, %v442
  %v1386 = vmul.f32 %v1359, %v442
  %v1387 = vmul.f32 %v1361, %v442
  %v1388 = vmul.f32 %v1364, %v442
  %v1389 = vmul.f32 %v1366, %v442
  %v1390 = vmul.f32 %v1369, %v442
  %v1391 = vmul.f32 %v1371, %v442
  %v1392 = vmul.f32 %v1374, %v442
  %v1393 = vmul.f32 %v1376, %v442
  %v1394 = vmul.f32 %v1379, %v442
  %v1395 = vadd.f32 %v1382, %v458
  %v1396 = vadd.f32 %v1383, %v458
  %v1397 = vadd.f32 %v1384, %v458
  %v1398 = vadd.f32 %v1385, %v458
  %v1399 = vadd.f32 %v1386, %v458
  %v1400 = vadd.f32 %v1387, %v458
  %v1401 = vadd.f32 %v1388, %v458
  %v1402 = vadd.f32 %v1389, %v458
  %v1403 = vadd.f32 %v1390, %v458
  %v1404 = vadd.f32 %v1391, %v458
  %v1405 = vadd.f32 %v1392, %v458
  %v1406 = vadd.f32 %v1393, %v458
  %v1407 = vadd.f32 %v1394, %v458
  %v1408 = vmax.f32 %v1092, %v1395
  %v1409 = vmax.f32 %v1093, %v1396
  %v1410 = vmax.f32 %v1094, %v1397
  %v1411 = vmax.f32 %v1095, %v1398
  %v1412 = vmax.f32 %v1096, %v1399
  %v1413 = vmax.f32 %v1097, %v1400
  %v1414 = vmax.f32 %v1098, %v1401
  %v1415 = vmax.f32 %v1099, %v1402
  %v1416 = vmax.f32 %v1100, %v1403
  %v1417 = vmax.f32 %v1101, %v1404
  %v1418 = vmax.f32 %v1102, %v1405
  %v1419 = vmax.f32 %v1103, %v1406
  %v1420 = vmax.f32 %v1104, %v1407
  %v1421 = vmax.f32 %v1408, 0.0
  %v1422 = vmax.f32 %v1409, 0.0
  %v1423 = vmax.f32 %v1410, 0.0
  %v1424 = vmax.f32 %v1411, 0.0
  %v1425 = vmax.f32 %v1412, 0.0
  %v1426 = vmax.f32 %v1413, 0.0
  %v1427 = vmax.f32 %v1414, 0.0
  %v1428 = vmax.f32 %v1415, 0.0
  %v1429 = vmax.f32 %v1416, 0.0
  %v1430 = vmax.f32 %v1417, 0.0
  %v1431 = vmax.f32 %v1418, 0.0
  %v1432 = vmax.f32 %v1419, 0.0
  %v1433 = vmax.f32 %v1420, 0.0
  %v1434 = vpack.c.bf16 %v1421, %v1421
  %v1435 = vpack.c.bf16 %v1422, %v1422
  %v1436 = vpack.c.bf16 %v1423, %v1423
  %v1437 = vpack.c.bf16 %v1424, %v1424
  %v1438 = vpack.c.bf16 %v1425, %v1425
  %v1439 = vpack.c.bf16 %v1426, %v1426
  %v1440 = vpack.c.bf16 %v1427, %v1427
  %v1441 = vpack.c.bf16 %v1428, %v1428
  %v1442 = vpack.c.bf16 %v1429, %v1429
  %v1443 = vpack.c.bf16 %v1430, %v1430
  %v1444 = vpack.c.bf16 %v1431, %v1431
  %v1445 = vpack.c.bf16 %v1432, %v1432
  %v1446 = vpack.c.bf16 %v1433, %v1433
  %1447 = vst [vmem:[%s4] sm:$0xf] %v1434
  %1448 = vst [vmem:[%s4 + $0x4] sm:$0xf] %v1435
  %1449 = vst [vmem:[%s4 + $0x8] sm:$0xf] %v1436
  %1450 = vst [vmem:[%s4 + $0xc] sm:$0xf] %v1437
  %1451 = vst [vmem:[%s4 + $0x10] sm:$0xf] %v1438
  %1452 = vst [vmem:[%s4 + $0x14] sm:$0xf] %v1439
  %1453 = vst [vmem:[%s4 + $0x18] sm:$0xf] %v1440
  %1454 = vst [vmem:[%s4 + $0x1c] sm:$0xf] %v1441
  %1455 = vst [vmem:[%s4 + $0x20] sm:$0xf] %v1442
  %1456 = vst [vmem:[%s4 + $0x24] sm:$0xf] %v1443
  %1457 = vst [vmem:[%s4 + $0x28] sm:$0xf] %v1444
  %1458 = vst [vmem:[%s4 + $0x2c] sm:$0xf] %v1445
  %1459 = vst [vmem:[%s4 + $0x30] sm:$0xf] %v1446
  // Predicated region
  $region18: #{cnn_forward.4} parent=0 // pred_check
    _
  $region19: #{cnn_forward.4} parent=0 // pred_check_branch
    %1461 = sbr.rel (0) target = $region21
  $region20: #{cnn_forward.4} parent=0 // pred_region
    _
  $region21: #{cnn_forward.4} parent=0 // pred_fallthru
    _
  // Predicated region
  $region22: #{cnn_forward.4} parent=0 // pred_check
    _
  $region23: #{cnn_forward.4} parent=0 // pred_check_branch
    %1463 = sbr.rel (0) target = $region25
  $region24: #{cnn_forward.4} parent=0 // pred_region
    _
  $region25: #{cnn_forward.4} parent=0 // pred_fallthru
    _

// kernel: cnn_forward.5
$region0: #{cnn_forward.5}
  #allocation0 [shape = 'u32[]', space=smem, size = 0x4, offset = 0x4, fixed_abs, tag = 'smem constant byte address 0x4 - core index']
  #allocation1 [shape = 'u32[72,128]{1,0:T(1,128)}', space=vmem, size = 0x9000, scoped, tag = 'internal scratch']
  %s0 = inlined_call_operand.vmem [shape: bf16[8,6272], index: 0, kind: input, shape index: {}]
  %s1 = inlined_call_operand.vmem [shape: bf16[6272,256], index: 1, kind: input, shape index: {}]
  %s2 = inlined_call_operand.vmem [shape: f32[1,256], index: 2, kind: input, shape index: {}]
  %s3 = inlined_call_operand.vmem [shape: f32[256,128], index: 3, kind: input, shape index: {}]
  %s4 = inlined_call_operand.vmem [shape: f32[1,128], index: 4, kind: input, shape index: {}]
  %s5 = inlined_call_operand.vmem [shape: f32[128,10], index: 5, kind: input, shape index: {}]
  %s6 = inlined_call_operand.vmem [shape: f32[1,10], index: 6, kind: input, shape index: {}]
  %s7 = inlined_call_operand.vmem [shape: f32[8,10], index: 7, kind: output, shape index: {}]
  %s8 = sld [smem:[#allocation0]]
  $region38: #{cnn_forward.5} parent=0
    _
  %s10 = ssub.s32 1, %s8
  %s11 = scalar_select 0, %s10, %s8
  // Predicated region
  $region2: #{cnn_forward.5} parent=0 // pred_check
    _
  $region3: #{cnn_forward.5} parent=0 // pred_check_branch
    %13 = sbr.rel (0) target = $region5
  $region4: #{cnn_forward.5} parent=0 // pred_region
    _
  $region5: #{cnn_forward.5} parent=0 // pred_fallthru
    _
  // Predicated region
  $region6: #{cnn_forward.5} parent=0 // pred_check
    _
  $region7: #{cnn_forward.5} parent=0 // pred_check_branch
    %15 = sbr.rel (0) target = $region9
  $region8: #{cnn_forward.5} parent=0 // pred_region
    _
  $region9: #{cnn_forward.5} parent=0 // pred_fallthru
    _
  // Predicated region
  $region10: #{cnn_forward.5} parent=0 // pred_check
    _
  $region11: #{cnn_forward.5} parent=0 // pred_check_branch
    %17 = sbr.rel (0) target = $region13
  $region12: #{cnn_forward.5} parent=0 // pred_region
    _
  $region13: #{cnn_forward.5} parent=0 // pred_fallthru
    _
  // Predicated region
  $region14: #{cnn_forward.5} parent=0 // pred_check
    _
  $region15: #{cnn_forward.5} parent=0 // pred_check_branch
    %19 = sbr.rel (0) target = $region17
  $region16: #{cnn_forward.5} parent=0 // pred_region
    _
  $region17: #{cnn_forward.5} parent=0 // pred_fallthru
    _
  // Predicated region
  $region18: #{cnn_forward.5} parent=0 // pred_check
    _
  $region19: #{cnn_forward.5} parent=0 // pred_check_branch
    %21 = sbr.rel (0) target = $region21
  $region20: #{cnn_forward.5} parent=0 // pred_region
    _
  $region21: #{cnn_forward.5} parent=0 // pred_fallthru
    _
  // Predicated region
  $region22: #{cnn_forward.5} parent=0 // pred_check
    _
  $region23: #{cnn_forward.5} parent=0 // pred_check_branch
    %23 = sbr.rel (0) target = $region25
  $region24: #{cnn_forward.5} parent=0 // pred_region
    _
  $region25: #{cnn_forward.5} parent=0 // pred_fallthru
    _
  // Predicated region
  $region26: #{cnn_forward.5} parent=0 // pred_check
    _
  $region27: #{cnn_forward.5} parent=0 // pred_check_branch
    %25 = sbr.rel (0) target = $region29
  $region28: #{cnn_forward.5} parent=0 // pred_region
    _
  $region29: #{cnn_forward.5} parent=0 // pred_fallthru
    _
  %v26 = vld [vmem:[%s0] sm:$0xff]
  %v27 = vld [vmem:[%s0 + $0x8] sm:$0xff]
  %v28 = vld [vmem:[%s0 + $0x10] sm:$0xff]
  %v29 = vld [vmem:[%s0 + $0x18] sm:$0xff]
  %v30 = vld [vmem:[%s0 + $0x20] sm:$0xff]
  %v31 = vld [vmem:[%s0 + $0x28] sm:$0xff]
  %v32 = vld [vmem:[%s0 + $0x30] sm:$0xff]
  %v33 = vld [vmem:[%s0 + $0x38] sm:$0xff]
  %v34 = vld [vmem:[%s0 + $0x40] sm:$0xff]
  %v35 = vld [vmem:[%s0 + $0x48] sm:$0xff]
  %v36 = vld [vmem:[%s0 + $0x50] sm:$0xff]
  %v37 = vld [vmem:[%s0 + $0x58] sm:$0xff]
  %v38 = vld [vmem:[%s0 + $0x60] sm:$0xff]
  %v39 = vld [vmem:[%s0 + $0x68] sm:$0xff]
  %v40 = vld [vmem:[%s0 + $0x70] sm:$0xff]
  %v41 = vld [vmem:[%s0 + $0x78] sm:$0xff]
  %v42 = vld [vmem:[%s0 + $0x80] sm:$0xff]
  %v43 = vld [vmem:[%s0 + $0x88] sm:$0xff]
  %v44 = vld [vmem:[%s0 + $0x90] sm:$0xff]
  %v45 = vld [vmem:[%s0 + $0x98] sm:$0xff]
  %v46 = vld [vmem:[%s0 + $0xa0] sm:$0xff]
  %v47 = vld [vmem:[%s0 + $0xa8] sm:$0xff]
  %v48 = vld [vmem:[%s0 + $0xb0] sm:$0xff]
  %v49 = vld [vmem:[%s0 + $0xb8] sm:$0xff]
  %v50 = vld [vmem:[%s0 + $0xc0] sm:$0xf]
  %v51 = vld [vmem:[%s1] sm:$0xff]
  %v52 = vld [vmem:[%s1 + $0x8] sm:$0xff]
  %v53 = vld [vmem:[%s1 + $0x10] sm:$0xff]
  %v54 = vld [vmem:[%s1 + $0x18] sm:$0xff]
  %v55 = vld [vmem:[%s1 + $0x20] sm:$0xff]
  %v56 = vld [vmem:[%s1 + $0x28] sm:$0xff]
  %v57 = vld [vmem:[%s1 + $0x30] sm:$0xff]
  %v58 = vld [vmem:[%s1 + $0x38] sm:$0xff]
  %v59 = vld [vmem:[%s1 + $0x40] sm:$0xff]
  %v60 = vld [vmem:[%s1 + $0x48] sm:$0xff]
  %v61 = vld [vmem:[%s1 + $0x50] sm:$0xff]
  %v62 = vld [vmem:[%s1 + $0x58] sm:$0xff]
  %v63 = vld [vmem:[%s1 + $0x60] sm:$0xff]
  %v64 = vld [vmem:[%s1 + $0x68] sm:$0xff]
  %v65 = vld [vmem:[%s1 + $0x70] sm:$0xff]
  %v66 = vld [vmem:[%s1 + $0x78] sm:$0xff]
  %v67 = vld [vmem:[%s1 + $0x80] sm:$0xff]
  %v68 = vld [vmem:[%s1 + $0x88] sm:$0xff]
  %v69 = vld [vmem:[%s1 + $0x90] sm:$0xff]
  %v70 = vld [vmem:[%s1 + $0x98] sm:$0xff]
  %v71 = vld [vmem:[%s1 + $0xa0] sm:$0xff]
  %v72 = vld [vmem:[%s1 + $0xa8] sm:$0xff]
  %v73 = vld [vmem:[%s1 + $0xb0] sm:$0xff]
  %v74 = vld [vmem:[%s1 + $0xb8] sm:$0xff]
  %v75 = vld [vmem:[%s1 + $0xc0] sm:$0xff]
  %v76 = vld [vmem:[%s1 + $0xc8] sm:$0xff]
  %v77 = vld [vmem:[%s1 + $0xd0] sm:$0xff]
  %v78 = vld [vmem:[%s1 + $0xd8] sm:$0xff]
  %v79 = vld [vmem:[%s1 + $0xe0] sm:$0xff]
  %v80 = vld [vmem:[%s1 + $0xe8] sm:$0xff]
  %v81 = vld [vmem:[%s1 + $0xf0] sm:$0xff]
  %v82 = vld [vmem:[%s1 + $0xf8] sm:$0xff]
  %v83 = vld [vmem:[%s1 + $0x100] sm:$0xff]
  %v84 = vld [vmem:[%s1 + $0x108] sm:$0xff]
  %v85 = vld [vmem:[%s1 + $0x110] sm:$0xff]
  %v86 = vld [vmem:[%s1 + $0x118] sm:$0xff]
  %v87 = vld [vmem:[%s1 + $0x120] sm:$0xff]
  %v88 = vld [vmem:[%s1 + $0x128] sm:$0xff]
  %v89 = vld [vmem:[%s1 + $0x130] sm:$0xff]
  %v90 = vld [vmem:[%s1 + $0x138] sm:$0xff]
  %v91 = vld [vmem:[%s1 + $0x140] sm:$0xff]
  %v92 = vld [vmem:[%s1 + $0x148] sm:$0xff]
  %v93 = vld [vmem:[%s1 + $0x150] sm:$0xff]
  %v94 = vld [vmem:[%s1 + $0x158] sm:$0xff]
  %v95 = vld [vmem:[%s1 + $0x160] sm:$0xff]
  %v96 = vld [vmem:[%s1 + $0x168] sm:$0xff]
  %v97 = vld [vmem:[%s1 + $0x170] sm:$0xff]
  %v98 = vld [vmem:[%s1 + $0x178] sm:$0xff]
  %v99 = vld [vmem:[%s1 + $0x180] sm:$0xff]
  %v100 = vld [vmem:[%s1 + $0x188] sm:$0xff]
  %v101 = vld [vmem:[%s1 + $0x190] sm:$0xff]
  %v102 = vld [vmem:[%s1 + $0x198] sm:$0xff]
  %v103 = vld [vmem:[%s1 + $0x1a0] sm:$0xff]
  %v104 = vld [vmem:[%s1 + $0x1a8] sm:$0xff]
  %v105 = vld [vmem:[%s1 + $0x1b0] sm:$0xff]
  %v106 = vld [vmem:[%s1 + $0x1b8] sm:$0xff]
  %v107 = vld [vmem:[%s1 + $0x1c0] sm:$0xff]
  %v108 = vld [vmem:[%s1 + $0x1c8] sm:$0xff]
  %v109 = vld [vmem:[%s1 + $0x1d0] sm:$0xff]
  %v110 = vld [vmem:[%s1 + $0x1d8] sm:$0xff]
  %v111 = vld [vmem:[%s1 + $0x1e0] sm:$0xff]
  %v112 = vld [vmem:[%s1 + $0x1e8] sm:$0xff]
  %v113 = vld [vmem:[%s1 + $0x1f0] sm:$0xff]
  %v114 = vld [vmem:[%s1 + $0x1f8] sm:$0xff]
  %v115 = vld [vmem:[%s1 + $0x200] sm:$0xff]
  %v116 = vld [vmem:[%s1 + $0x208] sm:$0xff]
  %v117 = vld [vmem:[%s1 + $0x210] sm:$0xff]
  %v118 = vld [vmem:[%s1 + $0x218] sm:$0xff]
  %v119 = vld [vmem:[%s1 + $0x220] sm:$0xff]
  %v120 = vld [vmem:[%s1 + $0x228] sm:$0xff]
  %v121 = vld [vmem:[%s1 + $0x230] sm:$0xff]
  %v122 = vld [vmem:[%s1 + $0x238] sm:$0xff]
  %v123 = vld [vmem:[%s1 + $0x240] sm:$0xff]
  %v124 = vld [vmem:[%s1 + $0x248] sm:$0xff]
  %v125 = vld [vmem:[%s1 + $0x250] sm:$0xff]
  %v126 = vld [vmem:[%s1 + $0x258] sm:$0xff]
  %v127 = vld [vmem:[%s1 + $0x260] sm:$0xff]
  %v128 = vld [vmem:[%s1 + $0x268] sm:$0xff]
  %v129 = vld [vmem:[%s1 + $0x270] sm:$0xff]
  %v130 = vld [vmem:[%s1 + $0x278] sm:$0xff]
  %v131 = vld [vmem:[%s1 + $0x280] sm:$0xff]
  %v132 = vld [vmem:[%s1 + $0x288] sm:$0xff]
  %v133 = vld [vmem:[%s1 + $0x290] sm:$0xff]
  %v134 = vld [vmem:[%s1 + $0x298] sm:$0xff]
  %v135 = vld [vmem:[%s1 + $0x2a0] sm:$0xff]
  %v136 = vld [vmem:[%s1 + $0x2a8] sm:$0xff]
  %v137 = vld [vmem:[%s1 + $0x2b0] sm:$0xff]
  %v138 = vld [vmem:[%s1 + $0x2b8] sm:$0xff]
  %v139 = vld [vmem:[%s1 + $0x2c0] sm:$0xff]
  %v140 = vld [vmem:[%s1 + $0x2c8] sm:$0xff]
  %v141 = vld [vmem:[%s1 + $0x2d0] sm:$0xff]
  %v142 = vld [vmem:[%s1 + $0x2d8] sm:$0xff]
  %v143 = vld [vmem:[%s1 + $0x2e0] sm:$0xff]
  %v144 = vld [vmem:[%s1 + $0x2e8] sm:$0xff]
  %v145 = vld [vmem:[%s1 + $0x2f0] sm:$0xff]
  %v146 = vld [vmem:[%s1 + $0x2f8] sm:$0xff]
  %v147 = vld [vmem:[%s1 + $0x300] sm:$0xff]
  %v148 = vld [vmem:[%s1 + $0x308] sm:$0xff]
  %v149 = vld [vmem:[%s1 + $0x310] sm:$0xff]
  %v150 = vld [vmem:[%s1 + $0x318] sm:$0xff]
  %v151 = vld [vmem:[%s1 + $0x320] sm:$0xff]
  %v152 = vld [vmem:[%s1 + $0x328] sm:$0xff]
  %v153 = vld [vmem:[%s1 + $0x330] sm:$0xff]
  %v154 = vld [vmem:[%s1 + $0x338] sm:$0xff]
  %v155 = vld [vmem:[%s1 + $0x340] sm:$0xff]
  %v156 = vld [vmem:[%s1 + $0x348] sm:$0xff]
  %v157 = vld [vmem:[%s1 + $0x350] sm:$0xff]
  %v158 = vld [vmem:[%s1 + $0x358] sm:$0xff]
  %v159 = vld [vmem:[%s1 + $0x360] sm:$0xff]
  %v160 = vld [vmem:[%s1 + $0x368] sm:$0xff]
  %v161 = vld [vmem:[%s1 + $0x370] sm:$0xff]
  %v162 = vld [vmem:[%s1 + $0x378] sm:$0xff]
  %v163 = vld [vmem:[%s1 + $0x380] sm:$0xff]
  %v164 = vld [vmem:[%s1 + $0x388] sm:$0xff]
  %v165 = vld [vmem:[%s1 + $0x390] sm:$0xff]
  %v166 = vld [vmem:[%s1 + $0x398] sm:$0xff]
  %v167 = vld [vmem:[%s1 + $0x3a0] sm:$0xff]
  %v168 = vld [vmem:[%s1 + $0x3a8] sm:$0xff]
  %v169 = vld [vmem:[%s1 + $0x3b0] sm:$0xff]
  %v170 = vld [vmem:[%s1 + $0x3b8] sm:$0xff]
  %v171 = vld [vmem:[%s1 + $0x3c0] sm:$0xff]
  %v172 = vld [vmem:[%s1 + $0x3c8] sm:$0xff]
  %v173 = vld [vmem:[%s1 + $0x3d0] sm:$0xff]
  %v174 = vld [vmem:[%s1 + $0x3d8] sm:$0xff]
  %v175 = vld [vmem:[%s1 + $0x3e0] sm:$0xff]
  %v176 = vld [vmem:[%s1 + $0x3e8] sm:$0xff]
  %v177 = vld [vmem:[%s1 + $0x3f0] sm:$0xff]
  %v178 = vld [vmem:[%s1 + $0x3f8] sm:$0xff]
  %v179 = vld [vmem:[%s1 + $0x400] sm:$0xff]
  %v180 = vld [vmem:[%s1 + $0x408] sm:$0xff]
  %v181 = vld [vmem:[%s1 + $0x410] sm:$0xff]
  %v182 = vld [vmem:[%s1 + $0x418] sm:$0xff]
  %v183 = vld [vmem:[%s1 + $0x420] sm:$0xff]
  %v184 = vld [vmem:[%s1 + $0x428] sm:$0xff]
  %v185 = vld [vmem:[%s1 + $0x430] sm:$0xff]
  %v186 = vld [vmem:[%s1 + $0x438] sm:$0xff]
  %v187 = vld [vmem:[%s1 + $0x440] sm:$0xff]
  %v188 = vld [vmem:[%s1 + $0x448] sm:$0xff]
  %v189 = vld [vmem:[%s1 + $0x450] sm:$0xff]
  %v190 = vld [vmem:[%s1 + $0x458] sm:$0xff]
  %v191 = vld [vmem:[%s1 + $0x460] sm:$0xff]
  %v192 = vld [vmem:[%s1 + $0x468] sm:$0xff]
  %v193 = vld [vmem:[%s1 + $0x470] sm:$0xff]
  %v194 = vld [vmem:[%s1 + $0x478] sm:$0xff]
  %v195 = vld [vmem:[%s1 + $0x480] sm:$0xff]
  %v196 = vld [vmem:[%s1 + $0x488] sm:$0xff]
  %v197 = vld [vmem:[%s1 + $0x490] sm:$0xff]
  %v198 = vld [vmem:[%s1 + $0x498] sm:$0xff]
  %v199 = vld [vmem:[%s1 + $0x4a0] sm:$0xff]
  %v200 = vld [vmem:[%s1 + $0x4a8] sm:$0xff]
  %v201 = vld [vmem:[%s1 + $0x4b0] sm:$0xff]
  %v202 = vld [vmem:[%s1 + $0x4b8] sm:$0xff]
  %v203 = vld [vmem:[%s1 + $0x4c0] sm:$0xff]
  %v204 = vld [vmem:[%s1 + $0x4c8] sm:$0xff]
  %v205 = vld [vmem:[%s1 + $0x4d0] sm:$0xff]
  %v206 = vld [vmem:[%s1 + $0x4d8] sm:$0xff]
  %v207 = vld [vmem:[%s1 + $0x4e0] sm:$0xff]
  %v208 = vld [vmem:[%s1 + $0x4e8] sm:$0xff]
  %v209 = vld [vmem:[%s1 + $0x4f0] sm:$0xff]
  %v210 = vld [vmem:[%s1 + $0x4f8] sm:$0xff]
  %v211 = vld [vmem:[%s1 + $0x500] sm:$0xff]
  %v212 = vld [vmem:[%s1 + $0x508] sm:$0xff]
  %v213 = vld [vmem:[%s1 + $0x510] sm:$0xff]
  %v214 = vld [vmem:[%s1 + $0x518] sm:$0xff]
  %v215 = vld [vmem:[%s1 + $0x520] sm:$0xff]
  %v216 = vld [vmem:[%s1 + $0x528] sm:$0xff]
  %v217 = vld [vmem:[%s1 + $0x530] sm:$0xff]
  %v218 = vld [vmem:[%s1 + $0x538] sm:$0xff]
  %v219 = vld [vmem:[%s1 + $0x540] sm:$0xff]
  %v220 = vld [vmem:[%s1 + $0x548] sm:$0xff]
  %v221 = vld [vmem:[%s1 + $0x550] sm:$0xff]
  %v222 = vld [vmem:[%s1 + $0x558] sm:$0xff]
  %v223 = vld [vmem:[%s1 + $0x560] sm:$0xff]
  %v224 = vld [vmem:[%s1 + $0x568] sm:$0xff]
  %v225 = vld [vmem:[%s1 + $0x570] sm:$0xff]
  %v226 = vld [vmem:[%s1 + $0x578] sm:$0xff]
  %v227 = vld [vmem:[%s1 + $0x580] sm:$0xff]
  %v228 = vld [vmem:[%s1 + $0x588] sm:$0xff]
  %v229 = vld [vmem:[%s1 + $0x590] sm:$0xff]
  %v230 = vld [vmem:[%s1 + $0x598] sm:$0xff]
  %v231 = vld [vmem:[%s1 + $0x5a0] sm:$0xff]
  %v232 = vld [vmem:[%s1 + $0x5a8] sm:$0xff]
  %v233 = vld [vmem:[%s1 + $0x5b0] sm:$0xff]
  %v234 = vld [vmem:[%s1 + $0x5b8] sm:$0xff]
  %v235 = vld [vmem:[%s1 + $0x5c0] sm:$0xff]
  %v236 = vld [vmem:[%s1 + $0x5c8] sm:$0xff]
  %v237 = vld [vmem:[%s1 + $0x5d0] sm:$0xff]
  %v238 = vld [vmem:[%s1 + $0x5d8] sm:$0xff]
  %v239 = vld [vmem:[%s1 + $0x5e0] sm:$0xff]
  %v240 = vld [vmem:[%s1 + $0x5e8] sm:$0xff]
  %v241 = vld [vmem:[%s1 + $0x5f0] sm:$0xff]
  %v242 = vld [vmem:[%s1 + $0x5f8] sm:$0xff]
  %v243 = vld [vmem:[%s1 + $0x600] sm:$0xff]
  %v244 = vld [vmem:[%s1 + $0x608] sm:$0xff]
  %v245 = vld [vmem:[%s1 + $0x610] sm:$0xff]
  %v246 = vld [vmem:[%s1 + $0x618] sm:$0xff]
  %v247 = vld [vmem:[%s1 + $0x620] sm:$0xff]
  %v248 = vld [vmem:[%s1 + $0x628] sm:$0xff]
  %v249 = vld [vmem:[%s1 + $0x630] sm:$0xff]
  %v250 = vld [vmem:[%s1 + $0x638] sm:$0xff]
  %v251 = vld [vmem:[%s1 + $0x640] sm:$0xff]
  %v252 = vld [vmem:[%s1 + $0x648] sm:$0xff]
  %v253 = vld [vmem:[%s1 + $0x650] sm:$0xff]
  %v254 = vld [vmem:[%s1 + $0x658] sm:$0xff]
  %v255 = vld [vmem:[%s1 + $0x660] sm:$0xff]
  %v256 = vld [vmem:[%s1 + $0x668] sm:$0xff]
  %v257 = vld [vmem:[%s1 + $0x670] sm:$0xff]
  %v258 = vld [vmem:[%s1 + $0x678] sm:$0xff]
  %v259 = vld [vmem:[%s1 + $0x680] sm:$0xff]
  %v260 = vld [vmem:[%s1 + $0x688] sm:$0xff]
  %v261 = vld [vmem:[%s1 + $0x690] sm:$0xff]
  %v262 = vld [vmem:[%s1 + $0x698] sm:$0xff]
  %v263 = vld [vmem:[%s1 + $0x6a0] sm:$0xff]
  %v264 = vld [vmem:[%s1 + $0x6a8] sm:$0xff]
  %v265 = vld [vmem:[%s1 + $0x6b0] sm:$0xff]
  %v266 = vld [vmem:[%s1 + $0x6b8] sm:$0xff]
  %v267 = vld [vmem:[%s1 + $0x6c0] sm:$0xff]
  %v268 = vld [vmem:[%s1 + $0x6c8] sm:$0xff]
  %v269 = vld [vmem:[%s1 + $0x6d0] sm:$0xff]
  %v270 = vld [vmem:[%s1 + $0x6d8] sm:$0xff]
  %v271 = vld [vmem:[%s1 + $0x6e0] sm:$0xff]
  %v272 = vld [vmem:[%s1 + $0x6e8] sm:$0xff]
  %v273 = vld [vmem:[%s1 + $0x6f0] sm:$0xff]
  %v274 = vld [vmem:[%s1 + $0x6f8] sm:$0xff]
  %v275 = vld [vmem:[%s1 + $0x700] sm:$0xff]
  %v276 = vld [vmem:[%s1 + $0x708] sm:$0xff]
  %v277 = vld [vmem:[%s1 + $0x710] sm:$0xff]
  %v278 = vld [vmem:[%s1 + $0x718] sm:$0xff]
  %v279 = vld [vmem:[%s1 + $0x720] sm:$0xff]
  %v280 = vld [vmem:[%s1 + $0x728] sm:$0xff]
  %v281 = vld [vmem:[%s1 + $0x730] sm:$0xff]
  %v282 = vld [vmem:[%s1 + $0x738] sm:$0xff]
  %v283 = vld [vmem:[%s1 + $0x740] sm:$0xff]
  %v284 = vld [vmem:[%s1 + $0x748] sm:$0xff]
  %v285 = vld [vmem:[%s1 + $0x750] sm:$0xff]
  %v286 = vld [vmem:[%s1 + $0x758] sm:$0xff]
  %v287 = vld [vmem:[%s1 + $0x760] sm:$0xff]
  %v288 = vld [vmem:[%s1 + $0x768] sm:$0xff]
  %v289 = vld [vmem:[%s1 + $0x770] sm:$0xff]
  %v290 = vld [vmem:[%s1 + $0x778] sm:$0xff]
  %v291 = vld [vmem:[%s1 + $0x780] sm:$0xff]
  %v292 = vld [vmem:[%s1 + $0x788] sm:$0xff]
  %v293 = vld [vmem:[%s1 + $0x790] sm:$0xff]
  %v294 = vld [vmem:[%s1 + $0x798] sm:$0xff]
  %v295 = vld [vmem:[%s1 + $0x7a0] sm:$0xff]
  %v296 = vld [vmem:[%s1 + $0x7a8] sm:$0xff]
  %v297 = vld [vmem:[%s1 + $0x7b0] sm:$0xff]
  %v298 = vld [vmem:[%s1 + $0x7b8] sm:$0xff]
  %v299 = vld [vmem:[%s1 + $0x7c0] sm:$0xff]
  %v300 = vld [vmem:[%s1 + $0x7c8] sm:$0xff]
  %v301 = vld [vmem:[%s1 + $0x7d0] sm:$0xff]
  %v302 = vld [vmem:[%s1 + $0x7d8] sm:$0xff]
  %v303 = vld [vmem:[%s1 + $0x7e0] sm:$0xff]
  %v304 = vld [vmem:[%s1 + $0x7e8] sm:$0xff]
  %v305 = vld [vmem:[%s1 + $0x7f0] sm:$0xff]
  %v306 = vld [vmem:[%s1 + $0x7f8] sm:$0xff]
  %v307 = vld [vmem:[%s1 + $0x800] sm:$0xff]
  %v308 = vld [vmem:[%s1 + $0x808] sm:$0xff]
  %v309 = vld [vmem:[%s1 + $0x810] sm:$0xff]
  %v310 = vld [vmem:[%s1 + $0x818] sm:$0xff]
  %v311 = vld [vmem:[%s1 + $0x820] sm:$0xff]
  %v312 = vld [vmem:[%s1 + $0x828] sm:$0xff]
  %v313 = vld [vmem:[%s1 + $0x830] sm:$0xff]
  %v314 = vld [vmem:[%s1 + $0x838] sm:$0xff]
  %v315 = vld [vmem:[%s1 + $0x840] sm:$0xff]
  %v316 = vld [vmem:[%s1 + $0x848] sm:$0xff]
  %v317 = vld [vmem:[%s1 + $0x850] sm:$0xff]
  %v318 = vld [vmem:[%s1 + $0x858] sm:$0xff]
  %v319 = vld [vmem:[%s1 + $0x860] sm:$0xff]
  %v320 = vld [vmem:[%s1 + $0x868] sm:$0xff]
  %v321 = vld [vmem:[%s1 + $0x870] sm:$0xff]
  %v322 = vld [vmem:[%s1 + $0x878] sm:$0xff]
  %v323 = vld [vmem:[%s1 + $0x880] sm:$0xff]
  %v324 = vld [vmem:[%s1 + $0x888] sm:$0xff]
  %v325 = vld [vmem:[%s1 + $0x890] sm:$0xff]
  %v326 = vld [vmem:[%s1 + $0x898] sm:$0xff]
  %v327 = vld [vmem:[%s1 + $0x8a0] sm:$0xff]
  %v328 = vld [vmem:[%s1 + $0x8a8] sm:$0xff]
  %v329 = vld [vmem:[%s1 + $0x8b0] sm:$0xff]
  %v330 = vld [vmem:[%s1 + $0x8b8] sm:$0xff]
  %v331 = vld [vmem:[%s1 + $0x8c0] sm:$0xff]
  %v332 = vld [vmem:[%s1 + $0x8c8] sm:$0xff]
  %v333 = vld [vmem:[%s1 + $0x8d0] sm:$0xff]
  %v334 = vld [vmem:[%s1 + $0x8d8] sm:$0xff]
  %v335 = vld [vmem:[%s1 + $0x8e0] sm:$0xff]
  %v336 = vld [vmem:[%s1 + $0x8e8] sm:$0xff]
  %v337 = vld [vmem:[%s1 + $0x8f0] sm:$0xff]
  %v338 = vld [vmem:[%s1 + $0x8f8] sm:$0xff]
  %v339 = vld [vmem:[%s1 + $0x900] sm:$0xff]
  %v340 = vld [vmem:[%s1 + $0x908] sm:$0xff]
  %v341 = vld [vmem:[%s1 + $0x910] sm:$0xff]
  %v342 = vld [vmem:[%s1 + $0x918] sm:$0xff]
  %v343 = vld [vmem:[%s1 + $0x920] sm:$0xff]
  %v344 = vld [vmem:[%s1 + $0x928] sm:$0xff]
  %v345 = vld [vmem:[%s1 + $0x930] sm:$0xff]
  %v346 = vld [vmem:[%s1 + $0x938] sm:$0xff]
  %v347 = vld [vmem:[%s1 + $0x940] sm:$0xff]
  %v348 = vld [vmem:[%s1 + $0x948] sm:$0xff]
  %v349 = vld [vmem:[%s1 + $0x950] sm:$0xff]
  %v350 = vld [vmem:[%s1 + $0x958] sm:$0xff]
  %v351 = vld [vmem:[%s1 + $0x960] sm:$0xff]
  %v352 = vld [vmem:[%s1 + $0x968] sm:$0xff]
  %v353 = vld [vmem:[%s1 + $0x970] sm:$0xff]
  %v354 = vld [vmem:[%s1 + $0x978] sm:$0xff]
  %v355 = vld [vmem:[%s1 + $0x980] sm:$0xff]
  %v356 = vld [vmem:[%s1 + $0x988] sm:$0xff]
  %v357 = vld [vmem:[%s1 + $0x990] sm:$0xff]
  %v358 = vld [vmem:[%s1 + $0x998] sm:$0xff]
  %v359 = vld [vmem:[%s1 + $0x9a0] sm:$0xff]
  %v360 = vld [vmem:[%s1 + $0x9a8] sm:$0xff]
  %v361 = vld [vmem:[%s1 + $0x9b0] sm:$0xff]
  %v362 = vld [vmem:[%s1 + $0x9b8] sm:$0xff]
  %v363 = vld [vmem:[%s1 + $0x9c0] sm:$0xff]
  %v364 = vld [vmem:[%s1 + $0x9c8] sm:$0xff]
  %v365 = vld [vmem:[%s1 + $0x9d0] sm:$0xff]
  %v366 = vld [vmem:[%s1 + $0x9d8] sm:$0xff]
  %v367 = vld [vmem:[%s1 + $0x9e0] sm:$0xff]
  %v368 = vld [vmem:[%s1 + $0x9e8] sm:$0xff]
  %v369 = vld [vmem:[%s1 + $0x9f0] sm:$0xff]
  %v370 = vld [vmem:[%s1 + $0x9f8] sm:$0xff]
  %v371 = vld [vmem:[%s1 + $0xa00] sm:$0xff]
  %v372 = vld [vmem:[%s1 + $0xa08] sm:$0xff]
  %v373 = vld [vmem:[%s1 + $0xa10] sm:$0xff]
  %v374 = vld [vmem:[%s1 + $0xa18] sm:$0xff]
  %v375 = vld [vmem:[%s1 + $0xa20] sm:$0xff]
  %v376 = vld [vmem:[%s1 + $0xa28] sm:$0xff]
  %v377 = vld [vmem:[%s1 + $0xa30] sm:$0xff]
  %v378 = vld [vmem:[%s1 + $0xa38] sm:$0xff]
  %v379 = vld [vmem:[%s1 + $0xa40] sm:$0xff]
  %v380 = vld [vmem:[%s1 + $0xa48] sm:$0xff]
  %v381 = vld [vmem:[%s1 + $0xa50] sm:$0xff]
  %v382 = vld [vmem:[%s1 + $0xa58] sm:$0xff]
  %v383 = vld [vmem:[%s1 + $0xa60] sm:$0xff]
  %v384 = vld [vmem:[%s1 + $0xa68] sm:$0xff]
  %v385 = vld [vmem:[%s1 + $0xa70] sm:$0xff]
  %v386 = vld [vmem:[%s1 + $0xa78] sm:$0xff]
  %v387 = vld [vmem:[%s1 + $0xa80] sm:$0xff]
  %v388 = vld [vmem:[%s1 + $0xa88] sm:$0xff]
  %v389 = vld [vmem:[%s1 + $0xa90] sm:$0xff]
  %v390 = vld [vmem:[%s1 + $0xa98] sm:$0xff]
  %v391 = vld [vmem:[%s1 + $0xaa0] sm:$0xff]
  %v392 = vld [vmem:[%s1 + $0xaa8] sm:$0xff]
  %v393 = vld [vmem:[%s1 + $0xab0] sm:$0xff]
  %v394 = vld [vmem:[%s1 + $0xab8] sm:$0xff]
  %v395 = vld [vmem:[%s1 + $0xac0] sm:$0xff]
  %v396 = vld [vmem:[%s1 + $0xac8] sm:$0xff]
  %v397 = vld [vmem:[%s1 + $0xad0] sm:$0xff]
  %v398 = vld [vmem:[%s1 + $0xad8] sm:$0xff]
  %v399 = vld [vmem:[%s1 + $0xae0] sm:$0xff]
  %v400 = vld [vmem:[%s1 + $0xae8] sm:$0xff]
  %v401 = vld [vmem:[%s1 + $0xaf0] sm:$0xff]
  %v402 = vld [vmem:[%s1 + $0xaf8] sm:$0xff]
  %v403 = vld [vmem:[%s1 + $0xb00] sm:$0xff]
  %v404 = vld [vmem:[%s1 + $0xb08] sm:$0xff]
  %v405 = vld [vmem:[%s1 + $0xb10] sm:$0xff]
  %v406 = vld [vmem:[%s1 + $0xb18] sm:$0xff]
  %v407 = vld [vmem:[%s1 + $0xb20] sm:$0xff]
  %v408 = vld [vmem:[%s1 + $0xb28] sm:$0xff]
  %v409 = vld [vmem:[%s1 + $0xb30] sm:$0xff]
  %v410 = vld [vmem:[%s1 + $0xb38] sm:$0xff]
  %v411 = vld [vmem:[%s1 + $0xb40] sm:$0xff]
  %v412 = vld [vmem:[%s1 + $0xb48] sm:$0xff]
  %v413 = vld [vmem:[%s1 + $0xb50] sm:$0xff]
  %v414 = vld [vmem:[%s1 + $0xb58] sm:$0xff]
  %v415 = vld [vmem:[%s1 + $0xb60] sm:$0xff]
  %v416 = vld [vmem:[%s1 + $0xb68] sm:$0xff]
  %v417 = vld [vmem:[%s1 + $0xb70] sm:$0xff]
  %v418 = vld [vmem:[%s1 + $0xb78] sm:$0xff]
  %v419 = vld [vmem:[%s1 + $0xb80] sm:$0xff]
  %v420 = vld [vmem:[%s1 + $0xb88] sm:$0xff]
  %v421 = vld [vmem:[%s1 + $0xb90] sm:$0xff]
  %v422 = vld [vmem:[%s1 + $0xb98] sm:$0xff]
  %v423 = vld [vmem:[%s1 + $0xba0] sm:$0xff]
  %v424 = vld [vmem:[%s1 + $0xba8] sm:$0xff]
  %v425 = vld [vmem:[%s1 + $0xbb0] sm:$0xff]
  %v426 = vld [vmem:[%s1 + $0xbb8] sm:$0xff]
  %v427 = vld [vmem:[%s1 + $0xbc0] sm:$0xff]
  %v428 = vld [vmem:[%s1 + $0xbc8] sm:$0xff]
  %v429 = vld [vmem:[%s1 + $0xbd0] sm:$0xff]
  %v430 = vld [vmem:[%s1 + $0xbd8] sm:$0xff]
  %v431 = vld [vmem:[%s1 + $0xbe0] sm:$0xff]
  %v432 = vld [vmem:[%s1 + $0xbe8] sm:$0xff]
  %v433 = vld [vmem:[%s1 + $0xbf0] sm:$0xff]
  %v434 = vld [vmem:[%s1 + $0xbf8] sm:$0xff]
  %v435 = vld [vmem:[%s1 + $0xc00] sm:$0xff]
  %v436 = vld [vmem:[%s1 + $0xc08] sm:$0xff]
  %v437 = vld [vmem:[%s1 + $0xc10] sm:$0xff]
  %v438 = vld [vmem:[%s1 + $0xc18] sm:$0xff]
  %v439 = vld [vmem:[%s1 + $0xc20] sm:$0xff]
  %v440 = vld [vmem:[%s1 + $0xc28] sm:$0xff]
  %v441 = vld [vmem:[%s1 + $0xc30] sm:$0xff]
  %v442 = vld [vmem:[%s1 + $0xc38] sm:$0xff]
  %v443 = vld [vmem:[%s1 + $0xc40] sm:$0xff]
  %v444 = vld [vmem:[%s1 + $0xc48] sm:$0xff]
  %v445 = vld [vmem:[%s1 + $0xc50] sm:$0xff]
  %v446 = vld [vmem:[%s1 + $0xc58] sm:$0xff]
  %v447 = vld [vmem:[%s1 + $0xc60] sm:$0xff]
  %v448 = vld [vmem:[%s1 + $0xc68] sm:$0xff]
  %v449 = vld [vmem:[%s1 + $0xc70] sm:$0xff]
  %v450 = vld [vmem:[%s1 + $0xc78] sm:$0xff]
  %v451 = vld [vmem:[%s1 + $0xc80] sm:$0xff]
  %v452 = vld [vmem:[%s1 + $0xc88] sm:$0xff]
  %v453 = vld [vmem:[%s1 + $0xc90] sm:$0xff]
  %v454 = vld [vmem:[%s1 + $0xc98] sm:$0xff]
  %v455 = vld [vmem:[%s1 + $0xca0] sm:$0xff]
  %v456 = vld [vmem:[%s1 + $0xca8] sm:$0xff]
  %v457 = vld [vmem:[%s1 + $0xcb0] sm:$0xff]
  %v458 = vld [vmem:[%s1 + $0xcb8] sm:$0xff]
  %v459 = vld [vmem:[%s1 + $0xcc0] sm:$0xff]
  %v460 = vld [vmem:[%s1 + $0xcc8] sm:$0xff]
  %v461 = vld [vmem:[%s1 + $0xcd0] sm:$0xff]
  %v462 = vld [vmem:[%s1 + $0xcd8] sm:$0xff]
  %v463 = vld [vmem:[%s1 + $0xce0] sm:$0xff]
  %v464 = vld [vmem:[%s1 + $0xce8] sm:$0xff]
  %v465 = vld [vmem:[%s1 + $0xcf0] sm:$0xff]
  %v466 = vld [vmem:[%s1 + $0xcf8] sm:$0xff]
  %v467 = vld [vmem:[%s1 + $0xd00] sm:$0xff]
  %v468 = vld [vmem:[%s1 + $0xd08] sm:$0xff]
  %v469 = vld [vmem:[%s1 + $0xd10] sm:$0xff]
  %v470 = vld [vmem:[%s1 + $0xd18] sm:$0xff]
  %v471 = vld [vmem:[%s1 + $0xd20] sm:$0xff]
  %v472 = vld [vmem:[%s1 + $0xd28] sm:$0xff]
  %v473 = vld [vmem:[%s1 + $0xd30] sm:$0xff]
  %v474 = vld [vmem:[%s1 + $0xd38] sm:$0xff]
  %v475 = vld [vmem:[%s1 + $0xd40] sm:$0xff]
  %v476 = vld [vmem:[%s1 + $0xd48] sm:$0xff]
  %v477 = vld [vmem:[%s1 + $0xd50] sm:$0xff]
  %v478 = vld [vmem:[%s1 + $0xd58] sm:$0xff]
  %v479 = vld [vmem:[%s1 + $0xd60] sm:$0xff]
  %v480 = vld [vmem:[%s1 + $0xd68] sm:$0xff]
  %v481 = vld [vmem:[%s1 + $0xd70] sm:$0xff]
  %v482 = vld [vmem:[%s1 + $0xd78] sm:$0xff]
  %v483 = vld [vmem:[%s1 + $0xd80] sm:$0xff]
  %v484 = vld [vmem:[%s1 + $0xd88] sm:$0xff]
  %v485 = vld [vmem:[%s1 + $0xd90] sm:$0xff]
  %v486 = vld [vmem:[%s1 + $0xd98] sm:$0xff]
  %v487 = vld [vmem:[%s1 + $0xda0] sm:$0xff]
  %v488 = vld [vmem:[%s1 + $0xda8] sm:$0xff]
  %v489 = vld [vmem:[%s1 + $0xdb0] sm:$0xff]
  %v490 = vld [vmem:[%s1 + $0xdb8] sm:$0xff]
  %v491 = vld [vmem:[%s1 + $0xdc0] sm:$0xff]
  %v492 = vld [vmem:[%s1 + $0xdc8] sm:$0xff]
  %v493 = vld [vmem:[%s1 + $0xdd0] sm:$0xff]
  %v494 = vld [vmem:[%s1 + $0xdd8] sm:$0xff]
  %v495 = vld [vmem:[%s1 + $0xde0] sm:$0xff]
  %v496 = vld [vmem:[%s1 + $0xde8] sm:$0xff]
  %v497 = vld [vmem:[%s1 + $0xdf0] sm:$0xff]
  %v498 = vld [vmem:[%s1 + $0xdf8] sm:$0xff]
  %v499 = vld [vmem:[%s1 + $0xe00] sm:$0xff]
  %v500 = vld [vmem:[%s1 + $0xe08] sm:$0xff]
  %v501 = vld [vmem:[%s1 + $0xe10] sm:$0xff]
  %v502 = vld [vmem:[%s1 + $0xe18] sm:$0xff]
  %v503 = vld [vmem:[%s1 + $0xe20] sm:$0xff]
  %v504 = vld [vmem:[%s1 + $0xe28] sm:$0xff]
  %v505 = vld [vmem:[%s1 + $0xe30] sm:$0xff]
  %v506 = vld [vmem:[%s1 + $0xe38] sm:$0xff]
  %v507 = vld [vmem:[%s1 + $0xe40] sm:$0xff]
  %v508 = vld [vmem:[%s1 + $0xe48] sm:$0xff]
  %v509 = vld [vmem:[%s1 + $0xe50] sm:$0xff]
  %v510 = vld [vmem:[%s1 + $0xe58] sm:$0xff]
  %v511 = vld [vmem:[%s1 + $0xe60] sm:$0xff]
  %v512 = vld [vmem:[%s1 + $0xe68] sm:$0xff]
  %v513 = vld [vmem:[%s1 + $0xe70] sm:$0xff]
  %v514 = vld [vmem:[%s1 + $0xe78] sm:$0xff]
  %v515 = vld [vmem:[%s1 + $0xe80] sm:$0xff]
  %v516 = vld [vmem:[%s1 + $0xe88] sm:$0xff]
  %v517 = vld [vmem:[%s1 + $0xe90] sm:$0xff]
  %v518 = vld [vmem:[%s1 + $0xe98] sm:$0xff]
  %v519 = vld [vmem:[%s1 + $0xea0] sm:$0xff]
  %v520 = vld [vmem:[%s1 + $0xea8] sm:$0xff]
  %v521 = vld [vmem:[%s1 + $0xeb0] sm:$0xff]
  %v522 = vld [vmem:[%s1 + $0xeb8] sm:$0xff]
  %v523 = vld [vmem:[%s1 + $0xec0] sm:$0xff]
  %v524 = vld [vmem:[%s1 + $0xec8] sm:$0xff]
  %v525 = vld [vmem:[%s1 + $0xed0] sm:$0xff]
  %v526 = vld [vmem:[%s1 + $0xed8] sm:$0xff]
  %v527 = vld [vmem:[%s1 + $0xee0] sm:$0xff]
  %v528 = vld [vmem:[%s1 + $0xee8] sm:$0xff]
  %v529 = vld [vmem:[%s1 + $0xef0] sm:$0xff]
  %v530 = vld [vmem:[%s1 + $0xef8] sm:$0xff]
  %v531 = vld [vmem:[%s1 + $0xf00] sm:$0xff]
  %v532 = vld [vmem:[%s1 + $0xf08] sm:$0xff]
  %v533 = vld [vmem:[%s1 + $0xf10] sm:$0xff]
  %v534 = vld [vmem:[%s1 + $0xf18] sm:$0xff]
  %v535 = vld [vmem:[%s1 + $0xf20] sm:$0xff]
  %v536 = vld [vmem:[%s1 + $0xf28] sm:$0xff]
  %v537 = vld [vmem:[%s1 + $0xf30] sm:$0xff]
  %v538 = vld [vmem:[%s1 + $0xf38] sm:$0xff]
  %v539 = vld [vmem:[%s1 + $0xf40] sm:$0xff]
  %v540 = vld [vmem:[%s1 + $0xf48] sm:$0xff]
  %v541 = vld [vmem:[%s1 + $0xf50] sm:$0xff]
  %v542 = vld [vmem:[%s1 + $0xf58] sm:$0xff]
  %v543 = vld [vmem:[%s1 + $0xf60] sm:$0xff]
  %v544 = vld [vmem:[%s1 + $0xf68] sm:$0xff]
  %v545 = vld [vmem:[%s1 + $0xf70] sm:$0xff]
  %v546 = vld [vmem:[%s1 + $0xf78] sm:$0xff]
  %v547 = vld [vmem:[%s1 + $0xf80] sm:$0xff]
  %v548 = vld [vmem:[%s1 + $0xf88] sm:$0xff]
  %v549 = vld [vmem:[%s1 + $0xf90] sm:$0xff]
  %v550 = vld [vmem:[%s1 + $0xf98] sm:$0xff]
  %v551 = vld [vmem:[%s1 + $0xfa0] sm:$0xff]
  %v552 = vld [vmem:[%s1 + $0xfa8] sm:$0xff]
  %v553 = vld [vmem:[%s1 + $0xfb0] sm:$0xff]
  %v554 = vld [vmem:[%s1 + $0xfb8] sm:$0xff]
  %v555 = vld [vmem:[%s1 + $0xfc0] sm:$0xff]
  %v556 = vld [vmem:[%s1 + $0xfc8] sm:$0xff]
  %v557 = vld [vmem:[%s1 + $0xfd0] sm:$0xff]
  %v558 = vld [vmem:[%s1 + $0xfd8] sm:$0xff]
  %v559 = vld [vmem:[%s1 + $0xfe0] sm:$0xff]
  %v560 = vld [vmem:[%s1 + $0xfe8] sm:$0xff]
  %v561 = vld [vmem:[%s1 + $0xff0] sm:$0xff]
  %v562 = vld [vmem:[%s1 + $0xff8] sm:$0xff]
  %v563 = vld [vmem:[%s1 + $0x1000] sm:$0xff]
  %v564 = vld [vmem:[%s1 + $0x1008] sm:$0xff]
  %v565 = vld [vmem:[%s1 + $0x1010] sm:$0xff]
  %v566 = vld [vmem:[%s1 + $0x1018] sm:$0xff]
  %v567 = vld [vmem:[%s1 + $0x1020] sm:$0xff]
  %v568 = vld [vmem:[%s1 + $0x1028] sm:$0xff]
  %v569 = vld [vmem:[%s1 + $0x1030] sm:$0xff]
  %v570 = vld [vmem:[%s1 + $0x1038] sm:$0xff]
  %v571 = vld [vmem:[%s1 + $0x1040] sm:$0xff]
  %v572 = vld [vmem:[%s1 + $0x1048] sm:$0xff]
  %v573 = vld [vmem:[%s1 + $0x1050] sm:$0xff]
  %v574 = vld [vmem:[%s1 + $0x1058] sm:$0xff]
  %v575 = vld [vmem:[%s1 + $0x1060] sm:$0xff]
  %v576 = vld [vmem:[%s1 + $0x1068] sm:$0xff]
  %v577 = vld [vmem:[%s1 + $0x1070] sm:$0xff]
  %v578 = vld [vmem:[%s1 + $0x1078] sm:$0xff]
  %v579 = vld [vmem:[%s1 + $0x1080] sm:$0xff]
  %v580 = vld [vmem:[%s1 + $0x1088] sm:$0xff]
  %v581 = vld [vmem:[%s1 + $0x1090] sm:$0xff]
  %v582 = vld [vmem:[%s1 + $0x1098] sm:$0xff]
  %v583 = vld [vmem:[%s1 + $0x10a0] sm:$0xff]
  %v584 = vld [vmem:[%s1 + $0x10a8] sm:$0xff]
  %v585 = vld [vmem:[%s1 + $0x10b0] sm:$0xff]
  %v586 = vld [vmem:[%s1 + $0x10b8] sm:$0xff]
  %v587 = vld [vmem:[%s1 + $0x10c0] sm:$0xff]
  %v588 = vld [vmem:[%s1 + $0x10c8] sm:$0xff]
  %v589 = vld [vmem:[%s1 + $0x10d0] sm:$0xff]
  %v590 = vld [vmem:[%s1 + $0x10d8] sm:$0xff]
  %v591 = vld [vmem:[%s1 + $0x10e0] sm:$0xff]
  %v592 = vld [vmem:[%s1 + $0x10e8] sm:$0xff]
  %v593 = vld [vmem:[%s1 + $0x10f0] sm:$0xff]
  %v594 = vld [vmem:[%s1 + $0x10f8] sm:$0xff]
  %v595 = vld [vmem:[%s1 + $0x1100] sm:$0xff]
  %v596 = vld [vmem:[%s1 + $0x1108] sm:$0xff]
  %v597 = vld [vmem:[%s1 + $0x1110] sm:$0xff]
  %v598 = vld [vmem:[%s1 + $0x1118] sm:$0xff]
  %v599 = vld [vmem:[%s1 + $0x1120] sm:$0xff]
  %v600 = vld [vmem:[%s1 + $0x1128] sm:$0xff]
  %v601 = vld [vmem:[%s1 + $0x1130] sm:$0xff]
  %v602 = vld [vmem:[%s1 + $0x1138] sm:$0xff]
  %v603 = vld [vmem:[%s1 + $0x1140] sm:$0xff]
  %v604 = vld [vmem:[%s1 + $0x1148] sm:$0xff]
  %v605 = vld [vmem:[%s1 + $0x1150] sm:$0xff]
  %v606 = vld [vmem:[%s1 + $0x1158] sm:$0xff]
  %v607 = vld [vmem:[%s1 + $0x1160] sm:$0xff]
  %v608 = vld [vmem:[%s1 + $0x1168] sm:$0xff]
  %v609 = vld [vmem:[%s1 + $0x1170] sm:$0xff]
  %v610 = vld [vmem:[%s1 + $0x1178] sm:$0xff]
  %v611 = vld [vmem:[%s1 + $0x1180] sm:$0xff]
  %v612 = vld [vmem:[%s1 + $0x1188] sm:$0xff]
  %v613 = vld [vmem:[%s1 + $0x1190] sm:$0xff]
  %v614 = vld [vmem:[%s1 + $0x1198] sm:$0xff]
  %v615 = vld [vmem:[%s1 + $0x11a0] sm:$0xff]
  %v616 = vld [vmem:[%s1 + $0x11a8] sm:$0xff]
  %v617 = vld [vmem:[%s1 + $0x11b0] sm:$0xff]
  %v618 = vld [vmem:[%s1 + $0x11b8] sm:$0xff]
  %v619 = vld [vmem:[%s1 + $0x11c0] sm:$0xff]
  %v620 = vld [vmem:[%s1 + $0x11c8] sm:$0xff]
  %v621 = vld [vmem:[%s1 + $0x11d0] sm:$0xff]
  %v622 = vld [vmem:[%s1 + $0x11d8] sm:$0xff]
  %v623 = vld [vmem:[%s1 + $0x11e0] sm:$0xff]
  %v624 = vld [vmem:[%s1 + $0x11e8] sm:$0xff]
  %v625 = vld [vmem:[%s1 + $0x11f0] sm:$0xff]
  %v626 = vld [vmem:[%s1 + $0x11f8] sm:$0xff]
  %v627 = vld [vmem:[%s1 + $0x1200] sm:$0xff]
  %v628 = vld [vmem:[%s1 + $0x1208] sm:$0xff]
  %v629 = vld [vmem:[%s1 + $0x1210] sm:$0xff]
  %v630 = vld [vmem:[%s1 + $0x1218] sm:$0xff]
  %v631 = vld [vmem:[%s1 + $0x1220] sm:$0xff]
  %v632 = vld [vmem:[%s1 + $0x1228] sm:$0xff]
  %v633 = vld [vmem:[%s1 + $0x1230] sm:$0xff]
  %v634 = vld [vmem:[%s1 + $0x1238] sm:$0xff]
  %v635 = vld [vmem:[%s1 + $0x1240] sm:$0xff]
  %v636 = vld [vmem:[%s1 + $0x1248] sm:$0xff]
  %v637 = vld [vmem:[%s1 + $0x1250] sm:$0xff]
  %v638 = vld [vmem:[%s1 + $0x1258] sm:$0xff]
  %v639 = vld [vmem:[%s1 + $0x1260] sm:$0xff]
  %v640 = vld [vmem:[%s1 + $0x1268] sm:$0xff]
  %v641 = vld [vmem:[%s1 + $0x1270] sm:$0xff]
  %v642 = vld [vmem:[%s1 + $0x1278] sm:$0xff]
  %v643 = vld [vmem:[%s1 + $0x1280] sm:$0xff]
  %v644 = vld [vmem:[%s1 + $0x1288] sm:$0xff]
  %v645 = vld [vmem:[%s1 + $0x1290] sm:$0xff]
  %v646 = vld [vmem:[%s1 + $0x1298] sm:$0xff]
  %v647 = vld [vmem:[%s1 + $0x12a0] sm:$0xff]
  %v648 = vld [vmem:[%s1 + $0x12a8] sm:$0xff]
  %v649 = vld [vmem:[%s1 + $0x12b0] sm:$0xff]
  %v650 = vld [vmem:[%s1 + $0x12b8] sm:$0xff]
  %v651 = vld [vmem:[%s1 + $0x12c0] sm:$0xff]
  %v652 = vld [vmem:[%s1 + $0x12c8] sm:$0xff]
  %v653 = vld [vmem:[%s1 + $0x12d0] sm:$0xff]
  %v654 = vld [vmem:[%s1 + $0x12d8] sm:$0xff]
  %v655 = vld [vmem:[%s1 + $0x12e0] sm:$0xff]
  %v656 = vld [vmem:[%s1 + $0x12e8] sm:$0xff]
  %v657 = vld [vmem:[%s1 + $0x12f0] sm:$0xff]
  %v658 = vld [vmem:[%s1 + $0x12f8] sm:$0xff]
  %v659 = vld [vmem:[%s1 + $0x1300] sm:$0xff]
  %v660 = vld [vmem:[%s1 + $0x1308] sm:$0xff]
  %v661 = vld [vmem:[%s1 + $0x1310] sm:$0xff]
  %v662 = vld [vmem:[%s1 + $0x1318] sm:$0xff]
  %v663 = vld [vmem:[%s1 + $0x1320] sm:$0xff]
  %v664 = vld [vmem:[%s1 + $0x1328] sm:$0xff]
  %v665 = vld [vmem:[%s1 + $0x1330] sm:$0xff]
  %v666 = vld [vmem:[%s1 + $0x1338] sm:$0xff]
  %v667 = vld [vmem:[%s1 + $0x1340] sm:$0xff]
  %v668 = vld [vmem:[%s1 + $0x1348] sm:$0xff]
  %v669 = vld [vmem:[%s1 + $0x1350] sm:$0xff]
  %v670 = vld [vmem:[%s1 + $0x1358] sm:$0xff]
  %v671 = vld [vmem:[%s1 + $0x1360] sm:$0xff]
  %v672 = vld [vmem:[%s1 + $0x1368] sm:$0xff]
  %v673 = vld [vmem:[%s1 + $0x1370] sm:$0xff]
  %v674 = vld [vmem:[%s1 + $0x1378] sm:$0xff]
  %v675 = vld [vmem:[%s1 + $0x1380] sm:$0xff]
  %v676 = vld [vmem:[%s1 + $0x1388] sm:$0xff]
  %v677 = vld [vmem:[%s1 + $0x1390] sm:$0xff]
  %v678 = vld [vmem:[%s1 + $0x1398] sm:$0xff]
  %v679 = vld [vmem:[%s1 + $0x13a0] sm:$0xff]
  %v680 = vld [vmem:[%s1 + $0x13a8] sm:$0xff]
  %v681 = vld [vmem:[%s1 + $0x13b0] sm:$0xff]
  %v682 = vld [vmem:[%s1 + $0x13b8] sm:$0xff]
  %v683 = vld [vmem:[%s1 + $0x13c0] sm:$0xff]
  %v684 = vld [vmem:[%s1 + $0x13c8] sm:$0xff]
  %v685 = vld [vmem:[%s1 + $0x13d0] sm:$0xff]
  %v686 = vld [vmem:[%s1 + $0x13d8] sm:$0xff]
  %v687 = vld [vmem:[%s1 + $0x13e0] sm:$0xff]
  %v688 = vld [vmem:[%s1 + $0x13e8] sm:$0xff]
  %v689 = vld [vmem:[%s1 + $0x13f0] sm:$0xff]
  %v690 = vld [vmem:[%s1 + $0x13f8] sm:$0xff]
  %v691 = vld [vmem:[%s1 + $0x1400] sm:$0xff]
  %v692 = vld [vmem:[%s1 + $0x1408] sm:$0xff]
  %v693 = vld [vmem:[%s1 + $0x1410] sm:$0xff]
  %v694 = vld [vmem:[%s1 + $0x1418] sm:$0xff]
  %v695 = vld [vmem:[%s1 + $0x1420] sm:$0xff]
  %v696 = vld [vmem:[%s1 + $0x1428] sm:$0xff]
  %v697 = vld [vmem:[%s1 + $0x1430] sm:$0xff]
  %v698 = vld [vmem:[%s1 + $0x1438] sm:$0xff]
  %v699 = vld [vmem:[%s1 + $0x1440] sm:$0xff]
  %v700 = vld [vmem:[%s1 + $0x1448] sm:$0xff]
  %v701 = vld [vmem:[%s1 + $0x1450] sm:$0xff]
  %v702 = vld [vmem:[%s1 + $0x1458] sm:$0xff]
  %v703 = vld [vmem:[%s1 + $0x1460] sm:$0xff]
  %v704 = vld [vmem:[%s1 + $0x1468] sm:$0xff]
  %v705 = vld [vmem:[%s1 + $0x1470] sm:$0xff]
  %v706 = vld [vmem:[%s1 + $0x1478] sm:$0xff]
  %v707 = vld [vmem:[%s1 + $0x1480] sm:$0xff]
  %v708 = vld [vmem:[%s1 + $0x1488] sm:$0xff]
  %v709 = vld [vmem:[%s1 + $0x1490] sm:$0xff]
  %v710 = vld [vmem:[%s1 + $0x1498] sm:$0xff]
  %v711 = vld [vmem:[%s1 + $0x14a0] sm:$0xff]
  %v712 = vld [vmem:[%s1 + $0x14a8] sm:$0xff]
  %v713 = vld [vmem:[%s1 + $0x14b0] sm:$0xff]
  %v714 = vld [vmem:[%s1 + $0x14b8] sm:$0xff]
  %v715 = vld [vmem:[%s1 + $0x14c0] sm:$0xff]
  %v716 = vld [vmem:[%s1 + $0x14c8] sm:$0xff]
  %v717 = vld [vmem:[%s1 + $0x14d0] sm:$0xff]
  %v718 = vld [vmem:[%s1 + $0x14d8] sm:$0xff]
  %v719 = vld [vmem:[%s1 + $0x14e0] sm:$0xff]
  %v720 = vld [vmem:[%s1 + $0x14e8] sm:$0xff]
  %v721 = vld [vmem:[%s1 + $0x14f0] sm:$0xff]
  %v722 = vld [vmem:[%s1 + $0x14f8] sm:$0xff]
  %v723 = vld [vmem:[%s1 + $0x1500] sm:$0xff]
  %v724 = vld [vmem:[%s1 + $0x1508] sm:$0xff]
  %v725 = vld [vmem:[%s1 + $0x1510] sm:$0xff]
  %v726 = vld [vmem:[%s1 + $0x1518] sm:$0xff]
  %v727 = vld [vmem:[%s1 + $0x1520] sm:$0xff]
  %v728 = vld [vmem:[%s1 + $0x1528] sm:$0xff]
  %v729 = vld [vmem:[%s1 + $0x1530] sm:$0xff]
  %v730 = vld [vmem:[%s1 + $0x1538] sm:$0xff]
  %v731 = vld [vmem:[%s1 + $0x1540] sm:$0xff]
  %v732 = vld [vmem:[%s1 + $0x1548] sm:$0xff]
  %v733 = vld [vmem:[%s1 + $0x1550] sm:$0xff]
  %v734 = vld [vmem:[%s1 + $0x1558] sm:$0xff]
  %v735 = vld [vmem:[%s1 + $0x1560] sm:$0xff]
  %v736 = vld [vmem:[%s1 + $0x1568] sm:$0xff]
  %v737 = vld [vmem:[%s1 + $0x1570] sm:$0xff]
  %v738 = vld [vmem:[%s1 + $0x1578] sm:$0xff]
  %v739 = vld [vmem:[%s1 + $0x1580] sm:$0xff]
  %v740 = vld [vmem:[%s1 + $0x1588] sm:$0xff]
  %v741 = vld [vmem:[%s1 + $0x1590] sm:$0xff]
  %v742 = vld [vmem:[%s1 + $0x1598] sm:$0xff]
  %v743 = vld [vmem:[%s1 + $0x15a0] sm:$0xff]
  %v744 = vld [vmem:[%s1 + $0x15a8] sm:$0xff]
  %v745 = vld [vmem:[%s1 + $0x15b0] sm:$0xff]
  %v746 = vld [vmem:[%s1 + $0x15b8] sm:$0xff]
  %v747 = vld [vmem:[%s1 + $0x15c0] sm:$0xff]
  %v748 = vld [vmem:[%s1 + $0x15c8] sm:$0xff]
  %v749 = vld [vmem:[%s1 + $0x15d0] sm:$0xff]
  %v750 = vld [vmem:[%s1 + $0x15d8] sm:$0xff]
  %v751 = vld [vmem:[%s1 + $0x15e0] sm:$0xff]
  %v752 = vld [vmem:[%s1 + $0x15e8] sm:$0xff]
  %v753 = vld [vmem:[%s1 + $0x15f0] sm:$0xff]
  %v754 = vld [vmem:[%s1 + $0x15f8] sm:$0xff]
  %v755 = vld [vmem:[%s1 + $0x1600] sm:$0xff]
  %v756 = vld [vmem:[%s1 + $0x1608] sm:$0xff]
  %v757 = vld [vmem:[%s1 + $0x1610] sm:$0xff]
  %v758 = vld [vmem:[%s1 + $0x1618] sm:$0xff]
  %v759 = vld [vmem:[%s1 + $0x1620] sm:$0xff]
  %v760 = vld [vmem:[%s1 + $0x1628] sm:$0xff]
  %v761 = vld [vmem:[%s1 + $0x1630] sm:$0xff]
  %v762 = vld [vmem:[%s1 + $0x1638] sm:$0xff]
  %v763 = vld [vmem:[%s1 + $0x1640] sm:$0xff]
  %v764 = vld [vmem:[%s1 + $0x1648] sm:$0xff]
  %v765 = vld [vmem:[%s1 + $0x1650] sm:$0xff]
  %v766 = vld [vmem:[%s1 + $0x1658] sm:$0xff]
  %v767 = vld [vmem:[%s1 + $0x1660] sm:$0xff]
  %v768 = vld [vmem:[%s1 + $0x1668] sm:$0xff]
  %v769 = vld [vmem:[%s1 + $0x1670] sm:$0xff]
  %v770 = vld [vmem:[%s1 + $0x1678] sm:$0xff]
  %v771 = vld [vmem:[%s1 + $0x1680] sm:$0xff]
  %v772 = vld [vmem:[%s1 + $0x1688] sm:$0xff]
  %v773 = vld [vmem:[%s1 + $0x1690] sm:$0xff]
  %v774 = vld [vmem:[%s1 + $0x1698] sm:$0xff]
  %v775 = vld [vmem:[%s1 + $0x16a0] sm:$0xff]
  %v776 = vld [vmem:[%s1 + $0x16a8] sm:$0xff]
  %v777 = vld [vmem:[%s1 + $0x16b0] sm:$0xff]
  %v778 = vld [vmem:[%s1 + $0x16b8] sm:$0xff]
  %v779 = vld [vmem:[%s1 + $0x16c0] sm:$0xff]
  %v780 = vld [vmem:[%s1 + $0x16c8] sm:$0xff]
  %v781 = vld [vmem:[%s1 + $0x16d0] sm:$0xff]
  %v782 = vld [vmem:[%s1 + $0x16d8] sm:$0xff]
  %v783 = vld [vmem:[%s1 + $0x16e0] sm:$0xff]
  %v784 = vld [vmem:[%s1 + $0x16e8] sm:$0xff]
  %v785 = vld [vmem:[%s1 + $0x16f0] sm:$0xff]
  %v786 = vld [vmem:[%s1 + $0x16f8] sm:$0xff]
  %v787 = vld [vmem:[%s1 + $0x1700] sm:$0xff]
  %v788 = vld [vmem:[%s1 + $0x1708] sm:$0xff]
  %v789 = vld [vmem:[%s1 + $0x1710] sm:$0xff]
  %v790 = vld [vmem:[%s1 + $0x1718] sm:$0xff]
  %v791 = vld [vmem:[%s1 + $0x1720] sm:$0xff]
  %v792 = vld [vmem:[%s1 + $0x1728] sm:$0xff]
  %v793 = vld [vmem:[%s1 + $0x1730] sm:$0xff]
  %v794 = vld [vmem:[%s1 + $0x1738] sm:$0xff]
  %v795 = vld [vmem:[%s1 + $0x1740] sm:$0xff]
  %v796 = vld [vmem:[%s1 + $0x1748] sm:$0xff]
  %v797 = vld [vmem:[%s1 + $0x1750] sm:$0xff]
  %v798 = vld [vmem:[%s1 + $0x1758] sm:$0xff]
  %v799 = vld [vmem:[%s1 + $0x1760] sm:$0xff]
  %v800 = vld [vmem:[%s1 + $0x1768] sm:$0xff]
  %v801 = vld [vmem:[%s1 + $0x1770] sm:$0xff]
  %v802 = vld [vmem:[%s1 + $0x1778] sm:$0xff]
  %v803 = vld [vmem:[%s1 + $0x1780] sm:$0xff]
  %v804 = vld [vmem:[%s1 + $0x1788] sm:$0xff]
  %v805 = vld [vmem:[%s1 + $0x1790] sm:$0xff]
  %v806 = vld [vmem:[%s1 + $0x1798] sm:$0xff]
  %v807 = vld [vmem:[%s1 + $0x17a0] sm:$0xff]
  %v808 = vld [vmem:[%s1 + $0x17a8] sm:$0xff]
  %v809 = vld [vmem:[%s1 + $0x17b0] sm:$0xff]
  %v810 = vld [vmem:[%s1 + $0x17b8] sm:$0xff]
  %v811 = vld [vmem:[%s1 + $0x17c0] sm:$0xff]
  %v812 = vld [vmem:[%s1 + $0x17c8] sm:$0xff]
  %v813 = vld [vmem:[%s1 + $0x17d0] sm:$0xff]
  %v814 = vld [vmem:[%s1 + $0x17d8] sm:$0xff]
  %v815 = vld [vmem:[%s1 + $0x17e0] sm:$0xff]
  %v816 = vld [vmem:[%s1 + $0x17e8] sm:$0xff]
  %v817 = vld [vmem:[%s1 + $0x17f0] sm:$0xff]
  %v818 = vld [vmem:[%s1 + $0x17f8] sm:$0xff]
  %v819 = vld [vmem:[%s1 + $0x1800] sm:$0xff]
  %v820 = vld [vmem:[%s1 + $0x1808] sm:$0xff]
  %v821 = vld [vmem:[%s1 + $0x1810] sm:$0xff]
  %v822 = vld [vmem:[%s1 + $0x1818] sm:$0xff]
  %v823 = vld [vmem:[%s1 + $0x1820] sm:$0xff]
  %v824 = vld [vmem:[%s1 + $0x1828] sm:$0xff]
  %v825 = vld [vmem:[%s1 + $0x1830] sm:$0xff]
  %v826 = vld [vmem:[%s1 + $0x1838] sm:$0xff]
  %v827 = vld [vmem:[%s1 + $0x1840] sm:$0xff]
  %v828 = vld [vmem:[%s1 + $0x1848] sm:$0xff]
  %v829 = vld [vmem:[%s1 + $0x1850] sm:$0xff]
  %v830 = vld [vmem:[%s1 + $0x1858] sm:$0xff]
  %v831 = vld [vmem:[%s1 + $0x1860] sm:$0xff]
  %v832 = vld [vmem:[%s1 + $0x1868] sm:$0xff]
  %v833 = vld [vmem:[%s1 + $0x1870] sm:$0xff]
  %v834 = vld [vmem:[%s1 + $0x1878] sm:$0xff]
  %v835 = vld [vmem:[%s2] sm:$0x3]
  %v837 = vperm.slane %v835, 0
  %v838 = vperm.slane %v835, 1
  %v866 = vunpack.c.l.b16 %v26
  %v867 = vunpack.c.h.b16 %v26
  %v868 = vunpack.c.l.b16 %v27
  %v869 = vunpack.c.h.b16 %v27
  %v870 = vunpack.c.l.b16 %v28
  %v871 = vunpack.c.h.b16 %v28
  %v872 = vunpack.c.l.b16 %v29
  %v873 = vunpack.c.h.b16 %v29
  %v874 = vunpack.c.l.b16 %v30
  %v875 = vunpack.c.h.b16 %v30
  %v876 = vunpack.c.l.b16 %v31
  %v877 = vunpack.c.h.b16 %v31
  %v878 = vunpack.c.l.b16 %v32
  %v879 = vunpack.c.h.b16 %v32
  %v880 = vunpack.c.l.b16 %v33
  %v881 = vunpack.c.h.b16 %v33
  %v882 = vunpack.c.l.b16 %v34
  %v883 = vunpack.c.h.b16 %v34
  %v884 = vunpack.c.l.b16 %v35
  %v885 = vunpack.c.h.b16 %v35
  %v886 = vunpack.c.l.b16 %v36
  %v887 = vunpack.c.h.b16 %v36
  %v888 = vunpack.c.l.b16 %v37
  %v889 = vunpack.c.h.b16 %v37
  %v890 = vunpack.c.l.b16 %v38
  %v891 = vunpack.c.h.b16 %v38
  %v892 = vunpack.c.l.b16 %v39
  %v893 = vunpack.c.h.b16 %v39
  %v894 = vunpack.c.l.b16 %v40
  %v895 = vunpack.c.h.b16 %v40
  %v896 = vunpack.c.l.b16 %v41
  %v897 = vunpack.c.h.b16 %v41
  %v898 = vunpack.c.l.b16 %v42
  %v899 = vunpack.c.h.b16 %v42
  %v900 = vunpack.c.l.b16 %v43
  %v901 = vunpack.c.h.b16 %v43
  %v902 = vunpack.c.l.b16 %v44
  %v903 = vunpack.c.h.b16 %v44
  %v904 = vunpack.c.l.b16 %v45
  %v905 = vunpack.c.h.b16 %v45
  %v906 = vunpack.c.l.b16 %v46
  %v907 = vunpack.c.h.b16 %v46
  %v908 = vunpack.c.l.b16 %v47
  %v909 = vunpack.c.h.b16 %v47
  %v910 = vunpack.c.l.b16 %v48
  %v911 = vunpack.c.h.b16 %v48
  %v912 = vunpack.c.l.b16 %v49
  %v913 = vunpack.c.h.b16 %v49
  %v914 = vunpack.c.l.b16 %v50
  %v915 = vpack.c.b16 %v866, %v866
  %v916 = vpack.c.b16 %v867, %v867
  %v917 = vpack.c.b16 %v868, %v868
  %v918 = vpack.c.b16 %v869, %v869
  %v919 = vpack.c.b16 %v870, %v870
  %v920 = vpack.c.b16 %v871, %v871
  %v921 = vpack.c.b16 %v872, %v872
  %v922 = vpack.c.b16 %v873, %v873
  %v923 = vpack.c.b16 %v874, %v874
  %v924 = vpack.c.b16 %v875, %v875
  %v925 = vpack.c.b16 %v876, %v876
  %v926 = vpack.c.b16 %v877, %v877
  %v927 = vpack.c.b16 %v878, %v878
  %v928 = vpack.c.b16 %v879, %v879
  %v929 = vpack.c.b16 %v880, %v880
  %v930 = vpack.c.b16 %v881, %v881
  %v931 = vpack.c.b16 %v882, %v882
  %v932 = vpack.c.b16 %v883, %v883
  %v933 = vpack.c.b16 %v884, %v884
  %v934 = vpack.c.b16 %v885, %v885
  %v935 = vpack.c.b16 %v886, %v886
  %v936 = vpack.c.b16 %v887, %v887
  %v937 = vpack.c.b16 %v888, %v888
  %v938 = vpack.c.b16 %v889, %v889
  %v939 = vpack.c.b16 %v890, %v890
  %v940 = vpack.c.b16 %v891, %v891
  %v941 = vpack.c.b16 %v892, %v892
  %v942 = vpack.c.b16 %v893, %v893
  %v943 = vpack.c.b16 %v894, %v894
  %v944 = vpack.c.b16 %v895, %v895
  %v945 = vpack.c.b16 %v896, %v896
  %v946 = vpack.c.b16 %v897, %v897
  %v947 = vpack.c.b16 %v898, %v898
  %v948 = vpack.c.b16 %v899, %v899
  %v949 = vpack.c.b16 %v900, %v900
  %v950 = vpack.c.b16 %v901, %v901
  %v951 = vpack.c.b16 %v902, %v902
  %v952 = vpack.c.b16 %v903, %v903
  %v953 = vpack.c.b16 %v904, %v904
  %v954 = vpack.c.b16 %v905, %v905
  %v955 = vpack.c.b16 %v906, %v906
  %v956 = vpack.c.b16 %v907, %v907
  %v957 = vpack.c.b16 %v908, %v908
  %v958 = vpack.c.b16 %v909, %v909
  %v959 = vpack.c.b16 %v910, %v910
  %v960 = vpack.c.b16 %v911, %v911
  %v961 = vpack.c.b16 %v912, %v912
  %v962 = vpack.c.b16 %v913, %v913
  %v963 = vpack.c.b16 %v914, %v914
  %v1797 = vunpack.c.l.b16 %v51
  %v1798 = vunpack.c.h.b16 %v51
  %v1799 = vunpack.c.l.b16 %v52
  %v1800 = vunpack.c.h.b16 %v52
  %v1801 = vunpack.c.l.b16 %v53
  %v1802 = vunpack.c.h.b16 %v53
  %v1803 = vunpack.c.l.b16 %v54
  %v1804 = vunpack.c.h.b16 %v54
  %v1805 = vunpack.c.l.b16 %v55
  %v1806 = vunpack.c.h.b16 %v55
  %v1807 = vunpack.c.l.b16 %v56
  %v1808 = vunpack.c.h.b16 %v56
  %v1809 = vunpack.c.l.b16 %v57
  %v1810 = vunpack.c.h.b16 %v57
  %v1811 = vunpack.c.l.b16 %v58
  %v1812 = vunpack.c.h.b16 %v58
  %v1813 = vunpack.c.l.b16 %v59
  %v1814 = vunpack.c.h.b16 %v59
  %v1815 = vunpack.c.l.b16 %v60
  %v1816 = vunpack.c.h.b16 %v60
  %v1817 = vunpack.c.l.b16 %v61
  %v1818 = vunpack.c.h.b16 %v61
  %v1819 = vunpack.c.l.b16 %v62
  %v1820 = vunpack.c.h.b16 %v62
  %v1821 = vunpack.c.l.b16 %v63
  %v1822 = vunpack.c.h.b16 %v63
  %v1823 = vunpack.c.l.b16 %v64
  %v1824 = vunpack.c.h.b16 %v64
  %v1825 = vunpack.c.l.b16 %v65
  %v1826 = vunpack.c.h.b16 %v65
  %v1827 = vunpack.c.l.b16 %v66
  %v1828 = vunpack.c.h.b16 %v66
  %v1829 = vunpack.c.l.b16 %v67
  %v1830 = vunpack.c.h.b16 %v67
  %v1831 = vunpack.c.l.b16 %v68
  %v1832 = vunpack.c.h.b16 %v68
  %v1833 = vunpack.c.l.b16 %v69
  %v1834 = vunpack.c.h.b16 %v69
  %v1835 = vunpack.c.l.b16 %v70
  %v1836 = vunpack.c.h.b16 %v70
  %v1837 = vunpack.c.l.b16 %v71
  %v1838 = vunpack.c.h.b16 %v71
  %v1839 = vunpack.c.l.b16 %v72
  %v1840 = vunpack.c.h.b16 %v72
  %v1841 = vunpack.c.l.b16 %v73
  %v1842 = vunpack.c.h.b16 %v73
  %v1843 = vunpack.c.l.b16 %v74
  %v1844 = vunpack.c.h.b16 %v74
  %v1845 = vunpack.c.l.b16 %v75
  %v1846 = vunpack.c.h.b16 %v75
  %v1847 = vunpack.c.l.b16 %v76
  %v1848 = vunpack.c.h.b16 %v76
  %v1849 = vunpack.c.l.b16 %v77
  %v1850 = vunpack.c.h.b16 %v77
  %v1851 = vunpack.c.l.b16 %v78
  %v1852 = vunpack.c.h.b16 %v78
  %v1853 = vunpack.c.l.b16 %v79
  %v1854 = vunpack.c.h.b16 %v79
  %v1855 = vunpack.c.l.b16 %v80
  %v1856 = vunpack.c.h.b16 %v80
  %v1857 = vunpack.c.l.b16 %v81
  %v1858 = vunpack.c.h.b16 %v81
  %v1859 = vunpack.c.l.b16 %v82
  %v1860 = vunpack.c.h.b16 %v82
  %v1861 = vunpack.c.l.b16 %v83
  %v1862 = vunpack.c.h.b16 %v83
  %v1863 = vunpack.c.l.b16 %v84
  %v1864 = vunpack.c.h.b16 %v84
  %v1865 = vunpack.c.l.b16 %v85
  %v1866 = vunpack.c.h.b16 %v85
  %v1867 = vunpack.c.l.b16 %v86
  %v1868 = vunpack.c.h.b16 %v86
  %v1869 = vunpack.c.l.b16 %v87
  %v1870 = vunpack.c.h.b16 %v87
  %v1871 = vunpack.c.l.b16 %v88
  %v1872 = vunpack.c.h.b16 %v88
  %v1873 = vunpack.c.l.b16 %v89
  %v1874 = vunpack.c.h.b16 %v89
  %v1875 = vunpack.c.l.b16 %v90
  %v1876 = vunpack.c.h.b16 %v90
  %v1877 = vunpack.c.l.b16 %v91
  %v1878 = vunpack.c.h.b16 %v91
  %v1879 = vunpack.c.l.b16 %v92
  %v1880 = vunpack.c.h.b16 %v92
  %v1881 = vunpack.c.l.b16 %v93
  %v1882 = vunpack.c.h.b16 %v93
  %v1883 = vunpack.c.l.b16 %v94
  %v1884 = vunpack.c.h.b16 %v94
  %v1885 = vunpack.c.l.b16 %v95
  %v1886 = vunpack.c.h.b16 %v95
  %v1887 = vunpack.c.l.b16 %v96
  %v1888 = vunpack.c.h.b16 %v96
  %v1889 = vunpack.c.l.b16 %v97
  %v1890 = vunpack.c.h.b16 %v97
  %v1891 = vunpack.c.l.b16 %v98
  %v1892 = vunpack.c.h.b16 %v98
  %v1893 = vunpack.c.l.b16 %v99
  %v1894 = vunpack.c.h.b16 %v99
  %v1895 = vunpack.c.l.b16 %v100
  %v1896 = vunpack.c.h.b16 %v100
  %v1897 = vunpack.c.l.b16 %v101
  %v1898 = vunpack.c.h.b16 %v101
  %v1899 = vunpack.c.l.b16 %v102
  %v1900 = vunpack.c.h.b16 %v102
  %v1901 = vunpack.c.l.b16 %v103
  %v1902 = vunpack.c.h.b16 %v103
  %v1903 = vunpack.c.l.b16 %v104
  %v1904 = vunpack.c.h.b16 %v104
  %v1905 = vunpack.c.l.b16 %v105
  %v1906 = vunpack.c.h.b16 %v105
  %v1907 = vunpack.c.l.b16 %v106
  %v1908 = vunpack.c.h.b16 %v106
  %v1909 = vunpack.c.l.b16 %v107
  %v1910 = vunpack.c.h.b16 %v107
  %v1911 = vunpack.c.l.b16 %v108
  %v1912 = vunpack.c.h.b16 %v108
  %v1913 = vunpack.c.l.b16 %v109
  %v1914 = vunpack.c.h.b16 %v109
  %v1915 = vunpack.c.l.b16 %v110
  %v1916 = vunpack.c.h.b16 %v110
  %v1917 = vunpack.c.l.b16 %v111
  %v1918 = vunpack.c.h.b16 %v111
  %v1919 = vunpack.c.l.b16 %v112
  %v1920 = vunpack.c.h.b16 %v112
  %v1921 = vunpack.c.l.b16 %v113
  %v1922 = vunpack.c.h.b16 %v113
  %v1923 = vunpack.c.l.b16 %v114
  %v1924 = vunpack.c.h.b16 %v114
  %v1925 = vunpack.c.l.b16 %v115
  %v1926 = vunpack.c.h.b16 %v115
  %v1927 = vunpack.c.l.b16 %v116
  %v1928 = vunpack.c.h.b16 %v116
  %v1929 = vunpack.c.l.b16 %v117
  %v1930 = vunpack.c.h.b16 %v117
  %v1931 = vunpack.c.l.b16 %v118
  %v1932 = vunpack.c.h.b16 %v118
  %v1933 = vunpack.c.l.b16 %v119
  %v1934 = vunpack.c.h.b16 %v119
  %v1935 = vunpack.c.l.b16 %v120
  %v1936 = vunpack.c.h.b16 %v120
  %v1937 = vunpack.c.l.b16 %v121
  %v1938 = vunpack.c.h.b16 %v121
  %v1939 = vunpack.c.l.b16 %v122
  %v1940 = vunpack.c.h.b16 %v122
  %v1941 = vunpack.c.l.b16 %v123
  %v1942 = vunpack.c.h.b16 %v123
  %v1943 = vunpack.c.l.b16 %v124
  %v1944 = vunpack.c.h.b16 %v124
  %v1945 = vunpack.c.l.b16 %v125
  %v1946 = vunpack.c.h.b16 %v125
  %v1947 = vunpack.c.l.b16 %v126
  %v1948 = vunpack.c.h.b16 %v126
  %v1949 = vunpack.c.l.b16 %v127
  %v1950 = vunpack.c.h.b16 %v127
  %v1951 = vunpack.c.l.b16 %v128
  %v1952 = vunpack.c.h.b16 %v128
  %v1953 = vunpack.c.l.b16 %v129
  %v1954 = vunpack.c.h.b16 %v129
  %v1955 = vunpack.c.l.b16 %v130
  %v1956 = vunpack.c.h.b16 %v130
  %v1957 = vunpack.c.l.b16 %v131
  %v1958 = vunpack.c.h.b16 %v131
  %v1959 = vunpack.c.l.b16 %v132
  %v1960 = vunpack.c.h.b16 %v132
  %v1961 = vunpack.c.l.b16 %v133
  %v1962 = vunpack.c.h.b16 %v133
  %v1963 = vunpack.c.l.b16 %v134
  %v1964 = vunpack.c.h.b16 %v134
  %v1965 = vunpack.c.l.b16 %v135
  %v1966 = vunpack.c.h.b16 %v135
  %v1967 = vunpack.c.l.b16 %v136
  %v1968 = vunpack.c.h.b16 %v136
  %v1969 = vunpack.c.l.b16 %v137
  %v1970 = vunpack.c.h.b16 %v137
  %v1971 = vunpack.c.l.b16 %v138
  %v1972 = vunpack.c.h.b16 %v138
  %v1973 = vunpack.c.l.b16 %v139
  %v1974 = vunpack.c.h.b16 %v139
  %v1975 = vunpack.c.l.b16 %v140
  %v1976 = vunpack.c.h.b16 %v140
  %v1977 = vunpack.c.l.b16 %v141
  %v1978 = vunpack.c.h.b16 %v141
  %v1979 = vunpack.c.l.b16 %v142
  %v1980 = vunpack.c.h.b16 %v142
  %v1981 = vunpack.c.l.b16 %v143
  %v1982 = vunpack.c.h.b16 %v143
  %v1983 = vunpack.c.l.b16 %v144
  %v1984 = vunpack.c.h.b16 %v144
  %v1985 = vunpack.c.l.b16 %v145
  %v1986 = vunpack.c.h.b16 %v145
  %v1987 = vunpack.c.l.b16 %v146
  %v1988 = vunpack.c.h.b16 %v146
  %v1989 = vunpack.c.l.b16 %v147
  %v1990 = vunpack.c.h.b16 %v147
  %v1991 = vunpack.c.l.b16 %v148
  %v1992 = vunpack.c.h.b16 %v148
  %v1993 = vunpack.c.l.b16 %v149
  %v1994 = vunpack.c.h.b16 %v149
  %v1995 = vunpack.c.l.b16 %v150
  %v1996 = vunpack.c.h.b16 %v150
  %v1997 = vunpack.c.l.b16 %v151
  %v1998 = vunpack.c.h.b16 %v151
  %v1999 = vunpack.c.l.b16 %v152
  %v2000 = vunpack.c.h.b16 %v152
  %v2001 = vunpack.c.l.b16 %v153
  %v2002 = vunpack.c.h.b16 %v153
  %v2003 = vunpack.c.l.b16 %v154
  %v2004 = vunpack.c.h.b16 %v154
  %v2005 = vunpack.c.l.b16 %v155
  %v2006 = vunpack.c.h.b16 %v155
  %v2007 = vunpack.c.l.b16 %v156
  %v2008 = vunpack.c.h.b16 %v156
  %v2009 = vunpack.c.l.b16 %v157
  %v2010 = vunpack.c.h.b16 %v157
  %v2011 = vunpack.c.l.b16 %v158
  %v2012 = vunpack.c.h.b16 %v158
  %v2013 = vunpack.c.l.b16 %v159
  %v2014 = vunpack.c.h.b16 %v159
  %v2015 = vunpack.c.l.b16 %v160
  %v2016 = vunpack.c.h.b16 %v160
  %v2017 = vunpack.c.l.b16 %v161
  %v2018 = vunpack.c.h.b16 %v161
  %v2019 = vunpack.c.l.b16 %v162
  %v2020 = vunpack.c.h.b16 %v162
  %v2021 = vunpack.c.l.b16 %v163
  %v2022 = vunpack.c.h.b16 %v163
  %v2023 = vunpack.c.l.b16 %v164
  %v2024 = vunpack.c.h.b16 %v164
  %v2025 = vunpack.c.l.b16 %v165
  %v2026 = vunpack.c.h.b16 %v165
  %v2027 = vunpack.c.l.b16 %v166
  %v2028 = vunpack.c.h.b16 %v166
  %v2029 = vunpack.c.l.b16 %v167
  %v2030 = vunpack.c.h.b16 %v167
  %v2031 = vunpack.c.l.b16 %v168
  %v2032 = vunpack.c.h.b16 %v168
  %v2033 = vunpack.c.l.b16 %v169
  %v2034 = vunpack.c.h.b16 %v169
  %v2035 = vunpack.c.l.b16 %v170
  %v2036 = vunpack.c.h.b16 %v170
  %v2037 = vunpack.c.l.b16 %v171
  %v2038 = vunpack.c.h.b16 %v171
  %v2039 = vunpack.c.l.b16 %v172
  %v2040 = vunpack.c.h.b16 %v172
  %v2041 = vunpack.c.l.b16 %v173
  %v2042 = vunpack.c.h.b16 %v173
  %v2043 = vunpack.c.l.b16 %v174
  %v2044 = vunpack.c.h.b16 %v174
  %v2045 = vunpack.c.l.b16 %v175
  %v2046 = vunpack.c.h.b16 %v175
  %v2047 = vunpack.c.l.b16 %v176
  %v2048 = vunpack.c.h.b16 %v176
  %v2049 = vunpack.c.l.b16 %v177
  %v2050 = vunpack.c.h.b16 %v177
  %v2051 = vunpack.c.l.b16 %v178
  %v2052 = vunpack.c.h.b16 %v178
  %v2053 = vunpack.c.l.b16 %v179
  %v2054 = vunpack.c.h.b16 %v179
  %v2055 = vunpack.c.l.b16 %v180
  %v2056 = vunpack.c.h.b16 %v180
  %v2057 = vunpack.c.l.b16 %v181
  %v2058 = vunpack.c.h.b16 %v181
  %v2059 = vunpack.c.l.b16 %v182
  %v2060 = vunpack.c.h.b16 %v182
  %v2061 = vunpack.c.l.b16 %v183
  %v2062 = vunpack.c.h.b16 %v183
  %v2063 = vunpack.c.l.b16 %v184
  %v2064 = vunpack.c.h.b16 %v184
  %v2065 = vunpack.c.l.b16 %v185
  %v2066 = vunpack.c.h.b16 %v185
  %v2067 = vunpack.c.l.b16 %v186
  %v2068 = vunpack.c.h.b16 %v186
  %v2069 = vunpack.c.l.b16 %v187
  %v2070 = vunpack.c.h.b16 %v187
  %v2071 = vunpack.c.l.b16 %v188
  %v2072 = vunpack.c.h.b16 %v188
  %v2073 = vunpack.c.l.b16 %v189
  %v2074 = vunpack.c.h.b16 %v189
  %v2075 = vunpack.c.l.b16 %v190
  %v2076 = vunpack.c.h.b16 %v190
  %v2077 = vunpack.c.l.b16 %v191
  %v2078 = vunpack.c.h.b16 %v191
  %v2079 = vunpack.c.l.b16 %v192
  %v2080 = vunpack.c.h.b16 %v192
  %v2081 = vunpack.c.l.b16 %v193
  %v2082 = vunpack.c.h.b16 %v193
  %v2083 = vunpack.c.l.b16 %v194
  %v2084 = vunpack.c.h.b16 %v194
  %v2085 = vunpack.c.l.b16 %v195
  %v2086 = vunpack.c.h.b16 %v195
  %v2087 = vunpack.c.l.b16 %v196
  %v2088 = vunpack.c.h.b16 %v196
  %v2089 = vunpack.c.l.b16 %v197
  %v2090 = vunpack.c.h.b16 %v197
  %v2091 = vunpack.c.l.b16 %v198
  %v2092 = vunpack.c.h.b16 %v198
  %v2093 = vunpack.c.l.b16 %v199
  %v2094 = vunpack.c.h.b16 %v199
  %v2095 = vunpack.c.l.b16 %v200
  %v2096 = vunpack.c.h.b16 %v200
  %v2097 = vunpack.c.l.b16 %v201
  %v2098 = vunpack.c.h.b16 %v201
  %v2099 = vunpack.c.l.b16 %v202
  %v2100 = vunpack.c.h.b16 %v202
  %v2101 = vunpack.c.l.b16 %v203
  %v2102 = vunpack.c.h.b16 %v203
  %v2103 = vunpack.c.l.b16 %v204
  %v2104 = vunpack.c.h.b16 %v204
  %v2105 = vunpack.c.l.b16 %v205
  %v2106 = vunpack.c.h.b16 %v205
  %v2107 = vunpack.c.l.b16 %v206
  %v2108 = vunpack.c.h.b16 %v206
  %v2109 = vunpack.c.l.b16 %v207
  %v2110 = vunpack.c.h.b16 %v207
  %v2111 = vunpack.c.l.b16 %v208
  %v2112 = vunpack.c.h.b16 %v208
  %v2113 = vunpack.c.l.b16 %v209
  %v2114 = vunpack.c.h.b16 %v209
  %v2115 = vunpack.c.l.b16 %v210
  %v2116 = vunpack.c.h.b16 %v210
  %v2117 = vunpack.c.l.b16 %v211
  %v2118 = vunpack.c.h.b16 %v211
  %v2119 = vunpack.c.l.b16 %v212
  %v2120 = vunpack.c.h.b16 %v212
  %v2121 = vunpack.c.l.b16 %v213
  %v2122 = vunpack.c.h.b16 %v213
  %v2123 = vunpack.c.l.b16 %v214
  %v2124 = vunpack.c.h.b16 %v214
  %v2125 = vunpack.c.l.b16 %v215
  %v2126 = vunpack.c.h.b16 %v215
  %v2127 = vunpack.c.l.b16 %v216
  %v2128 = vunpack.c.h.b16 %v216
  %v2129 = vunpack.c.l.b16 %v217
  %v2130 = vunpack.c.h.b16 %v217
  %v2131 = vunpack.c.l.b16 %v218
  %v2132 = vunpack.c.h.b16 %v218
  %v2133 = vunpack.c.l.b16 %v219
  %v2134 = vunpack.c.h.b16 %v219
  %v2135 = vunpack.c.l.b16 %v220
  %v2136 = vunpack.c.h.b16 %v220
  %v2137 = vunpack.c.l.b16 %v221
  %v2138 = vunpack.c.h.b16 %v221
  %v2139 = vunpack.c.l.b16 %v222
  %v2140 = vunpack.c.h.b16 %v222
  %v2141 = vunpack.c.l.b16 %v223
  %v2142 = vunpack.c.h.b16 %v223
  %v2143 = vunpack.c.l.b16 %v224
  %v2144 = vunpack.c.h.b16 %v224
  %v2145 = vunpack.c.l.b16 %v225
  %v2146 = vunpack.c.h.b16 %v225
  %v2147 = vunpack.c.l.b16 %v226
  %v2148 = vunpack.c.h.b16 %v226
  %v2149 = vunpack.c.l.b16 %v227
  %v2150 = vunpack.c.h.b16 %v227
  %v2151 = vunpack.c.l.b16 %v228
  %v2152 = vunpack.c.h.b16 %v228
  %v2153 = vunpack.c.l.b16 %v229
  %v2154 = vunpack.c.h.b16 %v229
  %v2155 = vunpack.c.l.b16 %v230
  %v2156 = vunpack.c.h.b16 %v230
  %v2157 = vunpack.c.l.b16 %v231
  %v2158 = vunpack.c.h.b16 %v231
  %v2159 = vunpack.c.l.b16 %v232
  %v2160 = vunpack.c.h.b16 %v232
  %v2161 = vunpack.c.l.b16 %v233
  %v2162 = vunpack.c.h.b16 %v233
  %v2163 = vunpack.c.l.b16 %v234
  %v2164 = vunpack.c.h.b16 %v234
  %v2165 = vunpack.c.l.b16 %v235
  %v2166 = vunpack.c.h.b16 %v235
  %v2167 = vunpack.c.l.b16 %v236
  %v2168 = vunpack.c.h.b16 %v236
  %v2169 = vunpack.c.l.b16 %v237
  %v2170 = vunpack.c.h.b16 %v237
  %v2171 = vunpack.c.l.b16 %v238
  %v2172 = vunpack.c.h.b16 %v238
  %v2173 = vunpack.c.l.b16 %v239
  %v2174 = vunpack.c.h.b16 %v239
  %v2175 = vunpack.c.l.b16 %v240
  %v2176 = vunpack.c.h.b16 %v240
  %v2177 = vunpack.c.l.b16 %v241
  %v2178 = vunpack.c.h.b16 %v241
  %v2179 = vunpack.c.l.b16 %v242
  %v2180 = vunpack.c.h.b16 %v242
  %v2181 = vunpack.c.l.b16 %v243
  %v2182 = vunpack.c.h.b16 %v243
  %v2183 = vunpack.c.l.b16 %v244
  %v2184 = vunpack.c.h.b16 %v244
  %v2185 = vunpack.c.l.b16 %v245
  %v2186 = vunpack.c.h.b16 %v245
  %v2187 = vunpack.c.l.b16 %v246
  %v2188 = vunpack.c.h.b16 %v246
  %v2189 = vunpack.c.l.b16 %v247
  %v2190 = vunpack.c.h.b16 %v247
  %v2191 = vunpack.c.l.b16 %v248
  %v2192 = vunpack.c.h.b16 %v248
  %v2193 = vunpack.c.l.b16 %v249
  %v2194 = vunpack.c.h.b16 %v249
  %v2195 = vunpack.c.l.b16 %v250
  %v2196 = vunpack.c.h.b16 %v250
  %v2197 = vunpack.c.l.b16 %v251
  %v2198 = vunpack.c.h.b16 %v251
  %v2199 = vunpack.c.l.b16 %v252
  %v2200 = vunpack.c.h.b16 %v252
  %v2201 = vunpack.c.l.b16 %v253
  %v2202 = vunpack.c.h.b16 %v253
  %v2203 = vunpack.c.l.b16 %v254
  %v2204 = vunpack.c.h.b16 %v254
  %v2205 = vunpack.c.l.b16 %v255
  %v2206 = vunpack.c.h.b16 %v255
  %v2207 = vunpack.c.l.b16 %v256
  %v2208 = vunpack.c.h.b16 %v256
  %v2209 = vunpack.c.l.b16 %v257
  %v2210 = vunpack.c.h.b16 %v257
  %v2211 = vunpack.c.l.b16 %v258
  %v2212 = vunpack.c.h.b16 %v258
  %v2213 = vunpack.c.l.b16 %v259
  %v2214 = vunpack.c.h.b16 %v259
  %v2215 = vunpack.c.l.b16 %v260
  %v2216 = vunpack.c.h.b16 %v260
  %v2217 = vunpack.c.l.b16 %v261
  %v2218 = vunpack.c.h.b16 %v261
  %v2219 = vunpack.c.l.b16 %v262
  %v2220 = vunpack.c.h.b16 %v262
  %v2221 = vunpack.c.l.b16 %v263
  %v2222 = vunpack.c.h.b16 %v263
  %v2223 = vunpack.c.l.b16 %v264
  %v2224 = vunpack.c.h.b16 %v264
  %v2225 = vunpack.c.l.b16 %v265
  %v2226 = vunpack.c.h.b16 %v265
  %v2227 = vunpack.c.l.b16 %v266
  %v2228 = vunpack.c.h.b16 %v266
  %v2229 = vunpack.c.l.b16 %v267
  %v2230 = vunpack.c.h.b16 %v267
  %v2231 = vunpack.c.l.b16 %v268
  %v2232 = vunpack.c.h.b16 %v268
  %v2233 = vunpack.c.l.b16 %v269
  %v2234 = vunpack.c.h.b16 %v269
  %v2235 = vunpack.c.l.b16 %v270
  %v2236 = vunpack.c.h.b16 %v270
  %v2237 = vunpack.c.l.b16 %v271
  %v2238 = vunpack.c.h.b16 %v271
  %v2239 = vunpack.c.l.b16 %v272
  %v2240 = vunpack.c.h.b16 %v272
  %v2241 = vunpack.c.l.b16 %v273
  %v2242 = vunpack.c.h.b16 %v273
  %v2243 = vunpack.c.l.b16 %v274
  %v2244 = vunpack.c.h.b16 %v274
  %v2245 = vunpack.c.l.b16 %v275
  %v2246 = vunpack.c.h.b16 %v275
  %v2247 = vunpack.c.l.b16 %v276
  %v2248 = vunpack.c.h.b16 %v276
  %v2249 = vunpack.c.l.b16 %v277
  %v2250 = vunpack.c.h.b16 %v277
  %v2251 = vunpack.c.l.b16 %v278
  %v2252 = vunpack.c.h.b16 %v278
  %v2253 = vunpack.c.l.b16 %v279
  %v2254 = vunpack.c.h.b16 %v279
  %v2255 = vunpack.c.l.b16 %v280
  %v2256 = vunpack.c.h.b16 %v280
  %v2257 = vunpack.c.l.b16 %v281
  %v2258 = vunpack.c.h.b16 %v281
  %v2259 = vunpack.c.l.b16 %v282
  %v2260 = vunpack.c.h.b16 %v282
  %v2261 = vunpack.c.l.b16 %v283
  %v2262 = vunpack.c.h.b16 %v283
  %v2263 = vunpack.c.l.b16 %v284
  %v2264 = vunpack.c.h.b16 %v284
  %v2265 = vunpack.c.l.b16 %v285
  %v2266 = vunpack.c.h.b16 %v285
  %v2267 = vunpack.c.l.b16 %v286
  %v2268 = vunpack.c.h.b16 %v286
  %v2269 = vunpack.c.l.b16 %v287
  %v2270 = vunpack.c.h.b16 %v287
  %v2271 = vunpack.c.l.b16 %v288
  %v2272 = vunpack.c.h.b16 %v288
  %v2273 = vunpack.c.l.b16 %v289
  %v2274 = vunpack.c.h.b16 %v289
  %v2275 = vunpack.c.l.b16 %v290
  %v2276 = vunpack.c.h.b16 %v290
  %v2277 = vunpack.c.l.b16 %v291
  %v2278 = vunpack.c.h.b16 %v291
  %v2279 = vunpack.c.l.b16 %v292
  %v2280 = vunpack.c.h.b16 %v292
  %v2281 = vunpack.c.l.b16 %v293
  %v2282 = vunpack.c.h.b16 %v293
  %v2283 = vunpack.c.l.b16 %v294
  %v2284 = vunpack.c.h.b16 %v294
  %v2285 = vunpack.c.l.b16 %v295
  %v2286 = vunpack.c.h.b16 %v295
  %v2287 = vunpack.c.l.b16 %v296
  %v2288 = vunpack.c.h.b16 %v296
  %v2289 = vunpack.c.l.b16 %v297
  %v2290 = vunpack.c.h.b16 %v297
  %v2291 = vunpack.c.l.b16 %v298
  %v2292 = vunpack.c.h.b16 %v298
  %v2293 = vunpack.c.l.b16 %v299
  %v2294 = vunpack.c.h.b16 %v299
  %v2295 = vunpack.c.l.b16 %v300
  %v2296 = vunpack.c.h.b16 %v300
  %v2297 = vunpack.c.l.b16 %v301
  %v2298 = vunpack.c.h.b16 %v301
  %v2299 = vunpack.c.l.b16 %v302
  %v2300 = vunpack.c.h.b16 %v302
  %v2301 = vunpack.c.l.b16 %v303
  %v2302 = vunpack.c.h.b16 %v303
  %v2303 = vunpack.c.l.b16 %v304
  %v2304 = vunpack.c.h.b16 %v304
  %v2305 = vunpack.c.l.b16 %v305
  %v2306 = vunpack.c.h.b16 %v305
  %v2307 = vunpack.c.l.b16 %v306
  %v2308 = vunpack.c.h.b16 %v306
  %v2309 = vunpack.c.l.b16 %v307
  %v2310 = vunpack.c.h.b16 %v307
  %v2311 = vunpack.c.l.b16 %v308
  %v2312 = vunpack.c.h.b16 %v308
  %v2313 = vunpack.c.l.b16 %v309
  %v2314 = vunpack.c.h.b16 %v309
  %v2315 = vunpack.c.l.b16 %v310
  %v2316 = vunpack.c.h.b16 %v310
  %v2317 = vunpack.c.l.b16 %v311
  %v2318 = vunpack.c.h.b16 %v311
  %v2319 = vunpack.c.l.b16 %v312
  %v2320 = vunpack.c.h.b16 %v312
  %v2321 = vunpack.c.l.b16 %v313
  %v2322 = vunpack.c.h.b16 %v313
  %v2323 = vunpack.c.l.b16 %v314
  %v2324 = vunpack.c.h.b16 %v314
  %v2325 = vunpack.c.l.b16 %v315
  %v2326 = vunpack.c.h.b16 %v315
  %v2327 = vunpack.c.l.b16 %v316
  %v2328 = vunpack.c.h.b16 %v316
  %v2329 = vunpack.c.l.b16 %v317
  %v2330 = vunpack.c.h.b16 %v317
  %v2331 = vunpack.c.l.b16 %v318
  %v2332 = vunpack.c.h.b16 %v318
  %v2333 = vunpack.c.l.b16 %v319
  %v2334 = vunpack.c.h.b16 %v319
  %v2335 = vunpack.c.l.b16 %v320
  %v2336 = vunpack.c.h.b16 %v320
  %v2337 = vunpack.c.l.b16 %v321
  %v2338 = vunpack.c.h.b16 %v321
  %v2339 = vunpack.c.l.b16 %v322
  %v2340 = vunpack.c.h.b16 %v322
  %v2341 = vunpack.c.l.b16 %v323
  %v2342 = vunpack.c.h.b16 %v323
  %v2343 = vunpack.c.l.b16 %v324
  %v2344 = vunpack.c.h.b16 %v324
  %v2345 = vunpack.c.l.b16 %v325
  %v2346 = vunpack.c.h.b16 %v325
  %v2347 = vunpack.c.l.b16 %v326
  %v2348 = vunpack.c.h.b16 %v326
  %v2349 = vunpack.c.l.b16 %v327
  %v2350 = vunpack.c.h.b16 %v327
  %v2351 = vunpack.c.l.b16 %v328
  %v2352 = vunpack.c.h.b16 %v328
  %v2353 = vunpack.c.l.b16 %v329
  %v2354 = vunpack.c.h.b16 %v329
  %v2355 = vunpack.c.l.b16 %v330
  %v2356 = vunpack.c.h.b16 %v330
  %v2357 = vunpack.c.l.b16 %v331
  %v2358 = vunpack.c.h.b16 %v331
  %v2359 = vunpack.c.l.b16 %v332
  %v2360 = vunpack.c.h.b16 %v332
  %v2361 = vunpack.c.l.b16 %v333
  %v2362 = vunpack.c.h.b16 %v333
  %v2363 = vunpack.c.l.b16 %v334
  %v2364 = vunpack.c.h.b16 %v334
  %v2365 = vunpack.c.l.b16 %v335
  %v2366 = vunpack.c.h.b16 %v335
  %v2367 = vunpack.c.l.b16 %v336
  %v2368 = vunpack.c.h.b16 %v336
  %v2369 = vunpack.c.l.b16 %v337
  %v2370 = vunpack.c.h.b16 %v337
  %v2371 = vunpack.c.l.b16 %v338
  %v2372 = vunpack.c.h.b16 %v338
  %v2373 = vunpack.c.l.b16 %v339
  %v2374 = vunpack.c.h.b16 %v339
  %v2375 = vunpack.c.l.b16 %v340
  %v2376 = vunpack.c.h.b16 %v340
  %v2377 = vunpack.c.l.b16 %v341
  %v2378 = vunpack.c.h.b16 %v341
  %v2379 = vunpack.c.l.b16 %v342
  %v2380 = vunpack.c.h.b16 %v342
  %v2381 = vunpack.c.l.b16 %v343
  %v2382 = vunpack.c.h.b16 %v343
  %v2383 = vunpack.c.l.b16 %v344
  %v2384 = vunpack.c.h.b16 %v344
  %v2385 = vunpack.c.l.b16 %v345
  %v2386 = vunpack.c.h.b16 %v345
  %v2387 = vunpack.c.l.b16 %v346
  %v2388 = vunpack.c.h.b16 %v346
  %v2389 = vunpack.c.l.b16 %v347
  %v2390 = vunpack.c.h.b16 %v347
  %v2391 = vunpack.c.l.b16 %v348
  %v2392 = vunpack.c.h.b16 %v348
  %v2393 = vunpack.c.l.b16 %v349
  %v2394 = vunpack.c.h.b16 %v349
  %v2395 = vunpack.c.l.b16 %v350
  %v2396 = vunpack.c.h.b16 %v350
  %v2397 = vunpack.c.l.b16 %v351
  %v2398 = vunpack.c.h.b16 %v351
  %v2399 = vunpack.c.l.b16 %v352
  %v2400 = vunpack.c.h.b16 %v352
  %v2401 = vunpack.c.l.b16 %v353
  %v2402 = vunpack.c.h.b16 %v353
  %v2403 = vunpack.c.l.b16 %v354
  %v2404 = vunpack.c.h.b16 %v354
  %v2405 = vunpack.c.l.b16 %v355
  %v2406 = vunpack.c.h.b16 %v355
  %v2407 = vunpack.c.l.b16 %v356
  %v2408 = vunpack.c.h.b16 %v356
  %v2409 = vunpack.c.l.b16 %v357
  %v2410 = vunpack.c.h.b16 %v357
  %v2411 = vunpack.c.l.b16 %v358
  %v2412 = vunpack.c.h.b16 %v358
  %v2413 = vunpack.c.l.b16 %v359
  %v2414 = vunpack.c.h.b16 %v359
  %v2415 = vunpack.c.l.b16 %v360
  %v2416 = vunpack.c.h.b16 %v360
  %v2417 = vunpack.c.l.b16 %v361
  %v2418 = vunpack.c.h.b16 %v361
  %v2419 = vunpack.c.l.b16 %v362
  %v2420 = vunpack.c.h.b16 %v362
  %v2421 = vunpack.c.l.b16 %v363
  %v2422 = vunpack.c.h.b16 %v363
  %v2423 = vunpack.c.l.b16 %v364
  %v2424 = vunpack.c.h.b16 %v364
  %v2425 = vunpack.c.l.b16 %v365
  %v2426 = vunpack.c.h.b16 %v365
  %v2427 = vunpack.c.l.b16 %v366
  %v2428 = vunpack.c.h.b16 %v366
  %v2429 = vunpack.c.l.b16 %v367
  %v2430 = vunpack.c.h.b16 %v367
  %v2431 = vunpack.c.l.b16 %v368
  %v2432 = vunpack.c.h.b16 %v368
  %v2433 = vunpack.c.l.b16 %v369
  %v2434 = vunpack.c.h.b16 %v369
  %v2435 = vunpack.c.l.b16 %v370
  %v2436 = vunpack.c.h.b16 %v370
  %v2437 = vunpack.c.l.b16 %v371
  %v2438 = vunpack.c.h.b16 %v371
  %v2439 = vunpack.c.l.b16 %v372
  %v2440 = vunpack.c.h.b16 %v372
  %v2441 = vunpack.c.l.b16 %v373
  %v2442 = vunpack.c.h.b16 %v373
  %v2443 = vunpack.c.l.b16 %v374
  %v2444 = vunpack.c.h.b16 %v374
  %v2445 = vunpack.c.l.b16 %v375
  %v2446 = vunpack.c.h.b16 %v375
  %v2447 = vunpack.c.l.b16 %v376
  %v2448 = vunpack.c.h.b16 %v376
  %v2449 = vunpack.c.l.b16 %v377
  %v2450 = vunpack.c.h.b16 %v377
  %v2451 = vunpack.c.l.b16 %v378
  %v2452 = vunpack.c.h.b16 %v378
  %v2453 = vunpack.c.l.b16 %v379
  %v2454 = vunpack.c.h.b16 %v379
  %v2455 = vunpack.c.l.b16 %v380
  %v2456 = vunpack.c.h.b16 %v380
  %v2457 = vunpack.c.l.b16 %v381
  %v2458 = vunpack.c.h.b16 %v381
  %v2459 = vunpack.c.l.b16 %v382
  %v2460 = vunpack.c.h.b16 %v382
  %v2461 = vunpack.c.l.b16 %v383
  %v2462 = vunpack.c.h.b16 %v383
  %v2463 = vunpack.c.l.b16 %v384
  %v2464 = vunpack.c.h.b16 %v384
  %v2465 = vunpack.c.l.b16 %v385
  %v2466 = vunpack.c.h.b16 %v385
  %v2467 = vunpack.c.l.b16 %v386
  %v2468 = vunpack.c.h.b16 %v386
  %v2469 = vunpack.c.l.b16 %v387
  %v2470 = vunpack.c.h.b16 %v387
  %v2471 = vunpack.c.l.b16 %v388
  %v2472 = vunpack.c.h.b16 %v388
  %v2473 = vunpack.c.l.b16 %v389
  %v2474 = vunpack.c.h.b16 %v389
  %v2475 = vunpack.c.l.b16 %v390
  %v2476 = vunpack.c.h.b16 %v390
  %v2477 = vunpack.c.l.b16 %v391
  %v2478 = vunpack.c.h.b16 %v391
  %v2479 = vunpack.c.l.b16 %v392
  %v2480 = vunpack.c.h.b16 %v392
  %v2481 = vunpack.c.l.b16 %v393
  %v2482 = vunpack.c.h.b16 %v393
  %v2483 = vunpack.c.l.b16 %v394
  %v2484 = vunpack.c.h.b16 %v394
  %v2485 = vunpack.c.l.b16 %v395
  %v2486 = vunpack.c.h.b16 %v395
  %v2487 = vunpack.c.l.b16 %v396
  %v2488 = vunpack.c.h.b16 %v396
  %v2489 = vunpack.c.l.b16 %v397
  %v2490 = vunpack.c.h.b16 %v397
  %v2491 = vunpack.c.l.b16 %v398
  %v2492 = vunpack.c.h.b16 %v398
  %v2493 = vunpack.c.l.b16 %v399
  %v2494 = vunpack.c.h.b16 %v399
  %v2495 = vunpack.c.l.b16 %v400
  %v2496 = vunpack.c.h.b16 %v400
  %v2497 = vunpack.c.l.b16 %v401
  %v2498 = vunpack.c.h.b16 %v401
  %v2499 = vunpack.c.l.b16 %v402
  %v2500 = vunpack.c.h.b16 %v402
  %v2501 = vunpack.c.l.b16 %v403
  %v2502 = vunpack.c.h.b16 %v403
  %v2503 = vunpack.c.l.b16 %v404
  %v2504 = vunpack.c.h.b16 %v404
  %v2505 = vunpack.c.l.b16 %v405
  %v2506 = vunpack.c.h.b16 %v405
  %v2507 = vunpack.c.l.b16 %v406
  %v2508 = vunpack.c.h.b16 %v406
  %v2509 = vunpack.c.l.b16 %v407
  %v2510 = vunpack.c.h.b16 %v407
  %v2511 = vunpack.c.l.b16 %v408
  %v2512 = vunpack.c.h.b16 %v408
  %v2513 = vunpack.c.l.b16 %v409
  %v2514 = vunpack.c.h.b16 %v409
  %v2515 = vunpack.c.l.b16 %v410
  %v2516 = vunpack.c.h.b16 %v410
  %v2517 = vunpack.c.l.b16 %v411
  %v2518 = vunpack.c.h.b16 %v411
  %v2519 = vunpack.c.l.b16 %v412
  %v2520 = vunpack.c.h.b16 %v412
  %v2521 = vunpack.c.l.b16 %v413
  %v2522 = vunpack.c.h.b16 %v413
  %v2523 = vunpack.c.l.b16 %v414
  %v2524 = vunpack.c.h.b16 %v414
  %v2525 = vunpack.c.l.b16 %v415
  %v2526 = vunpack.c.h.b16 %v415
  %v2527 = vunpack.c.l.b16 %v416
  %v2528 = vunpack.c.h.b16 %v416
  %v2529 = vunpack.c.l.b16 %v417
  %v2530 = vunpack.c.h.b16 %v417
  %v2531 = vunpack.c.l.b16 %v418
  %v2532 = vunpack.c.h.b16 %v418
  %v2533 = vunpack.c.l.b16 %v419
  %v2534 = vunpack.c.h.b16 %v419
  %v2535 = vunpack.c.l.b16 %v420
  %v2536 = vunpack.c.h.b16 %v420
  %v2537 = vunpack.c.l.b16 %v421
  %v2538 = vunpack.c.h.b16 %v421
  %v2539 = vunpack.c.l.b16 %v422
  %v2540 = vunpack.c.h.b16 %v422
  %v2541 = vunpack.c.l.b16 %v423
  %v2542 = vunpack.c.h.b16 %v423
  %v2543 = vunpack.c.l.b16 %v424
  %v2544 = vunpack.c.h.b16 %v424
  %v2545 = vunpack.c.l.b16 %v425
  %v2546 = vunpack.c.h.b16 %v425
  %v2547 = vunpack.c.l.b16 %v426
  %v2548 = vunpack.c.h.b16 %v426
  %v2549 = vunpack.c.l.b16 %v427
  %v2550 = vunpack.c.h.b16 %v427
  %v2551 = vunpack.c.l.b16 %v428
  %v2552 = vunpack.c.h.b16 %v428
  %v2553 = vunpack.c.l.b16 %v429
  %v2554 = vunpack.c.h.b16 %v429
  %v2555 = vunpack.c.l.b16 %v430
  %v2556 = vunpack.c.h.b16 %v430
  %v2557 = vunpack.c.l.b16 %v431
  %v2558 = vunpack.c.h.b16 %v431
  %v2559 = vunpack.c.l.b16 %v432
  %v2560 = vunpack.c.h.b16 %v432
  %v2561 = vunpack.c.l.b16 %v433
  %v2562 = vunpack.c.h.b16 %v433
  %v2563 = vunpack.c.l.b16 %v434
  %v2564 = vunpack.c.h.b16 %v434
  %v2565 = vunpack.c.l.b16 %v435
  %v2566 = vunpack.c.h.b16 %v435
  %v2567 = vunpack.c.l.b16 %v436
  %v2568 = vunpack.c.h.b16 %v436
  %v2569 = vunpack.c.l.b16 %v437
  %v2570 = vunpack.c.h.b16 %v437
  %v2571 = vunpack.c.l.b16 %v438
  %v2572 = vunpack.c.h.b16 %v438
  %v2573 = vunpack.c.l.b16 %v439
  %v2574 = vunpack.c.h.b16 %v439
  %v2575 = vunpack.c.l.b16 %v440
  %v2576 = vunpack.c.h.b16 %v440
  %v2577 = vunpack.c.l.b16 %v441
  %v2578 = vunpack.c.h.b16 %v441
  %v2579 = vunpack.c.l.b16 %v442
  %v2580 = vunpack.c.h.b16 %v442
  %v2581 = vunpack.c.l.b16 %v443
  %v2582 = vunpack.c.h.b16 %v443
  %v2583 = vunpack.c.l.b16 %v444
  %v2584 = vunpack.c.h.b16 %v444
  %v2585 = vunpack.c.l.b16 %v445
  %v2586 = vunpack.c.h.b16 %v445
  %v2587 = vunpack.c.l.b16 %v446
  %v2588 = vunpack.c.h.b16 %v446
  %v2589 = vunpack.c.l.b16 %v447
  %v2590 = vunpack.c.h.b16 %v447
  %v2591 = vunpack.c.l.b16 %v448
  %v2592 = vunpack.c.h.b16 %v448
  %v2593 = vunpack.c.l.b16 %v449
  %v2594 = vunpack.c.h.b16 %v449
  %v2595 = vunpack.c.l.b16 %v450
  %v2596 = vunpack.c.h.b16 %v450
  %v2597 = vunpack.c.l.b16 %v451
  %v2598 = vunpack.c.h.b16 %v451
  %v2599 = vunpack.c.l.b16 %v452
  %v2600 = vunpack.c.h.b16 %v452
  %v2601 = vunpack.c.l.b16 %v453
  %v2602 = vunpack.c.h.b16 %v453
  %v2603 = vunpack.c.l.b16 %v454
  %v2604 = vunpack.c.h.b16 %v454
  %v2605 = vunpack.c.l.b16 %v455
  %v2606 = vunpack.c.h.b16 %v455
  %v2607 = vunpack.c.l.b16 %v456
  %v2608 = vunpack.c.h.b16 %v456
  %v2609 = vunpack.c.l.b16 %v457
  %v2610 = vunpack.c.h.b16 %v457
  %v2611 = vunpack.c.l.b16 %v458
  %v2612 = vunpack.c.h.b16 %v458
  %v2613 = vunpack.c.l.b16 %v459
  %v2614 = vunpack.c.h.b16 %v459
  %v2615 = vunpack.c.l.b16 %v460
  %v2616 = vunpack.c.h.b16 %v460
  %v2617 = vunpack.c.l.b16 %v461
  %v2618 = vunpack.c.h.b16 %v461
  %v2619 = vunpack.c.l.b16 %v462
  %v2620 = vunpack.c.h.b16 %v462
  %v2621 = vunpack.c.l.b16 %v463
  %v2622 = vunpack.c.h.b16 %v463
  %v2623 = vunpack.c.l.b16 %v464
  %v2624 = vunpack.c.h.b16 %v464
  %v2625 = vunpack.c.l.b16 %v465
  %v2626 = vunpack.c.h.b16 %v465
  %v2627 = vunpack.c.l.b16 %v466
  %v2628 = vunpack.c.h.b16 %v466
  %v2629 = vunpack.c.l.b16 %v467
  %v2630 = vunpack.c.h.b16 %v467
  %v2631 = vunpack.c.l.b16 %v468
  %v2632 = vunpack.c.h.b16 %v468
  %v2633 = vunpack.c.l.b16 %v469
  %v2634 = vunpack.c.h.b16 %v469
  %v2635 = vunpack.c.l.b16 %v470
  %v2636 = vunpack.c.h.b16 %v470
  %v2637 = vunpack.c.l.b16 %v471
  %v2638 = vunpack.c.h.b16 %v471
  %v2639 = vunpack.c.l.b16 %v472
  %v2640 = vunpack.c.h.b16 %v472
  %v2641 = vunpack.c.l.b16 %v473
  %v2642 = vunpack.c.h.b16 %v473
  %v2643 = vunpack.c.l.b16 %v474
  %v2644 = vunpack.c.h.b16 %v474
  %v2645 = vunpack.c.l.b16 %v475
  %v2646 = vunpack.c.h.b16 %v475
  %v2647 = vunpack.c.l.b16 %v476
  %v2648 = vunpack.c.h.b16 %v476
  %v2649 = vunpack.c.l.b16 %v477
  %v2650 = vunpack.c.h.b16 %v477
  %v2651 = vunpack.c.l.b16 %v478
  %v2652 = vunpack.c.h.b16 %v478
  %v2653 = vunpack.c.l.b16 %v479
  %v2654 = vunpack.c.h.b16 %v479
  %v2655 = vunpack.c.l.b16 %v480
  %v2656 = vunpack.c.h.b16 %v480
  %v2657 = vunpack.c.l.b16 %v481
  %v2658 = vunpack.c.h.b16 %v481
  %v2659 = vunpack.c.l.b16 %v482
  %v2660 = vunpack.c.h.b16 %v482
  %v2661 = vunpack.c.l.b16 %v483
  %v2662 = vunpack.c.h.b16 %v483
  %v2663 = vunpack.c.l.b16 %v484
  %v2664 = vunpack.c.h.b16 %v484
  %v2665 = vunpack.c.l.b16 %v485
  %v2666 = vunpack.c.h.b16 %v485
  %v2667 = vunpack.c.l.b16 %v486
  %v2668 = vunpack.c.h.b16 %v486
  %v2669 = vunpack.c.l.b16 %v487
  %v2670 = vunpack.c.h.b16 %v487
  %v2671 = vunpack.c.l.b16 %v488
  %v2672 = vunpack.c.h.b16 %v488
  %v2673 = vunpack.c.l.b16 %v489
  %v2674 = vunpack.c.h.b16 %v489
  %v2675 = vunpack.c.l.b16 %v490
  %v2676 = vunpack.c.h.b16 %v490
  %v2677 = vunpack.c.l.b16 %v491
  %v2678 = vunpack.c.h.b16 %v491
  %v2679 = vunpack.c.l.b16 %v492
  %v2680 = vunpack.c.h.b16 %v492
  %v2681 = vunpack.c.l.b16 %v493
  %v2682 = vunpack.c.h.b16 %v493
  %v2683 = vunpack.c.l.b16 %v494
  %v2684 = vunpack.c.h.b16 %v494
  %v2685 = vunpack.c.l.b16 %v495
  %v2686 = vunpack.c.h.b16 %v495
  %v2687 = vunpack.c.l.b16 %v496
  %v2688 = vunpack.c.h.b16 %v496
  %v2689 = vunpack.c.l.b16 %v497
  %v2690 = vunpack.c.h.b16 %v497
  %v2691 = vunpack.c.l.b16 %v498
  %v2692 = vunpack.c.h.b16 %v498
  %v2693 = vunpack.c.l.b16 %v499
  %v2694 = vunpack.c.h.b16 %v499
  %v2695 = vunpack.c.l.b16 %v500
  %v2696 = vunpack.c.h.b16 %v500
  %v2697 = vunpack.c.l.b16 %v501
  %v2698 = vunpack.c.h.b16 %v501
  %v2699 = vunpack.c.l.b16 %v502
  %v2700 = vunpack.c.h.b16 %v502
  %v2701 = vunpack.c.l.b16 %v503
  %v2702 = vunpack.c.h.b16 %v503
  %v2703 = vunpack.c.l.b16 %v504
  %v2704 = vunpack.c.h.b16 %v504
  %v2705 = vunpack.c.l.b16 %v505
  %v2706 = vunpack.c.h.b16 %v505
  %v2707 = vunpack.c.l.b16 %v506
  %v2708 = vunpack.c.h.b16 %v506
  %v2709 = vunpack.c.l.b16 %v507
  %v2710 = vunpack.c.h.b16 %v507
  %v2711 = vunpack.c.l.b16 %v508
  %v2712 = vunpack.c.h.b16 %v508
  %v2713 = vunpack.c.l.b16 %v509
  %v2714 = vunpack.c.h.b16 %v509
  %v2715 = vunpack.c.l.b16 %v510
  %v2716 = vunpack.c.h.b16 %v510
  %v2717 = vunpack.c.l.b16 %v511
  %v2718 = vunpack.c.h.b16 %v511
  %v2719 = vunpack.c.l.b16 %v512
  %v2720 = vunpack.c.h.b16 %v512
  %v2721 = vunpack.c.l.b16 %v513
  %v2722 = vunpack.c.h.b16 %v513
  %v2723 = vunpack.c.l.b16 %v514
  %v2724 = vunpack.c.h.b16 %v514
  %v2725 = vunpack.c.l.b16 %v515
  %v2726 = vunpack.c.h.b16 %v515
  %v2727 = vunpack.c.l.b16 %v516
  %v2728 = vunpack.c.h.b16 %v516
  %v2729 = vunpack.c.l.b16 %v517
  %v2730 = vunpack.c.h.b16 %v517
  %v2731 = vunpack.c.l.b16 %v518
  %v2732 = vunpack.c.h.b16 %v518
  %v2733 = vunpack.c.l.b16 %v519
  %v2734 = vunpack.c.h.b16 %v519
  %v2735 = vunpack.c.l.b16 %v520
  %v2736 = vunpack.c.h.b16 %v520
  %v2737 = vunpack.c.l.b16 %v521
  %v2738 = vunpack.c.h.b16 %v521
  %v2739 = vunpack.c.l.b16 %v522
  %v2740 = vunpack.c.h.b16 %v522
  %v2741 = vunpack.c.l.b16 %v523
  %v2742 = vunpack.c.h.b16 %v523
  %v2743 = vunpack.c.l.b16 %v524
  %v2744 = vunpack.c.h.b16 %v524
  %v2745 = vunpack.c.l.b16 %v525
  %v2746 = vunpack.c.h.b16 %v525
  %v2747 = vunpack.c.l.b16 %v526
  %v2748 = vunpack.c.h.b16 %v526
  %v2749 = vunpack.c.l.b16 %v527
  %v2750 = vunpack.c.h.b16 %v527
  %v2751 = vunpack.c.l.b16 %v528
  %v2752 = vunpack.c.h.b16 %v528
  %v2753 = vunpack.c.l.b16 %v529
  %v2754 = vunpack.c.h.b16 %v529
  %v2755 = vunpack.c.l.b16 %v530
  %v2756 = vunpack.c.h.b16 %v530
  %v2757 = vunpack.c.l.b16 %v531
  %v2758 = vunpack.c.h.b16 %v531
  %v2759 = vunpack.c.l.b16 %v532
  %v2760 = vunpack.c.h.b16 %v532
  %v2761 = vunpack.c.l.b16 %v533
  %v2762 = vunpack.c.h.b16 %v533
  %v2763 = vunpack.c.l.b16 %v534
  %v2764 = vunpack.c.h.b16 %v534
  %v2765 = vunpack.c.l.b16 %v535
  %v2766 = vunpack.c.h.b16 %v535
  %v2767 = vunpack.c.l.b16 %v536
  %v2768 = vunpack.c.h.b16 %v536
  %v2769 = vunpack.c.l.b16 %v537
  %v2770 = vunpack.c.h.b16 %v537
  %v2771 = vunpack.c.l.b16 %v538
  %v2772 = vunpack.c.h.b16 %v538
  %v2773 = vunpack.c.l.b16 %v539
  %v2774 = vunpack.c.h.b16 %v539
  %v2775 = vunpack.c.l.b16 %v540
  %v2776 = vunpack.c.h.b16 %v540
  %v2777 = vunpack.c.l.b16 %v541
  %v2778 = vunpack.c.h.b16 %v541
  %v2779 = vunpack.c.l.b16 %v542
  %v2780 = vunpack.c.h.b16 %v542
  %v2781 = vunpack.c.l.b16 %v543
  %v2782 = vunpack.c.h.b16 %v543
  %v2783 = vunpack.c.l.b16 %v544
  %v2784 = vunpack.c.h.b16 %v544
  %v2785 = vunpack.c.l.b16 %v545
  %v2786 = vunpack.c.h.b16 %v545
  %v2787 = vunpack.c.l.b16 %v546
  %v2788 = vunpack.c.h.b16 %v546
  %v2789 = vunpack.c.l.b16 %v547
  %v2790 = vunpack.c.h.b16 %v547
  %v2791 = vunpack.c.l.b16 %v548
  %v2792 = vunpack.c.h.b16 %v548
  %v2793 = vunpack.c.l.b16 %v549
  %v2794 = vunpack.c.h.b16 %v549
  %v2795 = vunpack.c.l.b16 %v550
  %v2796 = vunpack.c.h.b16 %v550
  %v2797 = vunpack.c.l.b16 %v551
  %v2798 = vunpack.c.h.b16 %v551
  %v2799 = vunpack.c.l.b16 %v552
  %v2800 = vunpack.c.h.b16 %v552
  %v2801 = vunpack.c.l.b16 %v553
  %v2802 = vunpack.c.h.b16 %v553
  %v2803 = vunpack.c.l.b16 %v554
  %v2804 = vunpack.c.h.b16 %v554
  %v2805 = vunpack.c.l.b16 %v555
  %v2806 = vunpack.c.h.b16 %v555
  %v2807 = vunpack.c.l.b16 %v556
  %v2808 = vunpack.c.h.b16 %v556
  %v2809 = vunpack.c.l.b16 %v557
  %v2810 = vunpack.c.h.b16 %v557
  %v2811 = vunpack.c.l.b16 %v558
  %v2812 = vunpack.c.h.b16 %v558
  %v2813 = vunpack.c.l.b16 %v559
  %v2814 = vunpack.c.h.b16 %v559
  %v2815 = vunpack.c.l.b16 %v560
  %v2816 = vunpack.c.h.b16 %v560
  %v2817 = vunpack.c.l.b16 %v561
  %v2818 = vunpack.c.h.b16 %v561
  %v2819 = vunpack.c.l.b16 %v562
  %v2820 = vunpack.c.h.b16 %v562
  %v2821 = vunpack.c.l.b16 %v563
  %v2822 = vunpack.c.h.b16 %v563
  %v2823 = vunpack.c.l.b16 %v564
  %v2824 = vunpack.c.h.b16 %v564
  %v2825 = vunpack.c.l.b16 %v565
  %v2826 = vunpack.c.h.b16 %v565
  %v2827 = vunpack.c.l.b16 %v566
  %v2828 = vunpack.c.h.b16 %v566
  %v2829 = vunpack.c.l.b16 %v567
  %v2830 = vunpack.c.h.b16 %v567
  %v2831 = vunpack.c.l.b16 %v568
  %v2832 = vunpack.c.h.b16 %v568
  %v2833 = vunpack.c.l.b16 %v569
  %v2834 = vunpack.c.h.b16 %v569
  %v2835 = vunpack.c.l.b16 %v570
  %v2836 = vunpack.c.h.b16 %v570
  %v2837 = vunpack.c.l.b16 %v571
  %v2838 = vunpack.c.h.b16 %v571
  %v2839 = vunpack.c.l.b16 %v572
  %v2840 = vunpack.c.h.b16 %v572
  %v2841 = vunpack.c.l.b16 %v573
  %v2842 = vunpack.c.h.b16 %v573
  %v2843 = vunpack.c.l.b16 %v574
  %v2844 = vunpack.c.h.b16 %v574
  %v2845 = vunpack.c.l.b16 %v575
  %v2846 = vunpack.c.h.b16 %v575
  %v2847 = vunpack.c.l.b16 %v576
  %v2848 = vunpack.c.h.b16 %v576
  %v2849 = vunpack.c.l.b16 %v577
  %v2850 = vunpack.c.h.b16 %v577
  %v2851 = vunpack.c.l.b16 %v578
  %v2852 = vunpack.c.h.b16 %v578
  %v2853 = vunpack.c.l.b16 %v579
  %v2854 = vunpack.c.h.b16 %v579
  %v2855 = vunpack.c.l.b16 %v580
  %v2856 = vunpack.c.h.b16 %v580
  %v2857 = vunpack.c.l.b16 %v581
  %v2858 = vunpack.c.h.b16 %v581
  %v2859 = vunpack.c.l.b16 %v582
  %v2860 = vunpack.c.h.b16 %v582
  %v2861 = vunpack.c.l.b16 %v583
  %v2862 = vunpack.c.h.b16 %v583
  %v2863 = vunpack.c.l.b16 %v584
  %v2864 = vunpack.c.h.b16 %v584
  %v2865 = vunpack.c.l.b16 %v585
  %v2866 = vunpack.c.h.b16 %v585
  %v2867 = vunpack.c.l.b16 %v586
  %v2868 = vunpack.c.h.b16 %v586
  %v2869 = vunpack.c.l.b16 %v587
  %v2870 = vunpack.c.h.b16 %v587
  %v2871 = vunpack.c.l.b16 %v588
  %v2872 = vunpack.c.h.b16 %v588
  %v2873 = vunpack.c.l.b16 %v589
  %v2874 = vunpack.c.h.b16 %v589
  %v2875 = vunpack.c.l.b16 %v590
  %v2876 = vunpack.c.h.b16 %v590
  %v2877 = vunpack.c.l.b16 %v591
  %v2878 = vunpack.c.h.b16 %v591
  %v2879 = vunpack.c.l.b16 %v592
  %v2880 = vunpack.c.h.b16 %v592
  %v2881 = vunpack.c.l.b16 %v593
  %v2882 = vunpack.c.h.b16 %v593
  %v2883 = vunpack.c.l.b16 %v594
  %v2884 = vunpack.c.h.b16 %v594
  %v2885 = vunpack.c.l.b16 %v595
  %v2886 = vunpack.c.h.b16 %v595
  %v2887 = vunpack.c.l.b16 %v596
  %v2888 = vunpack.c.h.b16 %v596
  %v2889 = vunpack.c.l.b16 %v597
  %v2890 = vunpack.c.h.b16 %v597
  %v2891 = vunpack.c.l.b16 %v598
  %v2892 = vunpack.c.h.b16 %v598
  %v2893 = vunpack.c.l.b16 %v599
  %v2894 = vunpack.c.h.b16 %v599
  %v2895 = vunpack.c.l.b16 %v600
  %v2896 = vunpack.c.h.b16 %v600
  %v2897 = vunpack.c.l.b16 %v601
  %v2898 = vunpack.c.h.b16 %v601
  %v2899 = vunpack.c.l.b16 %v602
  %v2900 = vunpack.c.h.b16 %v602
  %v2901 = vunpack.c.l.b16 %v603
  %v2902 = vunpack.c.h.b16 %v603
  %v2903 = vunpack.c.l.b16 %v604
  %v2904 = vunpack.c.h.b16 %v604
  %v2905 = vunpack.c.l.b16 %v605
  %v2906 = vunpack.c.h.b16 %v605
  %v2907 = vunpack.c.l.b16 %v606
  %v2908 = vunpack.c.h.b16 %v606
  %v2909 = vunpack.c.l.b16 %v607
  %v2910 = vunpack.c.h.b16 %v607
  %v2911 = vunpack.c.l.b16 %v608
  %v2912 = vunpack.c.h.b16 %v608
  %v2913 = vunpack.c.l.b16 %v609
  %v2914 = vunpack.c.h.b16 %v609
  %v2915 = vunpack.c.l.b16 %v610
  %v2916 = vunpack.c.h.b16 %v610
  %v2917 = vunpack.c.l.b16 %v611
  %v2918 = vunpack.c.h.b16 %v611
  %v2919 = vunpack.c.l.b16 %v612
  %v2920 = vunpack.c.h.b16 %v612
  %v2921 = vunpack.c.l.b16 %v613
  %v2922 = vunpack.c.h.b16 %v613
  %v2923 = vunpack.c.l.b16 %v614
  %v2924 = vunpack.c.h.b16 %v614
  %v2925 = vunpack.c.l.b16 %v615
  %v2926 = vunpack.c.h.b16 %v615
  %v2927 = vunpack.c.l.b16 %v616
  %v2928 = vunpack.c.h.b16 %v616
  %v2929 = vunpack.c.l.b16 %v617
  %v2930 = vunpack.c.h.b16 %v617
  %v2931 = vunpack.c.l.b16 %v618
  %v2932 = vunpack.c.h.b16 %v618
  %v2933 = vunpack.c.l.b16 %v619
  %v2934 = vunpack.c.h.b16 %v619
  %v2935 = vunpack.c.l.b16 %v620
  %v2936 = vunpack.c.h.b16 %v620
  %v2937 = vunpack.c.l.b16 %v621
  %v2938 = vunpack.c.h.b16 %v621
  %v2939 = vunpack.c.l.b16 %v622
  %v2940 = vunpack.c.h.b16 %v622
  %v2941 = vunpack.c.l.b16 %v623
  %v2942 = vunpack.c.h.b16 %v623
  %v2943 = vunpack.c.l.b16 %v624
  %v2944 = vunpack.c.h.b16 %v624
  %v2945 = vunpack.c.l.b16 %v625
  %v2946 = vunpack.c.h.b16 %v625
  %v2947 = vunpack.c.l.b16 %v626
  %v2948 = vunpack.c.h.b16 %v626
  %v2949 = vunpack.c.l.b16 %v627
  %v2950 = vunpack.c.h.b16 %v627
  %v2951 = vunpack.c.l.b16 %v628
  %v2952 = vunpack.c.h.b16 %v628
  %v2953 = vunpack.c.l.b16 %v629
  %v2954 = vunpack.c.h.b16 %v629
  %v2955 = vunpack.c.l.b16 %v630
  %v2956 = vunpack.c.h.b16 %v630
  %v2957 = vunpack.c.l.b16 %v631
  %v2958 = vunpack.c.h.b16 %v631
  %v2959 = vunpack.c.l.b16 %v632
  %v2960 = vunpack.c.h.b16 %v632
  %v2961 = vunpack.c.l.b16 %v633
  %v2962 = vunpack.c.h.b16 %v633
  %v2963 = vunpack.c.l.b16 %v634
  %v2964 = vunpack.c.h.b16 %v634
  %v2965 = vunpack.c.l.b16 %v635
  %v2966 = vunpack.c.h.b16 %v635
  %v2967 = vunpack.c.l.b16 %v636
  %v2968 = vunpack.c.h.b16 %v636
  %v2969 = vunpack.c.l.b16 %v637
  %v2970 = vunpack.c.h.b16 %v637
  %v2971 = vunpack.c.l.b16 %v638
  %v2972 = vunpack.c.h.b16 %v638
  %v2973 = vunpack.c.l.b16 %v639
  %v2974 = vunpack.c.h.b16 %v639
  %v2975 = vunpack.c.l.b16 %v640
  %v2976 = vunpack.c.h.b16 %v640
  %v2977 = vunpack.c.l.b16 %v641
  %v2978 = vunpack.c.h.b16 %v641
  %v2979 = vunpack.c.l.b16 %v642
  %v2980 = vunpack.c.h.b16 %v642
  %v2981 = vunpack.c.l.b16 %v643
  %v2982 = vunpack.c.h.b16 %v643
  %v2983 = vunpack.c.l.b16 %v644
  %v2984 = vunpack.c.h.b16 %v644
  %v2985 = vunpack.c.l.b16 %v645
  %v2986 = vunpack.c.h.b16 %v645
  %v2987 = vunpack.c.l.b16 %v646
  %v2988 = vunpack.c.h.b16 %v646
  %v2989 = vunpack.c.l.b16 %v647
  %v2990 = vunpack.c.h.b16 %v647
  %v2991 = vunpack.c.l.b16 %v648
  %v2992 = vunpack.c.h.b16 %v648
  %v2993 = vunpack.c.l.b16 %v649
  %v2994 = vunpack.c.h.b16 %v649
  %v2995 = vunpack.c.l.b16 %v650
  %v2996 = vunpack.c.h.b16 %v650
  %v2997 = vunpack.c.l.b16 %v651
  %v2998 = vunpack.c.h.b16 %v651
  %v2999 = vunpack.c.l.b16 %v652
  %v3000 = vunpack.c.h.b16 %v652
  %v3001 = vunpack.c.l.b16 %v653
  %v3002 = vunpack.c.h.b16 %v653
  %v3003 = vunpack.c.l.b16 %v654
  %v3004 = vunpack.c.h.b16 %v654
  %v3005 = vunpack.c.l.b16 %v655
  %v3006 = vunpack.c.h.b16 %v655
  %v3007 = vunpack.c.l.b16 %v656
  %v3008 = vunpack.c.h.b16 %v656
  %v3009 = vunpack.c.l.b16 %v657
  %v3010 = vunpack.c.h.b16 %v657
  %v3011 = vunpack.c.l.b16 %v658
  %v3012 = vunpack.c.h.b16 %v658
  %v3013 = vunpack.c.l.b16 %v659
  %v3014 = vunpack.c.h.b16 %v659
  %v3015 = vunpack.c.l.b16 %v660
  %v3016 = vunpack.c.h.b16 %v660
  %v3017 = vunpack.c.l.b16 %v661
  %v3018 = vunpack.c.h.b16 %v661
  %v3019 = vunpack.c.l.b16 %v662
  %v3020 = vunpack.c.h.b16 %v662
  %v3021 = vunpack.c.l.b16 %v663
  %v3022 = vunpack.c.h.b16 %v663
  %v3023 = vunpack.c.l.b16 %v664
  %v3024 = vunpack.c.h.b16 %v664
  %v3025 = vunpack.c.l.b16 %v665
  %v3026 = vunpack.c.h.b16 %v665
  %v3027 = vunpack.c.l.b16 %v666
  %v3028 = vunpack.c.h.b16 %v666
  %v3029 = vunpack.c.l.b16 %v667
  %v3030 = vunpack.c.h.b16 %v667
  %v3031 = vunpack.c.l.b16 %v668
  %v3032 = vunpack.c.h.b16 %v668
  %v3033 = vunpack.c.l.b16 %v669
  %v3034 = vunpack.c.h.b16 %v669
  %v3035 = vunpack.c.l.b16 %v670
  %v3036 = vunpack.c.h.b16 %v670
  %v3037 = vunpack.c.l.b16 %v671
  %v3038 = vunpack.c.h.b16 %v671
  %v3039 = vunpack.c.l.b16 %v672
  %v3040 = vunpack.c.h.b16 %v672
  %v3041 = vunpack.c.l.b16 %v673
  %v3042 = vunpack.c.h.b16 %v673
  %v3043 = vunpack.c.l.b16 %v674
  %v3044 = vunpack.c.h.b16 %v674
  %v3045 = vunpack.c.l.b16 %v675
  %v3046 = vunpack.c.h.b16 %v675
  %v3047 = vunpack.c.l.b16 %v676
  %v3048 = vunpack.c.h.b16 %v676
  %v3049 = vunpack.c.l.b16 %v677
  %v3050 = vunpack.c.h.b16 %v677
  %v3051 = vunpack.c.l.b16 %v678
  %v3052 = vunpack.c.h.b16 %v678
  %v3053 = vunpack.c.l.b16 %v679
  %v3054 = vunpack.c.h.b16 %v679
  %v3055 = vunpack.c.l.b16 %v680
  %v3056 = vunpack.c.h.b16 %v680
  %v3057 = vunpack.c.l.b16 %v681
  %v3058 = vunpack.c.h.b16 %v681
  %v3059 = vunpack.c.l.b16 %v682
  %v3060 = vunpack.c.h.b16 %v682
  %v3061 = vunpack.c.l.b16 %v683
  %v3062 = vunpack.c.h.b16 %v683
  %v3063 = vunpack.c.l.b16 %v684
  %v3064 = vunpack.c.h.b16 %v684
  %v3065 = vunpack.c.l.b16 %v685
  %v3066 = vunpack.c.h.b16 %v685
  %v3067 = vunpack.c.l.b16 %v686
  %v3068 = vunpack.c.h.b16 %v686
  %v3069 = vunpack.c.l.b16 %v687
  %v3070 = vunpack.c.h.b16 %v687
  %v3071 = vunpack.c.l.b16 %v688
  %v3072 = vunpack.c.h.b16 %v688
  %v3073 = vunpack.c.l.b16 %v689
  %v3074 = vunpack.c.h.b16 %v689
  %v3075 = vunpack.c.l.b16 %v690
  %v3076 = vunpack.c.h.b16 %v690
  %v3077 = vunpack.c.l.b16 %v691
  %v3078 = vunpack.c.h.b16 %v691
  %v3079 = vunpack.c.l.b16 %v692
  %v3080 = vunpack.c.h.b16 %v692
  %v3081 = vunpack.c.l.b16 %v693
  %v3082 = vunpack.c.h.b16 %v693
  %v3083 = vunpack.c.l.b16 %v694
  %v3084 = vunpack.c.h.b16 %v694
  %v3085 = vunpack.c.l.b16 %v695
  %v3086 = vunpack.c.h.b16 %v695
  %v3087 = vunpack.c.l.b16 %v696
  %v3088 = vunpack.c.h.b16 %v696
  %v3089 = vunpack.c.l.b16 %v697
  %v3090 = vunpack.c.h.b16 %v697
  %v3091 = vunpack.c.l.b16 %v698
  %v3092 = vunpack.c.h.b16 %v698
  %v3093 = vunpack.c.l.b16 %v699
  %v3094 = vunpack.c.h.b16 %v699
  %v3095 = vunpack.c.l.b16 %v700
  %v3096 = vunpack.c.h.b16 %v700
  %v3097 = vunpack.c.l.b16 %v701
  %v3098 = vunpack.c.h.b16 %v701
  %v3099 = vunpack.c.l.b16 %v702
  %v3100 = vunpack.c.h.b16 %v702
  %v3101 = vunpack.c.l.b16 %v703
  %v3102 = vunpack.c.h.b16 %v703
  %v3103 = vunpack.c.l.b16 %v704
  %v3104 = vunpack.c.h.b16 %v704
  %v3105 = vunpack.c.l.b16 %v705
  %v3106 = vunpack.c.h.b16 %v705
  %v3107 = vunpack.c.l.b16 %v706
  %v3108 = vunpack.c.h.b16 %v706
  %v3109 = vunpack.c.l.b16 %v707
  %v3110 = vunpack.c.h.b16 %v707
  %v3111 = vunpack.c.l.b16 %v708
  %v3112 = vunpack.c.h.b16 %v708
  %v3113 = vunpack.c.l.b16 %v709
  %v3114 = vunpack.c.h.b16 %v709
  %v3115 = vunpack.c.l.b16 %v710
  %v3116 = vunpack.c.h.b16 %v710
  %v3117 = vunpack.c.l.b16 %v711
  %v3118 = vunpack.c.h.b16 %v711
  %v3119 = vunpack.c.l.b16 %v712
  %v3120 = vunpack.c.h.b16 %v712
  %v3121 = vunpack.c.l.b16 %v713
  %v3122 = vunpack.c.h.b16 %v713
  %v3123 = vunpack.c.l.b16 %v714
  %v3124 = vunpack.c.h.b16 %v714
  %v3125 = vunpack.c.l.b16 %v715
  %v3126 = vunpack.c.h.b16 %v715
  %v3127 = vunpack.c.l.b16 %v716
  %v3128 = vunpack.c.h.b16 %v716
  %v3129 = vunpack.c.l.b16 %v717
  %v3130 = vunpack.c.h.b16 %v717
  %v3131 = vunpack.c.l.b16 %v718
  %v3132 = vunpack.c.h.b16 %v718
  %v3133 = vunpack.c.l.b16 %v719
  %v3134 = vunpack.c.h.b16 %v719
  %v3135 = vunpack.c.l.b16 %v720
  %v3136 = vunpack.c.h.b16 %v720
  %v3137 = vunpack.c.l.b16 %v721
  %v3138 = vunpack.c.h.b16 %v721
  %v3139 = vunpack.c.l.b16 %v722
  %v3140 = vunpack.c.h.b16 %v722
  %v3141 = vunpack.c.l.b16 %v723
  %v3142 = vunpack.c.h.b16 %v723
  %v3143 = vunpack.c.l.b16 %v724
  %v3144 = vunpack.c.h.b16 %v724
  %v3145 = vunpack.c.l.b16 %v725
  %v3146 = vunpack.c.h.b16 %v725
  %v3147 = vunpack.c.l.b16 %v726
  %v3148 = vunpack.c.h.b16 %v726
  %v3149 = vunpack.c.l.b16 %v727
  %v3150 = vunpack.c.h.b16 %v727
  %v3151 = vunpack.c.l.b16 %v728
  %v3152 = vunpack.c.h.b16 %v728
  %v3153 = vunpack.c.l.b16 %v729
  %v3154 = vunpack.c.h.b16 %v729
  %v3155 = vunpack.c.l.b16 %v730
  %v3156 = vunpack.c.h.b16 %v730
  %v3157 = vunpack.c.l.b16 %v731
  %v3158 = vunpack.c.h.b16 %v731
  %v3159 = vunpack.c.l.b16 %v732
  %v3160 = vunpack.c.h.b16 %v732
  %v3161 = vunpack.c.l.b16 %v733
  %v3162 = vunpack.c.h.b16 %v733
  %v3163 = vunpack.c.l.b16 %v734
  %v3164 = vunpack.c.h.b16 %v734
  %v3165 = vunpack.c.l.b16 %v735
  %v3166 = vunpack.c.h.b16 %v735
  %v3167 = vunpack.c.l.b16 %v736
  %v3168 = vunpack.c.h.b16 %v736
  %v3169 = vunpack.c.l.b16 %v737
  %v3170 = vunpack.c.h.b16 %v737
  %v3171 = vunpack.c.l.b16 %v738
  %v3172 = vunpack.c.h.b16 %v738
  %v3173 = vunpack.c.l.b16 %v739
  %v3174 = vunpack.c.h.b16 %v739
  %v3175 = vunpack.c.l.b16 %v740
  %v3176 = vunpack.c.h.b16 %v740
  %v3177 = vunpack.c.l.b16 %v741
  %v3178 = vunpack.c.h.b16 %v741
  %v3179 = vunpack.c.l.b16 %v742
  %v3180 = vunpack.c.h.b16 %v742
  %v3181 = vunpack.c.l.b16 %v743
  %v3182 = vunpack.c.h.b16 %v743
  %v3183 = vunpack.c.l.b16 %v744
  %v3184 = vunpack.c.h.b16 %v744
  %v3185 = vunpack.c.l.b16 %v745
  %v3186 = vunpack.c.h.b16 %v745
  %v3187 = vunpack.c.l.b16 %v746
  %v3188 = vunpack.c.h.b16 %v746
  %v3189 = vunpack.c.l.b16 %v747
  %v3190 = vunpack.c.h.b16 %v747
  %v3191 = vunpack.c.l.b16 %v748
  %v3192 = vunpack.c.h.b16 %v748
  %v3193 = vunpack.c.l.b16 %v749
  %v3194 = vunpack.c.h.b16 %v749
  %v3195 = vunpack.c.l.b16 %v750
  %v3196 = vunpack.c.h.b16 %v750
  %v3197 = vunpack.c.l.b16 %v751
  %v3198 = vunpack.c.h.b16 %v751
  %v3199 = vunpack.c.l.b16 %v752
  %v3200 = vunpack.c.h.b16 %v752
  %v3201 = vunpack.c.l.b16 %v753
  %v3202 = vunpack.c.h.b16 %v753
  %v3203 = vunpack.c.l.b16 %v754
  %v3204 = vunpack.c.h.b16 %v754
  %v3205 = vunpack.c.l.b16 %v755
  %v3206 = vunpack.c.h.b16 %v755
  %v3207 = vunpack.c.l.b16 %v756
  %v3208 = vunpack.c.h.b16 %v756
  %v3209 = vunpack.c.l.b16 %v757
  %v3210 = vunpack.c.h.b16 %v757
  %v3211 = vunpack.c.l.b16 %v758
  %v3212 = vunpack.c.h.b16 %v758
  %v3213 = vunpack.c.l.b16 %v759
  %v3214 = vunpack.c.h.b16 %v759
  %v3215 = vunpack.c.l.b16 %v760
  %v3216 = vunpack.c.h.b16 %v760
  %v3217 = vunpack.c.l.b16 %v761
  %v3218 = vunpack.c.h.b16 %v761
  %v3219 = vunpack.c.l.b16 %v762
  %v3220 = vunpack.c.h.b16 %v762
  %v3221 = vunpack.c.l.b16 %v763
  %v3222 = vunpack.c.h.b16 %v763
  %v3223 = vunpack.c.l.b16 %v764
  %v3224 = vunpack.c.h.b16 %v764
  %v3225 = vunpack.c.l.b16 %v765
  %v3226 = vunpack.c.h.b16 %v765
  %v3227 = vunpack.c.l.b16 %v766
  %v3228 = vunpack.c.h.b16 %v766
  %v3229 = vunpack.c.l.b16 %v767
  %v3230 = vunpack.c.h.b16 %v767
  %v3231 = vunpack.c.l.b16 %v768
  %v3232 = vunpack.c.h.b16 %v768
  %v3233 = vunpack.c.l.b16 %v769
  %v3234 = vunpack.c.h.b16 %v769
  %v3235 = vunpack.c.l.b16 %v770
  %v3236 = vunpack.c.h.b16 %v770
  %v3237 = vunpack.c.l.b16 %v771
  %v3238 = vunpack.c.h.b16 %v771
  %v3239 = vunpack.c.l.b16 %v772
  %v3240 = vunpack.c.h.b16 %v772
  %v3241 = vunpack.c.l.b16 %v773
  %v3242 = vunpack.c.h.b16 %v773
  %v3243 = vunpack.c.l.b16 %v774
  %v3244 = vunpack.c.h.b16 %v774
  %v3245 = vunpack.c.l.b16 %v775
  %v3246 = vunpack.c.h.b16 %v775
  %v3247 = vunpack.c.l.b16 %v776
  %v3248 = vunpack.c.h.b16 %v776
  %v3249 = vunpack.c.l.b16 %v777
  %v3250 = vunpack.c.h.b16 %v777
  %v3251 = vunpack.c.l.b16 %v778
  %v3252 = vunpack.c.h.b16 %v778
  %v3253 = vunpack.c.l.b16 %v779
  %v3254 = vunpack.c.h.b16 %v779
  %v3255 = vunpack.c.l.b16 %v780
  %v3256 = vunpack.c.h.b16 %v780
  %v3257 = vunpack.c.l.b16 %v781
  %v3258 = vunpack.c.h.b16 %v781
  %v3259 = vunpack.c.l.b16 %v782
  %v3260 = vunpack.c.h.b16 %v782
  %v3261 = vunpack.c.l.b16 %v783
  %v3262 = vunpack.c.h.b16 %v783
  %v3263 = vunpack.c.l.b16 %v784
  %v3264 = vunpack.c.h.b16 %v784
  %v3265 = vunpack.c.l.b16 %v785
  %v3266 = vunpack.c.h.b16 %v785
  %v3267 = vunpack.c.l.b16 %v786
  %v3268 = vunpack.c.h.b16 %v786
  %v3269 = vunpack.c.l.b16 %v787
  %v3270 = vunpack.c.h.b16 %v787
  %v3271 = vunpack.c.l.b16 %v788
  %v3272 = vunpack.c.h.b16 %v788
  %v3273 = vunpack.c.l.b16 %v789
  %v3274 = vunpack.c.h.b16 %v789
  %v3275 = vunpack.c.l.b16 %v790
  %v3276 = vunpack.c.h.b16 %v790
  %v3277 = vunpack.c.l.b16 %v791
  %v3278 = vunpack.c.h.b16 %v791
  %v3279 = vunpack.c.l.b16 %v792
  %v3280 = vunpack.c.h.b16 %v792
  %v3281 = vunpack.c.l.b16 %v793
  %v3282 = vunpack.c.h.b16 %v793
  %v3283 = vunpack.c.l.b16 %v794
  %v3284 = vunpack.c.h.b16 %v794
  %v3285 = vunpack.c.l.b16 %v795
  %v3286 = vunpack.c.h.b16 %v795
  %v3287 = vunpack.c.l.b16 %v796
  %v3288 = vunpack.c.h.b16 %v796
  %v3289 = vunpack.c.l.b16 %v797
  %v3290 = vunpack.c.h.b16 %v797
  %v3291 = vunpack.c.l.b16 %v798
  %v3292 = vunpack.c.h.b16 %v798
  %v3293 = vunpack.c.l.b16 %v799
  %v3294 = vunpack.c.h.b16 %v799
  %v3295 = vunpack.c.l.b16 %v800
  %v3296 = vunpack.c.h.b16 %v800
  %v3297 = vunpack.c.l.b16 %v801
  %v3298 = vunpack.c.h.b16 %v801
  %v3299 = vunpack.c.l.b16 %v802
  %v3300 = vunpack.c.h.b16 %v802
  %v3301 = vunpack.c.l.b16 %v803
  %v3302 = vunpack.c.h.b16 %v803
  %v3303 = vunpack.c.l.b16 %v804
  %v3304 = vunpack.c.h.b16 %v804
  %v3305 = vunpack.c.l.b16 %v805
  %v3306 = vunpack.c.h.b16 %v805
  %v3307 = vunpack.c.l.b16 %v806
  %v3308 = vunpack.c.h.b16 %v806
  %v3309 = vunpack.c.l.b16 %v807
  %v3310 = vunpack.c.h.b16 %v807
  %v3311 = vunpack.c.l.b16 %v808
  %v3312 = vunpack.c.h.b16 %v808
  %v3313 = vunpack.c.l.b16 %v809
  %v3314 = vunpack.c.h.b16 %v809
  %v3315 = vunpack.c.l.b16 %v810
  %v3316 = vunpack.c.h.b16 %v810
  %v3317 = vunpack.c.l.b16 %v811
  %v3318 = vunpack.c.h.b16 %v811
  %v3319 = vunpack.c.l.b16 %v812
  %v3320 = vunpack.c.h.b16 %v812
  %v3321 = vunpack.c.l.b16 %v813
  %v3322 = vunpack.c.h.b16 %v813
  %v3323 = vunpack.c.l.b16 %v814
  %v3324 = vunpack.c.h.b16 %v814
  %v3325 = vunpack.c.l.b16 %v815
  %v3326 = vunpack.c.h.b16 %v815
  %v3327 = vunpack.c.l.b16 %v816
  %v3328 = vunpack.c.h.b16 %v816
  %v3329 = vunpack.c.l.b16 %v817
  %v3330 = vunpack.c.h.b16 %v817
  %v3331 = vunpack.c.l.b16 %v818
  %v3332 = vunpack.c.h.b16 %v818
  %v3333 = vunpack.c.l.b16 %v819
  %v3334 = vunpack.c.h.b16 %v819
  %v3335 = vunpack.c.l.b16 %v820
  %v3336 = vunpack.c.h.b16 %v820
  %v3337 = vunpack.c.l.b16 %v821
  %v3338 = vunpack.c.h.b16 %v821
  %v3339 = vunpack.c.l.b16 %v822
  %v3340 = vunpack.c.h.b16 %v822
  %v3341 = vunpack.c.l.b16 %v823
  %v3342 = vunpack.c.h.b16 %v823
  %v3343 = vunpack.c.l.b16 %v824
  %v3344 = vunpack.c.h.b16 %v824
  %v3345 = vunpack.c.l.b16 %v825
  %v3346 = vunpack.c.h.b16 %v825
  %v3347 = vunpack.c.l.b16 %v826
  %v3348 = vunpack.c.h.b16 %v826
  %v3349 = vunpack.c.l.b16 %v827
  %v3350 = vunpack.c.h.b16 %v827
  %v3351 = vunpack.c.l.b16 %v828
  %v3352 = vunpack.c.h.b16 %v828
  %v3353 = vunpack.c.l.b16 %v829
  %v3354 = vunpack.c.h.b16 %v829
  %v3355 = vunpack.c.l.b16 %v830
  %v3356 = vunpack.c.h.b16 %v830
  %v3357 = vunpack.c.l.b16 %v831
  %v3358 = vunpack.c.h.b16 %v831
  %v3359 = vunpack.c.l.b16 %v832
  %v3360 = vunpack.c.h.b16 %v832
  %v3361 = vunpack.c.l.b16 %v833
  %v3362 = vunpack.c.h.b16 %v833
  %v3363 = vunpack.c.l.b16 %v834
  %v3364 = vunpack.c.h.b16 %v834
  %v3365 = vpack.c.b16 %v1799, %v1797
  %v3366 = vpack.c.b16 %v1800, %v1798
  %v3367 = vpack.c.b16 %v1803, %v1801
  %v3368 = vpack.c.b16 %v1804, %v1802
  %v3369 = vpack.c.b16 %v1807, %v1805
  %v3370 = vpack.c.b16 %v1808, %v1806
  %v3371 = vpack.c.b16 %v1811, %v1809
  %v3372 = vpack.c.b16 %v1812, %v1810
  %v3373 = vpack.c.b16 %v1815, %v1813
  %v3374 = vpack.c.b16 %v1816, %v1814
  %v3375 = vpack.c.b16 %v1819, %v1817
  %v3376 = vpack.c.b16 %v1820, %v1818
  %v3377 = vpack.c.b16 %v1823, %v1821
  %v3378 = vpack.c.b16 %v1824, %v1822
  %v3379 = vpack.c.b16 %v1827, %v1825
  %v3380 = vpack.c.b16 %v1828, %v1826
  %v3381 = vpack.c.b16 %v1831, %v1829
  %v3382 = vpack.c.b16 %v1832, %v1830
  %v3383 = vpack.c.b16 %v1835, %v1833
  %v3384 = vpack.c.b16 %v1836, %v1834
  %v3385 = vpack.c.b16 %v1839, %v1837
  %v3386 = vpack.c.b16 %v1840, %v1838
  %v3387 = vpack.c.b16 %v1843, %v1841
  %v3388 = vpack.c.b16 %v1844, %v1842
  %v3389 = vpack.c.b16 %v1847, %v1845
  %v3390 = vpack.c.b16 %v1848, %v1846
  %v3391 = vpack.c.b16 %v1851, %v1849
  %v3392 = vpack.c.b16 %v1852, %v1850
  %v3393 = vpack.c.b16 %v1855, %v1853
  %v3394 = vpack.c.b16 %v1856, %v1854
  %v3395 = vpack.c.b16 %v1859, %v1857
  %v3396 = vpack.c.b16 %v1860, %v1858
  %v3397 = vpack.c.b16 %v1863, %v1861
  %v3398 = vpack.c.b16 %v1864, %v1862
  %v3399 = vpack.c.b16 %v1867, %v1865
  %v3400 = vpack.c.b16 %v1868, %v1866
  %v3401 = vpack.c.b16 %v1871, %v1869
  %v3402 = vpack.c.b16 %v1872, %v1870
  %v3403 = vpack.c.b16 %v1875, %v1873
  %v3404 = vpack.c.b16 %v1876, %v1874
  %v3405 = vpack.c.b16 %v1879, %v1877
  %v3406 = vpack.c.b16 %v1880, %v1878
  %v3407 = vpack.c.b16 %v1883, %v1881
  %v3408 = vpack.c.b16 %v1884, %v1882
  %v3409 = vpack.c.b16 %v1887, %v1885
  %v3410 = vpack.c.b16 %v1888, %v1886
  %v3411 = vpack.c.b16 %v1891, %v1889
  %v3412 = vpack.c.b16 %v1892, %v1890
  %v3413 = vpack.c.b16 %v1895, %v1893
  %v3414 = vpack.c.b16 %v1896, %v1894
  %v3415 = vpack.c.b16 %v1899, %v1897
  %v3416 = vpack.c.b16 %v1900, %v1898
  %v3417 = vpack.c.b16 %v1903, %v1901
  %v3418 = vpack.c.b16 %v1904, %v1902
  %v3419 = vpack.c.b16 %v1907, %v1905
  %v3420 = vpack.c.b16 %v1908, %v1906
  %v3421 = vpack.c.b16 %v1911, %v1909
  %v3422 = vpack.c.b16 %v1912, %v1910
  %v3423 = vpack.c.b16 %v1915, %v1913
  %v3424 = vpack.c.b16 %v1916, %v1914
  %v3425 = vpack.c.b16 %v1919, %v1917
  %v3426 = vpack.c.b16 %v1920, %v1918
  %v3427 = vpack.c.b16 %v1923, %v1921
  %v3428 = vpack.c.b16 %v1924, %v1922
  %v3429 = vpack.c.b16 %v1927, %v1925
  %v3430 = vpack.c.b16 %v1928, %v1926
  %v3431 = vpack.c.b16 %v1931, %v1929
  %v3432 = vpack.c.b16 %v1932, %v1930
  %v3433 = vpack.c.b16 %v1935, %v1933
  %v3434 = vpack.c.b16 %v1936, %v1934
  %v3435 = vpack.c.b16 %v1939, %v1937
  %v3436 = vpack.c.b16 %v1940, %v1938
  %v3437 = vpack.c.b16 %v1943, %v1941
  %v3438 = vpack.c.b16 %v1944, %v1942
  %v3439 = vpack.c.b16 %v1947, %v1945
  %v3440 = vpack.c.b16 %v1948, %v1946
  %v3441 = vpack.c.b16 %v1951, %v1949
  %v3442 = vpack.c.b16 %v1952, %v1950
  %v3443 = vpack.c.b16 %v1955, %v1953
  %v3444 = vpack.c.b16 %v1956, %v1954
  %v3445 = vpack.c.b16 %v1959, %v1957
  %v3446 = vpack.c.b16 %v1960, %v1958
  %v3447 = vpack.c.b16 %v1963, %v1961
  %v3448 = vpack.c.b16 %v1964, %v1962
  %v3449 = vpack.c.b16 %v1967, %v1965
  %v3450 = vpack.c.b16 %v1968, %v1966
  %v3451 = vpack.c.b16 %v1971, %v1969
  %v3452 = vpack.c.b16 %v1972, %v1970
  %v3453 = vpack.c.b16 %v1975, %v1973
  %v3454 = vpack.c.b16 %v1976, %v1974
  %v3455 = vpack.c.b16 %v1979, %v1977
  %v3456 = vpack.c.b16 %v1980, %v1978
  %v3457 = vpack.c.b16 %v1983, %v1981
  %v3458 = vpack.c.b16 %v1984, %v1982
  %v3459 = vpack.c.b16 %v1987, %v1985
  %v3460 = vpack.c.b16 %v1988, %v1986
  %v3461 = vpack.c.b16 %v1991, %v1989
  %v3462 = vpack.c.b16 %v1992, %v1990
  %v3463 = vpack.c.b16 %v1995, %v1993
  %v3464 = vpack.c.b16 %v1996, %v1994
  %v3465 = vpack.c.b16 %v1999, %v1997
  %v3466 = vpack.c.b16 %v2000, %v1998
  %v3467 = vpack.c.b16 %v2003, %v2001
  %v3468 = vpack.c.b16 %v2004, %v2002
  %v3469 = vpack.c.b16 %v2007, %v2005
  %v3470 = vpack.c.b16 %v2008, %v2006
  %v3471 = vpack.c.b16 %v2011, %v2009
  %v3472 = vpack.c.b16 %v2012, %v2010
  %v3473 = vpack.c.b16 %v2015, %v2013
  %v3474 = vpack.c.b16 %v2016, %v2014
  %v3475 = vpack.c.b16 %v2019, %v2017
  %v3476 = vpack.c.b16 %v2020, %v2018
  %v3477 = vpack.c.b16 %v2023, %v2021
  %v3478 = vpack.c.b16 %v2024, %v2022
  %v3479 = vpack.c.b16 %v2027, %v2025
  %v3480 = vpack.c.b16 %v2028, %v2026
  %v3481 = vpack.c.b16 %v2031, %v2029
  %v3482 = vpack.c.b16 %v2032, %v2030
  %v3483 = vpack.c.b16 %v2035, %v2033
  %v3484 = vpack.c.b16 %v2036, %v2034
  %v3485 = vpack.c.b16 %v2039, %v2037
  %v3486 = vpack.c.b16 %v2040, %v2038
  %v3487 = vpack.c.b16 %v2043, %v2041
  %v3488 = vpack.c.b16 %v2044, %v2042
  %v3489 = vpack.c.b16 %v2047, %v2045
  %v3490 = vpack.c.b16 %v2048, %v2046
  %v3491 = vpack.c.b16 %v2051, %v2049
  %v3492 = vpack.c.b16 %v2052, %v2050
  %v3493 = vpack.c.b16 %v2055, %v2053
  %v3494 = vpack.c.b16 %v2056, %v2054
  %v3495 = vpack.c.b16 %v2059, %v2057
  %v3496 = vpack.c.b16 %v2060, %v2058
  %v3497 = vpack.c.b16 %v2063, %v2061
  %v3498 = vpack.c.b16 %v2064, %v2062
  %v3499 = vpack.c.b16 %v2067, %v2065
  %v3500 = vpack.c.b16 %v2068, %v2066
  %v3501 = vpack.c.b16 %v2071, %v2069
  %v3502 = vpack.c.b16 %v2072, %v2070
  %v3503 = vpack.c.b16 %v2075, %v2073
  %v3504 = vpack.c.b16 %v2076, %v2074
  %v3505 = vpack.c.b16 %v2079, %v2077
  %v3506 = vpack.c.b16 %v2080, %v2078
  %v3507 = vpack.c.b16 %v2083, %v2081
  %v3508 = vpack.c.b16 %v2084, %v2082
  %v3509 = vpack.c.b16 %v2087, %v2085
  %v3510 = vpack.c.b16 %v2088, %v2086
  %v3511 = vpack.c.b16 %v2091, %v2089
  %v3512 = vpack.c.b16 %v2092, %v2090
  %v3513 = vpack.c.b16 %v2095, %v2093
  %v3514 = vpack.c.b16 %v2096, %v2094
  %v3515 = vpack.c.b16 %v2099, %v2097
  %v3516 = vpack.c.b16 %v2100, %v2098
  %v3517 = vpack.c.b16 %v2103, %v2101
  %v3518 = vpack.c.b16 %v2104, %v2102
  %v3519 = vpack.c.b16 %v2107, %v2105
  %v3520 = vpack.c.b16 %v2108, %v2106
  %v3521 = vpack.c.b16 %v2111, %v2109
  %v3522 = vpack.c.b16 %v2112, %v2110
  %v3523 = vpack.c.b16 %v2115, %v2113
  %v3524 = vpack.c.b16 %v2116, %v2114
  %v3525 = vpack.c.b16 %v2119, %v2117
  %v3526 = vpack.c.b16 %v2120, %v2118
  %v3527 = vpack.c.b16 %v2123, %v2121
  %v3528 = vpack.c.b16 %v2124, %v2122
  %v3529 = vpack.c.b16 %v2127, %v2125
  %v3530 = vpack.c.b16 %v2128, %v2126
  %v3531 = vpack.c.b16 %v2131, %v2129
  %v3532 = vpack.c.b16 %v2132, %v2130
  %v3533 = vpack.c.b16 %v2135, %v2133
  %v3534 = vpack.c.b16 %v2136, %v2134
  %v3535 = vpack.c.b16 %v2139, %v2137
  %v3536 = vpack.c.b16 %v2140, %v2138
  %v3537 = vpack.c.b16 %v2143, %v2141
  %v3538 = vpack.c.b16 %v2144, %v2142
  %v3539 = vpack.c.b16 %v2147, %v2145
  %v3540 = vpack.c.b16 %v2148, %v2146
  %v3541 = vpack.c.b16 %v2151, %v2149
  %v3542 = vpack.c.b16 %v2152, %v2150
  %v3543 = vpack.c.b16 %v2155, %v2153
  %v3544 = vpack.c.b16 %v2156, %v2154
  %v3545 = vpack.c.b16 %v2159, %v2157
  %v3546 = vpack.c.b16 %v2160, %v2158
  %v3547 = vpack.c.b16 %v2163, %v2161
  %v3548 = vpack.c.b16 %v2164, %v2162
  %v3549 = vpack.c.b16 %v2167, %v2165
  %v3550 = vpack.c.b16 %v2168, %v2166
  %v3551 = vpack.c.b16 %v2171, %v2169
  %v3552 = vpack.c.b16 %v2172, %v2170
  %v3553 = vpack.c.b16 %v2175, %v2173
  %v3554 = vpack.c.b16 %v2176, %v2174
  %v3555 = vpack.c.b16 %v2179, %v2177
  %v3556 = vpack.c.b16 %v2180, %v2178
  %v3557 = vpack.c.b16 %v2183, %v2181
  %v3558 = vpack.c.b16 %v2184, %v2182
  %v3559 = vpack.c.b16 %v2187, %v2185
  %v3560 = vpack.c.b16 %v2188, %v2186
  %v3561 = vpack.c.b16 %v2191, %v2189
  %v3562 = vpack.c.b16 %v2192, %v2190
  %v3563 = vpack.c.b16 %v2195, %v2193
  %v3564 = vpack.c.b16 %v2196, %v2194
  %v3565 = vpack.c.b16 %v2199, %v2197
  %v3566 = vpack.c.b16 %v2200, %v2198
  %v3567 = vpack.c.b16 %v2203, %v2201
  %v3568 = vpack.c.b16 %v2204, %v2202
  %v3569 = vpack.c.b16 %v2207, %v2205
  %v3570 = vpack.c.b16 %v2208, %v2206
  %v3571 = vpack.c.b16 %v2211, %v2209
  %v3572 = vpack.c.b16 %v2212, %v2210
  %v3573 = vpack.c.b16 %v2215, %v2213
  %v3574 = vpack.c.b16 %v2216, %v2214
  %v3575 = vpack.c.b16 %v2219, %v2217
  %v3576 = vpack.c.b16 %v2220, %v2218
  %v3577 = vpack.c.b16 %v2223, %v2221
  %v3578 = vpack.c.b16 %v2224, %v2222
  %v3579 = vpack.c.b16 %v2227, %v2225
  %v3580 = vpack.c.b16 %v2228, %v2226
  %v3581 = vpack.c.b16 %v2231, %v2229
  %v3582 = vpack.c.b16 %v2232, %v2230
  %v3583 = vpack.c.b16 %v2235, %v2233
  %v3584 = vpack.c.b16 %v2236, %v2234
  %v3585 = vpack.c.b16 %v2239, %v2237
  %v3586 = vpack.c.b16 %v2240, %v2238
  %v3587 = vpack.c.b16 %v2243, %v2241
  %v3588 = vpack.c.b16 %v2244, %v2242
  %v3589 = vpack.c.b16 %v2247, %v2245
  %v3590 = vpack.c.b16 %v2248, %v2246
  %v3591 = vpack.c.b16 %v2251, %v2249
  %v3592 = vpack.c.b16 %v2252, %v2250
  %v3593 = vpack.c.b16 %v2255, %v2253
  %v3594 = vpack.c.b16 %v2256, %v2254
  %v3595 = vpack.c.b16 %v2259, %v2257
  %v3596 = vpack.c.b16 %v2260, %v2258
  %v3597 = vpack.c.b16 %v2263, %v2261
  %v3598 = vpack.c.b16 %v2264, %v2262
  %v3599 = vpack.c.b16 %v2267, %v2265
  %v3600 = vpack.c.b16 %v2268, %v2266
  %v3601 = vpack.c.b16 %v2271, %v2269
  %v3602 = vpack.c.b16 %v2272, %v2270
  %v3603 = vpack.c.b16 %v2275, %v2273
  %v3604 = vpack.c.b16 %v2276, %v2274
  %v3605 = vpack.c.b16 %v2279, %v2277
  %v3606 = vpack.c.b16 %v2280, %v2278
  %v3607 = vpack.c.b16 %v2283, %v2281
  %v3608 = vpack.c.b16 %v2284, %v2282
  %v3609 = vpack.c.b16 %v2287, %v2285
  %v3610 = vpack.c.b16 %v2288, %v2286
  %v3611 = vpack.c.b16 %v2291, %v2289
  %v3612 = vpack.c.b16 %v2292, %v2290
  %v3613 = vpack.c.b16 %v2295, %v2293
  %v3614 = vpack.c.b16 %v2296, %v2294
  %v3615 = vpack.c.b16 %v2299, %v2297
  %v3616 = vpack.c.b16 %v2300, %v2298
  %v3617 = vpack.c.b16 %v2303, %v2301
  %v3618 = vpack.c.b16 %v2304, %v2302
  %v3619 = vpack.c.b16 %v2307, %v2305
  %v3620 = vpack.c.b16 %v2308, %v2306
  %v3621 = vpack.c.b16 %v2311, %v2309
  %v3622 = vpack.c.b16 %v2312, %v2310
  %v3623 = vpack.c.b16 %v2315, %v2313
  %v3624 = vpack.c.b16 %v2316, %v2314
  %v3625 = vpack.c.b16 %v2319, %v2317
  %v3626 = vpack.c.b16 %v2320, %v2318
  %v3627 = vpack.c.b16 %v2323, %v2321
  %v3628 = vpack.c.b16 %v2324, %v2322
  %v3629 = vpack.c.b16 %v2327, %v2325
  %v3630 = vpack.c.b16 %v2328, %v2326
  %v3631 = vpack.c.b16 %v2331, %v2329
  %v3632 = vpack.c.b16 %v2332, %v2330
  %v3633 = vpack.c.b16 %v2335, %v2333
  %v3634 = vpack.c.b16 %v2336, %v2334
  %v3635 = vpack.c.b16 %v2339, %v2337
  %v3636 = vpack.c.b16 %v2340, %v2338
  %v3637 = vpack.c.b16 %v2343, %v2341
  %v3638 = vpack.c.b16 %v2344, %v2342
  %v3639 = vpack.c.b16 %v2347, %v2345
  %v3640 = vpack.c.b16 %v2348, %v2346
  %v3641 = vpack.c.b16 %v2351, %v2349
  %v3642 = vpack.c.b16 %v2352, %v2350
  %v3643 = vpack.c.b16 %v2355, %v2353
  %v3644 = vpack.c.b16 %v2356, %v2354
  %v3645 = vpack.c.b16 %v2359, %v2357
  %v3646 = vpack.c.b16 %v2360, %v2358
  %v3647 = vpack.c.b16 %v2363, %v2361
  %v3648 = vpack.c.b16 %v2364, %v2362
  %v3649 = vpack.c.b16 %v2367, %v2365
  %v3650 = vpack.c.b16 %v2368, %v2366
  %v3651 = vpack.c.b16 %v2371, %v2369
  %v3652 = vpack.c.b16 %v2372, %v2370
  %v3653 = vpack.c.b16 %v2375, %v2373
  %v3654 = vpack.c.b16 %v2376, %v2374
  %v3655 = vpack.c.b16 %v2379, %v2377
  %v3656 = vpack.c.b16 %v2380, %v2378
  %v3657 = vpack.c.b16 %v2383, %v2381
  %v3658 = vpack.c.b16 %v2384, %v2382
  %v3659 = vpack.c.b16 %v2387, %v2385
  %v3660 = vpack.c.b16 %v2388, %v2386
  %v3661 = vpack.c.b16 %v2391, %v2389
  %v3662 = vpack.c.b16 %v2392, %v2390
  %v3663 = vpack.c.b16 %v2395, %v2393
  %v3664 = vpack.c.b16 %v2396, %v2394
  %v3665 = vpack.c.b16 %v2399, %v2397
  %v3666 = vpack.c.b16 %v2400, %v2398
  %v3667 = vpack.c.b16 %v2403, %v2401
  %v3668 = vpack.c.b16 %v2404, %v2402
  %v3669 = vpack.c.b16 %v2407, %v2405
  %v3670 = vpack.c.b16 %v2408, %v2406
  %v3671 = vpack.c.b16 %v2411, %v2409
  %v3672 = vpack.c.b16 %v2412, %v2410
  %v3673 = vpack.c.b16 %v2415, %v2413
  %v3674 = vpack.c.b16 %v2416, %v2414
  %v3675 = vpack.c.b16 %v2419, %v2417
  %v3676 = vpack.c.b16 %v2420, %v2418
  %v3677 = vpack.c.b16 %v2423, %v2421
  %v3678 = vpack.c.b16 %v2424, %v2422
  %v3679 = vpack.c.b16 %v2427, %v2425
  %v3680 = vpack.c.b16 %v2428, %v2426
  %v3681 = vpack.c.b16 %v2431, %v2429
  %v3682 = vpack.c.b16 %v2432, %v2430
  %v3683 = vpack.c.b16 %v2435, %v2433
  %v3684 = vpack.c.b16 %v2436, %v2434
  %v3685 = vpack.c.b16 %v2439, %v2437
  %v3686 = vpack.c.b16 %v2440, %v2438
  %v3687 = vpack.c.b16 %v2443, %v2441
  %v3688 = vpack.c.b16 %v2444, %v2442
  %v3689 = vpack.c.b16 %v2447, %v2445
  %v3690 = vpack.c.b16 %v2448, %v2446
  %v3691 = vpack.c.b16 %v2451, %v2449
  %v3692 = vpack.c.b16 %v2452, %v2450
  %v3693 = vpack.c.b16 %v2455, %v2453
  %v3694 = vpack.c.b16 %v2456, %v2454
  %v3695 = vpack.c.b16 %v2459, %v2457
  %v3696 = vpack.c.b16 %v2460, %v2458
  %v3697 = vpack.c.b16 %v2463, %v2461
  %v3698 = vpack.c.b16 %v2464, %v2462
  %v3699 = vpack.c.b16 %v2467, %v2465
  %v3700 = vpack.c.b16 %v2468, %v2466
  %v3701 = vpack.c.b16 %v2471, %v2469
  %v3702 = vpack.c.b16 %v2472, %v2470
  %v3703 = vpack.c.b16 %v2475, %v2473
  %v3704 = vpack.c.b16 %v2476, %v2474
  %v3705 = vpack.c.b16 %v2479, %v2477
  %v3706 = vpack.c.b16 %v2480, %v2478
  %v3707 = vpack.c.b16 %v2483, %v2481
  %v3708 = vpack.c.b16 %v2484, %v2482
  %v3709 = vpack.c.b16 %v2487, %v2485
  %v3710 = vpack.c.b16 %v2488, %v2486
  %v3711 = vpack.c.b16 %v2491, %v2489
  %v3712 = vpack.c.b16 %v2492, %v2490
  %v3713 = vpack.c.b16 %v2495, %v2493
  %v3714 = vpack.c.b16 %v2496, %v2494
  %v3715 = vpack.c.b16 %v2499, %v2497
  %v3716 = vpack.c.b16 %v2500, %v2498
  %v3717 = vpack.c.b16 %v2503, %v2501
  %v3718 = vpack.c.b16 %v2504, %v2502
  %v3719 = vpack.c.b16 %v2507, %v2505
  %v3720 = vpack.c.b16 %v2508, %v2506
  %v3721 = vpack.c.b16 %v2511, %v2509
  %v3722 = vpack.c.b16 %v2512, %v2510
  %v3723 = vpack.c.b16 %v2515, %v2513
  %v3724 = vpack.c.b16 %v2516, %v2514
  %v3725 = vpack.c.b16 %v2519, %v2517
  %v3726 = vpack.c.b16 %v2520, %v2518
  %v3727 = vpack.c.b16 %v2523, %v2521
  %v3728 = vpack.c.b16 %v2524, %v2522
  %v3729 = vpack.c.b16 %v2527, %v2525
  %v3730 = vpack.c.b16 %v2528, %v2526
  %v3731 = vpack.c.b16 %v2531, %v2529
  %v3732 = vpack.c.b16 %v2532, %v2530
  %v3733 = vpack.c.b16 %v2535, %v2533
  %v3734 = vpack.c.b16 %v2536, %v2534
  %v3735 = vpack.c.b16 %v2539, %v2537
  %v3736 = vpack.c.b16 %v2540, %v2538
  %v3737 = vpack.c.b16 %v2543, %v2541
  %v3738 = vpack.c.b16 %v2544, %v2542
  %v3739 = vpack.c.b16 %v2547, %v2545
  %v3740 = vpack.c.b16 %v2548, %v2546
  %v3741 = vpack.c.b16 %v2551, %v2549
  %v3742 = vpack.c.b16 %v2552, %v2550
  %v3743 = vpack.c.b16 %v2555, %v2553
  %v3744 = vpack.c.b16 %v2556, %v2554
  %v3745 = vpack.c.b16 %v2559, %v2557
  %v3746 = vpack.c.b16 %v2560, %v2558
  %v3747 = vpack.c.b16 %v2563, %v2561
  %v3748 = vpack.c.b16 %v2564, %v2562
  %v3749 = vpack.c.b16 %v2567, %v2565
  %v3750 = vpack.c.b16 %v2568, %v2566
  %v3751 = vpack.c.b16 %v2571, %v2569
  %v3752 = vpack.c.b16 %v2572, %v2570
  %v3753 = vpack.c.b16 %v2575, %v2573
  %v3754 = vpack.c.b16 %v2576, %v2574
  %v3755 = vpack.c.b16 %v2579, %v2577
  %v3756 = vpack.c.b16 %v2580, %v2578
  %v3757 = vpack.c.b16 %v2583, %v2581
  %v3758 = vpack.c.b16 %v2584, %v2582
  %v3759 = vpack.c.b16 %v2587, %v2585
  %v3760 = vpack.c.b16 %v2588, %v2586
  %v3761 = vpack.c.b16 %v2591, %v2589
  %v3762 = vpack.c.b16 %v2592, %v2590
  %v3763 = vpack.c.b16 %v2595, %v2593
  %v3764 = vpack.c.b16 %v2596, %v2594
  %v3765 = vpack.c.b16 %v2599, %v2597
  %v3766 = vpack.c.b16 %v2600, %v2598
  %v3767 = vpack.c.b16 %v2603, %v2601
  %v3768 = vpack.c.b16 %v2604, %v2602
  %v3769 = vpack.c.b16 %v2607, %v2605
  %v3770 = vpack.c.b16 %v2608, %v2606
  %v3771 = vpack.c.b16 %v2611, %v2609
  %v3772 = vpack.c.b16 %v2612, %v2610
  %v3773 = vpack.c.b16 %v2615, %v2613
  %v3774 = vpack.c.b16 %v2616, %v2614
  %v3775 = vpack.c.b16 %v2619, %v2617
  %v3776 = vpack.c.b16 %v2620, %v2618
  %v3777 = vpack.c.b16 %v2623, %v2621
  %v3778 = vpack.c.b16 %v2624, %v2622
  %v3779 = vpack.c.b16 %v2627, %v2625
  %v3780 = vpack.c.b16 %v2628, %v2626
  %v3781 = vpack.c.b16 %v2631, %v2629
  %v3782 = vpack.c.b16 %v2632, %v2630
  %v3783 = vpack.c.b16 %v2635, %v2633
  %v3784 = vpack.c.b16 %v2636, %v2634
  %v3785 = vpack.c.b16 %v2639, %v2637
  %v3786 = vpack.c.b16 %v2640, %v2638
  %v3787 = vpack.c.b16 %v2643, %v2641
  %v3788 = vpack.c.b16 %v2644, %v2642
  %v3789 = vpack.c.b16 %v2647, %v2645
  %v3790 = vpack.c.b16 %v2648, %v2646
  %v3791 = vpack.c.b16 %v2651, %v2649
  %v3792 = vpack.c.b16 %v2652, %v2650
  %v3793 = vpack.c.b16 %v2655, %v2653
  %v3794 = vpack.c.b16 %v2656, %v2654
  %v3795 = vpack.c.b16 %v2659, %v2657
  %v3796 = vpack.c.b16 %v2660, %v2658
  %v3797 = vpack.c.b16 %v2663, %v2661
  %v3798 = vpack.c.b16 %v2664, %v2662
  %v3799 = vpack.c.b16 %v2667, %v2665
  %v3800 = vpack.c.b16 %v2668, %v2666
  %v3801 = vpack.c.b16 %v2671, %v2669
  %v3802 = vpack.c.b16 %v2672, %v2670
  %v3803 = vpack.c.b16 %v2675, %v2673
  %v3804 = vpack.c.b16 %v2676, %v2674
  %v3805 = vpack.c.b16 %v2679, %v2677
  %v3806 = vpack.c.b16 %v2680, %v2678
  %v3807 = vpack.c.b16 %v2683, %v2681
  %v3808 = vpack.c.b16 %v2684, %v2682
  %v3809 = vpack.c.b16 %v2687, %v2685
  %v3810 = vpack.c.b16 %v2688, %v2686
  %v3811 = vpack.c.b16 %v2691, %v2689
  %v3812 = vpack.c.b16 %v2692, %v2690
  %v3813 = vpack.c.b16 %v2695, %v2693
  %v3814 = vpack.c.b16 %v2696, %v2694
  %v3815 = vpack.c.b16 %v2699, %v2697
  %v3816 = vpack.c.b16 %v2700, %v2698
  %v3817 = vpack.c.b16 %v2703, %v2701
  %v3818 = vpack.c.b16 %v2704, %v2702
  %v3819 = vpack.c.b16 %v2707, %v2705
  %v3820 = vpack.c.b16 %v2708, %v2706
  %v3821 = vpack.c.b16 %v2711, %v2709
  %v3822 = vpack.c.b16 %v2712, %v2710
  %v3823 = vpack.c.b16 %v2715, %v2713
  %v3824 = vpack.c.b16 %v2716, %v2714
  %v3825 = vpack.c.b16 %v2719, %v2717
  %v3826 = vpack.c.b16 %v2720, %v2718
  %v3827 = vpack.c.b16 %v2723, %v2721
  %v3828 = vpack.c.b16 %v2724, %v2722
  %v3829 = vpack.c.b16 %v2727, %v2725
  %v3830 = vpack.c.b16 %v2728, %v2726
  %v3831 = vpack.c.b16 %v2731, %v2729
  %v3832 = vpack.c.b16 %v2732, %v2730
  %v3833 = vpack.c.b16 %v2735, %v2733
  %v3834 = vpack.c.b16 %v2736, %v2734
  %v3835 = vpack.c.b16 %v2739, %v2737
  %v3836 = vpack.c.b16 %v2740, %v2738
  %v3837 = vpack.c.b16 %v2743, %v2741
  %v3838 = vpack.c.b16 %v2744, %v2742
  %v3839 = vpack.c.b16 %v2747, %v2745
  %v3840 = vpack.c.b16 %v2748, %v2746
  %v3841 = vpack.c.b16 %v2751, %v2749
  %v3842 = vpack.c.b16 %v2752, %v2750
  %v3843 = vpack.c.b16 %v2755, %v2753
  %v3844 = vpack.c.b16 %v2756, %v2754
  %v3845 = vpack.c.b16 %v2759, %v2757
  %v3846 = vpack.c.b16 %v2760, %v2758
  %v3847 = vpack.c.b16 %v2763, %v2761
  %v3848 = vpack.c.b16 %v2764, %v2762
  %v3849 = vpack.c.b16 %v2767, %v2765
  %v3850 = vpack.c.b16 %v2768, %v2766
  %v3851 = vpack.c.b16 %v2771, %v2769
  %v3852 = vpack.c.b16 %v2772, %v2770
  %v3853 = vpack.c.b16 %v2775, %v2773
  %v3854 = vpack.c.b16 %v2776, %v2774
  %v3855 = vpack.c.b16 %v2779, %v2777
  %v3856 = vpack.c.b16 %v2780, %v2778
  %v3857 = vpack.c.b16 %v2783, %v2781
  %v3858 = vpack.c.b16 %v2784, %v2782
  %v3859 = vpack.c.b16 %v2787, %v2785
  %v3860 = vpack.c.b16 %v2788, %v2786
  %v3861 = vpack.c.b16 %v2791, %v2789
  %v3862 = vpack.c.b16 %v2792, %v2790
  %v3863 = vpack.c.b16 %v2795, %v2793
  %v3864 = vpack.c.b16 %v2796, %v2794
  %v3865 = vpack.c.b16 %v2799, %v2797
  %v3866 = vpack.c.b16 %v2800, %v2798
  %v3867 = vpack.c.b16 %v2803, %v2801
  %v3868 = vpack.c.b16 %v2804, %v2802
  %v3869 = vpack.c.b16 %v2807, %v2805
  %v3870 = vpack.c.b16 %v2808, %v2806
  %v3871 = vpack.c.b16 %v2811, %v2809
  %v3872 = vpack.c.b16 %v2812, %v2810
  %v3873 = vpack.c.b16 %v2815, %v2813
  %v3874 = vpack.c.b16 %v2816, %v2814
  %v3875 = vpack.c.b16 %v2819, %v2817
  %v3876 = vpack.c.b16 %v2820, %v2818
  %v3877 = vpack.c.b16 %v2823, %v2821
  %v3878 = vpack.c.b16 %v2824, %v2822
  %v3879 = vpack.c.b16 %v2827, %v2825
  %v3880 = vpack.c.b16 %v2828, %v2826
  %v3881 = vpack.c.b16 %v2831, %v2829
  %v3882 = vpack.c.b16 %v2832, %v2830
  %v3883 = vpack.c.b16 %v2835, %v2833
  %v3884 = vpack.c.b16 %v2836, %v2834
  %v3885 = vpack.c.b16 %v2839, %v2837
  %v3886 = vpack.c.b16 %v2840, %v2838
  %v3887 = vpack.c.b16 %v2843, %v2841
  %v3888 = vpack.c.b16 %v2844, %v2842
  %v3889 = vpack.c.b16 %v2847, %v2845
  %v3890 = vpack.c.b16 %v2848, %v2846
  %v3891 = vpack.c.b16 %v2851, %v2849
  %v3892 = vpack.c.b16 %v2852, %v2850
  %v3893 = vpack.c.b16 %v2855, %v2853
  %v3894 = vpack.c.b16 %v2856, %v2854
  %v3895 = vpack.c.b16 %v2859, %v2857
  %v3896 = vpack.c.b16 %v2860, %v2858
  %v3897 = vpack.c.b16 %v2863, %v2861
  %v3898 = vpack.c.b16 %v2864, %v2862
  %v3899 = vpack.c.b16 %v2867, %v2865
  %v3900 = vpack.c.b16 %v2868, %v2866
  %v3901 = vpack.c.b16 %v2871, %v2869
  %v3902 = vpack.c.b16 %v2872, %v2870
  %v3903 = vpack.c.b16 %v2875, %v2873
  %v3904 = vpack.c.b16 %v2876, %v2874
  %v3905 = vpack.c.b16 %v2879, %v2877
  %v3906 = vpack.c.b16 %v2880, %v2878
  %v3907 = vpack.c.b16 %v2883, %v2881
  %v3908 = vpack.c.b16 %v2884, %v2882
  %v3909 = vpack.c.b16 %v2887, %v2885
  %v3910 = vpack.c.b16 %v2888, %v2886
  %v3911 = vpack.c.b16 %v2891, %v2889
  %v3912 = vpack.c.b16 %v2892, %v2890
  %v3913 = vpack.c.b16 %v2895, %v2893
  %v3914 = vpack.c.b16 %v2896, %v2894
  %v3915 = vpack.c.b16 %v2899, %v2897
  %v3916 = vpack.c.b16 %v2900, %v2898
  %v3917 = vpack.c.b16 %v2903, %v2901
  %v3918 = vpack.c.b16 %v2904, %v2902
  %v3919 = vpack.c.b16 %v2907, %v2905
  %v3920 = vpack.c.b16 %v2908, %v2906
  %v3921 = vpack.c.b16 %v2911, %v2909
  %v3922 = vpack.c.b16 %v2912, %v2910
  %v3923 = vpack.c.b16 %v2915, %v2913
  %v3924 = vpack.c.b16 %v2916, %v2914
  %v3925 = vpack.c.b16 %v2919, %v2917
  %v3926 = vpack.c.b16 %v2920, %v2918
  %v3927 = vpack.c.b16 %v2923, %v2921
  %v3928 = vpack.c.b16 %v2924, %v2922
  %v3929 = vpack.c.b16 %v2927, %v2925
  %v3930 = vpack.c.b16 %v2928, %v2926
  %v3931 = vpack.c.b16 %v2931, %v2929
  %v3932 = vpack.c.b16 %v2932, %v2930
  %v3933 = vpack.c.b16 %v2935, %v2933
  %v3934 = vpack.c.b16 %v2936, %v2934
  %v3935 = vpack.c.b16 %v2939, %v2937
  %v3936 = vpack.c.b16 %v2940, %v2938
  %v3937 = vpack.c.b16 %v2943, %v2941
  %v3938 = vpack.c.b16 %v2944, %v2942
  %v3939 = vpack.c.b16 %v2947, %v2945
  %v3940 = vpack.c.b16 %v2948, %v2946
  %v3941 = vpack.c.b16 %v2951, %v2949
  %v3942 = vpack.c.b16 %v2952, %v2950
  %v3943 = vpack.c.b16 %v2955, %v2953
  %v3944 = vpack.c.b16 %v2956, %v2954
  %v3945 = vpack.c.b16 %v2959, %v2957
  %v3946 = vpack.c.b16 %v2960, %v2958
  %v3947 = vpack.c.b16 %v2963, %v2961
  %v3948 = vpack.c.b16 %v2964, %v2962
  %v3949 = vpack.c.b16 %v2967, %v2965
  %v3950 = vpack.c.b16 %v2968, %v2966
  %v3951 = vpack.c.b16 %v2971, %v2969
  %v3952 = vpack.c.b16 %v2972, %v2970
  %v3953 = vpack.c.b16 %v2975, %v2973
  %v3954 = vpack.c.b16 %v2976, %v2974
  %v3955 = vpack.c.b16 %v2979, %v2977
  %v3956 = vpack.c.b16 %v2980, %v2978
  %v3957 = vpack.c.b16 %v2983, %v2981
  %v3958 = vpack.c.b16 %v2984, %v2982
  %v3959 = vpack.c.b16 %v2987, %v2985
  %v3960 = vpack.c.b16 %v2988, %v2986
  %v3961 = vpack.c.b16 %v2991, %v2989
  %v3962 = vpack.c.b16 %v2992, %v2990
  %v3963 = vpack.c.b16 %v2995, %v2993
  %v3964 = vpack.c.b16 %v2996, %v2994
  %v3965 = vpack.c.b16 %v2999, %v2997
  %v3966 = vpack.c.b16 %v3000, %v2998
  %v3967 = vpack.c.b16 %v3003, %v3001
  %v3968 = vpack.c.b16 %v3004, %v3002
  %v3969 = vpack.c.b16 %v3007, %v3005
  %v3970 = vpack.c.b16 %v3008, %v3006
  %v3971 = vpack.c.b16 %v3011, %v3009
  %v3972 = vpack.c.b16 %v3012, %v3010
  %v3973 = vpack.c.b16 %v3015, %v3013
  %v3974 = vpack.c.b16 %v3016, %v3014
  %v3975 = vpack.c.b16 %v3019, %v3017
  %v3976 = vpack.c.b16 %v3020, %v3018
  %v3977 = vpack.c.b16 %v3023, %v3021
  %v3978 = vpack.c.b16 %v3024, %v3022
  %v3979 = vpack.c.b16 %v3027, %v3025
  %v3980 = vpack.c.b16 %v3028, %v3026
  %v3981 = vpack.c.b16 %v3031, %v3029
  %v3982 = vpack.c.b16 %v3032, %v3030
  %v3983 = vpack.c.b16 %v3035, %v3033
  %v3984 = vpack.c.b16 %v3036, %v3034
  %v3985 = vpack.c.b16 %v3039, %v3037
  %v3986 = vpack.c.b16 %v3040, %v3038
  %v3987 = vpack.c.b16 %v3043, %v3041
  %v3988 = vpack.c.b16 %v3044, %v3042
  %v3989 = vpack.c.b16 %v3047, %v3045
  %v3990 = vpack.c.b16 %v3048, %v3046
  %v3991 = vpack.c.b16 %v3051, %v3049
  %v3992 = vpack.c.b16 %v3052, %v3050
  %v3993 = vpack.c.b16 %v3055, %v3053
  %v3994 = vpack.c.b16 %v3056, %v3054
  %v3995 = vpack.c.b16 %v3059, %v3057
  %v3996 = vpack.c.b16 %v3060, %v3058
  %v3997 = vpack.c.b16 %v3063, %v3061
  %v3998 = vpack.c.b16 %v3064, %v3062
  %v3999 = vpack.c.b16 %v3067, %v3065
  %v4000 = vpack.c.b16 %v3068, %v3066
  %v4001 = vpack.c.b16 %v3071, %v3069
  %v4002 = vpack.c.b16 %v3072, %v3070
  %v4003 = vpack.c.b16 %v3075, %v3073
  %v4004 = vpack.c.b16 %v3076, %v3074
  %v4005 = vpack.c.b16 %v3079, %v3077
  %v4006 = vpack.c.b16 %v3080, %v3078
  %v4007 = vpack.c.b16 %v3083, %v3081
  %v4008 = vpack.c.b16 %v3084, %v3082
  %v4009 = vpack.c.b16 %v3087, %v3085
  %v4010 = vpack.c.b16 %v3088, %v3086
  %v4011 = vpack.c.b16 %v3091, %v3089
  %v4012 = vpack.c.b16 %v3092, %v3090
  %v4013 = vpack.c.b16 %v3095, %v3093
  %v4014 = vpack.c.b16 %v3096, %v3094
  %v4015 = vpack.c.b16 %v3099, %v3097
  %v4016 = vpack.c.b16 %v3100, %v3098
  %v4017 = vpack.c.b16 %v3103, %v3101
  %v4018 = vpack.c.b16 %v3104, %v3102
  %v4019 = vpack.c.b16 %v3107, %v3105
  %v4020 = vpack.c.b16 %v3108, %v3106
  %v4021 = vpack.c.b16 %v3111, %v3109
  %v4022 = vpack.c.b16 %v3112, %v3110
  %v4023 = vpack.c.b16 %v3115, %v3113
  %v4024 = vpack.c.b16 %v3116, %v3114
  %v4025 = vpack.c.b16 %v3119, %v3117
  %v4026 = vpack.c.b16 %v3120, %v3118
  %v4027 = vpack.c.b16 %v3123, %v3121
  %v4028 = vpack.c.b16 %v3124, %v3122
  %v4029 = vpack.c.b16 %v3127, %v3125
  %v4030 = vpack.c.b16 %v3128, %v3126
  %v4031 = vpack.c.b16 %v3131, %v3129
  %v4032 = vpack.c.b16 %v3132, %v3130
  %v4033 = vpack.c.b16 %v3135, %v3133
  %v4034 = vpack.c.b16 %v3136, %v3134
  %v4035 = vpack.c.b16 %v3139, %v3137
  %v4036 = vpack.c.b16 %v3140, %v3138
  %v4037 = vpack.c.b16 %v3143, %v3141
  %v4038 = vpack.c.b16 %v3144, %v3142
  %v4039 = vpack.c.b16 %v3147, %v3145
  %v4040 = vpack.c.b16 %v3148, %v3146
  %v4041 = vpack.c.b16 %v3151, %v3149
  %v4042 = vpack.c.b16 %v3152, %v3150
  %v4043 = vpack.c.b16 %v3155, %v3153
  %v4044 = vpack.c.b16 %v3156, %v3154
  %v4045 = vpack.c.b16 %v3159, %v3157
  %v4046 = vpack.c.b16 %v3160, %v3158
  %v4047 = vpack.c.b16 %v3163, %v3161
  %v4048 = vpack.c.b16 %v3164, %v3162
  %v4049 = vpack.c.b16 %v3167, %v3165
  %v4050 = vpack.c.b16 %v3168, %v3166
  %v4051 = vpack.c.b16 %v3171, %v3169
  %v4052 = vpack.c.b16 %v3172, %v3170
  %v4053 = vpack.c.b16 %v3175, %v3173
  %v4054 = vpack.c.b16 %v3176, %v3174
  %v4055 = vpack.c.b16 %v3179, %v3177
  %v4056 = vpack.c.b16 %v3180, %v3178
  %v4057 = vpack.c.b16 %v3183, %v3181
  %v4058 = vpack.c.b16 %v3184, %v3182
  %v4059 = vpack.c.b16 %v3187, %v3185
  %v4060 = vpack.c.b16 %v3188, %v3186
  %v4061 = vpack.c.b16 %v3191, %v3189
  %v4062 = vpack.c.b16 %v3192, %v3190
  %v4063 = vpack.c.b16 %v3195, %v3193
  %v4064 = vpack.c.b16 %v3196, %v3194
  %v4065 = vpack.c.b16 %v3199, %v3197
  %v4066 = vpack.c.b16 %v3200, %v3198
  %v4067 = vpack.c.b16 %v3203, %v3201
  %v4068 = vpack.c.b16 %v3204, %v3202
  %v4069 = vpack.c.b16 %v3207, %v3205
  %v4070 = vpack.c.b16 %v3208, %v3206
  %v4071 = vpack.c.b16 %v3211, %v3209
  %v4072 = vpack.c.b16 %v3212, %v3210
  %v4073 = vpack.c.b16 %v3215, %v3213
  %v4074 = vpack.c.b16 %v3216, %v3214
  %v4075 = vpack.c.b16 %v3219, %v3217
  %v4076 = vpack.c.b16 %v3220, %v3218
  %v4077 = vpack.c.b16 %v3223, %v3221
  %v4078 = vpack.c.b16 %v3224, %v3222
  %v4079 = vpack.c.b16 %v3227, %v3225
  %v4080 = vpack.c.b16 %v3228, %v3226
  %v4081 = vpack.c.b16 %v3231, %v3229
  %v4082 = vpack.c.b16 %v3232, %v3230
  %v4083 = vpack.c.b16 %v3235, %v3233
  %v4084 = vpack.c.b16 %v3236, %v3234
  %v4085 = vpack.c.b16 %v3239, %v3237
  %v4086 = vpack.c.b16 %v3240, %v3238
  %v4087 = vpack.c.b16 %v3243, %v3241
  %v4088 = vpack.c.b16 %v3244, %v3242
  %v4089 = vpack.c.b16 %v3247, %v3245
  %v4090 = vpack.c.b16 %v3248, %v3246
  %v4091 = vpack.c.b16 %v3251, %v3249
  %v4092 = vpack.c.b16 %v3252, %v3250
  %v4093 = vpack.c.b16 %v3255, %v3253
  %v4094 = vpack.c.b16 %v3256, %v3254
  %v4095 = vpack.c.b16 %v3259, %v3257
  %v4096 = vpack.c.b16 %v3260, %v3258
  %v4097 = vpack.c.b16 %v3263, %v3261
  %v4098 = vpack.c.b16 %v3264, %v3262
  %v4099 = vpack.c.b16 %v3267, %v3265
  %v4100 = vpack.c.b16 %v3268, %v3266
  %v4101 = vpack.c.b16 %v3271, %v3269
  %v4102 = vpack.c.b16 %v3272, %v3270
  %v4103 = vpack.c.b16 %v3275, %v3273
  %v4104 = vpack.c.b16 %v3276, %v3274
  %v4105 = vpack.c.b16 %v3279, %v3277
  %v4106 = vpack.c.b16 %v3280, %v3278
  %v4107 = vpack.c.b16 %v3283, %v3281
  %v4108 = vpack.c.b16 %v3284, %v3282
  %v4109 = vpack.c.b16 %v3287, %v3285
  %v4110 = vpack.c.b16 %v3288, %v3286
  %v4111 = vpack.c.b16 %v3291, %v3289
  %v4112 = vpack.c.b16 %v3292, %v3290
  %v4113 = vpack.c.b16 %v3295, %v3293
  %v4114 = vpack.c.b16 %v3296, %v3294
  %v4115 = vpack.c.b16 %v3299, %v3297
  %v4116 = vpack.c.b16 %v3300, %v3298
  %v4117 = vpack.c.b16 %v3303, %v3301
  %v4118 = vpack.c.b16 %v3304, %v3302
  %v4119 = vpack.c.b16 %v3307, %v3305
  %v4120 = vpack.c.b16 %v3308, %v3306
  %v4121 = vpack.c.b16 %v3311, %v3309
  %v4122 = vpack.c.b16 %v3312, %v3310
  %v4123 = vpack.c.b16 %v3315, %v3313
  %v4124 = vpack.c.b16 %v3316, %v3314
  %v4125 = vpack.c.b16 %v3319, %v3317
  %v4126 = vpack.c.b16 %v3320, %v3318
  %v4127 = vpack.c.b16 %v3323, %v3321
  %v4128 = vpack.c.b16 %v3324, %v3322
  %v4129 = vpack.c.b16 %v3327, %v3325
  %v4130 = vpack.c.b16 %v3328, %v3326
  %v4131 = vpack.c.b16 %v3331, %v3329
  %v4132 = vpack.c.b16 %v3332, %v3330
  %v4133 = vpack.c.b16 %v3335, %v3333
  %v4134 = vpack.c.b16 %v3336, %v3334
  %v4135 = vpack.c.b16 %v3339, %v3337
  %v4136 = vpack.c.b16 %v3340, %v3338
  %v4137 = vpack.c.b16 %v3343, %v3341
  %v4138 = vpack.c.b16 %v3344, %v3342
  %v4139 = vpack.c.b16 %v3347, %v3345
  %v4140 = vpack.c.b16 %v3348, %v3346
  %v4141 = vpack.c.b16 %v3351, %v3349
  %v4142 = vpack.c.b16 %v3352, %v3350
  %v4143 = vpack.c.b16 %v3355, %v3353
  %v4144 = vpack.c.b16 %v3356, %v3354
  %v4145 = vpack.c.b16 %v3359, %v3357
  %v4146 = vpack.c.b16 %v3360, %v3358
  %v4147 = vpack.c.b16 %v3363, %v3361
  %v4148 = vpack.c.b16 %v3364, %v3362
  %4933 = vmatpush.bf16.msra.mxu0 %v3379
  %4934 = vmatpush.bf16.msra.mxu0 %v3377
  %4935 = vmatpush.bf16.msra.mxu0 %v3375
  %4936 = vmatpush.bf16.msra.mxu0 %v3373
  %4937 = vmatpush.bf16.msra.mxu0 %v3371
  %4938 = vmatpush.bf16.msra.mxu0 %v3369
  %4939 = vmatpush.bf16.msra.mxu0 %v3367
  %4940 = vmatpush.bf16.msra.mxu0 %v3365
  %4941 = vmatmul.bf16.gmra.mxu0 %v915
  %v4942 = vpop.f32.mrf.mxu0
  %v4943 = vadd.f32 %v837, %v4942
  %v4944 = vpop.f32.mrf.mxu0
  %4945 = vdwg.mxu0
  %4946 = vmatpush.bf16.msra.mxu0 %v3395
  %4947 = vmatpush.bf16.msra.mxu0 %v3393
  %4948 = vmatpush.bf16.msra.mxu0 %v3391
  %4949 = vmatpush.bf16.msra.mxu0 %v3389
  %4950 = vmatpush.bf16.msra.mxu0 %v3387
  %4951 = vmatpush.bf16.msra.mxu0 %v3385
  %4952 = vmatpush.bf16.msra.mxu0 %v3383
  %4953 = vmatpush.bf16.msra.mxu0 %v3381
  %4954 = vmatmul.bf16.gmra.mxu0 %v916
  %v4955 = vpop.f32.mrf.mxu0
  %v4956 = vadd.f32 %v4943, %v4955
  %v4957 = vpop.f32.mrf.mxu0
  %4958 = vdwg.mxu0
  %4959 = vmatpush.bf16.msra.mxu0 %v3411
  %4960 = vmatpush.bf16.msra.mxu0 %v3409
  %4961 = vmatpush.bf16.msra.mxu0 %v3407
  %4962 = vmatpush.bf16.msra.mxu0 %v3405
  %4963 = vmatpush.bf16.msra.mxu0 %v3403
  %4964 = vmatpush.bf16.msra.mxu0 %v3401
  %4965 = vmatpush.bf16.msra.mxu0 %v3399
  %4966 = vmatpush.bf16.msra.mxu0 %v3397
  %4967 = vmatmul.bf16.gmra.mxu0 %v917
  %v4968 = vpop.f32.mrf.mxu0
  %v4969 = vadd.f32 %v4956, %v4968
  %v4970 = vpop.f32.mrf.mxu0
  %4971 = vdwg.mxu0
  %4972 = vmatpush.bf16.msra.mxu0 %v3427
  %4973 = vmatpush.bf16.msra.mxu0 %v3425
  %4974 = vmatpush.bf16.msra.mxu0 %v3423
  %4975 = vmatpush.bf16.msra.mxu0 %v3421
  %4976 = vmatpush.bf16.msra.mxu0 %v3419
  %4977 = vmatpush.bf16.msra.mxu0 %v3417
  %4978 = vmatpush.bf16.msra.mxu0 %v3415
  %4979 = vmatpush.bf16.msra.mxu0 %v3413
  %4980 = vmatmul.bf16.gmra.mxu0 %v918
  %v4981 = vpop.f32.mrf.mxu0
  %v4982 = vadd.f32 %v4969, %v4981
  %v4983 = vpop.f32.mrf.mxu0
  %4984 = vdwg.mxu0
  %4985 = vmatpush.bf16.msra.mxu0 %v3443
  %4986 = vmatpush.bf16.msra.mxu0 %v3441
  %4987 = vmatpush.bf16.msra.mxu0 %v3439
  %4988 = vmatpush.bf16.msra.mxu0 %v3437
  %4989 = vmatpush.bf16.msra.mxu0 %v3435
  %4990 = vmatpush.bf16.msra.mxu0 %v3433
  %4991 = vmatpush.bf16.msra.mxu0 %v3431
  %4992 = vmatpush.bf16.msra.mxu0 %v3429
  %4993 = vmatmul.bf16.gmra.mxu0 %v919
  %v4994 = vpop.f32.mrf.mxu0
  %v4995 = vadd.f32 %v4982, %v4994
  %v4996 = vpop.f32.mrf.mxu0
  %4997 = vdwg.mxu0
  %4998 = vmatpush.bf16.msra.mxu0 %v3459
  %4999 = vmatpush.bf16.msra.mxu0 %v3457
  %5000 = vmatpush.bf16.msra.mxu0 %v3455
  %5001 = vmatpush.bf16.msra.mxu0 %v3453
  %5002 = vmatpush.bf16.msra.mxu0 %v3451
  %5003 = vmatpush.bf16.msra.mxu0 %v3449
  %5004 = vmatpush.bf16.msra.mxu0 %v3447
  %5005 = vmatpush.bf16.msra.mxu0 %v3445
  %5006 = vmatmul.bf16.gmra.mxu0 %v920
  %v5007 = vpop.f32.mrf.mxu0
  %v5008 = vadd.f32 %v4995, %v5007
  %v5009 = vpop.f32.mrf.mxu0
  %5010 = vdwg.mxu0
  %5011 = vmatpush.bf16.msra.mxu0 %v3475
  %5012 = vmatpush.bf16.msra.mxu0 %v3473
  %5013 = vmatpush.bf16.msra.mxu0 %v3471
  %5014 = vmatpush.bf16.msra.mxu0 %v3469
  %5015 = vmatpush.bf16.msra.mxu0 %v3467
  %5016 = vmatpush.bf16.msra.mxu0 %v3465
  %5017 = vmatpush.bf16.msra.mxu0 %v3463
  %5018 = vmatpush.bf16.msra.mxu0 %v3461
  %5019 = vmatmul.bf16.gmra.mxu0 %v921
  %v5020 = vpop.f32.mrf.mxu0
  %v5021 = vadd.f32 %v5008, %v5020
  %v5022 = vpop.f32.mrf.mxu0
  %5023 = vdwg.mxu0
  %5024 = vmatpush.bf16.msra.mxu0 %v3491
  %5025 = vmatpush.bf16.msra.mxu0 %v3489
  %5026 = vmatpush.bf16.msra.mxu0 %v3487
  %5027 = vmatpush.bf16.msra.mxu0 %v3485
  %5028 = vmatpush.bf16.msra.mxu0 %v3483
  %5029 = vmatpush.bf16.msra.mxu0 %v3481
  %5030 = vmatpush.bf16.msra.mxu0 %v3479
  %5031 = vmatpush.bf16.msra.mxu0 %v3477
  %5032 = vmatmul.bf16.gmra.mxu0 %v922
  %v5033 = vpop.f32.mrf.mxu0
  %v5034 = vadd.f32 %v5021, %v5033
  %v5035 = vpop.f32.mrf.mxu0
  %5036 = vdwg.mxu0
  %5037 = vmatpush.bf16.msra.mxu0 %v3507
  %5038 = vmatpush.bf16.msra.mxu0 %v3505
  %5039 = vmatpush.bf16.msra.mxu0 %v3503
  %5040 = vmatpush.bf16.msra.mxu0 %v3501
  %5041 = vmatpush.bf16.msra.mxu0 %v3499
  %5042 = vmatpush.bf16.msra.mxu0 %v3497
  %5043 = vmatpush.bf16.msra.mxu0 %v3495
  %5044 = vmatpush.bf16.msra.mxu0 %v3493
  %5045 = vmatmul.bf16.gmra.mxu0 %v923
  %v5046 = vpop.f32.mrf.mxu0
  %v5047 = vadd.f32 %v5034, %v5046
  %v5048 = vpop.f32.mrf.mxu0
  %5049 = vdwg.mxu0
  %5050 = vmatpush.bf16.msra.mxu0 %v3523
  %5051 = vmatpush.bf16.msra.mxu0 %v3521
  %5052 = vmatpush.bf16.msra.mxu0 %v3519
  %5053 = vmatpush.bf16.msra.mxu0 %v3517
  %5054 = vmatpush.bf16.msra.mxu0 %v3515
  %5055 = vmatpush.bf16.msra.mxu0 %v3513
  %5056 = vmatpush.bf16.msra.mxu0 %v3511
  %5057 = vmatpush.bf16.msra.mxu0 %v3509
  %5058 = vmatmul.bf16.gmra.mxu0 %v924
  %v5059 = vpop.f32.mrf.mxu0
  %v5060 = vadd.f32 %v5047, %v5059
  %v5061 = vpop.f32.mrf.mxu0
  %5062 = vdwg.mxu0
  %5063 = vmatpush.bf16.msra.mxu0 %v3539
  %5064 = vmatpush.bf16.msra.mxu0 %v3537
  %5065 = vmatpush.bf16.msra.mxu0 %v3535
  %5066 = vmatpush.bf16.msra.mxu0 %v3533
  %5067 = vmatpush.bf16.msra.mxu0 %v3531
  %5068 = vmatpush.bf16.msra.mxu0 %v3529
  %5069 = vmatpush.bf16.msra.mxu0 %v3527
  %5070 = vmatpush.bf16.msra.mxu0 %v3525
  %5071 = vmatmul.bf16.gmra.mxu0 %v925
  %v5072 = vpop.f32.mrf.mxu0
  %v5073 = vadd.f32 %v5060, %v5072
  %v5074 = vpop.f32.mrf.mxu0
  %5075 = vdwg.mxu0
  %5076 = vmatpush.bf16.msra.mxu0 %v3555
  %5077 = vmatpush.bf16.msra.mxu0 %v3553
  %5078 = vmatpush.bf16.msra.mxu0 %v3551
  %5079 = vmatpush.bf16.msra.mxu0 %v3549
  %5080 = vmatpush.bf16.msra.mxu0 %v3547
  %5081 = vmatpush.bf16.msra.mxu0 %v3545
  %5082 = vmatpush.bf16.msra.mxu0 %v3543
  %5083 = vmatpush.bf16.msra.mxu0 %v3541
  %5084 = vmatmul.bf16.gmra.mxu0 %v926
  %v5085 = vpop.f32.mrf.mxu0
  %v5086 = vadd.f32 %v5073, %v5085
  %v5087 = vpop.f32.mrf.mxu0
  %5088 = vdwg.mxu0
  %5089 = vmatpush.bf16.msra.mxu0 %v3571
  %5090 = vmatpush.bf16.msra.mxu0 %v3569
  %5091 = vmatpush.bf16.msra.mxu0 %v3567
  %5092 = vmatpush.bf16.msra.mxu0 %v3565
  %5093 = vmatpush.bf16.msra.mxu0 %v3563
  %5094 = vmatpush.bf16.msra.mxu0 %v3561
  %5095 = vmatpush.bf16.msra.mxu0 %v3559
  %5096 = vmatpush.bf16.msra.mxu0 %v3557
  %5097 = vmatmul.bf16.gmra.mxu0 %v927
  %v5098 = vpop.f32.mrf.mxu0
  %v5099 = vadd.f32 %v5086, %v5098
  %v5100 = vpop.f32.mrf.mxu0
  %5101 = vdwg.mxu0
  %5102 = vmatpush.bf16.msra.mxu0 %v3587
  %5103 = vmatpush.bf16.msra.mxu0 %v3585
  %5104 = vmatpush.bf16.msra.mxu0 %v3583
  %5105 = vmatpush.bf16.msra.mxu0 %v3581
  %5106 = vmatpush.bf16.msra.mxu0 %v3579
  %5107 = vmatpush.bf16.msra.mxu0 %v3577
  %5108 = vmatpush.bf16.msra.mxu0 %v3575
  %5109 = vmatpush.bf16.msra.mxu0 %v3573
  %5110 = vmatmul.bf16.gmra.mxu0 %v928
  %v5111 = vpop.f32.mrf.mxu0
  %v5112 = vadd.f32 %v5099, %v5111
  %v5113 = vpop.f32.mrf.mxu0
  %5114 = vdwg.mxu0
  %5115 = vmatpush.bf16.msra.mxu0 %v3603
  %5116 = vmatpush.bf16.msra.mxu0 %v3601
  %5117 = vmatpush.bf16.msra.mxu0 %v3599
  %5118 = vmatpush.bf16.msra.mxu0 %v3597
  %5119 = vmatpush.bf16.msra.mxu0 %v3595
  %5120 = vmatpush.bf16.msra.mxu0 %v3593
  %5121 = vmatpush.bf16.msra.mxu0 %v3591
  %5122 = vmatpush.bf16.msra.mxu0 %v3589
  %5123 = vmatmul.bf16.gmra.mxu0 %v929
  %v5124 = vpop.f32.mrf.mxu0
  %v5125 = vadd.f32 %v5112, %v5124
  %v5126 = vpop.f32.mrf.mxu0
  %5127 = vdwg.mxu0
  %5128 = vmatpush.bf16.msra.mxu0 %v3619
  %5129 = vmatpush.bf16.msra.mxu0 %v3617
  %5130 = vmatpush.bf16.msra.mxu0 %v3615
  %5131 = vmatpush.bf16.msra.mxu0 %v3613
  %5132 = vmatpush.bf16.msra.mxu0 %v3611
  %5133 = vmatpush.bf16.msra.mxu0 %v3609
  %5134 = vmatpush.bf16.msra.mxu0 %v3607
  %5135 = vmatpush.bf16.msra.mxu0 %v3605
  %5136 = vmatmul.bf16.gmra.mxu0 %v930
  %v5137 = vpop.f32.mrf.mxu0
  %v5138 = vadd.f32 %v5125, %v5137
  %v5139 = vpop.f32.mrf.mxu0
  %5140 = vdwg.mxu0
  %5141 = vmatpush.bf16.msra.mxu0 %v3635
  %5142 = vmatpush.bf16.msra.mxu0 %v3633
  %5143 = vmatpush.bf16.msra.mxu0 %v3631
  %5144 = vmatpush.bf16.msra.mxu0 %v3629
  %5145 = vmatpush.bf16.msra.mxu0 %v3627
  %5146 = vmatpush.bf16.msra.mxu0 %v3625
  %5147 = vmatpush.bf16.msra.mxu0 %v3623
  %5148 = vmatpush.bf16.msra.mxu0 %v3621
  %5149 = vmatmul.bf16.gmra.mxu0 %v931
  %v5150 = vpop.f32.mrf.mxu0
  %v5151 = vadd.f32 %v5138, %v5150
  %v5152 = vpop.f32.mrf.mxu0
  %5153 = vdwg.mxu0
  %5154 = vmatpush.bf16.msra.mxu0 %v3651
  %5155 = vmatpush.bf16.msra.mxu0 %v3649
  %5156 = vmatpush.bf16.msra.mxu0 %v3647
  %5157 = vmatpush.bf16.msra.mxu0 %v3645
  %5158 = vmatpush.bf16.msra.mxu0 %v3643
  %5159 = vmatpush.bf16.msra.mxu0 %v3641
  %5160 = vmatpush.bf16.msra.mxu0 %v3639
  %5161 = vmatpush.bf16.msra.mxu0 %v3637
  %5162 = vmatmul.bf16.gmra.mxu0 %v932
  %v5163 = vpop.f32.mrf.mxu0
  %v5164 = vadd.f32 %v5151, %v5163
  %v5165 = vpop.f32.mrf.mxu0
  %5166 = vdwg.mxu0
  %5167 = vmatpush.bf16.msra.mxu0 %v3667
  %5168 = vmatpush.bf16.msra.mxu0 %v3665
  %5169 = vmatpush.bf16.msra.mxu0 %v3663
  %5170 = vmatpush.bf16.msra.mxu0 %v3661
  %5171 = vmatpush.bf16.msra.mxu0 %v3659
  %5172 = vmatpush.bf16.msra.mxu0 %v3657
  %5173 = vmatpush.bf16.msra.mxu0 %v3655
  %5174 = vmatpush.bf16.msra.mxu0 %v3653
  %5175 = vmatmul.bf16.gmra.mxu0 %v933
  %v5176 = vpop.f32.mrf.mxu0
  %v5177 = vadd.f32 %v5164, %v5176
  %v5178 = vpop.f32.mrf.mxu0
  %5179 = vdwg.mxu0
  %5180 = vmatpush.bf16.msra.mxu0 %v3683
  %5181 = vmatpush.bf16.msra.mxu0 %v3681
  %5182 = vmatpush.bf16.msra.mxu0 %v3679
  %5183 = vmatpush.bf16.msra.mxu0 %v3677
  %5184 = vmatpush.bf16.msra.mxu0 %v3675
  %5185 = vmatpush.bf16.msra.mxu0 %v3673
  %5186 = vmatpush.bf16.msra.mxu0 %v3671
  %5187 = vmatpush.bf16.msra.mxu0 %v3669
  %5188 = vmatmul.bf16.gmra.mxu0 %v934
  %v5189 = vpop.f32.mrf.mxu0
  %v5190 = vadd.f32 %v5177, %v5189
  %v5191 = vpop.f32.mrf.mxu0
  %5192 = vdwg.mxu0
  %5193 = vmatpush.bf16.msra.mxu0 %v3699
  %5194 = vmatpush.bf16.msra.mxu0 %v3697
  %5195 = vmatpush.bf16.msra.mxu0 %v3695
  %5196 = vmatpush.bf16.msra.mxu0 %v3693
  %5197 = vmatpush.bf16.msra.mxu0 %v3691
  %5198 = vmatpush.bf16.msra.mxu0 %v3689
  %5199 = vmatpush.bf16.msra.mxu0 %v3687
  %5200 = vmatpush.bf16.msra.mxu0 %v3685
  %5201 = vmatmul.bf16.gmra.mxu0 %v935
  %v5202 = vpop.f32.mrf.mxu0
  %v5203 = vadd.f32 %v5190, %v5202
  %v5204 = vpop.f32.mrf.mxu0
  %5205 = vdwg.mxu0
  %5206 = vmatpush.bf16.msra.mxu0 %v3715
  %5207 = vmatpush.bf16.msra.mxu0 %v3713
  %5208 = vmatpush.bf16.msra.mxu0 %v3711
  %5209 = vmatpush.bf16.msra.mxu0 %v3709
  %5210 = vmatpush.bf16.msra.mxu0 %v3707
  %5211 = vmatpush.bf16.msra.mxu0 %v3705
  %5212 = vmatpush.bf16.msra.mxu0 %v3703
  %5213 = vmatpush.bf16.msra.mxu0 %v3701
  %5214 = vmatmul.bf16.gmra.mxu0 %v936
  %v5215 = vpop.f32.mrf.mxu0
  %v5216 = vadd.f32 %v5203, %v5215
  %v5217 = vpop.f32.mrf.mxu0
  %5218 = vdwg.mxu0
  %5219 = vmatpush.bf16.msra.mxu0 %v3731
  %5220 = vmatpush.bf16.msra.mxu0 %v3729
  %5221 = vmatpush.bf16.msra.mxu0 %v3727
  %5222 = vmatpush.bf16.msra.mxu0 %v3725
  %5223 = vmatpush.bf16.msra.mxu0 %v3723
  %5224 = vmatpush.bf16.msra.mxu0 %v3721
  %5225 = vmatpush.bf16.msra.mxu0 %v3719
  %5226 = vmatpush.bf16.msra.mxu0 %v3717
  %5227 = vmatmul.bf16.gmra.mxu0 %v937
  %v5228 = vpop.f32.mrf.mxu0
  %v5229 = vadd.f32 %v5216, %v5228
  %v5230 = vpop.f32.mrf.mxu0
  %5231 = vdwg.mxu0
  %5232 = vmatpush.bf16.msra.mxu0 %v3747
  %5233 = vmatpush.bf16.msra.mxu0 %v3745
  %5234 = vmatpush.bf16.msra.mxu0 %v3743
  %5235 = vmatpush.bf16.msra.mxu0 %v3741
  %5236 = vmatpush.bf16.msra.mxu0 %v3739
  %5237 = vmatpush.bf16.msra.mxu0 %v3737
  %5238 = vmatpush.bf16.msra.mxu0 %v3735
  %5239 = vmatpush.bf16.msra.mxu0 %v3733
  %5240 = vmatmul.bf16.gmra.mxu0 %v938
  %v5241 = vpop.f32.mrf.mxu0
  %v5242 = vadd.f32 %v5229, %v5241
  %v5243 = vpop.f32.mrf.mxu0
  %5244 = vdwg.mxu0
  %5245 = vmatpush.bf16.msra.mxu0 %v3763
  %5246 = vmatpush.bf16.msra.mxu0 %v3761
  %5247 = vmatpush.bf16.msra.mxu0 %v3759
  %5248 = vmatpush.bf16.msra.mxu0 %v3757
  %5249 = vmatpush.bf16.msra.mxu0 %v3755
  %5250 = vmatpush.bf16.msra.mxu0 %v3753
  %5251 = vmatpush.bf16.msra.mxu0 %v3751
  %5252 = vmatpush.bf16.msra.mxu0 %v3749
  %5253 = vmatmul.bf16.gmra.mxu0 %v939
  %v5254 = vpop.f32.mrf.mxu0
  %v5255 = vadd.f32 %v5242, %v5254
  %v5256 = vpop.f32.mrf.mxu0
  %5257 = vdwg.mxu0
  %5258 = vmatpush.bf16.msra.mxu0 %v3779
  %5259 = vmatpush.bf16.msra.mxu0 %v3777
  %5260 = vmatpush.bf16.msra.mxu0 %v3775
  %5261 = vmatpush.bf16.msra.mxu0 %v3773
  %5262 = vmatpush.bf16.msra.mxu0 %v3771
  %5263 = vmatpush.bf16.msra.mxu0 %v3769
  %5264 = vmatpush.bf16.msra.mxu0 %v3767
  %5265 = vmatpush.bf16.msra.mxu0 %v3765
  %5266 = vmatmul.bf16.gmra.mxu0 %v940
  %v5267 = vpop.f32.mrf.mxu0
  %v5268 = vadd.f32 %v5255, %v5267
  %v5269 = vpop.f32.mrf.mxu0
  %5270 = vdwg.mxu0
  %5271 = vmatpush.bf16.msra.mxu0 %v3795
  %5272 = vmatpush.bf16.msra.mxu0 %v3793
  %5273 = vmatpush.bf16.msra.mxu0 %v3791
  %5274 = vmatpush.bf16.msra.mxu0 %v3789
  %5275 = vmatpush.bf16.msra.mxu0 %v3787
  %5276 = vmatpush.bf16.msra.mxu0 %v3785
  %5277 = vmatpush.bf16.msra.mxu0 %v3783
  %5278 = vmatpush.bf16.msra.mxu0 %v3781
  %5279 = vmatmul.bf16.gmra.mxu0 %v941
  %v5280 = vpop.f32.mrf.mxu0
  %v5281 = vadd.f32 %v5268, %v5280
  %v5282 = vpop.f32.mrf.mxu0
  %5283 = vdwg.mxu0
  %5284 = vmatpush.bf16.msra.mxu0 %v3811
  %5285 = vmatpush.bf16.msra.mxu0 %v3809
  %5286 = vmatpush.bf16.msra.mxu0 %v3807
  %5287 = vmatpush.bf16.msra.mxu0 %v3805
  %5288 = vmatpush.bf16.msra.mxu0 %v3803
  %5289 = vmatpush.bf16.msra.mxu0 %v3801
  %5290 = vmatpush.bf16.msra.mxu0 %v3799
  %5291 = vmatpush.bf16.msra.mxu0 %v3797
  %5292 = vmatmul.bf16.gmra.mxu0 %v942
  %v5293 = vpop.f32.mrf.mxu0
  %v5294 = vadd.f32 %v5281, %v5293
  %v5295 = vpop.f32.mrf.mxu0
  %5296 = vdwg.mxu0
  %5297 = vmatpush.bf16.msra.mxu0 %v3827
  %5298 = vmatpush.bf16.msra.mxu0 %v3825
  %5299 = vmatpush.bf16.msra.mxu0 %v3823
  %5300 = vmatpush.bf16.msra.mxu0 %v3821
  %5301 = vmatpush.bf16.msra.mxu0 %v3819
  %5302 = vmatpush.bf16.msra.mxu0 %v3817
  %5303 = vmatpush.bf16.msra.mxu0 %v3815
  %5304 = vmatpush.bf16.msra.mxu0 %v3813
  %5305 = vmatmul.bf16.gmra.mxu0 %v943
  %v5306 = vpop.f32.mrf.mxu0
  %v5307 = vadd.f32 %v5294, %v5306
  %v5308 = vpop.f32.mrf.mxu0
  %5309 = vdwg.mxu0
  %5310 = vmatpush.bf16.msra.mxu0 %v3843
  %5311 = vmatpush.bf16.msra.mxu0 %v3841
  %5312 = vmatpush.bf16.msra.mxu0 %v3839
  %5313 = vmatpush.bf16.msra.mxu0 %v3837
  %5314 = vmatpush.bf16.msra.mxu0 %v3835
  %5315 = vmatpush.bf16.msra.mxu0 %v3833
  %5316 = vmatpush.bf16.msra.mxu0 %v3831
  %5317 = vmatpush.bf16.msra.mxu0 %v3829
  %5318 = vmatmul.bf16.gmra.mxu0 %v944
  %v5319 = vpop.f32.mrf.mxu0
  %v5320 = vadd.f32 %v5307, %v5319
  %v5321 = vpop.f32.mrf.mxu0
  %5322 = vdwg.mxu0
  %5323 = vmatpush.bf16.msra.mxu0 %v3859
  %5324 = vmatpush.bf16.msra.mxu0 %v3857
  %5325 = vmatpush.bf16.msra.mxu0 %v3855
  %5326 = vmatpush.bf16.msra.mxu0 %v3853
  %5327 = vmatpush.bf16.msra.mxu0 %v3851
  %5328 = vmatpush.bf16.msra.mxu0 %v3849
  %5329 = vmatpush.bf16.msra.mxu0 %v3847
  %5330 = vmatpush.bf16.msra.mxu0 %v3845
  %5331 = vmatmul.bf16.gmra.mxu0 %v945
  %v5332 = vpop.f32.mrf.mxu0
  %v5333 = vadd.f32 %v5320, %v5332
  %v5334 = vpop.f32.mrf.mxu0
  %5335 = vdwg.mxu0
  %5336 = vmatpush.bf16.msra.mxu0 %v3875
  %5337 = vmatpush.bf16.msra.mxu0 %v3873
  %5338 = vmatpush.bf16.msra.mxu0 %v3871
  %5339 = vmatpush.bf16.msra.mxu0 %v3869
  %5340 = vmatpush.bf16.msra.mxu0 %v3867
  %5341 = vmatpush.bf16.msra.mxu0 %v3865
  %5342 = vmatpush.bf16.msra.mxu0 %v3863
  %5343 = vmatpush.bf16.msra.mxu0 %v3861
  %5344 = vmatmul.bf16.gmra.mxu0 %v946
  %v5345 = vpop.f32.mrf.mxu0
  %v5346 = vadd.f32 %v5333, %v5345
  %v5347 = vpop.f32.mrf.mxu0
  %5348 = vdwg.mxu0
  %5349 = vmatpush.bf16.msra.mxu0 %v3891
  %5350 = vmatpush.bf16.msra.mxu0 %v3889
  %5351 = vmatpush.bf16.msra.mxu0 %v3887
  %5352 = vmatpush.bf16.msra.mxu0 %v3885
  %5353 = vmatpush.bf16.msra.mxu0 %v3883
  %5354 = vmatpush.bf16.msra.mxu0 %v3881
  %5355 = vmatpush.bf16.msra.mxu0 %v3879
  %5356 = vmatpush.bf16.msra.mxu0 %v3877
  %5357 = vmatmul.bf16.gmra.mxu0 %v947
  %v5358 = vpop.f32.mrf.mxu0
  %v5359 = vadd.f32 %v5346, %v5358
  %v5360 = vpop.f32.mrf.mxu0
  %5361 = vdwg.mxu0
  %5362 = vmatpush.bf16.msra.mxu0 %v3907
  %5363 = vmatpush.bf16.msra.mxu0 %v3905
  %5364 = vmatpush.bf16.msra.mxu0 %v3903
  %5365 = vmatpush.bf16.msra.mxu0 %v3901
  %5366 = vmatpush.bf16.msra.mxu0 %v3899
  %5367 = vmatpush.bf16.msra.mxu0 %v3897
  %5368 = vmatpush.bf16.msra.mxu0 %v3895
  %5369 = vmatpush.bf16.msra.mxu0 %v3893
  %5370 = vmatmul.bf16.gmra.mxu0 %v948
  %v5371 = vpop.f32.mrf.mxu0
  %v5372 = vadd.f32 %v5359, %v5371
  %v5373 = vpop.f32.mrf.mxu0
  %5374 = vdwg.mxu0
  %5375 = vmatpush.bf16.msra.mxu0 %v3923
  %5376 = vmatpush.bf16.msra.mxu0 %v3921
  %5377 = vmatpush.bf16.msra.mxu0 %v3919
  %5378 = vmatpush.bf16.msra.mxu0 %v3917
  %5379 = vmatpush.bf16.msra.mxu0 %v3915
  %5380 = vmatpush.bf16.msra.mxu0 %v3913
  %5381 = vmatpush.bf16.msra.mxu0 %v3911
  %5382 = vmatpush.bf16.msra.mxu0 %v3909
  %5383 = vmatmul.bf16.gmra.mxu0 %v949
  %v5384 = vpop.f32.mrf.mxu0
  %v5385 = vadd.f32 %v5372, %v5384
  %v5386 = vpop.f32.mrf.mxu0
  %5387 = vdwg.mxu0
  %5388 = vmatpush.bf16.msra.mxu0 %v3939
  %5389 = vmatpush.bf16.msra.mxu0 %v3937
  %5390 = vmatpush.bf16.msra.mxu0 %v3935
  %5391 = vmatpush.bf16.msra.mxu0 %v3933
  %5392 = vmatpush.bf16.msra.mxu0 %v3931
  %5393 = vmatpush.bf16.msra.mxu0 %v3929
  %5394 = vmatpush.bf16.msra.mxu0 %v3927
  %5395 = vmatpush.bf16.msra.mxu0 %v3925
  %5396 = vmatmul.bf16.gmra.mxu0 %v950
  %v5397 = vpop.f32.mrf.mxu0
  %v5398 = vadd.f32 %v5385, %v5397
  %v5399 = vpop.f32.mrf.mxu0
  %5400 = vdwg.mxu0
  %5401 = vmatpush.bf16.msra.mxu0 %v3955
  %5402 = vmatpush.bf16.msra.mxu0 %v3953
  %5403 = vmatpush.bf16.msra.mxu0 %v3951
  %5404 = vmatpush.bf16.msra.mxu0 %v3949
  %5405 = vmatpush.bf16.msra.mxu0 %v3947
  %5406 = vmatpush.bf16.msra.mxu0 %v3945
  %5407 = vmatpush.bf16.msra.mxu0 %v3943
  %5408 = vmatpush.bf16.msra.mxu0 %v3941
  %5409 = vmatmul.bf16.gmra.mxu0 %v951
  %v5410 = vpop.f32.mrf.mxu0
  %v5411 = vadd.f32 %v5398, %v5410
  %v5412 = vpop.f32.mrf.mxu0
  %5413 = vdwg.mxu0
  %5414 = vmatpush.bf16.msra.mxu0 %v3971
  %5415 = vmatpush.bf16.msra.mxu0 %v3969
  %5416 = vmatpush.bf16.msra.mxu0 %v3967
  %5417 = vmatpush.bf16.msra.mxu0 %v3965
  %5418 = vmatpush.bf16.msra.mxu0 %v3963
  %5419 = vmatpush.bf16.msra.mxu0 %v3961
  %5420 = vmatpush.bf16.msra.mxu0 %v3959
  %5421 = vmatpush.bf16.msra.mxu0 %v3957
  %5422 = vmatmul.bf16.gmra.mxu0 %v952
  %v5423 = vpop.f32.mrf.mxu0
  %v5424 = vadd.f32 %v5411, %v5423
  %v5425 = vpop.f32.mrf.mxu0
  %5426 = vdwg.mxu0
  %5427 = vmatpush.bf16.msra.mxu0 %v3987
  %5428 = vmatpush.bf16.msra.mxu0 %v3985
  %5429 = vmatpush.bf16.msra.mxu0 %v3983
  %5430 = vmatpush.bf16.msra.mxu0 %v3981
  %5431 = vmatpush.bf16.msra.mxu0 %v3979
  %5432 = vmatpush.bf16.msra.mxu0 %v3977
  %5433 = vmatpush.bf16.msra.mxu0 %v3975
  %5434 = vmatpush.bf16.msra.mxu0 %v3973
  %5435 = vmatmul.bf16.gmra.mxu0 %v953
  %v5436 = vpop.f32.mrf.mxu0
  %v5437 = vadd.f32 %v5424, %v5436
  %v5438 = vpop.f32.mrf.mxu0
  %5439 = vdwg.mxu0
  %5440 = vmatpush.bf16.msra.mxu0 %v4003
  %5441 = vmatpush.bf16.msra.mxu0 %v4001
  %5442 = vmatpush.bf16.msra.mxu0 %v3999
  %5443 = vmatpush.bf16.msra.mxu0 %v3997
  %5444 = vmatpush.bf16.msra.mxu0 %v3995
  %5445 = vmatpush.bf16.msra.mxu0 %v3993
  %5446 = vmatpush.bf16.msra.mxu0 %v3991
  %5447 = vmatpush.bf16.msra.mxu0 %v3989
  %5448 = vmatmul.bf16.gmra.mxu0 %v954
  %v5449 = vpop.f32.mrf.mxu0
  %v5450 = vadd.f32 %v5437, %v5449
  %v5451 = vpop.f32.mrf.mxu0
  %5452 = vdwg.mxu0
  %5453 = vmatpush.bf16.msra.mxu0 %v4019
  %5454 = vmatpush.bf16.msra.mxu0 %v4017
  %5455 = vmatpush.bf16.msra.mxu0 %v4015
  %5456 = vmatpush.bf16.msra.mxu0 %v4013
  %5457 = vmatpush.bf16.msra.mxu0 %v4011
  %5458 = vmatpush.bf16.msra.mxu0 %v4009
  %5459 = vmatpush.bf16.msra.mxu0 %v4007
  %5460 = vmatpush.bf16.msra.mxu0 %v4005
  %5461 = vmatmul.bf16.gmra.mxu0 %v955
  %v5462 = vpop.f32.mrf.mxu0
  %v5463 = vadd.f32 %v5450, %v5462
  %v5464 = vpop.f32.mrf.mxu0
  %5465 = vdwg.mxu0
  %5466 = vmatpush.bf16.msra.mxu0 %v4035
  %5467 = vmatpush.bf16.msra.mxu0 %v4033
  %5468 = vmatpush.bf16.msra.mxu0 %v4031
  %5469 = vmatpush.bf16.msra.mxu0 %v4029
  %5470 = vmatpush.bf16.msra.mxu0 %v4027
  %5471 = vmatpush.bf16.msra.mxu0 %v4025
  %5472 = vmatpush.bf16.msra.mxu0 %v4023
  %5473 = vmatpush.bf16.msra.mxu0 %v4021
  %5474 = vmatmul.bf16.gmra.mxu0 %v956
  %v5475 = vpop.f32.mrf.mxu0
  %v5476 = vadd.f32 %v5463, %v5475
  %v5477 = vpop.f32.mrf.mxu0
  %5478 = vdwg.mxu0
  %5479 = vmatpush.bf16.msra.mxu0 %v4051
  %5480 = vmatpush.bf16.msra.mxu0 %v4049
  %5481 = vmatpush.bf16.msra.mxu0 %v4047
  %5482 = vmatpush.bf16.msra.mxu0 %v4045
  %5483 = vmatpush.bf16.msra.mxu0 %v4043
  %5484 = vmatpush.bf16.msra.mxu0 %v4041
  %5485 = vmatpush.bf16.msra.mxu0 %v4039
  %5486 = vmatpush.bf16.msra.mxu0 %v4037
  %5487 = vmatmul.bf16.gmra.mxu0 %v957
  %v5488 = vpop.f32.mrf.mxu0
  %v5489 = vadd.f32 %v5476, %v5488
  %v5490 = vpop.f32.mrf.mxu0
  %5491 = vdwg.mxu0
  %5492 = vmatpush.bf16.msra.mxu0 %v4067
  %5493 = vmatpush.bf16.msra.mxu0 %v4065
  %5494 = vmatpush.bf16.msra.mxu0 %v4063
  %5495 = vmatpush.bf16.msra.mxu0 %v4061
  %5496 = vmatpush.bf16.msra.mxu0 %v4059
  %5497 = vmatpush.bf16.msra.mxu0 %v4057
  %5498 = vmatpush.bf16.msra.mxu0 %v4055
  %5499 = vmatpush.bf16.msra.mxu0 %v4053
  %5500 = vmatmul.bf16.gmra.mxu0 %v958
  %v5501 = vpop.f32.mrf.mxu0
  %v5502 = vadd.f32 %v5489, %v5501
  %v5503 = vpop.f32.mrf.mxu0
  %5504 = vdwg.mxu0
  %5505 = vmatpush.bf16.msra.mxu0 %v4083
  %5506 = vmatpush.bf16.msra.mxu0 %v4081
  %5507 = vmatpush.bf16.msra.mxu0 %v4079
  %5508 = vmatpush.bf16.msra.mxu0 %v4077
  %5509 = vmatpush.bf16.msra.mxu0 %v4075
  %5510 = vmatpush.bf16.msra.mxu0 %v4073
  %5511 = vmatpush.bf16.msra.mxu0 %v4071
  %5512 = vmatpush.bf16.msra.mxu0 %v4069
  %5513 = vmatmul.bf16.gmra.mxu0 %v959
  %v5514 = vpop.f32.mrf.mxu0
  %v5515 = vadd.f32 %v5502, %v5514
  %v5516 = vpop.f32.mrf.mxu0
  %5517 = vdwg.mxu0
  %5518 = vmatpush.bf16.msra.mxu0 %v4099
  %5519 = vmatpush.bf16.msra.mxu0 %v4097
  %5520 = vmatpush.bf16.msra.mxu0 %v4095
  %5521 = vmatpush.bf16.msra.mxu0 %v4093
  %5522 = vmatpush.bf16.msra.mxu0 %v4091
  %5523 = vmatpush.bf16.msra.mxu0 %v4089
  %5524 = vmatpush.bf16.msra.mxu0 %v4087
  %5525 = vmatpush.bf16.msra.mxu0 %v4085
  %5526 = vmatmul.bf16.gmra.mxu0 %v960
  %v5527 = vpop.f32.mrf.mxu0
  %v5528 = vadd.f32 %v5515, %v5527
  %v5529 = vpop.f32.mrf.mxu0
  %5530 = vdwg.mxu0
  %5531 = vmatpush.bf16.msra.mxu0 %v4115
  %5532 = vmatpush.bf16.msra.mxu0 %v4113
  %5533 = vmatpush.bf16.msra.mxu0 %v4111
  %5534 = vmatpush.bf16.msra.mxu0 %v4109
  %5535 = vmatpush.bf16.msra.mxu0 %v4107
  %5536 = vmatpush.bf16.msra.mxu0 %v4105
  %5537 = vmatpush.bf16.msra.mxu0 %v4103
  %5538 = vmatpush.bf16.msra.mxu0 %v4101
  %5539 = vmatmul.bf16.gmra.mxu0 %v961
  %v5540 = vpop.f32.mrf.mxu0
  %v5541 = vadd.f32 %v5528, %v5540
  %v5542 = vpop.f32.mrf.mxu0
  %5543 = vdwg.mxu0
  %5544 = vmatpush.bf16.msra.mxu0 %v4131
  %5545 = vmatpush.bf16.msra.mxu0 %v4129
  %5546 = vmatpush.bf16.msra.mxu0 %v4127
  %5547 = vmatpush.bf16.msra.mxu0 %v4125
  %5548 = vmatpush.bf16.msra.mxu0 %v4123
  %5549 = vmatpush.bf16.msra.mxu0 %v4121
  %5550 = vmatpush.bf16.msra.mxu0 %v4119
  %5551 = vmatpush.bf16.msra.mxu0 %v4117
  %5552 = vmatmul.bf16.gmra.mxu0 %v962
  %v5553 = vpop.f32.mrf.mxu0
  %v5554 = vadd.f32 %v5541, %v5553
  %v5555 = vpop.f32.mrf.mxu0
  %5556 = vdwg.mxu0
  %5557 = vmatpush.bf16.msra.mxu0 %v4147
  %5558 = vmatpush.bf16.msra.mxu0 %v4145
  %5559 = vmatpush.bf16.msra.mxu0 %v4143
  %5560 = vmatpush.bf16.msra.mxu0 %v4141
  %5561 = vmatpush.bf16.msra.mxu0 %v4139
  %5562 = vmatpush.bf16.msra.mxu0 %v4137
  %5563 = vmatpush.bf16.msra.mxu0 %v4135
  %5564 = vmatpush.bf16.msra.mxu0 %v4133
  %5565 = vmatmul.bf16.gmra.mxu0 %v963
  %v5566 = vpop.f32.mrf.mxu0
  %v5567 = vadd.f32 %v5554, %v5566
  %v5568 = vpop.f32.mrf.mxu0
  %5569 = vdwg.mxu0
  %5570 = vmatpush.bf16.msra.mxu0 %v3380
  %5571 = vmatpush.bf16.msra.mxu0 %v3378
  %5572 = vmatpush.bf16.msra.mxu0 %v3376
  %5573 = vmatpush.bf16.msra.mxu0 %v3374
  %5574 = vmatpush.bf16.msra.mxu0 %v3372
  %5575 = vmatpush.bf16.msra.mxu0 %v3370
  %5576 = vmatpush.bf16.msra.mxu0 %v3368
  %5577 = vmatpush.bf16.msra.mxu0 %v3366
  %5578 = vmatmul.bf16.gmra.mxu0 %v915
  %v5579 = vpop.f32.mrf.mxu0
  %v5580 = vadd.f32 %v838, %v5579
  %v5581 = vpop.f32.mrf.mxu0
  %5582 = vdwg.mxu0
  %5583 = vmatpush.bf16.msra.mxu0 %v3396
  %5584 = vmatpush.bf16.msra.mxu0 %v3394
  %5585 = vmatpush.bf16.msra.mxu0 %v3392
  %5586 = vmatpush.bf16.msra.mxu0 %v3390
  %5587 = vmatpush.bf16.msra.mxu0 %v3388
  %5588 = vmatpush.bf16.msra.mxu0 %v3386
  %5589 = vmatpush.bf16.msra.mxu0 %v3384
  %5590 = vmatpush.bf16.msra.mxu0 %v3382
  %5591 = vmatmul.bf16.gmra.mxu0 %v916
  %v5592 = vpop.f32.mrf.mxu0
  %v5593 = vadd.f32 %v5580, %v5592
  %v5594 = vpop.f32.mrf.mxu0
  %5595 = vdwg.mxu0
  %5596 = vmatpush.bf16.msra.mxu0 %v3412
  %5597 = vmatpush.bf16.msra.mxu0 %v3410
  %5598 = vmatpush.bf16.msra.mxu0 %v3408
  %5599 = vmatpush.bf16.msra.mxu0 %v3406
  %5600 = vmatpush.bf16.msra.mxu0 %v3404
  %5601 = vmatpush.bf16.msra.mxu0 %v3402
  %5602 = vmatpush.bf16.msra.mxu0 %v3400
  %5603 = vmatpush.bf16.msra.mxu0 %v3398
  %5604 = vmatmul.bf16.gmra.mxu0 %v917
  %v5605 = vpop.f32.mrf.mxu0
  %v5606 = vadd.f32 %v5593, %v5605
  %v5607 = vpop.f32.mrf.mxu0
  %5608 = vdwg.mxu0
  %5609 = vmatpush.bf16.msra.mxu0 %v3428
  %5610 = vmatpush.bf16.msra.mxu0 %v3426
  %5611 = vmatpush.bf16.msra.mxu0 %v3424
  %5612 = vmatpush.bf16.msra.mxu0 %v3422
  %5613 = vmatpush.bf16.msra.mxu0 %v3420
  %5614 = vmatpush.bf16.msra.mxu0 %v3418
  %5615 = vmatpush.bf16.msra.mxu0 %v3416
  %5616 = vmatpush.bf16.msra.mxu0 %v3414
  %5617 = vmatmul.bf16.gmra.mxu0 %v918
  %v5618 = vpop.f32.mrf.mxu0
  %v5619 = vadd.f32 %v5606, %v5618
  %v5620 = vpop.f32.mrf.mxu0
  %5621 = vdwg.mxu0
  %5622 = vmatpush.bf16.msra.mxu0 %v3444
  %5623 = vmatpush.bf16.msra.mxu0 %v3442
  %5624 = vmatpush.bf16.msra.mxu0 %v3440
  %5625 = vmatpush.bf16.msra.mxu0 %v3438
  %5626 = vmatpush.bf16.msra.mxu0 %v3436
  %5627 = vmatpush.bf16.msra.mxu0 %v3434
  %5628 = vmatpush.bf16.msra.mxu0 %v3432
  %5629 = vmatpush.bf16.msra.mxu0 %v3430
  %5630 = vmatmul.bf16.gmra.mxu0 %v919
  %v5631 = vpop.f32.mrf.mxu0
  %v5632 = vadd.f32 %v5619, %v5631
  %v5633 = vpop.f32.mrf.mxu0
  %5634 = vdwg.mxu0
  %5635 = vmatpush.bf16.msra.mxu0 %v3460
  %5636 = vmatpush.bf16.msra.mxu0 %v3458
  %5637 = vmatpush.bf16.msra.mxu0 %v3456
  %5638 = vmatpush.bf16.msra.mxu0 %v3454
  %5639 = vmatpush.bf16.msra.mxu0 %v3452
  %5640 = vmatpush.bf16.msra.mxu0 %v3450
  %5641 = vmatpush.bf16.msra.mxu0 %v3448
  %5642 = vmatpush.bf16.msra.mxu0 %v3446
  %5643 = vmatmul.bf16.gmra.mxu0 %v920
  %v5644 = vpop.f32.mrf.mxu0
  %v5645 = vadd.f32 %v5632, %v5644
  %v5646 = vpop.f32.mrf.mxu0
  %5647 = vdwg.mxu0
  %5648 = vmatpush.bf16.msra.mxu0 %v3476
  %5649 = vmatpush.bf16.msra.mxu0 %v3474
  %5650 = vmatpush.bf16.msra.mxu0 %v3472
  %5651 = vmatpush.bf16.msra.mxu0 %v3470
  %5652 = vmatpush.bf16.msra.mxu0 %v3468
  %5653 = vmatpush.bf16.msra.mxu0 %v3466
  %5654 = vmatpush.bf16.msra.mxu0 %v3464
  %5655 = vmatpush.bf16.msra.mxu0 %v3462
  %5656 = vmatmul.bf16.gmra.mxu0 %v921
  %v5657 = vpop.f32.mrf.mxu0
  %v5658 = vadd.f32 %v5645, %v5657
  %v5659 = vpop.f32.mrf.mxu0
  %5660 = vdwg.mxu0
  %5661 = vmatpush.bf16.msra.mxu0 %v3492
  %5662 = vmatpush.bf16.msra.mxu0 %v3490
  %5663 = vmatpush.bf16.msra.mxu0 %v3488
  %5664 = vmatpush.bf16.msra.mxu0 %v3486
  %5665 = vmatpush.bf16.msra.mxu0 %v3484
  %5666 = vmatpush.bf16.msra.mxu0 %v3482
  %5667 = vmatpush.bf16.msra.mxu0 %v3480
  %5668 = vmatpush.bf16.msra.mxu0 %v3478
  %5669 = vmatmul.bf16.gmra.mxu0 %v922
  %v5670 = vpop.f32.mrf.mxu0
  %v5671 = vadd.f32 %v5658, %v5670
  %v5672 = vpop.f32.mrf.mxu0
  %5673 = vdwg.mxu0
  %5674 = vmatpush.bf16.msra.mxu0 %v3508
  %5675 = vmatpush.bf16.msra.mxu0 %v3506
  %5676 = vmatpush.bf16.msra.mxu0 %v3504
  %5677 = vmatpush.bf16.msra.mxu0 %v3502
  %5678 = vmatpush.bf16.msra.mxu0 %v3500
  %5679 = vmatpush.bf16.msra.mxu0 %v3498
  %5680 = vmatpush.bf16.msra.mxu0 %v3496
  %5681 = vmatpush.bf16.msra.mxu0 %v3494
  %5682 = vmatmul.bf16.gmra.mxu0 %v923
  %v5683 = vpop.f32.mrf.mxu0
  %v5684 = vadd.f32 %v5671, %v5683
  %v5685 = vpop.f32.mrf.mxu0
  %5686 = vdwg.mxu0
  %5687 = vmatpush.bf16.msra.mxu0 %v3524
  %5688 = vmatpush.bf16.msra.mxu0 %v3522
  %5689 = vmatpush.bf16.msra.mxu0 %v3520
  %5690 = vmatpush.bf16.msra.mxu0 %v3518
  %5691 = vmatpush.bf16.msra.mxu0 %v3516
  %5692 = vmatpush.bf16.msra.mxu0 %v3514
  %5693 = vmatpush.bf16.msra.mxu0 %v3512
  %5694 = vmatpush.bf16.msra.mxu0 %v3510
  %5695 = vmatmul.bf16.gmra.mxu0 %v924
  %v5696 = vpop.f32.mrf.mxu0
  %v5697 = vadd.f32 %v5684, %v5696
  %v5698 = vpop.f32.mrf.mxu0
  %5699 = vdwg.mxu0
  %5700 = vmatpush.bf16.msra.mxu0 %v3540
  %5701 = vmatpush.bf16.msra.mxu0 %v3538
  %5702 = vmatpush.bf16.msra.mxu0 %v3536
  %5703 = vmatpush.bf16.msra.mxu0 %v3534
  %5704 = vmatpush.bf16.msra.mxu0 %v3532
  %5705 = vmatpush.bf16.msra.mxu0 %v3530
  %5706 = vmatpush.bf16.msra.mxu0 %v3528
  %5707 = vmatpush.bf16.msra.mxu0 %v3526
  %5708 = vmatmul.bf16.gmra.mxu0 %v925
  %v5709 = vpop.f32.mrf.mxu0
  %v5710 = vadd.f32 %v5697, %v5709
  %v5711 = vpop.f32.mrf.mxu0
  %5712 = vdwg.mxu0
  %5713 = vmatpush.bf16.msra.mxu0 %v3556
  %5714 = vmatpush.bf16.msra.mxu0 %v3554
  %5715 = vmatpush.bf16.msra.mxu0 %v3552
  %5716 = vmatpush.bf16.msra.mxu0 %v3550
  %5717 = vmatpush.bf16.msra.mxu0 %v3548
  %5718 = vmatpush.bf16.msra.mxu0 %v3546
  %5719 = vmatpush.bf16.msra.mxu0 %v3544
  %5720 = vmatpush.bf16.msra.mxu0 %v3542
  %5721 = vmatmul.bf16.gmra.mxu0 %v926
  %v5722 = vpop.f32.mrf.mxu0
  %v5723 = vadd.f32 %v5710, %v5722
  %v5724 = vpop.f32.mrf.mxu0
  %5725 = vdwg.mxu0
  %5726 = vmatpush.bf16.msra.mxu0 %v3572
  %5727 = vmatpush.bf16.msra.mxu0 %v3570
  %5728 = vmatpush.bf16.msra.mxu0 %v3568
  %5729 = vmatpush.bf16.msra.mxu0 %v3566
  %5730 = vmatpush.bf16.msra.mxu0 %v3564
  %5731 = vmatpush.bf16.msra.mxu0 %v3562
  %5732 = vmatpush.bf16.msra.mxu0 %v3560
  %5733 = vmatpush.bf16.msra.mxu0 %v3558
  %5734 = vmatmul.bf16.gmra.mxu0 %v927
  %v5735 = vpop.f32.mrf.mxu0
  %v5736 = vadd.f32 %v5723, %v5735
  %v5737 = vpop.f32.mrf.mxu0
  %5738 = vdwg.mxu0
  %5739 = vmatpush.bf16.msra.mxu0 %v3588
  %5740 = vmatpush.bf16.msra.mxu0 %v3586
  %5741 = vmatpush.bf16.msra.mxu0 %v3584
  %5742 = vmatpush.bf16.msra.mxu0 %v3582
  %5743 = vmatpush.bf16.msra.mxu0 %v3580
  %5744 = vmatpush.bf16.msra.mxu0 %v3578
  %5745 = vmatpush.bf16.msra.mxu0 %v3576
  %5746 = vmatpush.bf16.msra.mxu0 %v3574
  %5747 = vmatmul.bf16.gmra.mxu0 %v928
  %v5748 = vpop.f32.mrf.mxu0
  %v5749 = vadd.f32 %v5736, %v5748
  %v5750 = vpop.f32.mrf.mxu0
  %5751 = vdwg.mxu0
  %5752 = vmatpush.bf16.msra.mxu0 %v3604
  %5753 = vmatpush.bf16.msra.mxu0 %v3602
  %5754 = vmatpush.bf16.msra.mxu0 %v3600
  %5755 = vmatpush.bf16.msra.mxu0 %v3598
  %5756 = vmatpush.bf16.msra.mxu0 %v3596
  %5757 = vmatpush.bf16.msra.mxu0 %v3594
  %5758 = vmatpush.bf16.msra.mxu0 %v3592
  %5759 = vmatpush.bf16.msra.mxu0 %v3590
  %5760 = vmatmul.bf16.gmra.mxu0 %v929
  %v5761 = vpop.f32.mrf.mxu0
  %v5762 = vadd.f32 %v5749, %v5761
  %v5763 = vpop.f32.mrf.mxu0
  %5764 = vdwg.mxu0
  %5765 = vmatpush.bf16.msra.mxu0 %v3620
  %5766 = vmatpush.bf16.msra.mxu0 %v3618
  %5767 = vmatpush.bf16.msra.mxu0 %v3616
  %5768 = vmatpush.bf16.msra.mxu0 %v3614
  %5769 = vmatpush.bf16.msra.mxu0 %v3612
  %5770 = vmatpush.bf16.msra.mxu0 %v3610
  %5771 = vmatpush.bf16.msra.mxu0 %v3608
  %5772 = vmatpush.bf16.msra.mxu0 %v3606
  %5773 = vmatmul.bf16.gmra.mxu0 %v930
  %v5774 = vpop.f32.mrf.mxu0
  %v5775 = vadd.f32 %v5762, %v5774
  %v5776 = vpop.f32.mrf.mxu0
  %5777 = vdwg.mxu0
  %5778 = vmatpush.bf16.msra.mxu0 %v3636
  %5779 = vmatpush.bf16.msra.mxu0 %v3634
  %5780 = vmatpush.bf16.msra.mxu0 %v3632
  %5781 = vmatpush.bf16.msra.mxu0 %v3630
  %5782 = vmatpush.bf16.msra.mxu0 %v3628
  %5783 = vmatpush.bf16.msra.mxu0 %v3626
  %5784 = vmatpush.bf16.msra.mxu0 %v3624
  %5785 = vmatpush.bf16.msra.mxu0 %v3622
  %5786 = vmatmul.bf16.gmra.mxu0 %v931
  %v5787 = vpop.f32.mrf.mxu0
  %v5788 = vadd.f32 %v5775, %v5787
  %v5789 = vpop.f32.mrf.mxu0
  %5790 = vdwg.mxu0
  %5791 = vmatpush.bf16.msra.mxu0 %v3652
  %5792 = vmatpush.bf16.msra.mxu0 %v3650
  %5793 = vmatpush.bf16.msra.mxu0 %v3648
  %5794 = vmatpush.bf16.msra.mxu0 %v3646
  %5795 = vmatpush.bf16.msra.mxu0 %v3644
  %5796 = vmatpush.bf16.msra.mxu0 %v3642
  %5797 = vmatpush.bf16.msra.mxu0 %v3640
  %5798 = vmatpush.bf16.msra.mxu0 %v3638
  %5799 = vmatmul.bf16.gmra.mxu0 %v932
  %v5800 = vpop.f32.mrf.mxu0
  %v5801 = vadd.f32 %v5788, %v5800
  %v5802 = vpop.f32.mrf.mxu0
  %5803 = vdwg.mxu0
  %5804 = vmatpush.bf16.msra.mxu0 %v3668
  %5805 = vmatpush.bf16.msra.mxu0 %v3666
  %5806 = vmatpush.bf16.msra.mxu0 %v3664
  %5807 = vmatpush.bf16.msra.mxu0 %v3662
  %5808 = vmatpush.bf16.msra.mxu0 %v3660
  %5809 = vmatpush.bf16.msra.mxu0 %v3658
  %5810 = vmatpush.bf16.msra.mxu0 %v3656
  %5811 = vmatpush.bf16.msra.mxu0 %v3654
  %5812 = vmatmul.bf16.gmra.mxu0 %v933
  %v5813 = vpop.f32.mrf.mxu0
  %v5814 = vadd.f32 %v5801, %v5813
  %v5815 = vpop.f32.mrf.mxu0
  %5816 = vdwg.mxu0
  %5817 = vmatpush.bf16.msra.mxu0 %v3684
  %5818 = vmatpush.bf16.msra.mxu0 %v3682
  %5819 = vmatpush.bf16.msra.mxu0 %v3680
  %5820 = vmatpush.bf16.msra.mxu0 %v3678
  %5821 = vmatpush.bf16.msra.mxu0 %v3676
  %5822 = vmatpush.bf16.msra.mxu0 %v3674
  %5823 = vmatpush.bf16.msra.mxu0 %v3672
  %5824 = vmatpush.bf16.msra.mxu0 %v3670
  %5825 = vmatmul.bf16.gmra.mxu0 %v934
  %v5826 = vpop.f32.mrf.mxu0
  %v5827 = vadd.f32 %v5814, %v5826
  %v5828 = vpop.f32.mrf.mxu0
  %5829 = vdwg.mxu0
  %5830 = vmatpush.bf16.msra.mxu0 %v3700
  %5831 = vmatpush.bf16.msra.mxu0 %v3698
  %5832 = vmatpush.bf16.msra.mxu0 %v3696
  %5833 = vmatpush.bf16.msra.mxu0 %v3694
  %5834 = vmatpush.bf16.msra.mxu0 %v3692
  %5835 = vmatpush.bf16.msra.mxu0 %v3690
  %5836 = vmatpush.bf16.msra.mxu0 %v3688
  %5837 = vmatpush.bf16.msra.mxu0 %v3686
  %5838 = vmatmul.bf16.gmra.mxu0 %v935
  %v5839 = vpop.f32.mrf.mxu0
  %v5840 = vadd.f32 %v5827, %v5839
  %v5841 = vpop.f32.mrf.mxu0
  %5842 = vdwg.mxu0
  %5843 = vmatpush.bf16.msra.mxu0 %v3716
  %5844 = vmatpush.bf16.msra.mxu0 %v3714
  %5845 = vmatpush.bf16.msra.mxu0 %v3712
  %5846 = vmatpush.bf16.msra.mxu0 %v3710
  %5847 = vmatpush.bf16.msra.mxu0 %v3708
  %5848 = vmatpush.bf16.msra.mxu0 %v3706
  %5849 = vmatpush.bf16.msra.mxu0 %v3704
  %5850 = vmatpush.bf16.msra.mxu0 %v3702
  %5851 = vmatmul.bf16.gmra.mxu0 %v936
  %v5852 = vpop.f32.mrf.mxu0
  %v5853 = vadd.f32 %v5840, %v5852
  %v5854 = vpop.f32.mrf.mxu0
  %5855 = vdwg.mxu0
  %5856 = vmatpush.bf16.msra.mxu0 %v3732
  %5857 = vmatpush.bf16.msra.mxu0 %v3730
  %5858 = vmatpush.bf16.msra.mxu0 %v3728
  %5859 = vmatpush.bf16.msra.mxu0 %v3726
  %5860 = vmatpush.bf16.msra.mxu0 %v3724
  %5861 = vmatpush.bf16.msra.mxu0 %v3722
  %5862 = vmatpush.bf16.msra.mxu0 %v3720
  %5863 = vmatpush.bf16.msra.mxu0 %v3718
  %5864 = vmatmul.bf16.gmra.mxu0 %v937
  %v5865 = vpop.f32.mrf.mxu0
  %v5866 = vadd.f32 %v5853, %v5865
  %v5867 = vpop.f32.mrf.mxu0
  %5868 = vdwg.mxu0
  %5869 = vmatpush.bf16.msra.mxu0 %v3748
  %5870 = vmatpush.bf16.msra.mxu0 %v3746
  %5871 = vmatpush.bf16.msra.mxu0 %v3744
  %5872 = vmatpush.bf16.msra.mxu0 %v3742
  %5873 = vmatpush.bf16.msra.mxu0 %v3740
  %5874 = vmatpush.bf16.msra.mxu0 %v3738
  %5875 = vmatpush.bf16.msra.mxu0 %v3736
  %5876 = vmatpush.bf16.msra.mxu0 %v3734
  %5877 = vmatmul.bf16.gmra.mxu0 %v938
  %v5878 = vpop.f32.mrf.mxu0
  %v5879 = vadd.f32 %v5866, %v5878
  %v5880 = vpop.f32.mrf.mxu0
  %5881 = vdwg.mxu0
  %5882 = vmatpush.bf16.msra.mxu0 %v3764
  %5883 = vmatpush.bf16.msra.mxu0 %v3762
  %5884 = vmatpush.bf16.msra.mxu0 %v3760
  %5885 = vmatpush.bf16.msra.mxu0 %v3758
  %5886 = vmatpush.bf16.msra.mxu0 %v3756
  %5887 = vmatpush.bf16.msra.mxu0 %v3754
  %5888 = vmatpush.bf16.msra.mxu0 %v3752
  %5889 = vmatpush.bf16.msra.mxu0 %v3750
  %5890 = vmatmul.bf16.gmra.mxu0 %v939
  %v5891 = vpop.f32.mrf.mxu0
  %v5892 = vadd.f32 %v5879, %v5891
  %v5893 = vpop.f32.mrf.mxu0
  %5894 = vdwg.mxu0
  %5895 = vmatpush.bf16.msra.mxu0 %v3780
  %5896 = vmatpush.bf16.msra.mxu0 %v3778
  %5897 = vmatpush.bf16.msra.mxu0 %v3776
  %5898 = vmatpush.bf16.msra.mxu0 %v3774
  %5899 = vmatpush.bf16.msra.mxu0 %v3772
  %5900 = vmatpush.bf16.msra.mxu0 %v3770
  %5901 = vmatpush.bf16.msra.mxu0 %v3768
  %5902 = vmatpush.bf16.msra.mxu0 %v3766
  %5903 = vmatmul.bf16.gmra.mxu0 %v940
  %v5904 = vpop.f32.mrf.mxu0
  %v5905 = vadd.f32 %v5892, %v5904
  %v5906 = vpop.f32.mrf.mxu0
  %5907 = vdwg.mxu0
  %5908 = vmatpush.bf16.msra.mxu0 %v3796
  %5909 = vmatpush.bf16.msra.mxu0 %v3794
  %5910 = vmatpush.bf16.msra.mxu0 %v3792
  %5911 = vmatpush.bf16.msra.mxu0 %v3790
  %5912 = vmatpush.bf16.msra.mxu0 %v3788
  %5913 = vmatpush.bf16.msra.mxu0 %v3786
  %5914 = vmatpush.bf16.msra.mxu0 %v3784
  %5915 = vmatpush.bf16.msra.mxu0 %v3782
  %5916 = vmatmul.bf16.gmra.mxu0 %v941
  %v5917 = vpop.f32.mrf.mxu0
  %v5918 = vadd.f32 %v5905, %v5917
  %v5919 = vpop.f32.mrf.mxu0
  %5920 = vdwg.mxu0
  %5921 = vmatpush.bf16.msra.mxu0 %v3812
  %5922 = vmatpush.bf16.msra.mxu0 %v3810
  %5923 = vmatpush.bf16.msra.mxu0 %v3808
  %5924 = vmatpush.bf16.msra.mxu0 %v3806
  %5925 = vmatpush.bf16.msra.mxu0 %v3804
  %5926 = vmatpush.bf16.msra.mxu0 %v3802
  %5927 = vmatpush.bf16.msra.mxu0 %v3800
  %5928 = vmatpush.bf16.msra.mxu0 %v3798
  %5929 = vmatmul.bf16.gmra.mxu0 %v942
  %v5930 = vpop.f32.mrf.mxu0
  %v5931 = vadd.f32 %v5918, %v5930
  %v5932 = vpop.f32.mrf.mxu0
  %5933 = vdwg.mxu0
  %5934 = vmatpush.bf16.msra.mxu0 %v3828
  %5935 = vmatpush.bf16.msra.mxu0 %v3826
  %5936 = vmatpush.bf16.msra.mxu0 %v3824
  %5937 = vmatpush.bf16.msra.mxu0 %v3822
  %5938 = vmatpush.bf16.msra.mxu0 %v3820
  %5939 = vmatpush.bf16.msra.mxu0 %v3818
  %5940 = vmatpush.bf16.msra.mxu0 %v3816
  %5941 = vmatpush.bf16.msra.mxu0 %v3814
  %5942 = vmatmul.bf16.gmra.mxu0 %v943
  %v5943 = vpop.f32.mrf.mxu0
  %v5944 = vadd.f32 %v5931, %v5943
  %v5945 = vpop.f32.mrf.mxu0
  %5946 = vdwg.mxu0
  %5947 = vmatpush.bf16.msra.mxu0 %v3844
  %5948 = vmatpush.bf16.msra.mxu0 %v3842
  %5949 = vmatpush.bf16.msra.mxu0 %v3840
  %5950 = vmatpush.bf16.msra.mxu0 %v3838
  %5951 = vmatpush.bf16.msra.mxu0 %v3836
  %5952 = vmatpush.bf16.msra.mxu0 %v3834
  %5953 = vmatpush.bf16.msra.mxu0 %v3832
  %5954 = vmatpush.bf16.msra.mxu0 %v3830
  %5955 = vmatmul.bf16.gmra.mxu0 %v944
  %v5956 = vpop.f32.mrf.mxu0
  %v5957 = vadd.f32 %v5944, %v5956
  %v5958 = vpop.f32.mrf.mxu0
  %5959 = vdwg.mxu0
  %5960 = vmatpush.bf16.msra.mxu0 %v3860
  %5961 = vmatpush.bf16.msra.mxu0 %v3858
  %5962 = vmatpush.bf16.msra.mxu0 %v3856
  %5963 = vmatpush.bf16.msra.mxu0 %v3854
  %5964 = vmatpush.bf16.msra.mxu0 %v3852
  %5965 = vmatpush.bf16.msra.mxu0 %v3850
  %5966 = vmatpush.bf16.msra.mxu0 %v3848
  %5967 = vmatpush.bf16.msra.mxu0 %v3846
  %5968 = vmatmul.bf16.gmra.mxu0 %v945
  %v5969 = vpop.f32.mrf.mxu0
  %v5970 = vadd.f32 %v5957, %v5969
  %v5971 = vpop.f32.mrf.mxu0
  %5972 = vdwg.mxu0
  %5973 = vmatpush.bf16.msra.mxu0 %v3876
  %5974 = vmatpush.bf16.msra.mxu0 %v3874
  %5975 = vmatpush.bf16.msra.mxu0 %v3872
  %5976 = vmatpush.bf16.msra.mxu0 %v3870
  %5977 = vmatpush.bf16.msra.mxu0 %v3868
  %5978 = vmatpush.bf16.msra.mxu0 %v3866
  %5979 = vmatpush.bf16.msra.mxu0 %v3864
  %5980 = vmatpush.bf16.msra.mxu0 %v3862
  %5981 = vmatmul.bf16.gmra.mxu0 %v946
  %v5982 = vpop.f32.mrf.mxu0
  %v5983 = vadd.f32 %v5970, %v5982
  %v5984 = vpop.f32.mrf.mxu0
  %5985 = vdwg.mxu0
  %5986 = vmatpush.bf16.msra.mxu0 %v3892
  %5987 = vmatpush.bf16.msra.mxu0 %v3890
  %5988 = vmatpush.bf16.msra.mxu0 %v3888
  %5989 = vmatpush.bf16.msra.mxu0 %v3886
  %5990 = vmatpush.bf16.msra.mxu0 %v3884
  %5991 = vmatpush.bf16.msra.mxu0 %v3882
  %5992 = vmatpush.bf16.msra.mxu0 %v3880
  %5993 = vmatpush.bf16.msra.mxu0 %v3878
  %5994 = vmatmul.bf16.gmra.mxu0 %v947
  %v5995 = vpop.f32.mrf.mxu0
  %v5996 = vadd.f32 %v5983, %v5995
  %v5997 = vpop.f32.mrf.mxu0
  %5998 = vdwg.mxu0
  %5999 = vmatpush.bf16.msra.mxu0 %v3908
  %6000 = vmatpush.bf16.msra.mxu0 %v3906
  %6001 = vmatpush.bf16.msra.mxu0 %v3904
  %6002 = vmatpush.bf16.msra.mxu0 %v3902
  %6003 = vmatpush.bf16.msra.mxu0 %v3900
  %6004 = vmatpush.bf16.msra.mxu0 %v3898
  %6005 = vmatpush.bf16.msra.mxu0 %v3896
  %6006 = vmatpush.bf16.msra.mxu0 %v3894
  %6007 = vmatmul.bf16.gmra.mxu0 %v948
  %v6008 = vpop.f32.mrf.mxu0
  %v6009 = vadd.f32 %v5996, %v6008
  %v6010 = vpop.f32.mrf.mxu0
  %6011 = vdwg.mxu0
  %6012 = vmatpush.bf16.msra.mxu0 %v3924
  %6013 = vmatpush.bf16.msra.mxu0 %v3922
  %6014 = vmatpush.bf16.msra.mxu0 %v3920
  %6015 = vmatpush.bf16.msra.mxu0 %v3918
  %6016 = vmatpush.bf16.msra.mxu0 %v3916
  %6017 = vmatpush.bf16.msra.mxu0 %v3914
  %6018 = vmatpush.bf16.msra.mxu0 %v3912
  %6019 = vmatpush.bf16.msra.mxu0 %v3910
  %6020 = vmatmul.bf16.gmra.mxu0 %v949
  %v6021 = vpop.f32.mrf.mxu0
  %v6022 = vadd.f32 %v6009, %v6021
  %v6023 = vpop.f32.mrf.mxu0
  %6024 = vdwg.mxu0
  %6025 = vmatpush.bf16.msra.mxu0 %v3940
  %6026 = vmatpush.bf16.msra.mxu0 %v3938
  %6027 = vmatpush.bf16.msra.mxu0 %v3936
  %6028 = vmatpush.bf16.msra.mxu0 %v3934
  %6029 = vmatpush.bf16.msra.mxu0 %v3932
  %6030 = vmatpush.bf16.msra.mxu0 %v3930
  %6031 = vmatpush.bf16.msra.mxu0 %v3928
  %6032 = vmatpush.bf16.msra.mxu0 %v3926
  %6033 = vmatmul.bf16.gmra.mxu0 %v950
  %v6034 = vpop.f32.mrf.mxu0
  %v6035 = vadd.f32 %v6022, %v6034
  %v6036 = vpop.f32.mrf.mxu0
  %6037 = vdwg.mxu0
  %6038 = vmatpush.bf16.msra.mxu0 %v3956
  %6039 = vmatpush.bf16.msra.mxu0 %v3954
  %6040 = vmatpush.bf16.msra.mxu0 %v3952
  %6041 = vmatpush.bf16.msra.mxu0 %v3950
  %6042 = vmatpush.bf16.msra.mxu0 %v3948
  %6043 = vmatpush.bf16.msra.mxu0 %v3946
  %6044 = vmatpush.bf16.msra.mxu0 %v3944
  %6045 = vmatpush.bf16.msra.mxu0 %v3942
  %6046 = vmatmul.bf16.gmra.mxu0 %v951
  %v6047 = vpop.f32.mrf.mxu0
  %v6048 = vadd.f32 %v6035, %v6047
  %v6049 = vpop.f32.mrf.mxu0
  %6050 = vdwg.mxu0
  %6051 = vmatpush.bf16.msra.mxu0 %v3972
  %6052 = vmatpush.bf16.msra.mxu0 %v3970
  %6053 = vmatpush.bf16.msra.mxu0 %v3968
  %6054 = vmatpush.bf16.msra.mxu0 %v3966
  %6055 = vmatpush.bf16.msra.mxu0 %v3964
  %6056 = vmatpush.bf16.msra.mxu0 %v3962
  %6057 = vmatpush.bf16.msra.mxu0 %v3960
  %6058 = vmatpush.bf16.msra.mxu0 %v3958
  %6059 = vmatmul.bf16.gmra.mxu0 %v952
  %v6060 = vpop.f32.mrf.mxu0
  %v6061 = vadd.f32 %v6048, %v6060
  %v6062 = vpop.f32.mrf.mxu0
  %6063 = vdwg.mxu0
  %6064 = vmatpush.bf16.msra.mxu0 %v3988
  %6065 = vmatpush.bf16.msra.mxu0 %v3986
  %6066 = vmatpush.bf16.msra.mxu0 %v3984
  %6067 = vmatpush.bf16.msra.mxu0 %v3982
  %6068 = vmatpush.bf16.msra.mxu0 %v3980
  %6069 = vmatpush.bf16.msra.mxu0 %v3978
  %6070 = vmatpush.bf16.msra.mxu0 %v3976
  %6071 = vmatpush.bf16.msra.mxu0 %v3974
  %6072 = vmatmul.bf16.gmra.mxu0 %v953
  %v6073 = vpop.f32.mrf.mxu0
  %v6074 = vadd.f32 %v6061, %v6073
  %v6075 = vpop.f32.mrf.mxu0
  %6076 = vdwg.mxu0
  %6077 = vmatpush.bf16.msra.mxu0 %v4004
  %6078 = vmatpush.bf16.msra.mxu0 %v4002
  %6079 = vmatpush.bf16.msra.mxu0 %v4000
  %6080 = vmatpush.bf16.msra.mxu0 %v3998
  %6081 = vmatpush.bf16.msra.mxu0 %v3996
  %6082 = vmatpush.bf16.msra.mxu0 %v3994
  %6083 = vmatpush.bf16.msra.mxu0 %v3992
  %6084 = vmatpush.bf16.msra.mxu0 %v3990
  %6085 = vmatmul.bf16.gmra.mxu0 %v954
  %v6086 = vpop.f32.mrf.mxu0
  %v6087 = vadd.f32 %v6074, %v6086
  %v6088 = vpop.f32.mrf.mxu0
  %6089 = vdwg.mxu0
  %6090 = vmatpush.bf16.msra.mxu0 %v4020
  %6091 = vmatpush.bf16.msra.mxu0 %v4018
  %6092 = vmatpush.bf16.msra.mxu0 %v4016
  %6093 = vmatpush.bf16.msra.mxu0 %v4014
  %6094 = vmatpush.bf16.msra.mxu0 %v4012
  %6095 = vmatpush.bf16.msra.mxu0 %v4010
  %6096 = vmatpush.bf16.msra.mxu0 %v4008
  %6097 = vmatpush.bf16.msra.mxu0 %v4006
  %6098 = vmatmul.bf16.gmra.mxu0 %v955
  %v6099 = vpop.f32.mrf.mxu0
  %v6100 = vadd.f32 %v6087, %v6099
  %v6101 = vpop.f32.mrf.mxu0
  %6102 = vdwg.mxu0
  %6103 = vmatpush.bf16.msra.mxu0 %v4036
  %6104 = vmatpush.bf16.msra.mxu0 %v4034
  %6105 = vmatpush.bf16.msra.mxu0 %v4032
  %6106 = vmatpush.bf16.msra.mxu0 %v4030
  %6107 = vmatpush.bf16.msra.mxu0 %v4028
  %6108 = vmatpush.bf16.msra.mxu0 %v4026
  %6109 = vmatpush.bf16.msra.mxu0 %v4024
  %6110 = vmatpush.bf16.msra.mxu0 %v4022
  %6111 = vmatmul.bf16.gmra.mxu0 %v956
  %v6112 = vpop.f32.mrf.mxu0
  %v6113 = vadd.f32 %v6100, %v6112
  %v6114 = vpop.f32.mrf.mxu0
  %6115 = vdwg.mxu0
  %6116 = vmatpush.bf16.msra.mxu0 %v4052
  %6117 = vmatpush.bf16.msra.mxu0 %v4050
  %6118 = vmatpush.bf16.msra.mxu0 %v4048
  %6119 = vmatpush.bf16.msra.mxu0 %v4046
  %6120 = vmatpush.bf16.msra.mxu0 %v4044
  %6121 = vmatpush.bf16.msra.mxu0 %v4042
  %6122 = vmatpush.bf16.msra.mxu0 %v4040
  %6123 = vmatpush.bf16.msra.mxu0 %v4038
  %6124 = vmatmul.bf16.gmra.mxu0 %v957
  %v6125 = vpop.f32.mrf.mxu0
  %v6126 = vadd.f32 %v6113, %v6125
  %v6127 = vpop.f32.mrf.mxu0
  %6128 = vdwg.mxu0
  %6129 = vmatpush.bf16.msra.mxu0 %v4068
  %6130 = vmatpush.bf16.msra.mxu0 %v4066
  %6131 = vmatpush.bf16.msra.mxu0 %v4064
  %6132 = vmatpush.bf16.msra.mxu0 %v4062
  %6133 = vmatpush.bf16.msra.mxu0 %v4060
  %6134 = vmatpush.bf16.msra.mxu0 %v4058
  %6135 = vmatpush.bf16.msra.mxu0 %v4056
  %6136 = vmatpush.bf16.msra.mxu0 %v4054
  %6137 = vmatmul.bf16.gmra.mxu0 %v958
  %v6138 = vpop.f32.mrf.mxu0
  %v6139 = vadd.f32 %v6126, %v6138
  %v6140 = vpop.f32.mrf.mxu0
  %6141 = vdwg.mxu0
  %6142 = vmatpush.bf16.msra.mxu0 %v4084
  %6143 = vmatpush.bf16.msra.mxu0 %v4082
  %6144 = vmatpush.bf16.msra.mxu0 %v4080
  %6145 = vmatpush.bf16.msra.mxu0 %v4078
  %6146 = vmatpush.bf16.msra.mxu0 %v4076
  %6147 = vmatpush.bf16.msra.mxu0 %v4074
  %6148 = vmatpush.bf16.msra.mxu0 %v4072
  %6149 = vmatpush.bf16.msra.mxu0 %v4070
  %6150 = vmatmul.bf16.gmra.mxu0 %v959
  %v6151 = vpop.f32.mrf.mxu0
  %v6152 = vadd.f32 %v6139, %v6151
  %v6153 = vpop.f32.mrf.mxu0
  %6154 = vdwg.mxu0
  %6155 = vmatpush.bf16.msra.mxu0 %v4100
  %6156 = vmatpush.bf16.msra.mxu0 %v4098
  %6157 = vmatpush.bf16.msra.mxu0 %v4096
  %6158 = vmatpush.bf16.msra.mxu0 %v4094
  %6159 = vmatpush.bf16.msra.mxu0 %v4092
  %6160 = vmatpush.bf16.msra.mxu0 %v4090
  %6161 = vmatpush.bf16.msra.mxu0 %v4088
  %6162 = vmatpush.bf16.msra.mxu0 %v4086
  %6163 = vmatmul.bf16.gmra.mxu0 %v960
  %v6164 = vpop.f32.mrf.mxu0
  %v6165 = vadd.f32 %v6152, %v6164
  %v6166 = vpop.f32.mrf.mxu0
  %6167 = vdwg.mxu0
  %6168 = vmatpush.bf16.msra.mxu0 %v4116
  %6169 = vmatpush.bf16.msra.mxu0 %v4114
  %6170 = vmatpush.bf16.msra.mxu0 %v4112
  %6171 = vmatpush.bf16.msra.mxu0 %v4110
  %6172 = vmatpush.bf16.msra.mxu0 %v4108
  %6173 = vmatpush.bf16.msra.mxu0 %v4106
  %6174 = vmatpush.bf16.msra.mxu0 %v4104
  %6175 = vmatpush.bf16.msra.mxu0 %v4102
  %6176 = vmatmul.bf16.gmra.mxu0 %v961
  %v6177 = vpop.f32.mrf.mxu0
  %v6178 = vadd.f32 %v6165, %v6177
  %v6179 = vpop.f32.mrf.mxu0
  %6180 = vdwg.mxu0
  %6181 = vmatpush.bf16.msra.mxu0 %v4132
  %6182 = vmatpush.bf16.msra.mxu0 %v4130
  %6183 = vmatpush.bf16.msra.mxu0 %v4128
  %6184 = vmatpush.bf16.msra.mxu0 %v4126
  %6185 = vmatpush.bf16.msra.mxu0 %v4124
  %6186 = vmatpush.bf16.msra.mxu0 %v4122
  %6187 = vmatpush.bf16.msra.mxu0 %v4120
  %6188 = vmatpush.bf16.msra.mxu0 %v4118
  %6189 = vmatmul.bf16.gmra.mxu0 %v962
  %v6190 = vpop.f32.mrf.mxu0
  %v6191 = vadd.f32 %v6178, %v6190
  %v6192 = vpop.f32.mrf.mxu0
  %6193 = vdwg.mxu0
  %6194 = vmatpush.bf16.msra.mxu0 %v4148
  %6195 = vmatpush.bf16.msra.mxu0 %v4146
  %6196 = vmatpush.bf16.msra.mxu0 %v4144
  %6197 = vmatpush.bf16.msra.mxu0 %v4142
  %6198 = vmatpush.bf16.msra.mxu0 %v4140
  %6199 = vmatpush.bf16.msra.mxu0 %v4138
  %6200 = vmatpush.bf16.msra.mxu0 %v4136
  %6201 = vmatpush.bf16.msra.mxu0 %v4134
  %6202 = vmatmul.bf16.gmra.mxu0 %v963
  %v6203 = vpop.f32.mrf.mxu0
  %v6204 = vadd.f32 %v6191, %v6203
  %v6205 = vpop.f32.mrf.mxu0
  %6206 = vdwg.mxu0
  %v6207 = vmax.f32 %v5567, 0.0
  %v6208 = vmax.f32 %v6204, 0.0
  %v6209 = vld [vmem:[%s3] sm:$0xff]
  %v6210 = vld [vmem:[%s3 + $0x8] sm:$0xff]
  %v6211 = vld [vmem:[%s3 + $0x10] sm:$0xff]
  %v6212 = vld [vmem:[%s3 + $0x18] sm:$0xff]
  %v6213 = vld [vmem:[%s3 + $0x20] sm:$0xff]
  %v6214 = vld [vmem:[%s3 + $0x28] sm:$0xff]
  %v6215 = vld [vmem:[%s3 + $0x30] sm:$0xff]
  %v6216 = vld [vmem:[%s3 + $0x38] sm:$0xff]
  %v6217 = vld [vmem:[%s3 + $0x40] sm:$0xff]
  %v6218 = vld [vmem:[%s3 + $0x48] sm:$0xff]
  %v6219 = vld [vmem:[%s3 + $0x50] sm:$0xff]
  %v6220 = vld [vmem:[%s3 + $0x58] sm:$0xff]
  %v6221 = vld [vmem:[%s3 + $0x60] sm:$0xff]
  %v6222 = vld [vmem:[%s3 + $0x68] sm:$0xff]
  %v6223 = vld [vmem:[%s3 + $0x70] sm:$0xff]
  %v6224 = vld [vmem:[%s3 + $0x78] sm:$0xff]
  %v6225 = vld [vmem:[%s3 + $0x80] sm:$0xff]
  %v6226 = vld [vmem:[%s3 + $0x88] sm:$0xff]
  %v6227 = vld [vmem:[%s3 + $0x90] sm:$0xff]
  %v6228 = vld [vmem:[%s3 + $0x98] sm:$0xff]
  %v6229 = vld [vmem:[%s3 + $0xa0] sm:$0xff]
  %v6230 = vld [vmem:[%s3 + $0xa8] sm:$0xff]
  %v6231 = vld [vmem:[%s3 + $0xb0] sm:$0xff]
  %v6232 = vld [vmem:[%s3 + $0xb8] sm:$0xff]
  %v6233 = vld [vmem:[%s3 + $0xc0] sm:$0xff]
  %v6234 = vld [vmem:[%s3 + $0xc8] sm:$0xff]
  %v6235 = vld [vmem:[%s3 + $0xd0] sm:$0xff]
  %v6236 = vld [vmem:[%s3 + $0xd8] sm:$0xff]
  %v6237 = vld [vmem:[%s3 + $0xe0] sm:$0xff]
  %v6238 = vld [vmem:[%s3 + $0xe8] sm:$0xff]
  %v6239 = vld [vmem:[%s3 + $0xf0] sm:$0xff]
  %v6240 = vld [vmem:[%s3 + $0xf8] sm:$0xff]
  %v6241 = vld [vmem:[%s4] sm:$0x1]
  %v6243 = vperm.slane %v6241, 0
  %6245 = vmatpush.msra.mxu0 %v6224
  %6246 = vmatpush.msra.mxu0 %v6223
  %6247 = vmatpush.msra.mxu0 %v6222
  %6248 = vmatpush.msra.mxu0 %v6221
  %6249 = vmatpush.msra.mxu0 %v6220
  %6250 = vmatpush.msra.mxu0 %v6219
  %6251 = vmatpush.msra.mxu0 %v6218
  %6252 = vmatpush.msra.mxu0 %v6217
  %6253 = vmatpush.msra.mxu0 %v6216
  %6254 = vmatpush.msra.mxu0 %v6215
  %6255 = vmatpush.msra.mxu0 %v6214
  %6256 = vmatpush.msra.mxu0 %v6213
  %6257 = vmatpush.msra.mxu0 %v6212
  %6258 = vmatpush.msra.mxu0 %v6211
  %6259 = vmatpush.msra.mxu0 %v6210
  %6260 = vmatpush.msra.mxu0 %v6209
  %6261 = vmatmul.f32.gmra.mxu0 %v6207
  %v6262 = vpop.f32.mrf.mxu0
  %v6263 = vadd.f32 %v6243, %v6262
  %6264 = vdwg.mxu0
  %6265 = vmatpush.msra.mxu0 %v6240
  %6266 = vmatpush.msra.mxu0 %v6239
  %6267 = vmatpush.msra.mxu0 %v6238
  %6268 = vmatpush.msra.mxu0 %v6237
  %6269 = vmatpush.msra.mxu0 %v6236
  %6270 = vmatpush.msra.mxu0 %v6235
  %6271 = vmatpush.msra.mxu0 %v6234
  %6272 = vmatpush.msra.mxu0 %v6233
  %6273 = vmatpush.msra.mxu0 %v6232
  %6274 = vmatpush.msra.mxu0 %v6231
  %6275 = vmatpush.msra.mxu0 %v6230
  %6276 = vmatpush.msra.mxu0 %v6229
  %6277 = vmatpush.msra.mxu0 %v6228
  %6278 = vmatpush.msra.mxu0 %v6227
  %6279 = vmatpush.msra.mxu0 %v6226
  %6280 = vmatpush.msra.mxu0 %v6225
  %6281 = vmatmul.f32.gmra.mxu0 %v6208
  %v6282 = vpop.f32.mrf.mxu0
  %v6283 = vadd.f32 %v6263, %v6282
  %6284 = vdwg.mxu0
  %v6285 = vmax.f32 %v6283, 0.0
  %v6286 = vld [vmem:[%s5] sm:$0xff]
  %v6287 = vld [vmem:[%s5 + $0x8] sm:$0xff]
  %v6288 = vld [vmem:[%s5 + $0x10] sm:$0xff]
  %v6289 = vld [vmem:[%s5 + $0x18] sm:$0xff]
  %v6290 = vld [vmem:[%s5 + $0x20] sm:$0xff]
  %v6291 = vld [vmem:[%s5 + $0x28] sm:$0xff]
  %v6292 = vld [vmem:[%s5 + $0x30] sm:$0xff]
  %v6293 = vld [vmem:[%s5 + $0x38] sm:$0xff]
  %v6294 = vld [vmem:[%s5 + $0x40] sm:$0xff]
  %v6295 = vld [vmem:[%s5 + $0x48] sm:$0xff]
  %v6296 = vld [vmem:[%s5 + $0x50] sm:$0xff]
  %v6297 = vld [vmem:[%s5 + $0x58] sm:$0xff]
  %v6298 = vld [vmem:[%s5 + $0x60] sm:$0xff]
  %v6299 = vld [vmem:[%s5 + $0x68] sm:$0xff]
  %v6300 = vld [vmem:[%s5 + $0x70] sm:$0xff]
  %v6301 = vld [vmem:[%s5 + $0x78] sm:$0xff]
  %v6302 = vld [vmem:[%s6] sm:$0x1]
  %v6304 = vperm.slane %v6302, 0
  %6306 = vmatpush.msra.mxu0 %v6301
  %6307 = vmatpush.msra.mxu0 %v6300
  %6308 = vmatpush.msra.mxu0 %v6299
  %6309 = vmatpush.msra.mxu0 %v6298
  %6310 = vmatpush.msra.mxu0 %v6297
  %6311 = vmatpush.msra.mxu0 %v6296
  %6312 = vmatpush.msra.mxu0 %v6295
  %6313 = vmatpush.msra.mxu0 %v6294
  %6314 = vmatpush.msra.mxu0 %v6293
  %6315 = vmatpush.msra.mxu0 %v6292
  %6316 = vmatpush.msra.mxu0 %v6291
  %6317 = vmatpush.msra.mxu0 %v6290
  %6318 = vmatpush.msra.mxu0 %v6289
  %6319 = vmatpush.msra.mxu0 %v6288
  %6320 = vmatpush.msra.mxu0 %v6287
  %6321 = vmatpush.msra.mxu0 %v6286
  %6322 = vmatmul.f32.gmra.mxu0 %v6285
  %v6323 = vpop.f32.mrf.mxu0
  %v6324 = vadd.f32 %v6304, %v6323
  %6325 = vdwg.mxu0
  %vm6326 = vcmask 80896
  %6327 = vst.msk [vmem:[%s7] sm:$0xff] %vm6326, %v6324
  // Predicated region
  $region30: #{cnn_forward.5} parent=0 // pred_check
    _
  $region31: #{cnn_forward.5} parent=0 // pred_check_branch
    %6329 = sbr.rel (0) target = $region33
  $region32: #{cnn_forward.5} parent=0 // pred_region
    _
  $region33: #{cnn_forward.5} parent=0 // pred_fallthru
    _
  // Predicated region
  $region34: #{cnn_forward.5} parent=0 // pred_check
    _
  $region35: #{cnn_forward.5} parent=0 // pred_check_branch
    %6331 = sbr.rel (0) target = $region37
  $region36: #{cnn_forward.5} parent=0 // pred_region
    _
  $region37: #{cnn_forward.5} parent=0 // pred_fallthru
    _

</llo_original>
